<compile_context>
chip_gen: v5e
topology: v5e:2x2
jax: 0.10.0
libtpu: 0.0.40
codegen_flags: <defaults>
</compile_context>

<pallas_src>
import jax
import jax.numpy as jnp
from jax import lax
from jax.experimental import pallas as pl
from jax.experimental.pallas import tpu as pltpu

VMEM = pltpu.MemorySpace.VMEM

D_MODEL = 8
NHEAD = 2
DHEAD = D_MODEL // NHEAD
FF = 2048
HIDDEN = 32
SEQ_T = 41          # the "41" implied by lstm_fc(2624 = 41*64) and block3(1344 = 1088 + 256)
LN_EPS = 1e-5
VMEM_LIMIT = 32 * 1024 * 1024


def _round_up(x, m):
    return ((x + m - 1) // m) * m


# ------------------- kernel 1: QKV + MHA + out proj + residual + LayerNorm1 -------------------
# Attention is over dim0 of the original input (seq = A) independently per the 41 "batch"
# rows; here it is computed as one masked attention over the flattened (41*A) rows with a
# block-diagonal additive mask (two MXU matmuls per head).  Sized for modest A.

def _attn_block_kernel(x_ref, mask_ref, wqkv_ref, bqkv_ref, wo_ref, bo_ref, g_ref, b_ref, o_ref):
    x = x_ref[...]                                                       # (NS, 8)
    qkv = jnp.dot(x, wqkv_ref[...], preferred_element_type=jnp.float32) + bqkv_ref[...]
    mask = mask_ref[...]
    scale = 1.0 / float(DHEAD) ** 0.5
    heads = []
    for h in range(NHEAD):
        q = qkv[:, h * DHEAD:(h + 1) * DHEAD]
        k = qkv[:, D_MODEL + h * DHEAD:D_MODEL + (h + 1) * DHEAD]
        v = qkv[:, 2 * D_MODEL + h * DHEAD:2 * D_MODEL + (h + 1) * DHEAD]
        s = lax.dot_general(q, k, (((1,), (1,)), ((), ())),
                            preferred_element_type=jnp.float32) * scale + mask   # (NS, NS)
        s = s - jnp.max(s, axis=-1, keepdims=True)
        p = jnp.exp(s)
        p = p / jnp.sum(p, axis=-1, keepdims=True)
        heads.append(jnp.dot(p, v, preferred_element_type=jnp.float32))          # (NS, DHEAD)
    a = jnp.concatenate(heads, axis=-1)                                           # (NS, 8)
    a = jnp.dot(a, wo_ref[...], preferred_element_type=jnp.float32) + bo_ref[...]
    r = x + a
    mu = jnp.mean(r, axis=-1, keepdims=True)
    var = jnp.mean((r - mu) * (r - mu), axis=-1, keepdims=True)
    o_ref[...] = (r - mu) * lax.rsqrt(var + LN_EPS) * g_ref[...] + b_ref[...]


def attn_block(x2d, mask, wqkv, bqkv, wo, bo, g1, b1):
    ns = x2d.shape[0]
    return pl.pallas_call(
        _attn_block_kernel,
        out_shape=jax.ShapeDtypeStruct((ns, D_MODEL), jnp.float32),
        in_specs=[pl.BlockSpec(memory_space=VMEM)] * 8,
        out_specs=pl.BlockSpec(memory_space=VMEM),
    )(x2d, mask, wqkv, bqkv.reshape(1, -1), wo, bo.reshape(1, -1),
      g1.reshape(1, -1), b1.reshape(1, -1))


# ------------------- kernel 2: FFN (lin1 + ReLU + lin2) + residual + LayerNorm2 ----------------

def _ffn_block_kernel(y_ref, w1_ref, b1_ref, w2_ref, b2_ref, g_ref, be_ref, o_ref):
    y = y_ref[...]                                                       # (TM, 8)
    h = jnp.dot(y, w1_ref[...], preferred_element_type=jnp.float32) + b1_ref[...]
    h = jnp.maximum(h, 0.0)                                              # (TM, 2048) stays on-chip
    z = jnp.dot(h, w2_ref[...], preferred_element_type=jnp.float32) + b2_ref[...]
    r = y + z
    mu = jnp.mean(r, axis=-1, keepdims=True)
    var = jnp.mean((r - mu) * (r - mu), axis=-1, keepdims=True)
    o_ref[...] = (r - mu) * lax.rsqrt(var + LN_EPS) * g_ref[...] + be_ref[...]


def ffn_block(y2d, w1, b1, w2, b2, g2, be2):
    m = y2d.shape[0]
    tm = min(256, _round_up(m, 8))          # <=256 rows/tile keeps the f32 intermediate small
    mp = _round_up(m, tm)
    y_p = jnp.pad(y2d, ((0, mp - m), (0, 0)))
    out = pl.pallas_call(
        _ffn_block_kernel,
        out_shape=jax.ShapeDtypeStruct((mp, D_MODEL), jnp.float32),
        grid=(mp // tm,),
        in_specs=[
            pl.BlockSpec((tm, D_MODEL), lambda i: (i, 0)),
            pl.BlockSpec((D_MODEL, FF), lambda i: (0, 0)),
            pl.BlockSpec((1, FF), lambda i: (0, 0)),
            pl.BlockSpec((FF, D_MODEL), lambda i: (0, 0)),
            pl.BlockSpec((1, D_MODEL), lambda i: (0, 0)),
            pl.BlockSpec((1, D_MODEL), lambda i: (0, 0)),
            pl.BlockSpec((1, D_MODEL), lambda i: (0, 0)),
        ],
        out_specs=pl.BlockSpec((tm, D_MODEL), lambda i: (i, 0)),
        compiler_params=pltpu.CompilerParams(
            dimension_semantics=("parallel",), vmem_limit_bytes=VMEM_LIMIT),
    )(y_p, w1, b1.reshape(1, -1), w2, b2.reshape(1, -1),
      g2.reshape(1, -1), be2.reshape(1, -1))
    return out[:m]


# ------------------- kernel 3: one bidirectional LSTM layer (both directions fused) ------------

def _lstm_layer_kernel(x_ref, wif_ref, bif_ref, whf_ref, wib_ref, bib_ref, whb_ref,
                       of_ref, ob_ref, hf, cf, hb, cb):
    T = x_ref.shape[0]
    hf[...] = jnp.zeros_like(hf)
    cf[...] = jnp.zeros_like(cf)
    hb[...] = jnp.zeros_like(hb)
    cb[...] = jnp.zeros_like(cb)

    def step(t, carry):
        xf = x_ref[t]              # (B, F)  forward stream
        xb = x_ref[T - 1 - t]      # (B, F)  backward stream (time-reversed access)
        gf = (jnp.dot(xf, wif_ref[...], preferred_element_type=jnp.float32) + bif_ref[...]
              + jnp.dot(hf[...], whf_ref[...], preferred_element_type=jnp.float32))
        gb = (jnp.dot(xb, wib_ref[...], preferred_element_type=jnp.float32) + bib_ref[...]
              + jnp.dot(hb[...], whb_ref[...], preferred_element_type=jnp.float32))

        def gate_update(g, h_s, c_s):
            # TODO(synk): gate extraction is a 32-lane sub-slice of a 128-lane vreg; a
            # gate-major layout would avoid the lane selects but needs 4x more tiny matmuls.
            i_g = 1.0 / (1.0 + jnp.exp(-g[:, 0 * HIDDEN:1 * HIDDEN]))
            f_g = 1.0 / (1.0 + jnp.exp(-g[:, 1 * HIDDEN:2 * HIDDEN]))
            g_g = jnp.tanh(g[:, 2 * HIDDEN:3 * HIDDEN])
            o_g = 1.0 / (1.0 + jnp.exp(-g[:, 3 * HIDDEN:4 * HIDDEN]))
            c = f_g * c_s[...] + i_g * g_g
            h = o_g * jnp.tanh(c)
            c_s[...] = c
            h_s[...] = h
            return h

        of_ref[t] = gate_update(gf, hf, cf)
        ob_ref[T - 1 - t] = gate_update(gb, hb, cb)
        return carry

    lax.fori_loop(0, T, step, 0)


def lstm_layer(x_tbf, params_f, params_b):
    """x_tbf: (T, B, F) time-major.  Returns (out_fwd, out_bwd), each (T, B, 32)."""
    T, B, _ = x_tbf.shape
    w_ih_f, w_hh_f, b_ih_f, b_hh_f = params_f
    w_ih_b, w_hh_b, b_ih_b, b_hh_b = params_b
    return pl.pallas_call(
        _lstm_layer_kernel,
        out_shape=(jax.ShapeDtypeStruct((T, B, HIDDEN), jnp.float32),
                   jax.ShapeDtypeStruct((T, B, HIDDEN), jnp.float32)),
        in_specs=[pl.BlockSpec(memory_space=VMEM)] * 7,
        out_specs=(pl.BlockSpec(memory_space=VMEM),
                   pl.BlockSpec(memory_space=VMEM)),
        scratch_shapes=[pltpu.VMEM((B, HIDDEN), jnp.float32)] * 4,
    )(x_tbf,
      w_ih_f.T, (b_ih_f + b_hh_f).reshape(1, -1), w_hh_f.T,
      w_ih_b.T, (b_ih_b + b_hh_b).reshape(1, -1), w_hh_b.T)


# ------------------- kernel 4: conv1 -> conv2 -> maxpool -> flatten (per sample) ----------------

def _conv_branch_kernel(x_ref, w1_ref, b1_ref, w2_ref, b2_ref, o_ref):
    x = x_ref[0]                                                     # (41, 8)
    w1 = w1_ref[...]
    b1 = b1_ref[...]
    # conv1 (1->32 ch, 4x4, valid): spatial (38, 5); channels-minor layout, col = j*32 + c.
    cols = []
    for j in range(5):
        patch = jnp.concatenate([x[ki:ki + 38, j:j + 4] for ki in range(4)], axis=1)   # (38, 16)
        cols.append(jnp.dot(patch, w1, preferred_element_type=jnp.float32) + b1)       # (38, 32)
    o1 = jnp.concatenate(cols, axis=1)                               # (38, 160)
    # conv2 (32->64 ch, 4x4, valid): spatial (35, 2); im2col rows from 128-lane blocks of o1.
    blocks = []
    for j2 in range(2):
        blk = o1[:, j2 * 32:(j2 + 4) * 32]                           # (38, 128)
        blocks.append(jnp.concatenate([blk[ki:ki + 35, :] for ki in range(4)], axis=1))  # (35, 512)
    p2 = jnp.concatenate(blocks, axis=0)                             # (70, 512): rows 0..34 j=0
    o2 = jnp.dot(p2, w2_ref[...], preferred_element_type=jnp.float32) + b2_ref[...]      # (70, 64)
    # maxpool 2x2 (floor) over spatial (35, 2) -> (17, 1); select even pairs with a tiny matmul.
    m = jnp.maximum(o2[0:35, :], o2[35:70, :])                       # max over j
    pair = jnp.maximum(m[0:34, :], m[1:35, :])                       # pair[r] = max(m[r], m[r+1])
    row_i = lax.broadcasted_iota(jnp.int32, (17, 34), 0)
    col_i = lax.broadcasted_iota(jnp.int32, (17, 34), 1)
    sel = (col_i == 2 * row_i).astype(jnp.float32)                   # picks rows 0, 2, ..., 32
    o_ref[0] = jnp.dot(sel, pair, preferred_element_type=jnp.float32)   # (17, 64)


def conv_branch(enc_b, w1m, b1, w2m, b2):
    A = enc_b.shape[0]
    return pl.pallas_call(
        _conv_branch_kernel,
        out_shape=jax.ShapeDtypeStruct((A, 17, 64), jnp.float32),
        grid=(A,),
        in_specs=[
            pl.BlockSpec((1, SEQ_T, D_MODEL), lambda a: (a, 0, 0)),
            pl.BlockSpec((16, 32), lambda a: (0, 0)),
            pl.BlockSpec((1, 32), lambda a: (0, 0)),
            pl.BlockSpec((512, 64), lambda a: (0, 0)),
            pl.BlockSpec((1, 64), lambda a: (0, 0)),
        ],
        out_specs=pl.BlockSpec((1, 17, 64), lambda a: (a, 0, 0)),
        compiler_params=pltpu.CompilerParams(
            dimension_semantics=("parallel",), vmem_limit_bytes=VMEM_LIMIT),
    )(enc_b, w1m, b1.reshape(1, -1), w2m, b2.reshape(1, -1))


# ------------------- kernel 5: lstm_fc + ReLU + block3 (fc1/fc2/fc3 + softmax) ------------------

def _head_kernel(x2_ref, c3_ref, wfc_ref, bfc_ref, w1a_ref, w1b_ref, b1_ref,
                 w2_ref, b2_ref, w3_ref, b3_ref, o_ref):
    x3 = jnp.dot(x2_ref[...], wfc_ref[...], preferred_element_type=jnp.float32) + bfc_ref[...]
    x3 = jnp.maximum(x3, 0.0)                                        # (TA, 256)
    h = (jnp.dot(c3_ref[...], w1a_ref[...], preferred_element_type=jnp.float32)
         + jnp.dot(x3, w1b_ref[...], preferred_element_type=jnp.float32) + b1_ref[...])
    h = jnp.where(h >= 0.0, h, 0.01 * h)                             # LeakyReLU
    h = jnp.dot(h, w2_ref[...], preferred_element_type=jnp.float32) + b2_ref[...]
    h = jnp.where(h >= 0.0, h, 0.01 * h)
    h = jnp.dot(h, w3_ref[...], preferred_element_type=jnp.float32) + b3_ref[...]
    h = h - jnp.max(h, axis=-1, keepdims=True)
    e = jnp.exp(h)
    o_ref[...] = e / jnp.sum(e, axis=-1, keepdims=True)


def head_block(x2, c3, wfc, bfc, w1a, w1b, b1, w2, b2, w3, b3):
    A = x2.shape[0]
    ta = min(256, _round_up(A, 8))
    ap = _round_up(A, ta)
    x2p = jnp.pad(x2, ((0, ap - A), (0, 0)))
    c3p = jnp.pad(c3, ((0, ap - A), (0, 0)))
    k_lstm = SEQ_T * 2 * HIDDEN       # 2624
    out = pl.pallas_call(
        _head_kernel,
        out_shape=jax.ShapeDtypeStruct((ap, 2), jnp.float32),
        grid=(ap // ta,),
        in_specs=[
            pl.BlockSpec((ta, k_lstm), lambda i: (i, 0)),
            pl.BlockSpec((ta, 1088), lambda i: (i, 0)),
            pl.BlockSpec((k_lstm, 256), lambda i: (0, 0)),
            pl.BlockSpec((1, 256), lambda i: (0, 0)),
            pl.BlockSpec((1088, 128), lambda i: (0, 0)),
            pl.BlockSpec((256, 128), lambda i: (0, 0)),
            pl.BlockSpec((1, 128), lambda i: (0, 0)),
            pl.BlockSpec((128, 12), lambda i: (0, 0)),
            pl.BlockSpec((1, 12), lambda i: (0, 0)),
            pl.BlockSpec((12, 2), lambda i: (0, 0)),
            pl.BlockSpec((1, 2), lambda i: (0, 0)),
        ],
        out_specs=pl.BlockSpec((ta, 2), lambda i: (i, 0)),
        compiler_params=pltpu.CompilerParams(
            dimension_semantics=("parallel",), vmem_limit_bytes=VMEM_LIMIT),
    )(x2p, c3p, wfc, bfc.reshape(1, -1), w1a, w1b, b1.reshape(1, -1),
      w2, b2.reshape(1, -1), w3, b3.reshape(1, -1))
    return out[:A]


# ----------------------------------- full forward pass ------------------------------------------

def new_model2_forward(x, p):
    """x: (A, 41, 8) float32 -> (A, 2) softmax probabilities (inference, dropout = identity)."""
    A, T, E = x.shape
    N, S = T, A                 # transformer: seq len = A, "batch" = 41
    NS = N * S

    # ----- transformer encoder (shared by both branches) -----
    x2d = jnp.transpose(x, (1, 0, 2)).reshape(NS, E)             # rows ordered (n major, s minor)
    n_id = jnp.repeat(jnp.arange(N, dtype=jnp.int32), S)
    mask = jnp.where(n_id[:, None] == n_id[None, :], 0.0, -1e30).astype(jnp.float32)
    y1 = attn_block(x2d, mask, p["attn_in_w"].T, p["attn_in_b"],
                    p["attn_out_w"].T, p["attn_out_b"], p["norm1_g"], p["norm1_b"])
    enc2d = ffn_block(y1, p["lin1_w"].T, p["lin1_b"], p["lin2_w"].T, p["lin2_b"],
                      p["norm2_g"], p["norm2_b"])                # (NS, 8)
    enc_t = enc2d.reshape(N, S, E)                               # (41, A, 8) = time-major LSTM in
    enc_b = jnp.transpose(enc_t, (1, 0, 2))                      # (A, 41, 8) for conv branch

    # ----- 2-layer bidirectional LSTM (directions fused per layer) -----
    f0, b0 = lstm_layer(enc_t, p["lstm"][(0, 0)], p["lstm"][(0, 1)])
    in1 = jnp.concatenate([f0, b0], axis=-1)                     # (41, A, 64)
    f1, bk1 = lstm_layer(in1, p["lstm"][(1, 0)], p["lstm"][(1, 1)])
    hcat = jnp.concatenate([f1, bk1], axis=-1)                   # (41, A, 64)
    x2 = jnp.transpose(hcat, (1, 0, 2)).reshape(A, T * 2 * HIDDEN)   # (A, 2624), col = t*64 + d

    # ----- conv branch (fused conv1/conv2/maxpool/flatten) -----
    w1m = p["conv1_w"].reshape(32, 16).T                             # (16, 32)  rows (ki, kj)
    w2m = p["conv2_w"].transpose(2, 3, 1, 0).reshape(512, 64)        # (512, 64) rows (ki, kj, c)
    c3 = conv_branch(enc_b, w1m, p["conv1_b"], w2m, p["conv2_b"])    # (A, 17, 64)
    c3 = c3.reshape(A, 17 * 64)                                      # (A, 1088), col = i_p*64 + c

    # ----- head: lstm_fc + block3; fc1 split into conv-part and lstm-part matmuls -----
    # PyTorch conv-flatten order is c*17 + i_p; permute fc1's first 1088 columns to our order.
    w1a = p["fc1_w"][:, :1088].reshape(128, 64, 17).transpose(2, 1, 0).reshape(1088, 128)
    w1b = p["fc1_w"][:, 1088:].T                                     # (256, 128)
    out = head_block(x2, c3, p["lstm_fc_w"].T, p["lstm_fc_b"],
                     w1a, w1b, p["fc1_b"], p["fc2_w"].T, p["fc2_b"],
                     p["fc3_w"].T, p["fc3_b"])
    return out


# ----------------------------- deterministic parameter init (PyTorch layouts) -------------------

def init_params(key):
    def randn(k, shape, scale):
        return scale * jax.random.normal(k, shape, dtype=jnp.float32)

    keys = iter(jax.random.split(key, 64))
    p = {}
    # TransformerEncoderLayer(d_model=8, nhead=2, dim_feedforward=2048)
    p["attn_in_w"] = randn(next(keys), (3 * D_MODEL, D_MODEL), 0.3)
    p["attn_in_b"] = randn(next(keys), (3 * D_MODEL,), 0.1)
    p["attn_out_w"] = randn(next(keys), (D_MODEL, D_MODEL), 0.3)
    p["attn_out_b"] = randn(next(keys), (D_MODEL,), 0.1)
    p["lin1_w"] = randn(next(keys), (FF, D_MODEL), 0.2)
    p["lin1_b"] = randn(next(keys), (FF,), 0.1)
    p["lin2_w"] = randn(next(keys), (D_MODEL, FF), 0.02)
    p["lin2_b"] = randn(next(keys), (D_MODEL,), 0.1)
    p["norm1_g"] = jnp.ones((D_MODEL,), jnp.float32)
    p["norm1_b"] = jnp.zeros((D_MODEL,), jnp.float32)
    p["norm2_g"] = jnp.ones((D_MODEL,), jnp.float32)
    p["norm2_b"] = jnp.zeros((D_MODEL,), jnp.float32)
    # LSTM(input=8, hidden=32, num_layers=2, bidirectional=True)
    lstm = {}
    for layer in range(2):
        in_f = D_MODEL if layer == 0 else 2 * HIDDEN
        for direction in range(2):
            lstm[(layer, direction)] = (
                randn(next(keys), (4 * HIDDEN, in_f), 0.15),    # weight_ih
                randn(next(keys), (4 * HIDDEN, HIDDEN), 0.15),  # weight_hh
                randn(next(keys), (4 * HIDDEN,), 0.05),         # bias_ih
                randn(next(keys), (4 * HIDDEN,), 0.05),         # bias_hh
            )
    p["lstm"] = lstm
    p["lstm_fc_w"] = randn(next(keys), (256, SEQ_T * 2 * HIDDEN), 0.02)  # (256, 2624)
    p["lstm_fc_b"] = randn(next(keys), (256,), 0.05)
    # block2
    p["conv1_w"] = randn(next(keys), (32, 1, 4, 4), 0.2)
    p["conv1_b"] = randn(next(keys), (32,), 0.05)
    p["conv2_w"] = randn(next(keys), (64, 32, 4, 4), 0.05)
    p["conv2_b"] = randn(next(keys), (64,), 0.05)
    # block3
    p["fc1_w"] = randn(next(keys), (128, 1344), 0.02)
    p["fc1_b"] = randn(next(keys), (128,), 0.05)
    p["fc2_w"] = randn(next(keys), (12, 128), 0.1)
    p["fc2_b"] = randn(next(keys), (12,), 0.05)
    p["fc3_w"] = randn(next(keys), (2, 12), 0.3)
    p["fc3_b"] = randn(next(keys), (2,), 0.05)
    return p


if __name__ == "__main__":
    key = jax.random.PRNGKey(0)
    pkey, xkey = jax.random.split(key)
    params = init_params(pkey)
    # The module's Linear sizes force dim1=41, dim2=8; pick a small dim0 batch of 2.
    x = jax.random.normal(xkey, (2, SEQ_T, D_MODEL), dtype=jnp.float32)
    fwd = jax.jit(new_model2_forward)
    out = jax.block_until_ready(fwd(x, params))
    assert out.shape == (2, 2), out.shape
    assert bool(jnp.all(jnp.isfinite(out)))
    # rows of the final softmax must sum to 1
    assert bool(jnp.allclose(jnp.sum(out, axis=1), 1.0, atol=1e-5))
    print("KERNEL_OK")
</pallas_src>

<mosaic_0001>
module attributes {stable_mosaic.version = 11 : i64} {
  func.func @_attn_block_kernel(%arg0: memref<82x8xf32, #tpu.memory_space<vmem>>, %arg1: memref<82x82xf32, #tpu.memory_space<vmem>>, %arg2: memref<8x24xf32, #tpu.memory_space<vmem>>, %arg3: memref<1x24xf32, #tpu.memory_space<vmem>>, %arg4: memref<8x8xf32, #tpu.memory_space<vmem>>, %arg5: memref<1x8xf32, #tpu.memory_space<vmem>>, %arg6: memref<1x8xf32, #tpu.memory_space<vmem>>, %arg7: memref<1x8xf32, #tpu.memory_space<vmem>>, %arg8: memref<82x8xf32, #tpu.memory_space<vmem>>) attributes {dimension_semantics = [], scalar_prefetch = 0 : i64, scratch_operands = 0 : i64, tpu.core_type = #tpu.core_type<tc>} {
    %c0 = arith.constant 0 : index
    %c0_0 = arith.constant 0 : index
    %0 = vector.load %arg0[%c0, %c0_0] : memref<82x8xf32, #tpu.memory_space<vmem>>, vector<82x8xf32>
    %c0_1 = arith.constant 0 : index
    %c0_2 = arith.constant 0 : index
    %1 = vector.load %arg2[%c0_1, %c0_2] : memref<8x24xf32, #tpu.memory_space<vmem>>, vector<8x24xf32>
    %cst = arith.constant dense<0.000000e+00> : vector<82x24xf32>
    %2 = tpu.matmul %0, %1, %cst {dimension_numbers = #tpu.dot_dimension_numbers<[1], [0], [0], [1], [0, 0, 1, 1], [], []>} : vector<82x8xf32>, vector<8x24xf32>, vector<82x24xf32> -> vector<82x24xf32>
    %c0_3 = arith.constant 0 : index
    %c0_4 = arith.constant 0 : index
    %3 = vector.load %arg3[%c0_3, %c0_4] : memref<1x24xf32, #tpu.memory_space<vmem>>, vector<1x24xf32>
    %4 = vector.broadcast %3 : vector<1x24xf32> to vector<82x24xf32>
    %5 = arith.addf %2, %4 : vector<82x24xf32>
    %c0_5 = arith.constant 0 : index
    %c0_6 = arith.constant 0 : index
    %6 = vector.load %arg1[%c0_5, %c0_6] : memref<82x82xf32, #tpu.memory_space<vmem>>, vector<82x82xf32>
    %7 = vector.extract_strided_slice %5 {offsets = [0, 0], sizes = [82, 4], strides = [1, 1]} : vector<82x24xf32> to vector<82x4xf32>
    %8 = vector.extract_strided_slice %5 {offsets = [0, 8], sizes = [82, 4], strides = [1, 1]} : vector<82x24xf32> to vector<82x4xf32>
    %9 = vector.extract_strided_slice %5 {offsets = [0, 16], sizes = [82, 4], strides = [1, 1]} : vector<82x24xf32> to vector<82x4xf32>
    %cst_7 = arith.constant dense<0.000000e+00> : vector<82x82xf32>
    %10 = tpu.matmul %7, %8, %cst_7 {dimension_numbers = #tpu.dot_dimension_numbers<[1], [1], [0], [0], [0, 0, 1, 0], [], []>} : vector<82x4xf32>, vector<82x4xf32>, vector<82x82xf32> -> vector<82x82xf32>
    %cst_8 = arith.constant 5.000000e-01 : f32
    %11 = vector.broadcast %cst_8 : f32 to vector<82x82xf32>
    %12 = arith.mulf %10, %11 : vector<82x82xf32>
    %13 = arith.addf %12, %6 : vector<82x82xf32>
    %cst_9 = arith.constant dense<0xFF800000> : vector<82xf32>
    %14 = vector.multi_reduction <maximumf>, %13, %cst_9 [1] : vector<82x82xf32> to vector<82xf32>
    %15 = vector.shape_cast %14 : vector<82xf32> to vector<82x1xf32>
    %16 = vector.broadcast %15 : vector<82x1xf32> to vector<82x82xf32>
    %17 = arith.subf %13, %16 : vector<82x82xf32>
    %18 = math.exp %17 : vector<82x82xf32>
    %cst_10 = arith.constant dense<0.000000e+00> : vector<82xf32>
    %19 = vector.multi_reduction <add>, %18, %cst_10 [1] : vector<82x82xf32> to vector<82xf32>
    %20 = vector.shape_cast %19 : vector<82xf32> to vector<82x1xf32>
    %21 = vector.broadcast %20 : vector<82x1xf32> to vector<82x82xf32>
    %22 = arith.divf %18, %21 : vector<82x82xf32>
    %cst_11 = arith.constant dense<0.000000e+00> : vector<82x4xf32>
    %23 = tpu.matmul %22, %9, %cst_11 {dimension_numbers = #tpu.dot_dimension_numbers<[1], [0], [0], [1], [0, 0, 1, 1], [], []>} : vector<82x82xf32>, vector<82x4xf32>, vector<82x4xf32> -> vector<82x4xf32>
    %24 = vector.extract_strided_slice %5 {offsets = [0, 4], sizes = [82, 4], strides = [1, 1]} : vector<82x24xf32> to vector<82x4xf32>
    %25 = vector.extract_strided_slice %5 {offsets = [0, 12], sizes = [82, 4], strides = [1, 1]} : vector<82x24xf32> to vector<82x4xf32>
    %26 = vector.extract_strided_slice %5 {offsets = [0, 20], sizes = [82, 4], strides = [1, 1]} : vector<82x24xf32> to vector<82x4xf32>
    %cst_12 = arith.constant dense<0.000000e+00> : vector<82x82xf32>
    %27 = tpu.matmul %24, %25, %cst_12 {dimension_numbers = #tpu.dot_dimension_numbers<[1], [1], [0], [0], [0, 0, 1, 0], [], []>} : vector<82x4xf32>, vector<82x4xf32>, vector<82x82xf32> -> vector<82x82xf32>
    %cst_13 = arith.constant 5.000000e-01 : f32
    %28 = vector.broadcast %cst_13 : f32 to vector<82x82xf32>
    %29 = arith.mulf %27, %28 : vector<82x82xf32>
    %30 = arith.addf %29, %6 : vector<82x82xf32>
    %cst_14 = arith.constant dense<0xFF800000> : vector<82xf32>
    %31 = vector.multi_reduction <maximumf>, %30, %cst_14 [1] : vector<82x82xf32> to vector<82xf32>
    %32 = vector.shape_cast %31 : vector<82xf32> to vector<82x1xf32>
    %33 = vector.broadcast %32 : vector<82x1xf32> to vector<82x82xf32>
    %34 = arith.subf %30, %33 : vector<82x82xf32>
    %35 = math.exp %34 : vector<82x82xf32>
    %cst_15 = arith.constant dense<0.000000e+00> : vector<82xf32>
    %36 = vector.multi_reduction <add>, %35, %cst_15 [1] : vector<82x82xf32> to vector<82xf32>
    %37 = vector.shape_cast %36 : vector<82xf32> to vector<82x1xf32>
    %38 = vector.broadcast %37 : vector<82x1xf32> to vector<82x82xf32>
    %39 = arith.divf %35, %38 : vector<82x82xf32>
    %cst_16 = arith.constant dense<0.000000e+00> : vector<82x4xf32>
    %40 = tpu.matmul %39, %26, %cst_16 {dimension_numbers = #tpu.dot_dimension_numbers<[1], [0], [0], [1], [0, 0, 1, 1], [], []>} : vector<82x82xf32>, vector<82x4xf32>, vector<82x4xf32> -> vector<82x4xf32>
    %41 = tpu.concatenate %23, %40 in 1 : vector<82x4xf32>, vector<82x4xf32> -> vector<82x8xf32>
    %c0_17 = arith.constant 0 : index
    %c0_18 = arith.constant 0 : index
    %42 = vector.load %arg4[%c0_17, %c0_18] : memref<8x8xf32, #tpu.memory_space<vmem>>, vector<8x8xf32>
    %cst_19 = arith.constant dense<0.000000e+00> : vector<82x8xf32>
    %43 = tpu.matmul %41, %42, %cst_19 {dimension_numbers = #tpu.dot_dimension_numbers<[1], [0], [0], [1], [0, 0, 1, 1], [], []>} : vector<82x8xf32>, vector<8x8xf32>, vector<82x8xf32> -> vector<82x8xf32>
    %c0_20 = arith.constant 0 : index
    %c0_21 = arith.constant 0 : index
    %44 = vector.load %arg5[%c0_20, %c0_21] : memref<1x8xf32, #tpu.memory_space<vmem>>, vector<1x8xf32>
    %45 = vector.broadcast %44 : vector<1x8xf32> to vector<82x8xf32>
    %46 = arith.addf %43, %45 : vector<82x8xf32>
    %47 = arith.addf %0, %46 : vector<82x8xf32>
    %cst_22 = arith.constant dense<0.000000e+00> : vector<82xf32>
    %48 = vector.multi_reduction <add>, %47, %cst_22 [1] : vector<82x8xf32> to vector<82xf32>
    %49 = vector.shape_cast %48 : vector<82xf32> to vector<82x1xf32>
    %cst_23 = arith.constant 8.000000e+00 : f32
    %50 = vector.broadcast %cst_23 : f32 to vector<82x1xf32>
    %51 = arith.divf %49, %50 : vector<82x1xf32>
    %52 = vector.broadcast %51 : vector<82x1xf32> to vector<82x8xf32>
    %53 = arith.subf %47, %52 : vector<82x8xf32>
    %54 = vector.broadcast %51 : vector<82x1xf32> to vector<82x8xf32>
    %55 = arith.subf %47, %54 : vector<82x8xf32>
    %56 = arith.mulf %53, %55 : vector<82x8xf32>
    %cst_24 = arith.constant dense<0.000000e+00> : vector<82xf32>
    %57 = vector.multi_reduction <add>, %56, %cst_24 [1] : vector<82x8xf32> to vector<82xf32>
    %58 = vector.shape_cast %57 : vector<82xf32> to vector<82x1xf32>
    %cst_25 = arith.constant 8.000000e+00 : f32
    %59 = vector.broadcast %cst_25 : f32 to vector<82x1xf32>
    %60 = arith.divf %58, %59 : vector<82x1xf32>
    %61 = vector.broadcast %51 : vector<82x1xf32> to vector<82x8xf32>
    %62 = arith.subf %47, %61 : vector<82x8xf32>
    %cst_26 = arith.constant 9.99999974E-6 : f32
    %63 = vector.broadcast %cst_26 : f32 to vector<82x1xf32>
    %64 = arith.addf %60, %63 : vector<82x1xf32>
    %65 = math.rsqrt %64 : vector<82x1xf32>
    %66 = vector.broadcast %65 : vector<82x1xf32> to vector<82x8xf32>
    %67 = arith.mulf %62, %66 : vector<82x8xf32>
    %c0_27 = arith.constant 0 : index
    %c0_28 = arith.constant 0 : index
    %68 = vector.load %arg6[%c0_27, %c0_28] : memref<1x8xf32, #tpu.memory_space<vmem>>, vector<1x8xf32>
    %69 = vector.broadcast %68 : vector<1x8xf32> to vector<82x8xf32>
    %70 = arith.mulf %67, %69 : vector<82x8xf32>
    %c0_29 = arith.constant 0 : index
    %c0_30 = arith.constant 0 : index
    %71 = vector.load %arg7[%c0_29, %c0_30] : memref<1x8xf32, #tpu.memory_space<vmem>>, vector<1x8xf32>
    %72 = vector.broadcast %71 : vector<1x8xf32> to vector<82x8xf32>
    %73 = arith.addf %70, %72 : vector<82x8xf32>
    %c0_31 = arith.constant 0 : index
    %c0_32 = arith.constant 0 : index
    %74 = vector.load %arg8[%c0_31, %c0_32] : memref<82x8xf32, #tpu.memory_space<vmem>>, vector<82x8xf32>
    tpu.vector_store %arg8[%c0_31, %c0_32], %73 {strides = array<i32>} : memref<82x8xf32, #tpu.memory_space<vmem>>, vector<82x8xf32>,
    return
  }
}

module attributes {stable_mosaic.version = 11 : i64} {
  func.func @_ffn_block_kernel(%arg0: i32, %arg1: memref<88x8xf32, #tpu.memory_space<vmem>>, %arg2: memref<8x2048xf32, #tpu.memory_space<vmem>>, %arg3: memref<1x2048xf32, #tpu.memory_space<vmem>>, %arg4: memref<2048x8xf32, #tpu.memory_space<vmem>>, %arg5: memref<1x8xf32, #tpu.memory_space<vmem>>, %arg6: memref<1x8xf32, #tpu.memory_space<vmem>>, %arg7: memref<1x8xf32, #tpu.memory_space<vmem>>, %arg8: memref<88x8xf32, #tpu.memory_space<vmem>>) attributes {dimension_semantics = [#tpu.dimension_semantics<parallel>], iteration_bounds = array<i64: 1>, scalar_prefetch = 0 : i64, scratch_operands = 0 : i64, tpu.core_type = #tpu.core_type<tc>, window_params = [{transform_indices = @transform_0, window_bounds = array<i64: 88, 8>}, {pipeline_mode = #tpu.pipeline_mode<synchronous>, transform_indices = @transform_1, window_bounds = array<i64: 8, 2048>}, {pipeline_mode = #tpu.pipeline_mode<synchronous>, transform_indices = @transform_2, window_bounds = array<i64: 1, 2048>}, {pipeline_mode = #tpu.pipeline_mode<synchronous>, transform_indices = @transform_3, window_bounds = array<i64: 2048, 8>}, {pipeline_mode = #tpu.pipeline_mode<synchronous>, transform_indices = @transform_4, window_bounds = array<i64: 1, 8>}, {pipeline_mode = #tpu.pipeline_mode<synchronous>, transform_indices = @transform_5, window_bounds = array<i64: 1, 8>}, {pipeline_mode = #tpu.pipeline_mode<synchronous>, transform_indices = @transform_6, window_bounds = array<i64: 1, 8>}, {transform_indices = @transform_7, window_bounds = array<i64: 88, 8>}]} {
    %c0 = arith.constant 0 : index
    %c0_0 = arith.constant 0 : index
    %0 = vector.load %arg1[%c0, %c0_0] : memref<88x8xf32, #tpu.memory_space<vmem>>, vector<88x8xf32>
    %c0_1 = arith.constant 0 : index
    %c0_2 = arith.constant 0 : index
    %1 = vector.load %arg2[%c0_1, %c0_2] : memref<8x2048xf32, #tpu.memory_space<vmem>>, vector<8x2048xf32>
    %cst = arith.constant dense<0.000000e+00> : vector<88x2048xf32>
    %2 = tpu.matmul %0, %1, %cst {dimension_numbers = #tpu.dot_dimension_numbers<[1], [0], [0], [1], [0, 0, 1, 1], [], []>} : vector<88x8xf32>, vector<8x2048xf32>, vector<88x2048xf32> -> vector<88x2048xf32>
    %c0_3 = arith.constant 0 : index
    %c0_4 = arith.constant 0 : index
    %3 = vector.load %arg3[%c0_3, %c0_4] : memref<1x2048xf32, #tpu.memory_space<vmem>>, vector<1x2048xf32>
    %4 = vector.broadcast %3 : vector<1x2048xf32> to vector<88x2048xf32>
    %5 = arith.addf %2, %4 : vector<88x2048xf32>
    %cst_5 = arith.constant 0.000000e+00 : f32
    %6 = vector.broadcast %cst_5 : f32 to vector<88x2048xf32>
    %7 = arith.maximumf %5, %6 : vector<88x2048xf32>
    %c0_6 = arith.constant 0 : index
    %c0_7 = arith.constant 0 : index
    %8 = vector.load %arg4[%c0_6, %c0_7] : memref<2048x8xf32, #tpu.memory_space<vmem>>, vector<2048x8xf32>
    %cst_8 = arith.constant dense<0.000000e+00> : vector<88x8xf32>
    %9 = tpu.matmul %7, %8, %cst_8 {dimension_numbers = #tpu.dot_dimension_numbers<[1], [0], [0], [1], [0, 0, 1, 1], [], []>} : vector<88x2048xf32>, vector<2048x8xf32>, vector<88x8xf32> -> vector<88x8xf32>
    %c0_9 = arith.constant 0 : index
    %c0_10 = arith.constant 0 : index
    %10 = vector.load %arg5[%c0_9, %c0_10] : memref<1x8xf32, #tpu.memory_space<vmem>>, vector<1x8xf32>
    %11 = vector.broadcast %10 : vector<1x8xf32> to vector<88x8xf32>
    %12 = arith.addf %9, %11 : vector<88x8xf32>
    %13 = arith.addf %0, %12 : vector<88x8xf32>
    %cst_11 = arith.constant dense<0.000000e+00> : vector<88xf32>
    %14 = vector.multi_reduction <add>, %13, %cst_11 [1] : vector<88x8xf32> to vector<88xf32>
    %15 = vector.shape_cast %14 : vector<88xf32> to vector<88x1xf32>
    %cst_12 = arith.constant 8.000000e+00 : f32
    %16 = vector.broadcast %cst_12 : f32 to vector<88x1xf32>
    %17 = arith.divf %15, %16 : vector<88x1xf32>
    %18 = vector.broadcast %17 : vector<88x1xf32> to vector<88x8xf32>
    %19 = arith.subf %13, %18 : vector<88x8xf32>
    %20 = vector.broadcast %17 : vector<88x1xf32> to vector<88x8xf32>
    %21 = arith.subf %13, %20 : vector<88x8xf32>
    %22 = arith.mulf %19, %21 : vector<88x8xf32>
    %cst_13 = arith.constant dense<0.000000e+00> : vector<88xf32>
    %23 = vector.multi_reduction <add>, %22, %cst_13 [1] : vector<88x8xf32> to vector<88xf32>
    %24 = vector.shape_cast %23 : vector<88xf32> to vector<88x1xf32>
    %cst_14 = arith.constant 8.000000e+00 : f32
    %25 = vector.broadcast %cst_14 : f32 to vector<88x1xf32>
    %26 = arith.divf %24, %25 : vector<88x1xf32>
    %27 = vector.broadcast %17 : vector<88x1xf32> to vector<88x8xf32>
    %28 = arith.subf %13, %27 : vector<88x8xf32>
    %cst_15 = arith.constant 9.99999974E-6 : f32
    %29 = vector.broadcast %cst_15 : f32 to vector<88x1xf32>
    %30 = arith.addf %26, %29 : vector<88x1xf32>
    %31 = math.rsqrt %30 : vector<88x1xf32>
    %32 = vector.broadcast %31 : vector<88x1xf32> to vector<88x8xf32>
    %33 = arith.mulf %28, %32 : vector<88x8xf32>
    %c0_16 = arith.constant 0 : index
    %c0_17 = arith.constant 0 : index
    %34 = vector.load %arg6[%c0_16, %c0_17] : memref<1x8xf32, #tpu.memory_space<vmem>>, vector<1x8xf32>
    %35 = vector.broadcast %34 : vector<1x8xf32> to vector<88x8xf32>
    %36 = arith.mulf %33, %35 : vector<88x8xf32>
    %c0_18 = arith.constant 0 : index
    %c0_19 = arith.constant 0 : index
    %37 = vector.load %arg7[%c0_18, %c0_19] : memref<1x8xf32, #tpu.memory_space<vmem>>, vector<1x8xf32>
    %38 = vector.broadcast %37 : vector<1x8xf32> to vector<88x8xf32>
    %39 = arith.addf %36, %38 : vector<88x8xf32>
    %c0_20 = arith.constant 0 : index
    %c0_21 = arith.constant 0 : index
    %40 = vector.load %arg8[%c0_20, %c0_21] : memref<88x8xf32, #tpu.memory_space<vmem>>, vector<88x8xf32>
    tpu.vector_store %arg8[%c0_20, %c0_21], %39 {strides = array<i32>} : memref<88x8xf32, #tpu.memory_space<vmem>>, vector<88x8xf32>,
    return
  }
  func.func @transform_0(%arg0: i32) -> (i32, i32) {
    %c0_i32 = arith.constant 0 : i32
    %c0_i32_0 = arith.constant 0 : i32
    return %arg0, %c0_i32 : i32, i32
  }
  func.func @transform_1(%arg0: i32) -> (i32, i32) {
    %c0_i32 = arith.constant 0 : i32
    %c0_i32_0 = arith.constant 0 : i32
    %c0_i32_1 = arith.constant 0 : i32
    return %c0_i32, %c0_i32_0 : i32, i32
  }
  func.func @transform_2(%arg0: i32) -> (i32, i32) {
    %c0_i32 = arith.constant 0 : i32
    %c0_i32_0 = arith.constant 0 : i32
    %c0_i32_1 = arith.constant 0 : i32
    return %c0_i32, %c0_i32_0 : i32, i32
  }
  func.func @transform_3(%arg0: i32) -> (i32, i32) {
    %c0_i32 = arith.constant 0 : i32
    %c0_i32_0 = arith.constant 0 : i32
    %c0_i32_1 = arith.constant 0 : i32
    return %c0_i32, %c0_i32_0 : i32, i32
  }
  func.func @transform_4(%arg0: i32) -> (i32, i32) {
    %c0_i32 = arith.constant 0 : i32
    %c0_i32_0 = arith.constant 0 : i32
    %c0_i32_1 = arith.constant 0 : i32
    return %c0_i32, %c0_i32_0 : i32, i32
  }
  func.func @transform_5(%arg0: i32) -> (i32, i32) {
    %c0_i32 = arith.constant 0 : i32
    %c0_i32_0 = arith.constant 0 : i32
    %c0_i32_1 = arith.constant 0 : i32
    return %c0_i32, %c0_i32_0 : i32, i32
  }
  func.func @transform_6(%arg0: i32) -> (i32, i32) {
    %c0_i32 = arith.constant 0 : i32
    %c0_i32_0 = arith.constant 0 : i32
    %c0_i32_1 = arith.constant 0 : i32
    return %c0_i32, %c0_i32_0 : i32, i32
  }
  func.func @transform_7(%arg0: i32) -> (i32, i32) {
    %c0_i32 = arith.constant 0 : i32
    %c0_i32_0 = arith.constant 0 : i32
    return %arg0, %c0_i32 : i32, i32
  }
}

module attributes {stable_mosaic.version = 11 : i64} {
  func.func @_lstm_layer_kernel(%arg0: memref<41x2x8xf32, #tpu.memory_space<vmem>>, %arg1: memref<8x128xf32, #tpu.memory_space<vmem>>, %arg2: memref<1x128xf32, #tpu.memory_space<vmem>>, %arg3: memref<32x128xf32, #tpu.memory_space<vmem>>, %arg4: memref<8x128xf32, #tpu.memory_space<vmem>>, %arg5: memref<1x128xf32, #tpu.memory_space<vmem>>, %arg6: memref<32x128xf32, #tpu.memory_space<vmem>>, %arg7: memref<41x2x32xf32, #tpu.memory_space<vmem>>, %arg8: memref<41x2x32xf32, #tpu.memory_space<vmem>>, %arg9: memref<2x32xf32, #tpu.memory_space<vmem>>, %arg10: memref<2x32xf32, #tpu.memory_space<vmem>>, %arg11: memref<2x32xf32, #tpu.memory_space<vmem>>, %arg12: memref<2x32xf32, #tpu.memory_space<vmem>>) attributes {dimension_semantics = [], scalar_prefetch = 0 : i64, scratch_operands = 4 : i64, tpu.core_type = #tpu.core_type<tc>} {
    %cst = arith.constant 0.000000e+00 : f32
    %0 = vector.broadcast %cst : f32 to vector<2x32xf32>
    %c0 = arith.constant 0 : index
    %c0_0 = arith.constant 0 : index
    %1 = vector.load %arg9[%c0, %c0_0] : memref<2x32xf32, #tpu.memory_space<vmem>>, vector<2x32xf32>
    tpu.vector_store %arg9[%c0, %c0_0], %0 {strides = array<i32>} : memref<2x32xf32, #tpu.memory_space<vmem>>, vector<2x32xf32>,
    %cst_1 = arith.constant 0.000000e+00 : f32
    %2 = vector.broadcast %cst_1 : f32 to vector<2x32xf32>
    %c0_2 = arith.constant 0 : index
    %c0_3 = arith.constant 0 : index
    %3 = vector.load %arg10[%c0_2, %c0_3] : memref<2x32xf32, #tpu.memory_space<vmem>>, vector<2x32xf32>
    tpu.vector_store %arg10[%c0_2, %c0_3], %2 {strides = array<i32>} : memref<2x32xf32, #tpu.memory_space<vmem>>, vector<2x32xf32>,
    %cst_4 = arith.constant 0.000000e+00 : f32
    %4 = vector.broadcast %cst_4 : f32 to vector<2x32xf32>
    %c0_5 = arith.constant 0 : index
    %c0_6 = arith.constant 0 : index
    %5 = vector.load %arg11[%c0_5, %c0_6] : memref<2x32xf32, #tpu.memory_space<vmem>>, vector<2x32xf32>
    tpu.vector_store %arg11[%c0_5, %c0_6], %4 {strides = array<i32>} : memref<2x32xf32, #tpu.memory_space<vmem>>, vector<2x32xf32>,
    %cst_7 = arith.constant 0.000000e+00 : f32
    %6 = vector.broadcast %cst_7 : f32 to vector<2x32xf32>
    %c0_8 = arith.constant 0 : index
    %c0_9 = arith.constant 0 : index
    %7 = vector.load %arg12[%c0_8, %c0_9] : memref<2x32xf32, #tpu.memory_space<vmem>>, vector<2x32xf32>
    tpu.vector_store %arg12[%c0_8, %c0_9], %6 {strides = array<i32>} : memref<2x32xf32, #tpu.memory_space<vmem>>, vector<2x32xf32>,
    %c0_i32 = arith.constant 0 : i32
    %c41_i32 = arith.constant 41 : i32
    %8 = arith.addi %c0_i32, %c41_i32 : i32
    %c1_i32 = arith.constant 1 : i32
    scf.for %arg13 = %c0_i32 to %8 step %c1_i32  : i32 {
      %9 = arith.index_cast %arg13 : i32 to index
      %c0_11 = arith.constant 0 : index
      %c0_12 = arith.constant 0 : index
      %10 = vector.load %arg0[%9, %c0_11, %c0_12] : memref<41x2x8xf32, #tpu.memory_space<vmem>>, vector<1x2x8xf32>
      %11 = vector.shape_cast %10 : vector<1x2x8xf32> to vector<2x8xf32>
      %c40_i32 = arith.constant 40 : i32
      %12 = arith.subi %c40_i32, %arg13 : i32
      %13 = arith.index_cast %12 : i32 to index
      %c0_13 = arith.constant 0 : index
      %c0_14 = arith.constant 0 : index
      %14 = vector.load %arg0[%13, %c0_13, %c0_14] : memref<41x2x8xf32, #tpu.memory_space<vmem>>, vector<1x2x8xf32>
      %15 = vector.shape_cast %14 : vector<1x2x8xf32> to vector<2x8xf32>
      %c0_15 = arith.constant 0 : index
      %c0_16 = arith.constant 0 : index
      %16 = vector.load %arg1[%c0_15, %c0_16] : memref<8x128xf32, #tpu.memory_space<vmem>>, vector<8x128xf32>
      %cst_17 = arith.constant dense<0.000000e+00> : vector<2x128xf32>
      %17 = tpu.matmul %11, %16, %cst_17 {dimension_numbers = #tpu.dot_dimension_numbers<[1], [0], [0], [1], [0, 0, 1, 1], [], []>} : vector<2x8xf32>, vector<8x128xf32>, vector<2x128xf32> -> vector<2x128xf32>
      %c0_18 = arith.constant 0 : index
      %c0_19 = arith.constant 0 : index
      %18 = vector.load %arg2[%c0_18, %c0_19] : memref<1x128xf32, #tpu.memory_space<vmem>>, vector<1x128xf32>
      %19 = vector.broadcast %18 : vector<1x128xf32> to vector<2x128xf32>
      %20 = arith.addf %17, %19 : vector<2x128xf32>
      %c0_20 = arith.constant 0 : index
      %c0_21 = arith.constant 0 : index
      %21 = vector.load %arg9[%c0_20, %c0_21] : memref<2x32xf32, #tpu.memory_space<vmem>>, vector<2x32xf32>
      %c0_22 = arith.constant 0 : index
      %c0_23 = arith.constant 0 : index
      %22 = vector.load %arg3[%c0_22, %c0_23] : memref<32x128xf32, #tpu.memory_space<vmem>>, vector<32x128xf32>
      %cst_24 = arith.constant dense<0.000000e+00> : vector<2x128xf32>
      %23 = tpu.matmul %21, %22, %cst_24 {dimension_numbers = #tpu.dot_dimension_numbers<[1], [0], [0], [1], [0, 0, 1, 1], [], []>} : vector<2x32xf32>, vector<32x128xf32>, vector<2x128xf32> -> vector<2x128xf32>
      %24 = arith.addf %20, %23 : vector<2x128xf32>
      %c0_25 = arith.constant 0 : index
      %c0_26 = arith.constant 0 : index
      %25 = vector.load %arg4[%c0_25, %c0_26] : memref<8x128xf32, #tpu.memory_space<vmem>>, vector<8x128xf32>
      %cst_27 = arith.constant dense<0.000000e+00> : vector<2x128xf32>
      %26 = tpu.matmul %15, %25, %cst_27 {dimension_numbers = #tpu.dot_dimension_numbers<[1], [0], [0], [1], [0, 0, 1, 1], [], []>} : vector<2x8xf32>, vector<8x128xf32>, vector<2x128xf32> -> vector<2x128xf32>
      %c0_28 = arith.constant 0 : index
      %c0_29 = arith.constant 0 : index
      %27 = vector.load %arg5[%c0_28, %c0_29] : memref<1x128xf32, #tpu.memory_space<vmem>>, vector<1x128xf32>
      %28 = vector.broadcast %27 : vector<1x128xf32> to vector<2x128xf32>
      %29 = arith.addf %26, %28 : vector<2x128xf32>
      %c0_30 = arith.constant 0 : index
      %c0_31 = arith.constant 0 : index
      %30 = vector.load %arg11[%c0_30, %c0_31] : memref<2x32xf32, #tpu.memory_space<vmem>>, vector<2x32xf32>
      %c0_32 = arith.constant 0 : index
      %c0_33 = arith.constant 0 : index
      %31 = vector.load %arg6[%c0_32, %c0_33] : memref<32x128xf32, #tpu.memory_space<vmem>>, vector<32x128xf32>
      %cst_34 = arith.constant dense<0.000000e+00> : vector<2x128xf32>
      %32 = tpu.matmul %30, %31, %cst_34 {dimension_numbers = #tpu.dot_dimension_numbers<[1], [0], [0], [1], [0, 0, 1, 1], [], []>} : vector<2x32xf32>, vector<32x128xf32>, vector<2x128xf32> -> vector<2x128xf32>
      %33 = arith.addf %29, %32 : vector<2x128xf32>
      %34 = vector.extract_strided_slice %24 {offsets = [0, 0], sizes = [2, 32], strides = [1, 1]} : vector<2x128xf32> to vector<2x32xf32>
      %cst_35 = arith.constant 0.000000e+00 : f32
      %35 = vector.broadcast %cst_35 : f32 to vector<2x32xf32>
      %36 = arith.subf %35, %34 : vector<2x32xf32>
      %37 = math.exp %36 : vector<2x32xf32>
      %cst_36 = arith.constant 1.000000e+00 : f32
      %38 = vector.broadcast %cst_36 : f32 to vector<2x32xf32>
      %39 = arith.addf %38, %37 : vector<2x32xf32>
      %cst_37 = arith.constant 1.000000e+00 : f32
      %40 = vector.broadcast %cst_37 : f32 to vector<2x32xf32>
      %41 = arith.divf %40, %39 : vector<2x32xf32>
      %42 = vector.extract_strided_slice %24 {offsets = [0, 32], sizes = [2, 32], strides = [1, 1]} : vector<2x128xf32> to vector<2x32xf32>
      %cst_38 = arith.constant 0.000000e+00 : f32
      %43 = vector.broadcast %cst_38 : f32 to vector<2x32xf32>
      %44 = arith.subf %43, %42 : vector<2x32xf32>
      %45 = math.exp %44 : vector<2x32xf32>
      %cst_39 = arith.constant 1.000000e+00 : f32
      %46 = vector.broadcast %cst_39 : f32 to vector<2x32xf32>
      %47 = arith.addf %46, %45 : vector<2x32xf32>
      %cst_40 = arith.constant 1.000000e+00 : f32
      %48 = vector.broadcast %cst_40 : f32 to vector<2x32xf32>
      %49 = arith.divf %48, %47 : vector<2x32xf32>
      %50 = vector.extract_strided_slice %24 {offsets = [0, 64], sizes = [2, 32], strides = [1, 1]} : vector<2x128xf32> to vector<2x32xf32>
      %51 = math.tanh %50 : vector<2x32xf32>
      %52 = vector.extract_strided_slice %24 {offsets = [0, 96], sizes = [2, 32], strides = [1, 1]} : vector<2x128xf32> to vector<2x32xf32>
      %cst_41 = arith.constant 0.000000e+00 : f32
      %53 = vector.broadcast %cst_41 : f32 to vector<2x32xf32>
      %54 = arith.subf %53, %52 : vector<2x32xf32>
      %55 = math.exp %54 : vector<2x32xf32>
      %cst_42 = arith.constant 1.000000e+00 : f32
      %56 = vector.broadcast %cst_42 : f32 to vector<2x32xf32>
      %57 = arith.addf %56, %55 : vector<2x32xf32>
      %cst_43 = arith.constant 1.000000e+00 : f32
      %58 = vector.broadcast %cst_43 : f32 to vector<2x32xf32>
      %59 = arith.divf %58, %57 : vector<2x32xf32>
      %c0_44 = arith.constant 0 : index
      %c0_45 = arith.constant 0 : index
      %60 = vector.load %arg10[%c0_44, %c0_45] : memref<2x32xf32, #tpu.memory_space<vmem>>, vector<2x32xf32>
      %61 = arith.mulf %49, %60 : vector<2x32xf32>
      %62 = arith.mulf %41, %51 : vector<2x32xf32>
      %63 = arith.addf %61, %62 : vector<2x32xf32>
      %64 = math.tanh %63 : vector<2x32xf32>
      %65 = arith.mulf %59, %64 : vector<2x32xf32>
      %c0_46 = arith.constant 0 : index
      %c0_47 = arith.constant 0 : index
      %66 = vector.load %arg10[%c0_46, %c0_47] : memref<2x32xf32, #tpu.memory_space<vmem>>, vector<2x32xf32>
      tpu.vector_store %arg10[%c0_46, %c0_47], %63 {strides = array<i32>} : memref<2x32xf32, #tpu.memory_space<vmem>>, vector<2x32xf32>,
      %c0_48 = arith.constant 0 : index
      %c0_49 = arith.constant 0 : index
      %67 = vector.load %arg9[%c0_48, %c0_49] : memref<2x32xf32, #tpu.memory_space<vmem>>, vector<2x32xf32>
      tpu.vector_store %arg9[%c0_48, %c0_49], %65 {strides = array<i32>} : memref<2x32xf32, #tpu.memory_space<vmem>>, vector<2x32xf32>,
      %68 = arith.index_cast %arg13 : i32 to index
      %c0_50 = arith.constant 0 : index
      %c0_51 = arith.constant 0 : index
      %69 = vector.load %arg7[%68, %c0_50, %c0_51] : memref<41x2x32xf32, #tpu.memory_space<vmem>>, vector<1x2x32xf32>
      %70 = vector.shape_cast %69 : vector<1x2x32xf32> to vector<2x32xf32>
      %71 = vector.shape_cast %65 : vector<2x32xf32> to vector<1x2x32xf32>
      tpu.vector_store %arg7[%68, %c0_50, %c0_51], %71 {strides = array<i32>} : memref<41x2x32xf32, #tpu.memory_space<vmem>>, vector<1x2x32xf32>,
      %72 = vector.extract_strided_slice %33 {offsets = [0, 0], sizes = [2, 32], strides = [1, 1]} : vector<2x128xf32> to vector<2x32xf32>
      %cst_52 = arith.constant 0.000000e+00 : f32
      %73 = vector.broadcast %cst_52 : f32 to vector<2x32xf32>
      %74 = arith.subf %73, %72 : vector<2x32xf32>
      %75 = math.exp %74 : vector<2x32xf32>
      %cst_53 = arith.constant 1.000000e+00 : f32
      %76 = vector.broadcast %cst_53 : f32 to vector<2x32xf32>
      %77 = arith.addf %76, %75 : vector<2x32xf32>
      %cst_54 = arith.constant 1.000000e+00 : f32
      %78 = vector.broadcast %cst_54 : f32 to vector<2x32xf32>
      %79 = arith.divf %78, %77 : vector<2x32xf32>
      %80 = vector.extract_strided_slice %33 {offsets = [0, 32], sizes = [2, 32], strides = [1, 1]} : vector<2x128xf32> to vector<2x32xf32>
      %cst_55 = arith.constant 0.000000e+00 : f32
      %81 = vector.broadcast %cst_55 : f32 to vector<2x32xf32>
      %82 = arith.subf %81, %80 : vector<2x32xf32>
      %83 = math.exp %82 : vector<2x32xf32>
      %cst_56 = arith.constant 1.000000e+00 : f32
      %84 = vector.broadcast %cst_56 : f32 to vector<2x32xf32>
      %85 = arith.addf %84, %83 : vector<2x32xf32>
      %cst_57 = arith.constant 1.000000e+00 : f32
      %86 = vector.broadcast %cst_57 : f32 to vector<2x32xf32>
      %87 = arith.divf %86, %85 : vector<2x32xf32>
      %88 = vector.extract_strided_slice %33 {offsets = [0, 64], sizes = [2, 32], strides = [1, 1]} : vector<2x128xf32> to vector<2x32xf32>
      %89 = math.tanh %88 : vector<2x32xf32>
      %90 = vector.extract_strided_slice %33 {offsets = [0, 96], sizes = [2, 32], strides = [1, 1]} : vector<2x128xf32> to vector<2x32xf32>
      %cst_58 = arith.constant 0.000000e+00 : f32
      %91 = vector.broadcast %cst_58 : f32 to vector<2x32xf32>
      %92 = arith.subf %91, %90 : vector<2x32xf32>
      %93 = math.exp %92 : vector<2x32xf32>
      %cst_59 = arith.constant 1.000000e+00 : f32
      %94 = vector.broadcast %cst_59 : f32 to vector<2x32xf32>
      %95 = arith.addf %94, %93 : vector<2x32xf32>
      %cst_60 = arith.constant 1.000000e+00 : f32
      %96 = vector.broadcast %cst_60 : f32 to vector<2x32xf32>
      %97 = arith.divf %96, %95 : vector<2x32xf32>
      %c0_61 = arith.constant 0 : index
      %c0_62 = arith.constant 0 : index
      %98 = vector.load %arg12[%c0_61, %c0_62] : memref<2x32xf32, #tpu.memory_space<vmem>>, vector<2x32xf32>
      %99 = arith.mulf %87, %98 : vector<2x32xf32>
      %100 = arith.mulf %79, %89 : vector<2x32xf32>
      %101 = arith.addf %99, %100 : vector<2x32xf32>
      %102 = math.tanh %101 : vector<2x32xf32>
      %103 = arith.mulf %97, %102 : vector<2x32xf32>
      %c0_63 = arith.constant 0 : index
      %c0_64 = arith.constant 0 : index
      %104 = vector.load %arg12[%c0_63, %c0_64] : memref<2x32xf32, #tpu.memory_space<vmem>>, vector<2x32xf32>
      tpu.vector_store %arg12[%c0_63, %c0_64], %101 {strides = array<i32>} : memref<2x32xf32, #tpu.memory_space<vmem>>, vector<2x32xf32>,
      %c0_65 = arith.constant 0 : index
      %c0_66 = arith.constant 0 : index
      %105 = vector.load %arg11[%c0_65, %c0_66] : memref<2x32xf32, #tpu.memory_space<vmem>>, vector<2x32xf32>
      tpu.vector_store %arg11[%c0_65, %c0_66], %103 {strides = array<i32>} : memref<2x32xf32, #tpu.memory_space<vmem>>, vector<2x32xf32>,
      %c40_i32_67 = arith.constant 40 : i32
      %106 = arith.subi %c40_i32_67, %arg13 : i32
      %107 = arith.index_cast %106 : i32 to index
      %c0_68 = arith.constant 0 : index
      %c0_69 = arith.constant 0 : index
      %108 = vector.load %arg8[%107, %c0_68, %c0_69] : memref<41x2x32xf32, #tpu.memory_space<vmem>>, vector<1x2x32xf32>
      %109 = vector.shape_cast %108 : vector<1x2x32xf32> to vector<2x32xf32>
      %110 = vector.shape_cast %103 : vector<2x32xf32> to vector<1x2x32xf32>
      tpu.vector_store %arg8[%107, %c0_68, %c0_69], %110 {strides = array<i32>} : memref<41x2x32xf32, #tpu.memory_space<vmem>>, vector<1x2x32xf32>,
    }
    %c41_i32_10 = arith.constant 41 : i32
    return
  }
}

module attributes {stable_mosaic.version = 11 : i64} {
  func.func @_lstm_layer_kernel(%arg0: memref<41x2x64xf32, #tpu.memory_space<vmem>>, %arg1: memref<64x128xf32, #tpu.memory_space<vmem>>, %arg2: memref<1x128xf32, #tpu.memory_space<vmem>>, %arg3: memref<32x128xf32, #tpu.memory_space<vmem>>, %arg4: memref<64x128xf32, #tpu.memory_space<vmem>>, %arg5: memref<1x128xf32, #tpu.memory_space<vmem>>, %arg6: memref<32x128xf32, #tpu.memory_space<vmem>>, %arg7: memref<41x2x32xf32, #tpu.memory_space<vmem>>, %arg8: memref<41x2x32xf32, #tpu.memory_space<vmem>>, %arg9: memref<2x32xf32, #tpu.memory_space<vmem>>, %arg10: memref<2x32xf32, #tpu.memory_space<vmem>>, %arg11: memref<2x32xf32, #tpu.memory_space<vmem>>, %arg12: memref<2x32xf32, #tpu.memory_space<vmem>>) attributes {dimension_semantics = [], scalar_prefetch = 0 : i64, scratch_operands = 4 : i64, tpu.core_type = #tpu.core_type<tc>} {
    %cst = arith.constant 0.000000e+00 : f32
    %0 = vector.broadcast %cst : f32 to vector<2x32xf32>
    %c0 = arith.constant 0 : index
    %c0_0 = arith.constant 0 : index
    %1 = vector.load %arg9[%c0, %c0_0] : memref<2x32xf32, #tpu.memory_space<vmem>>, vector<2x32xf32>
    tpu.vector_store %arg9[%c0, %c0_0], %0 {strides = array<i32>} : memref<2x32xf32, #tpu.memory_space<vmem>>, vector<2x32xf32>,
    %cst_1 = arith.constant 0.000000e+00 : f32
    %2 = vector.broadcast %cst_1 : f32 to vector<2x32xf32>
    %c0_2 = arith.constant 0 : index
    %c0_3 = arith.constant 0 : index
    %3 = vector.load %arg10[%c0_2, %c0_3] : memref<2x32xf32, #tpu.memory_space<vmem>>, vector<2x32xf32>
    tpu.vector_store %arg10[%c0_2, %c0_3], %2 {strides = array<i32>} : memref<2x32xf32, #tpu.memory_space<vmem>>, vector<2x32xf32>,
    %cst_4 = arith.constant 0.000000e+00 : f32
    %4 = vector.broadcast %cst_4 : f32 to vector<2x32xf32>
    %c0_5 = arith.constant 0 : index
    %c0_6 = arith.constant 0 : index
    %5 = vector.load %arg11[%c0_5, %c0_6] : memref<2x32xf32, #tpu.memory_space<vmem>>, vector<2x32xf32>
    tpu.vector_store %arg11[%c0_5, %c0_6], %4 {strides = array<i32>} : memref<2x32xf32, #tpu.memory_space<vmem>>, vector<2x32xf32>,
    %cst_7 = arith.constant 0.000000e+00 : f32
    %6 = vector.broadcast %cst_7 : f32 to vector<2x32xf32>
    %c0_8 = arith.constant 0 : index
    %c0_9 = arith.constant 0 : index
    %7 = vector.load %arg12[%c0_8, %c0_9] : memref<2x32xf32, #tpu.memory_space<vmem>>, vector<2x32xf32>
    tpu.vector_store %arg12[%c0_8, %c0_9], %6 {strides = array<i32>} : memref<2x32xf32, #tpu.memory_space<vmem>>, vector<2x32xf32>,
    %c0_i32 = arith.constant 0 : i32
    %c41_i32 = arith.constant 41 : i32
    %8 = arith.addi %c0_i32, %c41_i32 : i32
    %c1_i32 = arith.constant 1 : i32
    scf.for %arg13 = %c0_i32 to %8 step %c1_i32  : i32 {
      %9 = arith.index_cast %arg13 : i32 to index
      %c0_11 = arith.constant 0 : index
      %c0_12 = arith.constant 0 : index
      %10 = vector.load %arg0[%9, %c0_11, %c0_12] : memref<41x2x64xf32, #tpu.memory_space<vmem>>, vector<1x2x64xf32>
      %11 = vector.shape_cast %10 : vector<1x2x64xf32> to vector<2x64xf32>
      %c40_i32 = arith.constant 40 : i32
      %12 = arith.subi %c40_i32, %arg13 : i32
      %13 = arith.index_cast %12 : i32 to index
      %c0_13 = arith.constant 0 : index
      %c0_14 = arith.constant 0 : index
      %14 = vector.load %arg0[%13, %c0_13, %c0_14] : memref<41x2x64xf32, #tpu.memory_space<vmem>>, vector<1x2x64xf32>
      %15 = vector.shape_cast %14 : vector<1x2x64xf32> to vector<2x64xf32>
      %c0_15 = arith.constant 0 : index
      %c0_16 = arith.constant 0 : index
      %16 = vector.load %arg1[%c0_15, %c0_16] : memref<64x128xf32, #tpu.memory_space<vmem>>, vector<64x128xf32>
      %cst_17 = arith.constant dense<0.000000e+00> : vector<2x128xf32>
      %17 = tpu.matmul %11, %16, %cst_17 {dimension_numbers = #tpu.dot_dimension_numbers<[1], [0], [0], [1], [0, 0, 1, 1], [], []>} : vector<2x64xf32>, vector<64x128xf32>, vector<2x128xf32> -> vector<2x128xf32>
      %c0_18 = arith.constant 0 : index
      %c0_19 = arith.constant 0 : index
      %18 = vector.load %arg2[%c0_18, %c0_19] : memref<1x128xf32, #tpu.memory_space<vmem>>, vector<1x128xf32>
      %19 = vector.broadcast %18 : vector<1x128xf32> to vector<2x128xf32>
      %20 = arith.addf %17, %19 : vector<2x128xf32>
      %c0_20 = arith.constant 0 : index
      %c0_21 = arith.constant 0 : index
      %21 = vector.load %arg9[%c0_20, %c0_21] : memref<2x32xf32, #tpu.memory_space<vmem>>, vector<2x32xf32>
      %c0_22 = arith.constant 0 : index
      %c0_23 = arith.constant 0 : index
      %22 = vector.load %arg3[%c0_22, %c0_23] : memref<32x128xf32, #tpu.memory_space<vmem>>, vector<32x128xf32>
      %cst_24 = arith.constant dense<0.000000e+00> : vector<2x128xf32>
      %23 = tpu.matmul %21, %22, %cst_24 {dimension_numbers = #tpu.dot_dimension_numbers<[1], [0], [0], [1], [0, 0, 1, 1], [], []>} : vector<2x32xf32>, vector<32x128xf32>, vector<2x128xf32> -> vector<2x128xf32>
      %24 = arith.addf %20, %23 : vector<2x128xf32>
      %c0_25 = arith.constant 0 : index
      %c0_26 = arith.constant 0 : index
      %25 = vector.load %arg4[%c0_25, %c0_26] : memref<64x128xf32, #tpu.memory_space<vmem>>, vector<64x128xf32>
      %cst_27 = arith.constant dense<0.000000e+00> : vector<2x128xf32>
      %26 = tpu.matmul %15, %25, %cst_27 {dimension_numbers = #tpu.dot_dimension_numbers<[1], [0], [0], [1], [0, 0, 1, 1], [], []>} : vector<2x64xf32>, vector<64x128xf32>, vector<2x128xf32> -> vector<2x128xf32>
      %c0_28 = arith.constant 0 : index
      %c0_29 = arith.constant 0 : index
      %27 = vector.load %arg5[%c0_28, %c0_29] : memref<1x128xf32, #tpu.memory_space<vmem>>, vector<1x128xf32>
      %28 = vector.broadcast %27 : vector<1x128xf32> to vector<2x128xf32>
      %29 = arith.addf %26, %28 : vector<2x128xf32>
      %c0_30 = arith.constant 0 : index
      %c0_31 = arith.constant 0 : index
      %30 = vector.load %arg11[%c0_30, %c0_31] : memref<2x32xf32, #tpu.memory_space<vmem>>, vector<2x32xf32>
      %c0_32 = arith.constant 0 : index
      %c0_33 = arith.constant 0 : index
      %31 = vector.load %arg6[%c0_32, %c0_33] : memref<32x128xf32, #tpu.memory_space<vmem>>, vector<32x128xf32>
      %cst_34 = arith.constant dense<0.000000e+00> : vector<2x128xf32>
      %32 = tpu.matmul %30, %31, %cst_34 {dimension_numbers = #tpu.dot_dimension_numbers<[1], [0], [0], [1], [0, 0, 1, 1], [], []>} : vector<2x32xf32>, vector<32x128xf32>, vector<2x128xf32> -> vector<2x128xf32>
      %33 = arith.addf %29, %32 : vector<2x128xf32>
      %34 = vector.extract_strided_slice %24 {offsets = [0, 0], sizes = [2, 32], strides = [1, 1]} : vector<2x128xf32> to vector<2x32xf32>
      %cst_35 = arith.constant 0.000000e+00 : f32
      %35 = vector.broadcast %cst_35 : f32 to vector<2x32xf32>
      %36 = arith.subf %35, %34 : vector<2x32xf32>
      %37 = math.exp %36 : vector<2x32xf32>
      %cst_36 = arith.constant 1.000000e+00 : f32
      %38 = vector.broadcast %cst_36 : f32 to vector<2x32xf32>
      %39 = arith.addf %38, %37 : vector<2x32xf32>
      %cst_37 = arith.constant 1.000000e+00 : f32
      %40 = vector.broadcast %cst_37 : f32 to vector<2x32xf32>
      %41 = arith.divf %40, %39 : vector<2x32xf32>
      %42 = vector.extract_strided_slice %24 {offsets = [0, 32], sizes = [2, 32], strides = [1, 1]} : vector<2x128xf32> to vector<2x32xf32>
      %cst_38 = arith.constant 0.000000e+00 : f32
      %43 = vector.broadcast %cst_38 : f32 to vector<2x32xf32>
      %44 = arith.subf %43, %42 : vector<2x32xf32>
      %45 = math.exp %44 : vector<2x32xf32>
      %cst_39 = arith.constant 1.000000e+00 : f32
      %46 = vector.broadcast %cst_39 : f32 to vector<2x32xf32>
      %47 = arith.addf %46, %45 : vector<2x32xf32>
      %cst_40 = arith.constant 1.000000e+00 : f32
      %48 = vector.broadcast %cst_40 : f32 to vector<2x32xf32>
      %49 = arith.divf %48, %47 : vector<2x32xf32>
      %50 = vector.extract_strided_slice %24 {offsets = [0, 64], sizes = [2, 32], strides = [1, 1]} : vector<2x128xf32> to vector<2x32xf32>
      %51 = math.tanh %50 : vector<2x32xf32>
      %52 = vector.extract_strided_slice %24 {offsets = [0, 96], sizes = [2, 32], strides = [1, 1]} : vector<2x128xf32> to vector<2x32xf32>
      %cst_41 = arith.constant 0.000000e+00 : f32
      %53 = vector.broadcast %cst_41 : f32 to vector<2x32xf32>
      %54 = arith.subf %53, %52 : vector<2x32xf32>
      %55 = math.exp %54 : vector<2x32xf32>
      %cst_42 = arith.constant 1.000000e+00 : f32
      %56 = vector.broadcast %cst_42 : f32 to vector<2x32xf32>
      %57 = arith.addf %56, %55 : vector<2x32xf32>
      %cst_43 = arith.constant 1.000000e+00 : f32
      %58 = vector.broadcast %cst_43 : f32 to vector<2x32xf32>
      %59 = arith.divf %58, %57 : vector<2x32xf32>
      %c0_44 = arith.constant 0 : index
      %c0_45 = arith.constant 0 : index
      %60 = vector.load %arg10[%c0_44, %c0_45] : memref<2x32xf32, #tpu.memory_space<vmem>>, vector<2x32xf32>
      %61 = arith.mulf %49, %60 : vector<2x32xf32>
      %62 = arith.mulf %41, %51 : vector<2x32xf32>
      %63 = arith.addf %61, %62 : vector<2x32xf32>
      %64 = math.tanh %63 : vector<2x32xf32>
      %65 = arith.mulf %59, %64 : vector<2x32xf32>
      %c0_46 = arith.constant 0 : index
      %c0_47 = arith.constant 0 : index
      %66 = vector.load %arg10[%c0_46, %c0_47] : memref<2x32xf32, #tpu.memory_space<vmem>>, vector<2x32xf32>
      tpu.vector_store %arg10[%c0_46, %c0_47], %63 {strides = array<i32>} : memref<2x32xf32, #tpu.memory_space<vmem>>, vector<2x32xf32>,
      %c0_48 = arith.constant 0 : index
      %c0_49 = arith.constant 0 : index
      %67 = vector.load %arg9[%c0_48, %c0_49] : memref<2x32xf32, #tpu.memory_space<vmem>>, vector<2x32xf32>
      tpu.vector_store %arg9[%c0_48, %c0_49], %65 {strides = array<i32>} : memref<2x32xf32, #tpu.memory_space<vmem>>, vector<2x32xf32>,
      %68 = arith.index_cast %arg13 : i32 to index
      %c0_50 = arith.constant 0 : index
      %c0_51 = arith.constant 0 : index
      %69 = vector.load %arg7[%68, %c0_50, %c0_51] : memref<41x2x32xf32, #tpu.memory_space<vmem>>, vector<1x2x32xf32>
      %70 = vector.shape_cast %69 : vector<1x2x32xf32> to vector<2x32xf32>
      %71 = vector.shape_cast %65 : vector<2x32xf32> to vector<1x2x32xf32>
      tpu.vector_store %arg7[%68, %c0_50, %c0_51], %71 {strides = array<i32>} : memref<41x2x32xf32, #tpu.memory_space<vmem>>, vector<1x2x32xf32>,
      %72 = vector.extract_strided_slice %33 {offsets = [0, 0], sizes = [2, 32], strides = [1, 1]} : vector<2x128xf32> to vector<2x32xf32>
      %cst_52 = arith.constant 0.000000e+00 : f32
      %73 = vector.broadcast %cst_52 : f32 to vector<2x32xf32>
      %74 = arith.subf %73, %72 : vector<2x32xf32>
      %75 = math.exp %74 : vector<2x32xf32>
      %cst_53 = arith.constant 1.000000e+00 : f32
      %76 = vector.broadcast %cst_53 : f32 to vector<2x32xf32>
      %77 = arith.addf %76, %75 : vector<2x32xf32>
      %cst_54 = arith.constant 1.000000e+00 : f32
      %78 = vector.broadcast %cst_54 : f32 to vector<2x32xf32>
      %79 = arith.divf %78, %77 : vector<2x32xf32>
      %80 = vector.extract_strided_slice %33 {offsets = [0, 32], sizes = [2, 32], strides = [1, 1]} : vector<2x128xf32> to vector<2x32xf32>
      %cst_55 = arith.constant 0.000000e+00 : f32
      %81 = vector.broadcast %cst_55 : f32 to vector<2x32xf32>
      %82 = arith.subf %81, %80 : vector<2x32xf32>
      %83 = math.exp %82 : vector<2x32xf32>
      %cst_56 = arith.constant 1.000000e+00 : f32
      %84 = vector.broadcast %cst_56 : f32 to vector<2x32xf32>
      %85 = arith.addf %84, %83 : vector<2x32xf32>
      %cst_57 = arith.constant 1.000000e+00 : f32
      %86 = vector.broadcast %cst_57 : f32 to vector<2x32xf32>
      %87 = arith.divf %86, %85 : vector<2x32xf32>
      %88 = vector.extract_strided_slice %33 {offsets = [0, 64], sizes = [2, 32], strides = [1, 1]} : vector<2x128xf32> to vector<2x32xf32>
      %89 = math.tanh %88 : vector<2x32xf32>
      %90 = vector.extract_strided_slice %33 {offsets = [0, 96], sizes = [2, 32], strides = [1, 1]} : vector<2x128xf32> to vector<2x32xf32>
      %cst_58 = arith.constant 0.000000e+00 : f32
      %91 = vector.broadcast %cst_58 : f32 to vector<2x32xf32>
      %92 = arith.subf %91, %90 : vector<2x32xf32>
      %93 = math.exp %92 : vector<2x32xf32>
      %cst_59 = arith.constant 1.000000e+00 : f32
      %94 = vector.broadcast %cst_59 : f32 to vector<2x32xf32>
      %95 = arith.addf %94, %93 : vector<2x32xf32>
      %cst_60 = arith.constant 1.000000e+00 : f32
      %96 = vector.broadcast %cst_60 : f32 to vector<2x32xf32>
      %97 = arith.divf %96, %95 : vector<2x32xf32>
      %c0_61 = arith.constant 0 : index
      %c0_62 = arith.constant 0 : index
      %98 = vector.load %arg12[%c0_61, %c0_62] : memref<2x32xf32, #tpu.memory_space<vmem>>, vector<2x32xf32>
      %99 = arith.mulf %87, %98 : vector<2x32xf32>
      %100 = arith.mulf %79, %89 : vector<2x32xf32>
      %101 = arith.addf %99, %100 : vector<2x32xf32>
      %102 = math.tanh %101 : vector<2x32xf32>
      %103 = arith.mulf %97, %102 : vector<2x32xf32>
      %c0_63 = arith.constant 0 : index
      %c0_64 = arith.constant 0 : index
      %104 = vector.load %arg12[%c0_63, %c0_64] : memref<2x32xf32, #tpu.memory_space<vmem>>, vector<2x32xf32>
      tpu.vector_store %arg12[%c0_63, %c0_64], %101 {strides = array<i32>} : memref<2x32xf32, #tpu.memory_space<vmem>>, vector<2x32xf32>,
      %c0_65 = arith.constant 0 : index
      %c0_66 = arith.constant 0 : index
      %105 = vector.load %arg11[%c0_65, %c0_66] : memref<2x32xf32, #tpu.memory_space<vmem>>, vector<2x32xf32>
      tpu.vector_store %arg11[%c0_65, %c0_66], %103 {strides = array<i32>} : memref<2x32xf32, #tpu.memory_space<vmem>>, vector<2x32xf32>,
      %c40_i32_67 = arith.constant 40 : i32
      %106 = arith.subi %c40_i32_67, %arg13 : i32
      %107 = arith.index_cast %106 : i32 to index
      %c0_68 = arith.constant 0 : index
      %c0_69 = arith.constant 0 : index
      %108 = vector.load %arg8[%107, %c0_68, %c0_69] : memref<41x2x32xf32, #tpu.memory_space<vmem>>, vector<1x2x32xf32>
      %109 = vector.shape_cast %108 : vector<1x2x32xf32> to vector<2x32xf32>
      %110 = vector.shape_cast %103 : vector<2x32xf32> to vector<1x2x32xf32>
      tpu.vector_store %arg8[%107, %c0_68, %c0_69], %110 {strides = array<i32>} : memref<41x2x32xf32, #tpu.memory_space<vmem>>, vector<1x2x32xf32>,
    }
    %c41_i32_10 = arith.constant 41 : i32
    return
  }
}

module attributes {stable_mosaic.version = 11 : i64} {
  func.func @_conv_branch_kernel(%arg0: i32, %arg1: memref<1x41x8xf32, #tpu.memory_space<vmem>>, %arg2: memref<16x32xf32, #tpu.memory_space<vmem>>, %arg3: memref<1x32xf32, #tpu.memory_space<vmem>>, %arg4: memref<512x64xf32, #tpu.memory_space<vmem>>, %arg5: memref<1x64xf32, #tpu.memory_space<vmem>>, %arg6: memref<1x17x64xf32, #tpu.memory_space<vmem>>) attributes {dimension_semantics = [#tpu.dimension_semantics<parallel>], iteration_bounds = array<i64: 2>, scalar_prefetch = 0 : i64, scratch_operands = 0 : i64, tpu.core_type = #tpu.core_type<tc>, window_params = [{transform_indices = @transform_0, window_bounds = array<i64: 1, 41, 8>}, {pipeline_mode = #tpu.pipeline_mode<synchronous>, transform_indices = @transform_1, window_bounds = array<i64: 16, 32>}, {pipeline_mode = #tpu.pipeline_mode<synchronous>, transform_indices = @transform_2, window_bounds = array<i64: 1, 32>}, {pipeline_mode = #tpu.pipeline_mode<synchronous>, transform_indices = @transform_3, window_bounds = array<i64: 512, 64>}, {pipeline_mode = #tpu.pipeline_mode<synchronous>, transform_indices = @transform_4, window_bounds = array<i64: 1, 64>}, {transform_indices = @transform_5, window_bounds = array<i64: 1, 17, 64>}]} {
    %c0 = arith.constant 0 : index
    %c0_0 = arith.constant 0 : index
    %c0_1 = arith.constant 0 : index
    %0 = vector.load %arg1[%c0, %c0_0, %c0_1] : memref<1x41x8xf32, #tpu.memory_space<vmem>>, vector<1x41x8xf32>
    %1 = vector.shape_cast %0 : vector<1x41x8xf32> to vector<41x8xf32>
    %c0_2 = arith.constant 0 : index
    %c0_3 = arith.constant 0 : index
    %2 = vector.load %arg2[%c0_2, %c0_3] : memref<16x32xf32, #tpu.memory_space<vmem>>, vector<16x32xf32>
    %c0_4 = arith.constant 0 : index
    %c0_5 = arith.constant 0 : index
    %3 = vector.load %arg3[%c0_4, %c0_5] : memref<1x32xf32, #tpu.memory_space<vmem>>, vector<1x32xf32>
    %4 = vector.extract_strided_slice %1 {offsets = [0, 0], sizes = [38, 4], strides = [1, 1]} : vector<41x8xf32> to vector<38x4xf32>
    %5 = vector.extract_strided_slice %1 {offsets = [1, 0], sizes = [38, 4], strides = [1, 1]} : vector<41x8xf32> to vector<38x4xf32>
    %6 = vector.extract_strided_slice %1 {offsets = [2, 0], sizes = [38, 4], strides = [1, 1]} : vector<41x8xf32> to vector<38x4xf32>
    %7 = vector.extract_strided_slice %1 {offsets = [3, 0], sizes = [38, 4], strides = [1, 1]} : vector<41x8xf32> to vector<38x4xf32>
    %8 = tpu.concatenate %4, %5, %6, %7 in 1 : vector<38x4xf32>, vector<38x4xf32>, vector<38x4xf32>, vector<38x4xf32> -> vector<38x16xf32>
    %cst = arith.constant dense<0.000000e+00> : vector<38x32xf32>
    %9 = tpu.matmul %8, %2, %cst {dimension_numbers = #tpu.dot_dimension_numbers<[1], [0], [0], [1], [0, 0, 1, 1], [], []>} : vector<38x16xf32>, vector<16x32xf32>, vector<38x32xf32> -> vector<38x32xf32>
    %10 = vector.broadcast %3 : vector<1x32xf32> to vector<38x32xf32>
    %11 = arith.addf %9, %10 : vector<38x32xf32>
    %12 = vector.extract_strided_slice %1 {offsets = [0, 1], sizes = [38, 4], strides = [1, 1]} : vector<41x8xf32> to vector<38x4xf32>
    %13 = vector.extract_strided_slice %1 {offsets = [1, 1], sizes = [38, 4], strides = [1, 1]} : vector<41x8xf32> to vector<38x4xf32>
    %14 = vector.extract_strided_slice %1 {offsets = [2, 1], sizes = [38, 4], strides = [1, 1]} : vector<41x8xf32> to vector<38x4xf32>
    %15 = vector.extract_strided_slice %1 {offsets = [3, 1], sizes = [38, 4], strides = [1, 1]} : vector<41x8xf32> to vector<38x4xf32>
    %16 = tpu.concatenate %12, %13, %14, %15 in 1 : vector<38x4xf32>, vector<38x4xf32>, vector<38x4xf32>, vector<38x4xf32> -> vector<38x16xf32>
    %cst_6 = arith.constant dense<0.000000e+00> : vector<38x32xf32>
    %17 = tpu.matmul %16, %2, %cst_6 {dimension_numbers = #tpu.dot_dimension_numbers<[1], [0], [0], [1], [0, 0, 1, 1], [], []>} : vector<38x16xf32>, vector<16x32xf32>, vector<38x32xf32> -> vector<38x32xf32>
    %18 = vector.broadcast %3 : vector<1x32xf32> to vector<38x32xf32>
    %19 = arith.addf %17, %18 : vector<38x32xf32>
    %20 = vector.extract_strided_slice %1 {offsets = [0, 2], sizes = [38, 4], strides = [1, 1]} : vector<41x8xf32> to vector<38x4xf32>
    %21 = vector.extract_strided_slice %1 {offsets = [1, 2], sizes = [38, 4], strides = [1, 1]} : vector<41x8xf32> to vector<38x4xf32>
    %22 = vector.extract_strided_slice %1 {offsets = [2, 2], sizes = [38, 4], strides = [1, 1]} : vector<41x8xf32> to vector<38x4xf32>
    %23 = vector.extract_strided_slice %1 {offsets = [3, 2], sizes = [38, 4], strides = [1, 1]} : vector<41x8xf32> to vector<38x4xf32>
    %24 = tpu.concatenate %20, %21, %22, %23 in 1 : vector<38x4xf32>, vector<38x4xf32>, vector<38x4xf32>, vector<38x4xf32> -> vector<38x16xf32>
    %cst_7 = arith.constant dense<0.000000e+00> : vector<38x32xf32>
    %25 = tpu.matmul %24, %2, %cst_7 {dimension_numbers = #tpu.dot_dimension_numbers<[1], [0], [0], [1], [0, 0, 1, 1], [], []>} : vector<38x16xf32>, vector<16x32xf32>, vector<38x32xf32> -> vector<38x32xf32>
    %26 = vector.broadcast %3 : vector<1x32xf32> to vector<38x32xf32>
    %27 = arith.addf %25, %26 : vector<38x32xf32>
    %28 = vector.extract_strided_slice %1 {offsets = [0, 3], sizes = [38, 4], strides = [1, 1]} : vector<41x8xf32> to vector<38x4xf32>
    %29 = vector.extract_strided_slice %1 {offsets = [1, 3], sizes = [38, 4], strides = [1, 1]} : vector<41x8xf32> to vector<38x4xf32>
    %30 = vector.extract_strided_slice %1 {offsets = [2, 3], sizes = [38, 4], strides = [1, 1]} : vector<41x8xf32> to vector<38x4xf32>
    %31 = vector.extract_strided_slice %1 {offsets = [3, 3], sizes = [38, 4], strides = [1, 1]} : vector<41x8xf32> to vector<38x4xf32>
    %32 = tpu.concatenate %28, %29, %30, %31 in 1 : vector<38x4xf32>, vector<38x4xf32>, vector<38x4xf32>, vector<38x4xf32> -> vector<38x16xf32>
    %cst_8 = arith.constant dense<0.000000e+00> : vector<38x32xf32>
    %33 = tpu.matmul %32, %2, %cst_8 {dimension_numbers = #tpu.dot_dimension_numbers<[1], [0], [0], [1], [0, 0, 1, 1], [], []>} : vector<38x16xf32>, vector<16x32xf32>, vector<38x32xf32> -> vector<38x32xf32>
    %34 = vector.broadcast %3 : vector<1x32xf32> to vector<38x32xf32>
    %35 = arith.addf %33, %34 : vector<38x32xf32>
    %36 = vector.extract_strided_slice %1 {offsets = [0, 4], sizes = [38, 4], strides = [1, 1]} : vector<41x8xf32> to vector<38x4xf32>
    %37 = vector.extract_strided_slice %1 {offsets = [1, 4], sizes = [38, 4], strides = [1, 1]} : vector<41x8xf32> to vector<38x4xf32>
    %38 = vector.extract_strided_slice %1 {offsets = [2, 4], sizes = [38, 4], strides = [1, 1]} : vector<41x8xf32> to vector<38x4xf32>
    %39 = vector.extract_strided_slice %1 {offsets = [3, 4], sizes = [38, 4], strides = [1, 1]} : vector<41x8xf32> to vector<38x4xf32>
    %40 = tpu.concatenate %36, %37, %38, %39 in 1 : vector<38x4xf32>, vector<38x4xf32>, vector<38x4xf32>, vector<38x4xf32> -> vector<38x16xf32>
    %cst_9 = arith.constant dense<0.000000e+00> : vector<38x32xf32>
    %41 = tpu.matmul %40, %2, %cst_9 {dimension_numbers = #tpu.dot_dimension_numbers<[1], [0], [0], [1], [0, 0, 1, 1], [], []>} : vector<38x16xf32>, vector<16x32xf32>, vector<38x32xf32> -> vector<38x32xf32>
    %42 = vector.broadcast %3 : vector<1x32xf32> to vector<38x32xf32>
    %43 = arith.addf %41, %42 : vector<38x32xf32>
    %44 = tpu.concatenate %11, %19, %27, %35, %43 in 1 : vector<38x32xf32>, vector<38x32xf32>, vector<38x32xf32>, vector<38x32xf32>, vector<38x32xf32> -> vector<38x160xf32>
    %45 = vector.extract_strided_slice %44 {offsets = [0, 0], sizes = [38, 128], strides = [1, 1]} : vector<38x160xf32> to vector<38x128xf32>
    %46 = vector.extract_strided_slice %45 {offsets = [0, 0], sizes = [35, 128], strides = [1, 1]} : vector<38x128xf32> to vector<35x128xf32>
    %47 = vector.extract_strided_slice %45 {offsets = [1, 0], sizes = [35, 128], strides = [1, 1]} : vector<38x128xf32> to vector<35x128xf32>
    %48 = vector.extract_strided_slice %45 {offsets = [2, 0], sizes = [35, 128], strides = [1, 1]} : vector<38x128xf32> to vector<35x128xf32>
    %49 = vector.extract_strided_slice %45 {offsets = [3, 0], sizes = [35, 128], strides = [1, 1]} : vector<38x128xf32> to vector<35x128xf32>
    %50 = tpu.concatenate %46, %47, %48, %49 in 1 : vector<35x128xf32>, vector<35x128xf32>, vector<35x128xf32>, vector<35x128xf32> -> vector<35x512xf32>
    %51 = vector.extract_strided_slice %44 {offsets = [0, 32], sizes = [38, 128], strides = [1, 1]} : vector<38x160xf32> to vector<38x128xf32>
    %52 = vector.extract_strided_slice %51 {offsets = [0, 0], sizes = [35, 128], strides = [1, 1]} : vector<38x128xf32> to vector<35x128xf32>
    %53 = vector.extract_strided_slice %51 {offsets = [1, 0], sizes = [35, 128], strides = [1, 1]} : vector<38x128xf32> to vector<35x128xf32>
    %54 = vector.extract_strided_slice %51 {offsets = [2, 0], sizes = [35, 128], strides = [1, 1]} : vector<38x128xf32> to vector<35x128xf32>
    %55 = vector.extract_strided_slice %51 {offsets = [3, 0], sizes = [35, 128], strides = [1, 1]} : vector<38x128xf32> to vector<35x128xf32>
    %56 = tpu.concatenate %52, %53, %54, %55 in 1 : vector<35x128xf32>, vector<35x128xf32>, vector<35x128xf32>, vector<35x128xf32> -> vector<35x512xf32>
    %57 = tpu.concatenate %50, %56 in 0 : vector<35x512xf32>, vector<35x512xf32> -> vector<70x512xf32>
    %c0_10 = arith.constant 0 : index
    %c0_11 = arith.constant 0 : index
    %58 = vector.load %arg4[%c0_10, %c0_11] : memref<512x64xf32, #tpu.memory_space<vmem>>, vector<512x64xf32>
    %cst_12 = arith.constant dense<0.000000e+00> : vector<70x64xf32>
    %59 = tpu.matmul %57, %58, %cst_12 {dimension_numbers = #tpu.dot_dimension_numbers<[1], [0], [0], [1], [0, 0, 1, 1], [], []>} : vector<70x512xf32>, vector<512x64xf32>, vector<70x64xf32> -> vector<70x64xf32>
    %c0_13 = arith.constant 0 : index
    %c0_14 = arith.constant 0 : index
    %60 = vector.load %arg5[%c0_13, %c0_14] : memref<1x64xf32, #tpu.memory_space<vmem>>, vector<1x64xf32>
    %61 = vector.broadcast %60 : vector<1x64xf32> to vector<70x64xf32>
    %62 = arith.addf %59, %61 : vector<70x64xf32>
    %63 = vector.extract_strided_slice %62 {offsets = [0, 0], sizes = [35, 64], strides = [1, 1]} : vector<70x64xf32> to vector<35x64xf32>
    %64 = vector.extract_strided_slice %62 {offsets = [35, 0], sizes = [35, 64], strides = [1, 1]} : vector<70x64xf32> to vector<35x64xf32>
    %65 = arith.maximumf %63, %64 : vector<35x64xf32>
    %66 = vector.extract_strided_slice %65 {offsets = [0, 0], sizes = [34, 64], strides = [1, 1]} : vector<35x64xf32> to vector<34x64xf32>
    %67 = vector.extract_strided_slice %65 {offsets = [1, 0], sizes = [34, 64], strides = [1, 1]} : vector<35x64xf32> to vector<34x64xf32>
    %68 = arith.maximumf %66, %67 : vector<34x64xf32>
    %69 = tpu.iota {dimensions = array<i32: 0>} : vector<17x34xi32>
    %70 = tpu.iota {dimensions = array<i32: 1>} : vector<17x34xi32>
    %c2_i32 = arith.constant 2 : i32
    %71 = vector.broadcast %c2_i32 : i32 to vector<17x34xi32>
    %72 = arith.muli %71, %69 : vector<17x34xi32>
    %73 = arith.cmpi eq, %70, %72 : vector<17x34xi32>
    %74 = arith.extui %73 : vector<17x34xi1> to vector<17x34xi32>
    %75 = arith.sitofp %74 : vector<17x34xi32> to vector<17x34xf32>
    %cst_15 = arith.constant dense<0.000000e+00> : vector<17x64xf32>
    %76 = tpu.matmul %75, %68, %cst_15 {dimension_numbers = #tpu.dot_dimension_numbers<[1], [0], [0], [1], [0, 0, 1, 1], [], []>} : vector<17x34xf32>, vector<34x64xf32>, vector<17x64xf32> -> vector<17x64xf32>
    %c0_16 = arith.constant 0 : index
    %c0_17 = arith.constant 0 : index
    %c0_18 = arith.constant 0 : index
    %77 = vector.load %arg6[%c0_16, %c0_17, %c0_18] : memref<1x17x64xf32, #tpu.memory_space<vmem>>, vector<1x17x64xf32>
    %78 = vector.shape_cast %77 : vector<1x17x64xf32> to vector<17x64xf32>
    %79 = vector.shape_cast %76 : vector<17x64xf32> to vector<1x17x64xf32>
    tpu.vector_store %arg6[%c0_16, %c0_17, %c0_18], %79 {strides = array<i32>} : memref<1x17x64xf32, #tpu.memory_space<vmem>>, vector<1x17x64xf32>,
    return
  }
  func.func @transform_0(%arg0: i32) -> (i32, i32, i32) {
    %c0_i32 = arith.constant 0 : i32
    %c0_i32_0 = arith.constant 0 : i32
    %c0_i32_1 = arith.constant 0 : i32
    return %arg0, %c0_i32, %c0_i32_0 : i32, i32, i32
  }
  func.func @transform_1(%arg0: i32) -> (i32, i32) {
    %c0_i32 = arith.constant 0 : i32
    %c0_i32_0 = arith.constant 0 : i32
    %c0_i32_1 = arith.constant 0 : i32
    return %c0_i32, %c0_i32_0 : i32, i32
  }
  func.func @transform_2(%arg0: i32) -> (i32, i32) {
    %c0_i32 = arith.constant 0 : i32
    %c0_i32_0 = arith.constant 0 : i32
    %c0_i32_1 = arith.constant 0 : i32
    return %c0_i32, %c0_i32_0 : i32, i32
  }
  func.func @transform_3(%arg0: i32) -> (i32, i32) {
    %c0_i32 = arith.constant 0 : i32
    %c0_i32_0 = arith.constant 0 : i32
    %c0_i32_1 = arith.constant 0 : i32
    return %c0_i32, %c0_i32_0 : i32, i32
  }
  func.func @transform_4(%arg0: i32) -> (i32, i32) {
    %c0_i32 = arith.constant 0 : i32
    %c0_i32_0 = arith.constant 0 : i32
    %c0_i32_1 = arith.constant 0 : i32
    return %c0_i32, %c0_i32_0 : i32, i32
  }
  func.func @transform_5(%arg0: i32) -> (i32, i32, i32) {
    %c0_i32 = arith.constant 0 : i32
    %c0_i32_0 = arith.constant 0 : i32
    %c0_i32_1 = arith.constant 0 : i32
    return %arg0, %c0_i32, %c0_i32_0 : i32, i32, i32
  }
}

module attributes {stable_mosaic.version = 11 : i64} {
  func.func @_head_kernel(%arg0: i32, %arg1: memref<8x2624xf32, #tpu.memory_space<vmem>>, %arg2: memref<8x1088xf32, #tpu.memory_space<vmem>>, %arg3: memref<2624x256xf32, #tpu.memory_space<vmem>>, %arg4: memref<1x256xf32, #tpu.memory_space<vmem>>, %arg5: memref<1088x128xf32, #tpu.memory_space<vmem>>, %arg6: memref<256x128xf32, #tpu.memory_space<vmem>>, %arg7: memref<1x128xf32, #tpu.memory_space<vmem>>, %arg8: memref<128x12xf32, #tpu.memory_space<vmem>>, %arg9: memref<1x12xf32, #tpu.memory_space<vmem>>, %arg10: memref<12x2xf32, #tpu.memory_space<vmem>>, %arg11: memref<1x2xf32, #tpu.memory_space<vmem>>, %arg12: memref<8x2xf32, #tpu.memory_space<vmem>>) attributes {dimension_semantics = [#tpu.dimension_semantics<parallel>], iteration_bounds = array<i64: 1>, scalar_prefetch = 0 : i64, scratch_operands = 0 : i64, tpu.core_type = #tpu.core_type<tc>, window_params = [{transform_indices = @transform_0, window_bounds = array<i64: 8, 2624>}, {transform_indices = @transform_1, window_bounds = array<i64: 8, 1088>}, {pipeline_mode = #tpu.pipeline_mode<synchronous>, transform_indices = @transform_2, window_bounds = array<i64: 2624, 256>}, {pipeline_mode = #tpu.pipeline_mode<synchronous>, transform_indices = @transform_3, window_bounds = array<i64: 1, 256>}, {pipeline_mode = #tpu.pipeline_mode<synchronous>, transform_indices = @transform_4, window_bounds = array<i64: 1088, 128>}, {pipeline_mode = #tpu.pipeline_mode<synchronous>, transform_indices = @transform_5, window_bounds = array<i64: 256, 128>}, {pipeline_mode = #tpu.pipeline_mode<synchronous>, transform_indices = @transform_6, window_bounds = array<i64: 1, 128>}, {pipeline_mode = #tpu.pipeline_mode<synchronous>, transform_indices = @transform_7, window_bounds = array<i64: 128, 12>}, {pipeline_mode = #tpu.pipeline_mode<synchronous>, transform_indices = @transform_8, window_bounds = array<i64: 1, 12>}, {pipeline_mode = #tpu.pipeline_mode<synchronous>, transform_indices = @transform_9, window_bounds = array<i64: 12, 2>}, {pipeline_mode = #tpu.pipeline_mode<synchronous>, transform_indices = @transform_10, window_bounds = array<i64: 1, 2>}, {transform_indices = @transform_11, window_bounds = array<i64: 8, 2>}]} {
    %c0 = arith.constant 0 : index
    %c0_0 = arith.constant 0 : index
    %0 = vector.load %arg1[%c0, %c0_0] : memref<8x2624xf32, #tpu.memory_space<vmem>>, vector<8x2624xf32>
    %c0_1 = arith.constant 0 : index
    %c0_2 = arith.constant 0 : index
    %1 = vector.load %arg3[%c0_1, %c0_2] : memref<2624x256xf32, #tpu.memory_space<vmem>>, vector<2624x256xf32>
    %cst = arith.constant dense<0.000000e+00> : vector<8x256xf32>
    %2 = tpu.matmul %0, %1, %cst {dimension_numbers = #tpu.dot_dimension_numbers<[1], [0], [0], [1], [0, 0, 1, 1], [], []>} : vector<8x2624xf32>, vector<2624x256xf32>, vector<8x256xf32> -> vector<8x256xf32>
    %c0_3 = arith.constant 0 : index
    %c0_4 = arith.constant 0 : index
    %3 = vector.load %arg4[%c0_3, %c0_4] : memref<1x256xf32, #tpu.memory_space<vmem>>, vector<1x256xf32>
    %4 = vector.broadcast %3 : vector<1x256xf32> to vector<8x256xf32>
    %5 = arith.addf %2, %4 : vector<8x256xf32>
    %cst_5 = arith.constant 0.000000e+00 : f32
    %6 = vector.broadcast %cst_5 : f32 to vector<8x256xf32>
    %7 = arith.maximumf %5, %6 : vector<8x256xf32>
    %c0_6 = arith.constant 0 : index
    %c0_7 = arith.constant 0 : index
    %8 = vector.load %arg2[%c0_6, %c0_7] : memref<8x1088xf32, #tpu.memory_space<vmem>>, vector<8x1088xf32>
    %c0_8 = arith.constant 0 : index
    %c0_9 = arith.constant 0 : index
    %9 = vector.load %arg5[%c0_8, %c0_9] : memref<1088x128xf32, #tpu.memory_space<vmem>>, vector<1088x128xf32>
    %cst_10 = arith.constant dense<0.000000e+00> : vector<8x128xf32>
    %10 = tpu.matmul %8, %9, %cst_10 {dimension_numbers = #tpu.dot_dimension_numbers<[1], [0], [0], [1], [0, 0, 1, 1], [], []>} : vector<8x1088xf32>, vector<1088x128xf32>, vector<8x128xf32> -> vector<8x128xf32>
    %c0_11 = arith.constant 0 : index
    %c0_12 = arith.constant 0 : index
    %11 = vector.load %arg6[%c0_11, %c0_12] : memref<256x128xf32, #tpu.memory_space<vmem>>, vector<256x128xf32>
    %cst_13 = arith.constant dense<0.000000e+00> : vector<8x128xf32>
    %12 = tpu.matmul %7, %11, %cst_13 {dimension_numbers = #tpu.dot_dimension_numbers<[1], [0], [0], [1], [0, 0, 1, 1], [], []>} : vector<8x256xf32>, vector<256x128xf32>, vector<8x128xf32> -> vector<8x128xf32>
    %13 = arith.addf %10, %12 : vector<8x128xf32>
    %c0_14 = arith.constant 0 : index
    %c0_15 = arith.constant 0 : index
    %14 = vector.load %arg7[%c0_14, %c0_15] : memref<1x128xf32, #tpu.memory_space<vmem>>, vector<1x128xf32>
    %15 = vector.broadcast %14 : vector<1x128xf32> to vector<8x128xf32>
    %16 = arith.addf %13, %15 : vector<8x128xf32>
    %cst_16 = arith.constant 0.000000e+00 : f32
    %17 = vector.broadcast %cst_16 : f32 to vector<8x128xf32>
    %18 = arith.cmpf oge, %16, %17 : vector<8x128xf32>
    %cst_17 = arith.constant 0.00999999977 : f32
    %19 = vector.broadcast %cst_17 : f32 to vector<8x128xf32>
    %20 = arith.mulf %19, %16 : vector<8x128xf32>
    %21 = arith.select %18, %16, %20 : vector<8x128xi1>, vector<8x128xf32>
    %c0_18 = arith.constant 0 : index
    %c0_19 = arith.constant 0 : index
    %22 = vector.load %arg8[%c0_18, %c0_19] : memref<128x12xf32, #tpu.memory_space<vmem>>, vector<128x12xf32>
    %cst_20 = arith.constant dense<0.000000e+00> : vector<8x12xf32>
    %23 = tpu.matmul %21, %22, %cst_20 {dimension_numbers = #tpu.dot_dimension_numbers<[1], [0], [0], [1], [0, 0, 1, 1], [], []>} : vector<8x128xf32>, vector<128x12xf32>, vector<8x12xf32> -> vector<8x12xf32>
    %c0_21 = arith.constant 0 : index
    %c0_22 = arith.constant 0 : index
    %24 = vector.load %arg9[%c0_21, %c0_22] : memref<1x12xf32, #tpu.memory_space<vmem>>, vector<1x12xf32>
    %25 = vector.broadcast %24 : vector<1x12xf32> to vector<8x12xf32>
    %26 = arith.addf %23, %25 : vector<8x12xf32>
    %cst_23 = arith.constant 0.000000e+00 : f32
    %27 = vector.broadcast %cst_23 : f32 to vector<8x12xf32>
    %28 = arith.cmpf oge, %26, %27 : vector<8x12xf32>
    %cst_24 = arith.constant 0.00999999977 : f32
    %29 = vector.broadcast %cst_24 : f32 to vector<8x12xf32>
    %30 = arith.mulf %29, %26 : vector<8x12xf32>
    %31 = arith.select %28, %26, %30 : vector<8x12xi1>, vector<8x12xf32>
    %c0_25 = arith.constant 0 : index
    %c0_26 = arith.constant 0 : index
    %32 = vector.load %arg10[%c0_25, %c0_26] : memref<12x2xf32, #tpu.memory_space<vmem>>, vector<12x2xf32>
    %cst_27 = arith.constant dense<0.000000e+00> : vector<8x2xf32>
    %33 = tpu.matmul %31, %32, %cst_27 {dimension_numbers = #tpu.dot_dimension_numbers<[1], [0], [0], [1], [0, 0, 1, 1], [], []>} : vector<8x12xf32>, vector<12x2xf32>, vector<8x2xf32> -> vector<8x2xf32>
    %c0_28 = arith.constant 0 : index
    %c0_29 = arith.constant 0 : index
    %34 = vector.load %arg11[%c0_28, %c0_29] : memref<1x2xf32, #tpu.memory_space<vmem>>, vector<1x2xf32>
    %35 = vector.broadcast %34 : vector<1x2xf32> to vector<8x2xf32>
    %36 = arith.addf %33, %35 : vector<8x2xf32>
    %cst_30 = arith.constant dense<0xFF800000> : vector<8xf32>
    %37 = vector.multi_reduction <maximumf>, %36, %cst_30 [1] : vector<8x2xf32> to vector<8xf32>
    %38 = vector.shape_cast %37 : vector<8xf32> to vector<8x1xf32>
    %39 = vector.broadcast %38 : vector<8x1xf32> to vector<8x2xf32>
    %40 = arith.subf %36, %39 : vector<8x2xf32>
    %41 = math.exp %40 : vector<8x2xf32>
    %cst_31 = arith.constant dense<0.000000e+00> : vector<8xf32>
    %42 = vector.multi_reduction <add>, %41, %cst_31 [1] : vector<8x2xf32> to vector<8xf32>
    %43 = vector.shape_cast %42 : vector<8xf32> to vector<8x1xf32>
    %44 = vector.broadcast %43 : vector<8x1xf32> to vector<8x2xf32>
    %45 = arith.divf %41, %44 : vector<8x2xf32>
    %c0_32 = arith.constant 0 : index
    %c0_33 = arith.constant 0 : index
    %46 = vector.load %arg12[%c0_32, %c0_33] : memref<8x2xf32, #tpu.memory_space<vmem>>, vector<8x2xf32>
    tpu.vector_store %arg12[%c0_32, %c0_33], %45 {strides = array<i32>} : memref<8x2xf32, #tpu.memory_space<vmem>>, vector<8x2xf32>,
    return
  }
  func.func @transform_0(%arg0: i32) -> (i32, i32) {
    %c0_i32 = arith.constant 0 : i32
    %c0_i32_0 = arith.constant 0 : i32
    return %arg0, %c0_i32 : i32, i32
  }
  func.func @transform_1(%arg0: i32) -> (i32, i32) {
    %c0_i32 = arith.constant 0 : i32
    %c0_i32_0 = arith.constant 0 : i32
    return %arg0, %c0_i32 : i32, i32
  }
  func.func @transform_2(%arg0: i32) -> (i32, i32) {
    %c0_i32 = arith.constant 0 : i32
    %c0_i32_0 = arith.constant 0 : i32
    %c0_i32_1 = arith.constant 0 : i32
    return %c0_i32, %c0_i32_0 : i32, i32
  }
  func.func @transform_3(%arg0: i32) -> (i32, i32) {
    %c0_i32 = arith.constant 0 : i32
    %c0_i32_0 = arith.constant 0 : i32
    %c0_i32_1 = arith.constant 0 : i32
    return %c0_i32, %c0_i32_0 : i32, i32
  }
  func.func @transform_4(%arg0: i32) -> (i32, i32) {
    %c0_i32 = arith.constant 0 : i32
    %c0_i32_0 = arith.constant 0 : i32
    %c0_i32_1 = arith.constant 0 : i32
    return %c0_i32, %c0_i32_0 : i32, i32
  }
  func.func @transform_5(%arg0: i32) -> (i32, i32) {
    %c0_i32 = arith.constant 0 : i32
    %c0_i32_0 = arith.constant 0 : i32
    %c0_i32_1 = arith.constant 0 : i32
    return %c0_i32, %c0_i32_0 : i32, i32
  }
  func.func @transform_6(%arg0: i32) -> (i32, i32) {
    %c0_i32 = arith.constant 0 : i32
    %c0_i32_0 = arith.constant 0 : i32
    %c0_i32_1 = arith.constant 0 : i32
    return %c0_i32, %c0_i32_0 : i32, i32
  }
  func.func @transform_7(%arg0: i32) -> (i32, i32) {
    %c0_i32 = arith.constant 0 : i32
    %c0_i32_0 = arith.constant 0 : i32
    %c0_i32_1 = arith.constant 0 : i32
    return %c0_i32, %c0_i32_0 : i32, i32
  }
  func.func @transform_8(%arg0: i32) -> (i32, i32) {
    %c0_i32 = arith.constant 0 : i32
    %c0_i32_0 = arith.constant 0 : i32
    %c0_i32_1 = arith.constant 0 : i32
    return %c0_i32, %c0_i32_0 : i32, i32
  }
  func.func @transform_9(%arg0: i32) -> (i32, i32) {
    %c0_i32 = arith.constant 0 : i32
    %c0_i32_0 = arith.constant 0 : i32
    %c0_i32_1 = arith.constant 0 : i32
    return %c0_i32, %c0_i32_0 : i32, i32
  }
  func.func @transform_10(%arg0: i32) -> (i32, i32) {
    %c0_i32 = arith.constant 0 : i32
    %c0_i32_0 = arith.constant 0 : i32
    %c0_i32_1 = arith.constant 0 : i32
    return %c0_i32, %c0_i32_0 : i32, i32
  }
  func.func @transform_11(%arg0: i32) -> (i32, i32) {
    %c0_i32 = arith.constant 0 : i32
    %c0_i32_0 = arith.constant 0 : i32
    return %arg0, %c0_i32 : i32, i32
  }
}

</mosaic_0001>

<llo_original>
// kernel: eq.8
$region0: #{eq.8}
  %s0 = inlined_call_operand.vmem [shape: s32[41,2], index: 0, kind: input, shape index: {}]
  %s1 = inlined_call_operand.vmem [shape: s32[82], index: 1, kind: output, shape index: {}]
  $region1: #{eq.8} parent=0
    #allocation0 [shape = 'u8[4096]{0}', space=vmem, size = 0x1000, scoped, tag = 'scoped mem for output reshape']
    %v2 = vld [vmem:[%s0] sm:$0x1]
    %vm3 = vcmask 15360
    %4 = vst.msk [vmem:[#allocation0] sm:$0x1] %vm3, %v2
    %s5 = scalar_lea.vmem %s0, 40
    %v6 = vld [vmem:[%s5] sm:$0x1]
    %7 = vrot.lane.b32.xlu0 %v6, 80
    %v8 = vpop.permute.xlu0 %7
    %vm9 = vcmask 671360
    %10 = vst.msk [vmem:[#allocation0] sm:$0x1] %vm9, %v8
    %s11 = scalar_lea.vmem %s0, 39
    %v12 = vld [vmem:[%s11] sm:$0x1]
    %13 = vrot.lane.b32.xlu0 %v12, 78
    %v14 = vpop.permute.xlu0 %13
    %vm15 = vcmask 654960
    %16 = vst.msk [vmem:[#allocation0] sm:$0x1] %vm15, %v14
    %s17 = scalar_lea.vmem %s0, 38
    %v18 = vld [vmem:[%s17] sm:$0x1]
    %19 = vrot.lane.b32.xlu0 %v18, 76
    %v20 = vpop.permute.xlu0 %19
    %vm21 = vcmask 638560
    %22 = vst.msk [vmem:[#allocation0] sm:$0x1] %vm21, %v20
    %s23 = scalar_lea.vmem %s0, 37
    %v24 = vld [vmem:[%s23] sm:$0x1]
    %25 = vrot.lane.b32.xlu0 %v24, 74
    %v26 = vpop.permute.xlu0 %25
    %vm27 = vcmask 622160
    %28 = vst.msk [vmem:[#allocation0] sm:$0x1] %vm27, %v26
    %s29 = scalar_lea.vmem %s0, 36
    %v30 = vld [vmem:[%s29] sm:$0x1]
    %31 = vrot.lane.b32.xlu0 %v30, 72
    %v32 = vpop.permute.xlu0 %31
    %vm33 = vcmask 605760
    %34 = vst.msk [vmem:[#allocation0] sm:$0x1] %vm33, %v32
    %s35 = scalar_lea.vmem %s0, 35
    %v36 = vld [vmem:[%s35] sm:$0x1]
    %37 = vrot.lane.b32.xlu0 %v36, 70
    %v38 = vpop.permute.xlu0 %37
    %vm39 = vcmask 589360
    %40 = vst.msk [vmem:[#allocation0] sm:$0x1] %vm39, %v38
    %s41 = scalar_lea.vmem %s0, 34
    %v42 = vld [vmem:[%s41] sm:$0x1]
    %43 = vrot.lane.b32.xlu0 %v42, 68
    %v44 = vpop.permute.xlu0 %43
    %vm45 = vcmask 572960
    %46 = vst.msk [vmem:[#allocation0] sm:$0x1] %vm45, %v44
    %s47 = scalar_lea.vmem %s0, 33
    %v48 = vld [vmem:[%s47] sm:$0x1]
    %49 = vrot.lane.b32.xlu0 %v48, 66
    %v50 = vpop.permute.xlu0 %49
    %vm51 = vcmask 556560
    %52 = vst.msk [vmem:[#allocation0] sm:$0x1] %vm51, %v50
    %s53 = scalar_lea.vmem %s0, 32
    %v54 = vld [vmem:[%s53] sm:$0x1]
    %55 = vrot.lane.b32.xlu0 %v54, 64
    %v56 = vpop.permute.xlu0 %55
    %vm57 = vcmask 540160
    %58 = vst.msk [vmem:[#allocation0] sm:$0x1] %vm57, %v56
    %s59 = scalar_lea.vmem %s0, 31
    %v60 = vld [vmem:[%s59] sm:$0x1]
    %61 = vrot.lane.b32.xlu0 %v60, 62
    %v62 = vpop.permute.xlu0 %61
    %vm63 = vcmask 523760
    %64 = vst.msk [vmem:[#allocation0] sm:$0x1] %vm63, %v62
    %s65 = scalar_lea.vmem %s0, 30
    %v66 = vld [vmem:[%s65] sm:$0x1]
    %67 = vrot.lane.b32.xlu0 %v66, 60
    %v68 = vpop.permute.xlu0 %67
    %vm69 = vcmask 507360
    %70 = vst.msk [vmem:[#allocation0] sm:$0x1] %vm69, %v68
    %s71 = scalar_lea.vmem %s0, 29
    %v72 = vld [vmem:[%s71] sm:$0x1]
    %73 = vrot.lane.b32.xlu0 %v72, 58
    %v74 = vpop.permute.xlu0 %73
    %vm75 = vcmask 490960
    %76 = vst.msk [vmem:[#allocation0] sm:$0x1] %vm75, %v74
    %s77 = scalar_lea.vmem %s0, 28
    %v78 = vld [vmem:[%s77] sm:$0x1]
    %79 = vrot.lane.b32.xlu0 %v78, 56
    %v80 = vpop.permute.xlu0 %79
    %vm81 = vcmask 474560
    %82 = vst.msk [vmem:[#allocation0] sm:$0x1] %vm81, %v80
    %s83 = scalar_lea.vmem %s0, 27
    %v84 = vld [vmem:[%s83] sm:$0x1]
    %85 = vrot.lane.b32.xlu0 %v84, 54
    %v86 = vpop.permute.xlu0 %85
    %vm87 = vcmask 458160
    %88 = vst.msk [vmem:[#allocation0] sm:$0x1] %vm87, %v86
    %s89 = scalar_lea.vmem %s0, 26
    %v90 = vld [vmem:[%s89] sm:$0x1]
    %91 = vrot.lane.b32.xlu0 %v90, 52
    %v92 = vpop.permute.xlu0 %91
    %vm93 = vcmask 441760
    %94 = vst.msk [vmem:[#allocation0] sm:$0x1] %vm93, %v92
    %s95 = scalar_lea.vmem %s0, 25
    %v96 = vld [vmem:[%s95] sm:$0x1]
    %97 = vrot.lane.b32.xlu0 %v96, 50
    %v98 = vpop.permute.xlu0 %97
    %vm99 = vcmask 425360
    %100 = vst.msk [vmem:[#allocation0] sm:$0x1] %vm99, %v98
    %s101 = scalar_lea.vmem %s0, 24
    %v102 = vld [vmem:[%s101] sm:$0x1]
    %103 = vrot.lane.b32.xlu0 %v102, 48
    %v104 = vpop.permute.xlu0 %103
    %vm105 = vcmask 408960
    %106 = vst.msk [vmem:[#allocation0] sm:$0x1] %vm105, %v104
    %s107 = scalar_lea.vmem %s0, 23
    %v108 = vld [vmem:[%s107] sm:$0x1]
    %109 = vrot.lane.b32.xlu0 %v108, 46
    %v110 = vpop.permute.xlu0 %109
    %vm111 = vcmask 392560
    %112 = vst.msk [vmem:[#allocation0] sm:$0x1] %vm111, %v110
    %s113 = scalar_lea.vmem %s0, 22
    %v114 = vld [vmem:[%s113] sm:$0x1]
    %115 = vrot.lane.b32.xlu0 %v114, 44
    %v116 = vpop.permute.xlu0 %115
    %vm117 = vcmask 376160
    %118 = vst.msk [vmem:[#allocation0] sm:$0x1] %vm117, %v116
    %s119 = scalar_lea.vmem %s0, 21
    %v120 = vld [vmem:[%s119] sm:$0x1]
    %121 = vrot.lane.b32.xlu0 %v120, 42
    %v122 = vpop.permute.xlu0 %121
    %vm123 = vcmask 359760
    %124 = vst.msk [vmem:[#allocation0] sm:$0x1] %vm123, %v122
    %s125 = scalar_lea.vmem %s0, 20
    %v126 = vld [vmem:[%s125] sm:$0x1]
    %127 = vrot.lane.b32.xlu0 %v126, 40
    %v128 = vpop.permute.xlu0 %127
    %vm129 = vcmask 343360
    %130 = vst.msk [vmem:[#allocation0] sm:$0x1] %vm129, %v128
    %s131 = scalar_lea.vmem %s0, 19
    %v132 = vld [vmem:[%s131] sm:$0x1]
    %133 = vrot.lane.b32.xlu0 %v132, 38
    %v134 = vpop.permute.xlu0 %133
    %vm135 = vcmask 326960
    %136 = vst.msk [vmem:[#allocation0] sm:$0x1] %vm135, %v134
    %s137 = scalar_lea.vmem %s0, 18
    %v138 = vld [vmem:[%s137] sm:$0x1]
    %139 = vrot.lane.b32.xlu0 %v138, 36
    %v140 = vpop.permute.xlu0 %139
    %vm141 = vcmask 310560
    %142 = vst.msk [vmem:[#allocation0] sm:$0x1] %vm141, %v140
    %s143 = scalar_lea.vmem %s0, 17
    %v144 = vld [vmem:[%s143] sm:$0x1]
    %145 = vrot.lane.b32.xlu0 %v144, 34
    %v146 = vpop.permute.xlu0 %145
    %vm147 = vcmask 294160
    %148 = vst.msk [vmem:[#allocation0] sm:$0x1] %vm147, %v146
    %s149 = scalar_lea.vmem %s0, 16
    %v150 = vld [vmem:[%s149] sm:$0x1]
    %151 = vrot.lane.b32.xlu0 %v150, 32
    %v152 = vpop.permute.xlu0 %151
    %vm153 = vcmask 277760
    %154 = vst.msk [vmem:[#allocation0] sm:$0x1] %vm153, %v152
    %s155 = scalar_lea.vmem %s0, 15
    %v156 = vld [vmem:[%s155] sm:$0x1]
    %157 = vrot.lane.b32.xlu0 %v156, 30
    %v158 = vpop.permute.xlu0 %157
    %vm159 = vcmask 261360
    %160 = vst.msk [vmem:[#allocation0] sm:$0x1] %vm159, %v158
    %s161 = scalar_lea.vmem %s0, 14
    %v162 = vld [vmem:[%s161] sm:$0x1]
    %163 = vrot.lane.b32.xlu0 %v162, 28
    %v164 = vpop.permute.xlu0 %163
    %vm165 = vcmask 244960
    %166 = vst.msk [vmem:[#allocation0] sm:$0x1] %vm165, %v164
    %s167 = scalar_lea.vmem %s0, 13
    %v168 = vld [vmem:[%s167] sm:$0x1]
    %169 = vrot.lane.b32.xlu0 %v168, 26
    %v170 = vpop.permute.xlu0 %169
    %vm171 = vcmask 228560
    %172 = vst.msk [vmem:[#allocation0] sm:$0x1] %vm171, %v170
    %s173 = scalar_lea.vmem %s0, 12
    %v174 = vld [vmem:[%s173] sm:$0x1]
    %175 = vrot.lane.b32.xlu0 %v174, 24
    %v176 = vpop.permute.xlu0 %175
    %vm177 = vcmask 212160
    %178 = vst.msk [vmem:[#allocation0] sm:$0x1] %vm177, %v176
    %s179 = scalar_lea.vmem %s0, 11
    %v180 = vld [vmem:[%s179] sm:$0x1]
    %181 = vrot.lane.b32.xlu0 %v180, 22
    %v182 = vpop.permute.xlu0 %181
    %vm183 = vcmask 195760
    %184 = vst.msk [vmem:[#allocation0] sm:$0x1] %vm183, %v182
    %s185 = scalar_lea.vmem %s0, 10
    %v186 = vld [vmem:[%s185] sm:$0x1]
    %187 = vrot.lane.b32.xlu0 %v186, 20
    %v188 = vpop.permute.xlu0 %187
    %vm189 = vcmask 179360
    %190 = vst.msk [vmem:[#allocation0] sm:$0x1] %vm189, %v188
    %s191 = scalar_lea.vmem %s0, 9
    %v192 = vld [vmem:[%s191] sm:$0x1]
    %193 = vrot.lane.b32.xlu0 %v192, 18
    %v194 = vpop.permute.xlu0 %193
    %vm195 = vcmask 162960
    %196 = vst.msk [vmem:[#allocation0] sm:$0x1] %vm195, %v194
    %s197 = scalar_lea.vmem %s0, 8
    %v198 = vld [vmem:[%s197] sm:$0x1]
    %199 = vrot.lane.b32.xlu0 %v198, 16
    %v200 = vpop.permute.xlu0 %199
    %vm201 = vcmask 146560
    %202 = vst.msk [vmem:[#allocation0] sm:$0x1] %vm201, %v200
    %s203 = scalar_lea.vmem %s0, 7
    %v204 = vld [vmem:[%s203] sm:$0x1]
    %205 = vrot.lane.b32.xlu0 %v204, 14
    %v206 = vpop.permute.xlu0 %205
    %vm207 = vcmask 130160
    %208 = vst.msk [vmem:[#allocation0] sm:$0x1] %vm207, %v206
    %s209 = scalar_lea.vmem %s0, 6
    %v210 = vld [vmem:[%s209] sm:$0x1]
    %211 = vrot.lane.b32.xlu0 %v210, 12
    %v212 = vpop.permute.xlu0 %211
    %vm213 = vcmask 113760
    %214 = vst.msk [vmem:[#allocation0] sm:$0x1] %vm213, %v212
    %s215 = scalar_lea.vmem %s0, 5
    %v216 = vld [vmem:[%s215] sm:$0x1]
    %217 = vrot.lane.b32.xlu0 %v216, 10
    %v218 = vpop.permute.xlu0 %217
    %vm219 = vcmask 97360
    %220 = vst.msk [vmem:[#allocation0] sm:$0x1] %vm219, %v218
    %s221 = scalar_lea.vmem %s0, 4
    %v222 = vld [vmem:[%s221] sm:$0x1]
    %223 = vrot.lane.b32.xlu0 %v222, 8
    %v224 = vpop.permute.xlu0 %223
    %vm225 = vcmask 80960
    %226 = vst.msk [vmem:[#allocation0] sm:$0x1] %vm225, %v224
    %s227 = scalar_lea.vmem %s0, 3
    %v228 = vld [vmem:[%s227] sm:$0x1]
    %229 = vrot.lane.b32.xlu0 %v228, 6
    %v230 = vpop.permute.xlu0 %229
    %vm231 = vcmask 64560
    %232 = vst.msk [vmem:[#allocation0] sm:$0x1] %vm231, %v230
    %s233 = scalar_lea.vmem %s0, 2
    %v234 = vld [vmem:[%s233] sm:$0x1]
    %235 = vrot.lane.b32.xlu0 %v234, 4
    %v236 = vpop.permute.xlu0 %235
    %vm237 = vcmask 48160
    %238 = vst.msk [vmem:[#allocation0] sm:$0x1] %vm237, %v236
    %s239 = scalar_lea.vmem %s0, 1
    %v240 = vld [vmem:[%s239] sm:$0x1]
    %241 = vrot.lane.b32.xlu0 %v240, 2
    %v242 = vpop.permute.xlu0 %241
    %vm243 = vcmask 31760
    %244 = vst.msk [vmem:[#allocation0] sm:$0x1] %vm243, %v242
    %s246 = ssub.s32 2, 1
    %v247 = vld [vmem:[#allocation0] sm:%s246]
    %s249 = ssub.s32 2, 1
    %250 = vst [vmem:[%s1] sm:%s249] %v247

// kernel: new_model2_forward.8
$region0: #{new_model2_forward.8}
  #allocation0 [shape = 'u32[]', space=smem, size = 0x4, offset = 0x4, fixed_abs, tag = 'smem constant byte address 0x4 - core index']
  #allocation1 [shape = 'u32[72,128]{1,0:T(1,128)}', space=vmem, size = 0x9000, scoped, tag = 'internal scratch']
  #allocation2 [shape = 'f32[2,32]{1,0:T(2,128)}', space=vmem, size = 0x400, scoped, tag = 'scratch operand']
  #allocation3 [shape = 'f32[2,32]{1,0:T(2,128)}', space=vmem, size = 0x400, scoped, tag = 'scratch operand']
  #allocation4 [shape = 'f32[2,32]{1,0:T(2,128)}', space=vmem, size = 0x400, scoped, tag = 'scratch operand']
  #allocation5 [shape = 'f32[2,32]{1,0:T(2,128)}', space=vmem, size = 0x400, scoped, tag = 'scratch operand']
  %s0 = inlined_call_operand.vmem [shape: f32[41,2,8], index: 0, kind: input, shape index: {}]
  %s1 = inlined_call_operand.hbm [shape: f32[8,128], index: 1, kind: input, shape index: {}]
  %s2 = inlined_call_operand.vmem [shape: f32[1,128], index: 2, kind: input, shape index: {}]
  %s3 = inlined_call_operand.hbm [shape: f32[32,128], index: 3, kind: input, shape index: {}]
  %s4 = inlined_call_operand.hbm [shape: f32[8,128], index: 4, kind: input, shape index: {}]
  %s5 = inlined_call_operand.vmem [shape: f32[1,128], index: 5, kind: input, shape index: {}]
  %s6 = inlined_call_operand.hbm [shape: f32[32,128], index: 6, kind: input, shape index: {}]
  %s7 = inlined_call_operand.vmem [shape: f32[41,2,32], index: 7, kind: output, shape index: {0}]
  %s8 = inlined_call_operand.vmem [shape: f32[41,2,32], index: 8, kind: output, shape index: {1}]
  %9 = xla_tuple %s7, %s8
  %s10 = sld [smem:[#allocation0]]
  $region69: #{new_model2_forward.8} parent=0
    _
  %s12 = ssub.s32 1, %s10
  %s13 = scalar_select 0, %s12, %s10
  $region1: #{new_model2_forward.8} parent=0
    #allocation6 [shape = 'u8[4096]{0}', space=vmem, size = 0x1000, scoped, tag = 'input window, operand 1, single buffered']
    #allocation7 [shape = 's32[1]{0}', space=sflag, size = 0x4, scoped, tag = 'scoped memory for new_model2_forward.8']
    #allocation8 [shape = 'u8[16384]{0}', space=vmem, size = 0x4000, scoped, tag = 'input window, operand 3, single buffered']
    #allocation9 [shape = 's32[1]{0}', space=sflag, size = 0x4, scoped, tag = 'scoped memory for new_model2_forward.8']
    #allocation10 [shape = 'u8[4096]{0}', space=vmem, size = 0x1000, scoped, tag = 'input window, operand 4, single buffered']
    #allocation11 [shape = 'u8[16384]{0}', space=vmem, size = 0x4000, scoped, tag = 'input window, operand 6, single buffered']
    #allocation12 [shape = 's32[1]{0}', space=sflag, size = 0x4, scoped, tag = 'scoped memory for new_model2_forward.8']
    %14 = vsyncpa [#allocation7], 0
    %15 = vsyncpa [#allocation9], 0
    %16 = vsyncpa [#allocation12], 0
    // Predicated region
    $region2: #{new_model2_forward.8} parent=1 // pred_check
      _
    $region3: #{new_model2_forward.8} parent=1 // pred_check_branch
      %18 = sbr.rel (0) target = $region5
    $region4: #{new_model2_forward.8} parent=1 // pred_region
      _
    $region5: #{new_model2_forward.8} parent=1 // pred_fallthru
      _
    // Predicated region
    $region6: #{new_model2_forward.8} parent=1 // pred_check
      _
    $region7: #{new_model2_forward.8} parent=1 // pred_check_branch
      %20 = sbr.rel (0) target = $region9
    $region8: #{new_model2_forward.8} parent=1 // pred_region
      %22 = vsyncadd [#allocation7], 0
      %s24 = sshll.u32 %s1, 4
      %s25 = int_to_ptr.hbm [resolvable:$true] %s24
      %s26 = sshll.u32 [#allocation6], 4
      %s27 = int_to_ptr.vmem [resolvable:$true] %s26
      %29 = dma.hbm_to_vmem [thread:$0]  %s25, 128, %s27, [#allocation7]
    $region9: #{new_model2_forward.8} parent=1 // pred_fallthru
      _
    // Predicated region
    $region10: #{new_model2_forward.8} parent=1 // pred_check
      _
    $region11: #{new_model2_forward.8} parent=1 // pred_check_branch
      %31 = sbr.rel (0) target = $region13
    $region12: #{new_model2_forward.8} parent=1 // pred_region
      _
    $region13: #{new_model2_forward.8} parent=1 // pred_fallthru
      _
    // Predicated region
    $region14: #{new_model2_forward.8} parent=1 // pred_check
      _
    $region15: #{new_model2_forward.8} parent=1 // pred_check_branch
      %33 = sbr.rel (0) target = $region17
    $region16: #{new_model2_forward.8} parent=1 // pred_region
      %35 = vsyncadd [#allocation9], 0
      %s36 = sshll.u32 %s3, 4
      %s37 = int_to_ptr.hbm [resolvable:$true] %s36
      %s38 = sshll.u32 [#allocation8], 4
      %s39 = int_to_ptr.vmem [resolvable:$true] %s38
      %44 = dma.hbm_to_vmem [thread:$0]  %s37, 512, %s39, [#allocation9], 128, 128, 8
    $region17: #{new_model2_forward.8} parent=1 // pred_fallthru
      _
    // Predicated region
    $region18: #{new_model2_forward.8} parent=1 // pred_check
      _
    $region19: #{new_model2_forward.8} parent=1 // pred_check_branch
      %46 = sbr.rel (0) target = $region21
    $region20: #{new_model2_forward.8} parent=1 // pred_region
      %48 = vsyncadd [#allocation9], 0
      %s50 = sshll.u32 %s4, 4
      %s51 = int_to_ptr.hbm [resolvable:$true] %s50
      %s52 = sshll.u32 [#allocation10], 4
      %s53 = int_to_ptr.vmem [resolvable:$true] %s52
      %55 = dma.hbm_to_vmem [thread:$0]  %s51, 128, %s53, [#allocation9]
    $region21: #{new_model2_forward.8} parent=1 // pred_fallthru
      _
    // Predicated region
    $region22: #{new_model2_forward.8} parent=1 // pred_check
      _
    $region23: #{new_model2_forward.8} parent=1 // pred_check_branch
      %57 = sbr.rel (0) target = $region25
    $region24: #{new_model2_forward.8} parent=1 // pred_region
      _
    $region25: #{new_model2_forward.8} parent=1 // pred_fallthru
      _
    // Predicated region
    $region26: #{new_model2_forward.8} parent=1 // pred_check
      _
    $region27: #{new_model2_forward.8} parent=1 // pred_check_branch
      %59 = sbr.rel (0) target = $region29
    $region28: #{new_model2_forward.8} parent=1 // pred_region
      %61 = vsyncadd [#allocation12], 0
      %s62 = sshll.u32 %s6, 4
      %s63 = int_to_ptr.hbm [resolvable:$true] %s62
      %s64 = sshll.u32 [#allocation11], 4
      %s65 = int_to_ptr.vmem [resolvable:$true] %s64
      %70 = dma.hbm_to_vmem [thread:$0]  %s63, 512, %s65, [#allocation12], 128, 128, 8
    $region29: #{new_model2_forward.8} parent=1 // pred_fallthru
      _
    // Predicated region
    $region30: #{new_model2_forward.8} parent=1 // pred_check
      _
    $region31: #{new_model2_forward.8} parent=1 // pred_check_branch
      %72 = sbr.rel (0) target = $region33
    $region32: #{new_model2_forward.8} parent=1 // pred_region
      %74 = dma.done [#allocation7], 128
    $region33: #{new_model2_forward.8} parent=1 // pred_fallthru
      _
    // Predicated region
    $region34: #{new_model2_forward.8} parent=1 // pred_check
      _
    $region35: #{new_model2_forward.8} parent=1 // pred_check_branch
      %76 = sbr.rel (0) target = $region37
    $region36: #{new_model2_forward.8} parent=1 // pred_region
      %78 = dma.done [#allocation9], 512
    $region37: #{new_model2_forward.8} parent=1 // pred_fallthru
      _
    // Predicated region
    $region38: #{new_model2_forward.8} parent=1 // pred_check
      _
    $region39: #{new_model2_forward.8} parent=1 // pred_check_branch
      %80 = sbr.rel (0) target = $region41
    $region40: #{new_model2_forward.8} parent=1 // pred_region
      %82 = dma.done [#allocation9], 128
    $region41: #{new_model2_forward.8} parent=1 // pred_fallthru
      _
    // Predicated region
    $region42: #{new_model2_forward.8} parent=1 // pred_check
      _
    $region43: #{new_model2_forward.8} parent=1 // pred_check_branch
      %84 = sbr.rel (0) target = $region45
    $region44: #{new_model2_forward.8} parent=1 // pred_region
      %86 = dma.done [#allocation12], 512
    $region45: #{new_model2_forward.8} parent=1 // pred_fallthru
      _
    %vm87 = vcmask 254976
    %88 = vst.msk [vmem:[#allocation2] sm:$0x3] %vm87, 0.0
    %89 = vst.msk [vmem:[#allocation3] sm:$0x3] %vm87, 0.0
    %90 = vst.msk [vmem:[#allocation4] sm:$0x3] %vm87, 0.0
    %91 = vst.msk [vmem:[#allocation5] sm:$0x3] %vm87, 0.0
    loop: start=0, step=1, limit=41
    $region46: #{new_model2_forward.8} parent=1 // loop_pre_header
      _
    $region47: #{new_model2_forward.8} parent=1 // loop_header
      %s93 = sphi 0, %s97
      %p94 = scmp.ge.s32.totalorder %s93, 41
    $region48: #{new_model2_forward.8} parent=1 // loop_header_branch
      %96 = sbr.rel (%p94) target = $region52
    $region49: #{new_model2_forward.8} parent=1 // loop_body
      %s98 = smul.u32 %s93, 2
      %s99 = scalar_lea.vmem %s0, %s98
      %v100 = vld [vmem:[%s99] sm:$0x3]
      %s101 = ssub.s32 40, %s93
      %s102 = smul.u32 %s101, 2
      %s103 = scalar_lea.vmem %s0, %s102
      %v104 = vld [vmem:[%s103] sm:$0x3]
      %v105 = vld [vmem:[#allocation6] sm:$0xff]
      %v106 = vld [vmem:[%s2] sm:$0x1]
      %v108 = vperm.slane %v106, 0
      %vm110 = vcmask 64512
      %v112 = vsel %vm110, %v100, 0
      %114 = vmatpush.msra.mxu0 0.0
      %115 = vmatpush.msra.mxu0 0.0
      %116 = vmatpush.msra.mxu0 0.0
      %117 = vmatpush.msra.mxu0 0.0
      %118 = vmatpush.msra.mxu0 0.0
      %119 = vmatpush.msra.mxu0 0.0
      %120 = vmatpush.msra.mxu0 0.0
      %121 = vmatpush.msra.mxu0 0.0
      %122 = vmatpush.msra.mxu0 0.0
      %123 = vmatpush.msra.mxu0 0.0
      %124 = vmatpush.msra.mxu0 0.0
      %125 = vmatpush.msra.mxu0 0.0
      %126 = vmatpush.msra.mxu0 0.0
      %127 = vmatpush.msra.mxu0 0.0
      %128 = vmatpush.msra.mxu0 0.0
      %129 = vmatpush.msra.mxu0 %v105
      %130 = vmatmul.f32.gmra.mxu0 %v112
      %v131 = vpop.f32.mrf.mxu0
      %v132 = vadd.f32 %v108, %v131
      %133 = vdwg.mxu0
      %v134 = vld [vmem:[#allocation2] sm:$0x3]
      %v135 = vld [vmem:[#allocation8] sm:$0xff]
      %v136 = vld [vmem:[#allocation8 + $0x8] sm:$0xff]
      %v137 = vld [vmem:[#allocation8 + $0x10] sm:$0xff]
      %v138 = vld [vmem:[#allocation8 + $0x18] sm:$0xff]
      %vm139 = vcmask 261120
      %v141 = vsel %vm139, %v134, 0
      %143 = vmatpush.msra.mxu0 0.0
      %144 = vmatpush.msra.mxu0 0.0
      %145 = vmatpush.msra.mxu0 0.0
      %146 = vmatpush.msra.mxu0 0.0
      %147 = vmatpush.msra.mxu0 0.0
      %148 = vmatpush.msra.mxu0 0.0
      %149 = vmatpush.msra.mxu0 0.0
      %150 = vmatpush.msra.mxu0 0.0
      %151 = vmatpush.msra.mxu0 0.0
      %152 = vmatpush.msra.mxu0 0.0
      %153 = vmatpush.msra.mxu0 0.0
      %154 = vmatpush.msra.mxu0 0.0
      %155 = vmatpush.msra.mxu0 %v138
      %156 = vmatpush.msra.mxu0 %v137
      %157 = vmatpush.msra.mxu0 %v136
      %158 = vmatpush.msra.mxu0 %v135
      %159 = vmatmul.f32.gmra.mxu0 %v141
      %v160 = vpop.f32.mrf.mxu0
      %v161 = vadd.f32 0.0, %v160
      %162 = vdwg.mxu0
      %v163 = vadd.f32 %v132, %v161
      %v164 = vld [vmem:[#allocation10] sm:$0xff]
      %v165 = vld [vmem:[%s5] sm:$0x1]
      %v167 = vperm.slane %v165, 0
      %v170 = vsel %vm110, %v104, 0
      %172 = vmatpush.msra.mxu0 0.0
      %173 = vmatpush.msra.mxu0 0.0
      %174 = vmatpush.msra.mxu0 0.0
      %175 = vmatpush.msra.mxu0 0.0
      %176 = vmatpush.msra.mxu0 0.0
      %177 = vmatpush.msra.mxu0 0.0
      %178 = vmatpush.msra.mxu0 0.0
      %179 = vmatpush.msra.mxu0 0.0
      %180 = vmatpush.msra.mxu0 0.0
      %181 = vmatpush.msra.mxu0 0.0
      %182 = vmatpush.msra.mxu0 0.0
      %183 = vmatpush.msra.mxu0 0.0
      %184 = vmatpush.msra.mxu0 0.0
      %185 = vmatpush.msra.mxu0 0.0
      %186 = vmatpush.msra.mxu0 0.0
      %187 = vmatpush.msra.mxu0 %v164
      %188 = vmatmul.f32.gmra.mxu0 %v170
      %v189 = vpop.f32.mrf.mxu0
      %v190 = vadd.f32 %v167, %v189
      %191 = vdwg.mxu0
      %v192 = vld [vmem:[#allocation4] sm:$0x3]
      %v193 = vld [vmem:[#allocation11] sm:$0xff]
      %v194 = vld [vmem:[#allocation11 + $0x8] sm:$0xff]
      %v195 = vld [vmem:[#allocation11 + $0x10] sm:$0xff]
      %v196 = vld [vmem:[#allocation11 + $0x18] sm:$0xff]
      %v198 = vsel %vm139, %v192, 0
      %200 = vmatpush.msra.mxu0 0.0
      %201 = vmatpush.msra.mxu0 0.0
      %202 = vmatpush.msra.mxu0 0.0
      %203 = vmatpush.msra.mxu0 0.0
      %204 = vmatpush.msra.mxu0 0.0
      %205 = vmatpush.msra.mxu0 0.0
      %206 = vmatpush.msra.mxu0 0.0
      %207 = vmatpush.msra.mxu0 0.0
      %208 = vmatpush.msra.mxu0 0.0
      %209 = vmatpush.msra.mxu0 0.0
      %210 = vmatpush.msra.mxu0 0.0
      %211 = vmatpush.msra.mxu0 0.0
      %212 = vmatpush.msra.mxu0 %v196
      %213 = vmatpush.msra.mxu0 %v195
      %214 = vmatpush.msra.mxu0 %v194
      %215 = vmatpush.msra.mxu0 %v193
      %216 = vmatmul.f32.gmra.mxu0 %v198
      %v217 = vpop.f32.mrf.mxu0
      %v218 = vadd.f32 0.0, %v217
      %219 = vdwg.mxu0
      %v220 = vadd.f32 %v190, %v218
      %v221 = vsub.f32 0.0, %v163
      %v222 = vmul.f32 %v221, 1.442695
      %v223 = vpow.pop %v222
      %v224 = vadd.f32 %v223, 1.0
      %v225 = vrcp.pop %v224
      %v226 = vmul.f32 %v224, %v225
      %v227 = vsub.f32 1.0, %v226
      %v228 = vmul.f32 %v225, %v227
      %v229 = vadd.f32 %v225, %v228
      %vm230 = vweird.f32 %v224
      %vm231 = vweird.f32 %v225
      %vm232 = vmor %vm230, %vm231
      %v233 = vsel %vm232, %v225, %v229
      %v234 = vand.u32 2147483647, %v224
      %vm235 = vcmp.eq.f32.partialorder %v234, 8.507059e+37
      %v236 = vand.u32 %v224, 2147483648
      %v237 = vor.u32 1.1754944e-38, %v236
      %v238 = vsel %vm235, %v237, %v233
      %v239 = vmul.f32 1.0, %v238
      %v240 = vtanh.pop %v163
      %v241 = vld [vmem:[#allocation3] sm:$0x3]
      %243 = vrot.lane.b32.xlu0 %v241, 32
      %v244 = vpop.permute.xlu0 %243
      %v246 = vmul.f32 %v239, %v244
      %248 = vrot.lane.b32.xlu0 %v240, 64
      %v249 = vpop.permute.xlu0 %248
      %v251 = vmul.f32 %v239, %v249
      %253 = vrot.lane.b32.xlu0 %v251, 32
      %v254 = vpop.permute.xlu0 %253
      %v256 = vadd.f32 %v246, %v254
      %v257 = vtanh.pop %v256
      %259 = vrot.lane.b32.xlu0 %v257, 64
      %v260 = vpop.permute.xlu0 %259
      %v262 = vmul.f32 %v239, %v260
      %264 = vrot.lane.b32.xlu0 %v256, 96
      %v265 = vpop.permute.xlu0 %264
      %267 = vst.msk [vmem:[#allocation3] sm:$0x3] %vm87, %v265
      %269 = vrot.lane.b32.xlu0 %v262, 32
      %v270 = vpop.permute.xlu0 %269
      %272 = vst.msk [vmem:[#allocation2] sm:$0x3] %vm87, %v270
      %s273 = scalar_lea.vmem %s7, %s98
      %274 = vst.msk [vmem:[%s273] sm:$0x3] %vm87, %v270
      %v275 = vsub.f32 0.0, %v220
      %v276 = vmul.f32 %v275, 1.442695
      %v277 = vpow.pop %v276
      %v278 = vadd.f32 %v277, 1.0
      %v279 = vrcp.pop %v278
      %v280 = vmul.f32 %v278, %v279
      %v281 = vsub.f32 1.0, %v280
      %v282 = vmul.f32 %v279, %v281
      %v283 = vadd.f32 %v279, %v282
      %vm284 = vweird.f32 %v278
      %vm285 = vweird.f32 %v279
      %vm286 = vmor %vm284, %vm285
      %v287 = vsel %vm286, %v279, %v283
      %v288 = vand.u32 2147483647, %v278
      %vm289 = vcmp.eq.f32.partialorder %v288, 8.507059e+37
      %v290 = vand.u32 %v278, 2147483648
      %v291 = vor.u32 1.1754944e-38, %v290
      %v292 = vsel %vm289, %v291, %v287
      %v293 = vmul.f32 1.0, %v292
      %v294 = vtanh.pop %v220
      %v295 = vld [vmem:[#allocation5] sm:$0x3]
      %297 = vrot.lane.b32.xlu0 %v295, 32
      %v298 = vpop.permute.xlu0 %297
      %v300 = vmul.f32 %v293, %v298
      %302 = vrot.lane.b32.xlu0 %v294, 64
      %v303 = vpop.permute.xlu0 %302
      %v305 = vmul.f32 %v293, %v303
      %307 = vrot.lane.b32.xlu0 %v305, 32
      %v308 = vpop.permute.xlu0 %307
      %v310 = vadd.f32 %v300, %v308
      %v311 = vtanh.pop %v310
      %313 = vrot.lane.b32.xlu0 %v311, 64
      %v314 = vpop.permute.xlu0 %313
      %v316 = vmul.f32 %v293, %v314
      %318 = vrot.lane.b32.xlu0 %v310, 96
      %v319 = vpop.permute.xlu0 %318
      %321 = vst.msk [vmem:[#allocation5] sm:$0x3] %vm87, %v319
      %323 = vrot.lane.b32.xlu0 %v316, 32
      %v324 = vpop.permute.xlu0 %323
      %326 = vst.msk [vmem:[#allocation4] sm:$0x3] %vm87, %v324
      %s327 = scalar_lea.vmem %s8, %s102
      %328 = vst.msk [vmem:[%s327] sm:$0x3] %vm87, %v324
    $region50: #{new_model2_forward.8} parent=1 // loop_footer
      %s97 = sadd.s32 1, %s93
    $region51: #{new_model2_forward.8} parent=1 // loop_footer_branch
      %92 = sbr.rel target = $region47
    $region52: #{new_model2_forward.8} parent=1 // loop_exit
      _
    // Predicated region
    $region53: #{new_model2_forward.8} parent=1 // pred_check
      _
    $region54: #{new_model2_forward.8} parent=1 // pred_check_branch
      %330 = sbr.rel (0) target = $region56
    $region55: #{new_model2_forward.8} parent=1 // pred_region
      _
    $region56: #{new_model2_forward.8} parent=1 // pred_fallthru
      _
    // Predicated region
    $region57: #{new_model2_forward.8} parent=1 // pred_check
      _
    $region58: #{new_model2_forward.8} parent=1 // pred_check_branch
      %332 = sbr.rel (0) target = $region60
    $region59: #{new_model2_forward.8} parent=1 // pred_region
      _
    $region60: #{new_model2_forward.8} parent=1 // pred_fallthru
      _
    // Predicated region
    $region61: #{new_model2_forward.8} parent=1 // pred_check
      _
    $region62: #{new_model2_forward.8} parent=1 // pred_check_branch
      %334 = sbr.rel (0) target = $region64
    $region63: #{new_model2_forward.8} parent=1 // pred_region
      _
    $region64: #{new_model2_forward.8} parent=1 // pred_fallthru
      _
    // Predicated region
    $region65: #{new_model2_forward.8} parent=1 // pred_check
      _
    $region66: #{new_model2_forward.8} parent=1 // pred_check_branch
      %336 = sbr.rel (0) target = $region68
    $region67: #{new_model2_forward.8} parent=1 // pred_region
      _
    $region68: #{new_model2_forward.8} parent=1 // pred_fallthru
      _
    %337 = vsyncpa [#allocation7], 1
    %338 = vsyncpa [#allocation9], 1
    %339 = vsyncpa [#allocation12], 1

// kernel: new_model2_forward.6
$region0: #{new_model2_forward.6}
  #allocation0 [shape = 'u32[]', space=smem, size = 0x4, offset = 0x4, fixed_abs, tag = 'smem constant byte address 0x4 - core index']
  #allocation1 [shape = 'u32[72,128]{1,0:T(1,128)}', space=vmem, size = 0x9000, scoped, tag = 'internal scratch']
  %s0 = inlined_call_operand.vmem [shape: f32[82,8], index: 0, kind: input, shape index: {}]
  %s1 = inlined_call_operand.vmem [shape: f32[82,82], index: 1, kind: input, shape index: {}]
  %s2 = inlined_call_operand.hbm [shape: f32[8,24], index: 2, kind: input, shape index: {}]
  %s3 = inlined_call_operand.hbm [shape: f32[1,24], index: 3, kind: input, shape index: {}]
  %s4 = inlined_call_operand.vmem [shape: f32[8,8], index: 4, kind: input, shape index: {}]
  %s5 = inlined_call_operand.hbm [shape: f32[1,8], index: 5, kind: input, shape index: {}]
  %s6 = inlined_call_operand.hbm [shape: f32[1,8], index: 6, kind: input, shape index: {}]
  %s7 = inlined_call_operand.hbm [shape: f32[1,8], index: 7, kind: input, shape index: {}]
  %s8 = inlined_call_operand.vmem [shape: f32[82,8], index: 8, kind: output, shape index: {}]
  %s9 = sld [smem:[#allocation0]]
  $region62: #{new_model2_forward.6} parent=0
    _
  %s11 = ssub.s32 1, %s9
  %s12 = scalar_select 0, %s11, %s9
  $region1: #{new_model2_forward.6} parent=0
    #allocation2 [shape = 'u8[4096]{0}', space=vmem, size = 0x1000, scoped, tag = 'input window, operand 2, single buffered']
    #allocation3 [shape = 's32[1]{0}', space=sflag, size = 0x4, scoped, tag = 'scoped memory for new_model2_forward.6']
    #allocation4 [shape = 'u8[512]{0}', space=vmem, size = 0x400, scoped, tag = 'input window, operand 3, single buffered']
    #allocation5 [shape = 's32[1]{0}', space=sflag, size = 0x4, scoped, tag = 'scoped memory for new_model2_forward.6']
    #allocation6 [shape = 'u8[512]{0}', space=vmem, size = 0x400, scoped, tag = 'input window, operand 5, single buffered']
    #allocation7 [shape = 'u8[512]{0}', space=vmem, size = 0x400, scoped, tag = 'input window, operand 6, single buffered']
    #allocation8 [shape = 's32[1]{0}', space=sflag, size = 0x4, scoped, tag = 'scoped memory for new_model2_forward.6']
    #allocation9 [shape = 'u8[512]{0}', space=vmem, size = 0x400, scoped, tag = 'input window, operand 7, single buffered']
    %13 = vsyncpa [#allocation3], 0
    %14 = vsyncpa [#allocation5], 0
    %15 = vsyncpa [#allocation8], 0
    // Predicated region
    $region2: #{new_model2_forward.6} parent=1 // pred_check
      _
    $region3: #{new_model2_forward.6} parent=1 // pred_check_branch
      %17 = sbr.rel (0) target = $region5
    $region4: #{new_model2_forward.6} parent=1 // pred_region
      _
    $region5: #{new_model2_forward.6} parent=1 // pred_fallthru
      _
    // Predicated region
    $region6: #{new_model2_forward.6} parent=1 // pred_check
      _
    $region7: #{new_model2_forward.6} parent=1 // pred_check_branch
      %19 = sbr.rel (0) target = $region9
    $region8: #{new_model2_forward.6} parent=1 // pred_region
      _
    $region9: #{new_model2_forward.6} parent=1 // pred_fallthru
      _
    // Predicated region
    $region10: #{new_model2_forward.6} parent=1 // pred_check
      _
    $region11: #{new_model2_forward.6} parent=1 // pred_check_branch
      %21 = sbr.rel (0) target = $region13
    $region12: #{new_model2_forward.6} parent=1 // pred_region
      %23 = vsyncadd [#allocation3], 0
      %s25 = sshll.u32 %s2, 4
      %s26 = int_to_ptr.hbm [resolvable:$true] %s25
      %s27 = sshll.u32 [#allocation2], 4
      %s28 = int_to_ptr.vmem [resolvable:$true] %s27
      %30 = dma.hbm_to_vmem [thread:$0]  %s26, 128, %s28, [#allocation3]
    $region13: #{new_model2_forward.6} parent=1 // pred_fallthru
      _
    // Predicated region
    $region14: #{new_model2_forward.6} parent=1 // pred_check
      _
    $region15: #{new_model2_forward.6} parent=1 // pred_check_branch
      %32 = sbr.rel (0) target = $region17
    $region16: #{new_model2_forward.6} parent=1 // pred_region
      %34 = vsyncadd [#allocation5], 0
      %s36 = sshll.u32 %s3, 4
      %s37 = int_to_ptr.hbm [resolvable:$true] %s36
      %s38 = sshll.u32 [#allocation4], 4
      %s39 = int_to_ptr.vmem [resolvable:$true] %s38
      %41 = dma.hbm_to_vmem [thread:$0]  %s37, 16, %s39, [#allocation5]
    $region17: #{new_model2_forward.6} parent=1 // pred_fallthru
      _
    // Predicated region
    $region18: #{new_model2_forward.6} parent=1 // pred_check
      _
    $region19: #{new_model2_forward.6} parent=1 // pred_check_branch
      %43 = sbr.rel (0) target = $region21
    $region20: #{new_model2_forward.6} parent=1 // pred_region
      _
    $region21: #{new_model2_forward.6} parent=1 // pred_fallthru
      _
    // Predicated region
    $region22: #{new_model2_forward.6} parent=1 // pred_check
      _
    $region23: #{new_model2_forward.6} parent=1 // pred_check_branch
      %45 = sbr.rel (0) target = $region25
    $region24: #{new_model2_forward.6} parent=1 // pred_region
      %47 = vsyncadd [#allocation5], 0
      %s49 = sshll.u32 %s5, 4
      %s50 = int_to_ptr.hbm [resolvable:$true] %s49
      %s51 = sshll.u32 [#allocation6], 4
      %s52 = int_to_ptr.vmem [resolvable:$true] %s51
      %54 = dma.hbm_to_vmem [thread:$0]  %s50, 16, %s52, [#allocation5]
    $region25: #{new_model2_forward.6} parent=1 // pred_fallthru
      _
    // Predicated region
    $region26: #{new_model2_forward.6} parent=1 // pred_check
      _
    $region27: #{new_model2_forward.6} parent=1 // pred_check_branch
      %56 = sbr.rel (0) target = $region29
    $region28: #{new_model2_forward.6} parent=1 // pred_region
      %58 = vsyncadd [#allocation8], 0
      %s60 = sshll.u32 %s6, 4
      %s61 = int_to_ptr.hbm [resolvable:$true] %s60
      %s62 = sshll.u32 [#allocation7], 4
      %s63 = int_to_ptr.vmem [resolvable:$true] %s62
      %65 = dma.hbm_to_vmem [thread:$0]  %s61, 16, %s63, [#allocation8]
    $region29: #{new_model2_forward.6} parent=1 // pred_fallthru
      _
    // Predicated region
    $region30: #{new_model2_forward.6} parent=1 // pred_check
      _
    $region31: #{new_model2_forward.6} parent=1 // pred_check_branch
      %67 = sbr.rel (0) target = $region33
    $region32: #{new_model2_forward.6} parent=1 // pred_region
      %69 = vsyncadd [#allocation8], 0
      %s71 = sshll.u32 %s7, 4
      %s72 = int_to_ptr.hbm [resolvable:$true] %s71
      %s73 = sshll.u32 [#allocation9], 4
      %s74 = int_to_ptr.vmem [resolvable:$true] %s73
      %76 = dma.hbm_to_vmem [thread:$0]  %s72, 16, %s74, [#allocation8]
    $region33: #{new_model2_forward.6} parent=1 // pred_fallthru
      _
    // Predicated region
    $region34: #{new_model2_forward.6} parent=1 // pred_check
      _
    $region35: #{new_model2_forward.6} parent=1 // pred_check_branch
      %78 = sbr.rel (0) target = $region37
    $region36: #{new_model2_forward.6} parent=1 // pred_region
      %80 = dma.done [#allocation3], 128
    $region37: #{new_model2_forward.6} parent=1 // pred_fallthru
      _
    // Predicated region
    $region38: #{new_model2_forward.6} parent=1 // pred_check
      _
    $region39: #{new_model2_forward.6} parent=1 // pred_check_branch
      %82 = sbr.rel (0) target = $region41
    $region40: #{new_model2_forward.6} parent=1 // pred_region
      %84 = dma.done [#allocation5], 16
    $region41: #{new_model2_forward.6} parent=1 // pred_fallthru
      _
    // Predicated region
    $region42: #{new_model2_forward.6} parent=1 // pred_check
      _
    $region43: #{new_model2_forward.6} parent=1 // pred_check_branch
      %86 = sbr.rel (0) target = $region45
    $region44: #{new_model2_forward.6} parent=1 // pred_region
      %88 = dma.done [#allocation5], 16
    $region45: #{new_model2_forward.6} parent=1 // pred_fallthru
      _
    // Predicated region
    $region46: #{new_model2_forward.6} parent=1 // pred_check
      _
    $region47: #{new_model2_forward.6} parent=1 // pred_check_branch
      %90 = sbr.rel (0) target = $region49
    $region48: #{new_model2_forward.6} parent=1 // pred_region
      %92 = dma.done [#allocation8], 16
    $region49: #{new_model2_forward.6} parent=1 // pred_fallthru
      _
    // Predicated region
    $region50: #{new_model2_forward.6} parent=1 // pred_check
      _
    $region51: #{new_model2_forward.6} parent=1 // pred_check_branch
      %94 = sbr.rel (0) target = $region53
    $region52: #{new_model2_forward.6} parent=1 // pred_region
      %96 = dma.done [#allocation8], 16
    $region53: #{new_model2_forward.6} parent=1 // pred_fallthru
      _
    %v97 = vld [vmem:[%s0] sm:$0xff]
    %v98 = vld [vmem:[%s0 + $0x8] sm:$0xff]
    %v99 = vld [vmem:[%s0 + $0x10] sm:$0xff]
    %v100 = vld [vmem:[%s0 + $0x18] sm:$0xff]
    %v101 = vld [vmem:[%s0 + $0x20] sm:$0xff]
    %v102 = vld [vmem:[%s0 + $0x28] sm:$0xff]
    %v103 = vld [vmem:[%s0 + $0x30] sm:$0xff]
    %v104 = vld [vmem:[%s0 + $0x38] sm:$0xff]
    %v105 = vld [vmem:[%s0 + $0x40] sm:$0xff]
    %v106 = vld [vmem:[%s0 + $0x48] sm:$0xff]
    %v107 = vld [vmem:[%s0 + $0x50] sm:$0x3]
    %v108 = vld [vmem:[#allocation2] sm:$0xff]
    %v109 = vld [vmem:[#allocation4] sm:$0x1]
    %v111 = vperm.slane %v109, 0
    %vm113 = vcmask 64512
    %v115 = vsel %vm113, %v97, 0
    %v118 = vsel %vm113, %v98, 0
    %v121 = vsel %vm113, %v99, 0
    %v124 = vsel %vm113, %v100, 0
    %v127 = vsel %vm113, %v101, 0
    %v130 = vsel %vm113, %v102, 0
    %v133 = vsel %vm113, %v103, 0
    %v136 = vsel %vm113, %v104, 0
    %v139 = vsel %vm113, %v105, 0
    %v142 = vsel %vm113, %v106, 0
    %v145 = vsel %vm113, %v107, 0
    %147 = vmatpush.msra.mxu0 0.0
    %148 = vmatpush.msra.mxu0 0.0
    %149 = vmatpush.msra.mxu0 0.0
    %150 = vmatpush.msra.mxu0 0.0
    %151 = vmatpush.msra.mxu0 0.0
    %152 = vmatpush.msra.mxu0 0.0
    %153 = vmatpush.msra.mxu0 0.0
    %154 = vmatpush.msra.mxu0 0.0
    %155 = vmatpush.msra.mxu0 0.0
    %156 = vmatpush.msra.mxu0 0.0
    %157 = vmatpush.msra.mxu0 0.0
    %158 = vmatpush.msra.mxu0 0.0
    %159 = vmatpush.msra.mxu0 0.0
    %160 = vmatpush.msra.mxu0 0.0
    %161 = vmatpush.msra.mxu0 0.0
    %162 = vmatpush.msra.mxu0 %v108
    %163 = vmatmul.f32.gmra.mxu0 %v115
    %v164 = vpop.f32.mrf.mxu0
    %v165 = vadd.f32 %v111, %v164
    %166 = vmatmul.f32.gmra.mxu0 %v118
    %v167 = vpop.f32.mrf.mxu0
    %v168 = vadd.f32 %v111, %v167
    %169 = vmatmul.f32.gmra.mxu0 %v121
    %v170 = vpop.f32.mrf.mxu0
    %v171 = vadd.f32 %v111, %v170
    %172 = vmatmul.f32.gmra.mxu0 %v124
    %v173 = vpop.f32.mrf.mxu0
    %v174 = vadd.f32 %v111, %v173
    %175 = vmatmul.f32.gmra.mxu0 %v127
    %v176 = vpop.f32.mrf.mxu0
    %v177 = vadd.f32 %v111, %v176
    %178 = vmatmul.f32.gmra.mxu0 %v130
    %v179 = vpop.f32.mrf.mxu0
    %v180 = vadd.f32 %v111, %v179
    %181 = vmatmul.f32.gmra.mxu0 %v133
    %v182 = vpop.f32.mrf.mxu0
    %v183 = vadd.f32 %v111, %v182
    %184 = vmatmul.f32.gmra.mxu0 %v136
    %v185 = vpop.f32.mrf.mxu0
    %v186 = vadd.f32 %v111, %v185
    %187 = vmatmul.f32.gmra.mxu0 %v139
    %v188 = vpop.f32.mrf.mxu0
    %v189 = vadd.f32 %v111, %v188
    %190 = vmatmul.f32.gmra.mxu0 %v142
    %v191 = vpop.f32.mrf.mxu0
    %v192 = vadd.f32 %v111, %v191
    %193 = vmatmul.f32.gmra.mxu0 %v145
    %v194 = vpop.f32.mrf.mxu0
    %v195 = vadd.f32 %v111, %v194
    %196 = vdwg.mxu0
    %v197 = vld [vmem:[%s1] sm:$0xff]
    %v198 = vld [vmem:[%s1 + $0x8] sm:$0xff]
    %v199 = vld [vmem:[%s1 + $0x10] sm:$0xff]
    %v200 = vld [vmem:[%s1 + $0x18] sm:$0xff]
    %v201 = vld [vmem:[%s1 + $0x20] sm:$0xff]
    %v202 = vld [vmem:[%s1 + $0x28] sm:$0xff]
    %v203 = vld [vmem:[%s1 + $0x30] sm:$0xff]
    %v204 = vld [vmem:[%s1 + $0x38] sm:$0xff]
    %v205 = vld [vmem:[%s1 + $0x40] sm:$0xff]
    %v206 = vld [vmem:[%s1 + $0x48] sm:$0xff]
    %v207 = vld [vmem:[%s1 + $0x50] sm:$0x3]
    %219 = vrot.lane.b32.xlu0 %v165, 120
    %v220 = vpop.permute.xlu0 %219
    %221 = vrot.lane.b32.xlu0 %v168, 120
    %v222 = vpop.permute.xlu0 %221
    %223 = vrot.lane.b32.xlu0 %v171, 120
    %v224 = vpop.permute.xlu0 %223
    %225 = vrot.lane.b32.xlu0 %v174, 120
    %v226 = vpop.permute.xlu0 %225
    %227 = vrot.lane.b32.xlu0 %v177, 120
    %v228 = vpop.permute.xlu0 %227
    %229 = vrot.lane.b32.xlu0 %v180, 120
    %v230 = vpop.permute.xlu0 %229
    %231 = vrot.lane.b32.xlu0 %v183, 120
    %v232 = vpop.permute.xlu0 %231
    %233 = vrot.lane.b32.xlu0 %v186, 120
    %v234 = vpop.permute.xlu0 %233
    %235 = vrot.lane.b32.xlu0 %v189, 120
    %v236 = vpop.permute.xlu0 %235
    %237 = vrot.lane.b32.xlu0 %v192, 120
    %v238 = vpop.permute.xlu0 %237
    %239 = vrot.lane.b32.xlu0 %v195, 120
    %v240 = vpop.permute.xlu0 %239
    %vm241 = vcmask 31744
    %v242 = vsel %vm241, %v165, 0
    %v244 = vsel %vm241, %v168, 0
    %v246 = vsel %vm241, %v171, 0
    %v248 = vsel %vm241, %v174, 0
    %v250 = vsel %vm241, %v177, 0
    %v252 = vsel %vm241, %v180, 0
    %v254 = vsel %vm241, %v183, 0
    %v256 = vsel %vm241, %v186, 0
    %v258 = vsel %vm241, %v189, 0
    %v260 = vsel %vm241, %v192, 0
    %v262 = vsel %vm241, %v195, 0
    %v264 = vsel %vm241, %v220, 0
    %v266 = vsel %vm241, %v222, 0
    %v268 = vsel %vm241, %v224, 0
    %v270 = vsel %vm241, %v226, 0
    %v272 = vsel %vm241, %v228, 0
    %v274 = vsel %vm241, %v230, 0
    %v276 = vsel %vm241, %v232, 0
    %v278 = vsel %vm241, %v234, 0
    %v280 = vsel %vm241, %v236, 0
    %v282 = vsel %vm241, %v238, 0
    %v284 = vsel %vm241, %v240, 0
    %286 = vmatpush.xpose.msra.mxu0 0.0
    %287 = vmatpush.xpose.msra.mxu0 0.0
    %288 = vmatpush.xpose.msra.mxu0 0.0
    %289 = vmatpush.xpose.msra.mxu0 0.0
    %290 = vmatpush.xpose.msra.mxu0 0.0
    %291 = vmatpush.xpose.msra.mxu0 %v284
    %292 = vmatpush.xpose.msra.mxu0 %v282
    %293 = vmatpush.xpose.msra.mxu0 %v280
    %294 = vmatpush.xpose.msra.mxu0 %v278
    %295 = vmatpush.xpose.msra.mxu0 %v276
    %296 = vmatpush.xpose.msra.mxu0 %v274
    %297 = vmatpush.xpose.msra.mxu0 %v272
    %298 = vmatpush.xpose.msra.mxu0 %v270
    %299 = vmatpush.xpose.msra.mxu0 %v268
    %300 = vmatpush.xpose.msra.mxu0 %v266
    %301 = vmatpush.xpose.msra.mxu0 %v264
    %302 = vmatmul.f32.gmra.mxu0 %v242
    %v303 = vpop.f32.mrf.mxu0
    %v304 = vadd.f32 0.0, %v303
    %305 = vmatmul.f32.gmra.mxu0 %v244
    %v306 = vpop.f32.mrf.mxu0
    %v307 = vadd.f32 0.0, %v306
    %308 = vmatmul.f32.gmra.mxu0 %v246
    %v309 = vpop.f32.mrf.mxu0
    %v310 = vadd.f32 0.0, %v309
    %311 = vmatmul.f32.gmra.mxu0 %v248
    %v312 = vpop.f32.mrf.mxu0
    %v313 = vadd.f32 0.0, %v312
    %314 = vmatmul.f32.gmra.mxu0 %v250
    %v315 = vpop.f32.mrf.mxu0
    %v316 = vadd.f32 0.0, %v315
    %317 = vmatmul.f32.gmra.mxu0 %v252
    %v318 = vpop.f32.mrf.mxu0
    %v319 = vadd.f32 0.0, %v318
    %320 = vmatmul.f32.gmra.mxu0 %v254
    %v321 = vpop.f32.mrf.mxu0
    %v322 = vadd.f32 0.0, %v321
    %323 = vmatmul.f32.gmra.mxu0 %v256
    %v324 = vpop.f32.mrf.mxu0
    %v325 = vadd.f32 0.0, %v324
    %326 = vmatmul.f32.gmra.mxu0 %v258
    %v327 = vpop.f32.mrf.mxu0
    %v328 = vadd.f32 0.0, %v327
    %329 = vmatmul.f32.gmra.mxu0 %v260
    %v330 = vpop.f32.mrf.mxu0
    %v331 = vadd.f32 0.0, %v330
    %332 = vmatmul.f32.gmra.mxu0 %v262
    %v333 = vpop.f32.mrf.mxu0
    %v334 = vadd.f32 0.0, %v333
    %335 = vdwg.mxu0
    %v336 = vmul.f32 %v304, 0.5
    %v337 = vmul.f32 %v307, 0.5
    %v338 = vmul.f32 %v310, 0.5
    %v339 = vmul.f32 %v313, 0.5
    %v340 = vmul.f32 %v316, 0.5
    %v341 = vmul.f32 %v319, 0.5
    %v342 = vmul.f32 %v322, 0.5
    %v343 = vmul.f32 %v325, 0.5
    %v344 = vmul.f32 %v328, 0.5
    %v345 = vmul.f32 %v331, 0.5
    %v346 = vmul.f32 %v334, 0.5
    %v347 = vadd.f32 %v336, %v197
    %v348 = vadd.f32 %v337, %v198
    %v349 = vadd.f32 %v338, %v199
    %v350 = vadd.f32 %v339, %v200
    %v351 = vadd.f32 %v340, %v201
    %v352 = vadd.f32 %v341, %v202
    %v353 = vadd.f32 %v342, %v203
    %v354 = vadd.f32 %v343, %v204
    %v355 = vadd.f32 %v344, %v205
    %v356 = vadd.f32 %v345, %v206
    %v357 = vadd.f32 %v346, %v207
    %vm358 = vcmask 670720
    %v359 = vsel %vm358, %v347, -inf
    %360 = vmax.xlane.f32.xlu0 %v359
    %v361 = vpop.xlane.xlu0 %360
    %v362 = vsel %vm358, %v348, -inf
    %363 = vmax.xlane.f32.xlu0 %v362
    %v364 = vpop.xlane.xlu0 %363
    %v365 = vsel %vm358, %v349, -inf
    %366 = vmax.xlane.f32.xlu0 %v365
    %v367 = vpop.xlane.xlu0 %366
    %v368 = vsel %vm358, %v350, -inf
    %369 = vmax.xlane.f32.xlu0 %v368
    %v370 = vpop.xlane.xlu0 %369
    %v371 = vsel %vm358, %v351, -inf
    %372 = vmax.xlane.f32.xlu0 %v371
    %v373 = vpop.xlane.xlu0 %372
    %v374 = vsel %vm358, %v352, -inf
    %375 = vmax.xlane.f32.xlu0 %v374
    %v376 = vpop.xlane.xlu0 %375
    %v377 = vsel %vm358, %v353, -inf
    %378 = vmax.xlane.f32.xlu0 %v377
    %v379 = vpop.xlane.xlu0 %378
    %v380 = vsel %vm358, %v354, -inf
    %381 = vmax.xlane.f32.xlu0 %v380
    %v382 = vpop.xlane.xlu0 %381
    %v383 = vsel %vm358, %v355, -inf
    %384 = vmax.xlane.f32.xlu0 %v383
    %v385 = vpop.xlane.xlu0 %384
    %v386 = vsel %vm358, %v356, -inf
    %387 = vmax.xlane.f32.xlu0 %v386
    %v388 = vpop.xlane.xlu0 %387
    %vm389 = vcmask 664576
    %v390 = vsel %vm389, %v357, -inf
    %391 = vmax.xlane.f32.xlu0 %v390
    %v392 = vpop.xlane.xlu0 %391
    %v393 = vsub.f32 %v347, %v361
    %v394 = vsub.f32 %v348, %v364
    %v395 = vsub.f32 %v349, %v367
    %v396 = vsub.f32 %v350, %v370
    %v397 = vsub.f32 %v351, %v373
    %v398 = vsub.f32 %v352, %v376
    %v399 = vsub.f32 %v353, %v379
    %v400 = vsub.f32 %v354, %v382
    %v401 = vsub.f32 %v355, %v385
    %v402 = vsub.f32 %v356, %v388
    %v403 = vsub.f32 %v357, %v392
    %v404 = vmul.f32 %v393, 1.442695
    %v405 = vpow.pop %v404
    %v406 = vmul.f32 %v394, 1.442695
    %v407 = vpow.pop %v406
    %v408 = vmul.f32 %v395, 1.442695
    %v409 = vpow.pop %v408
    %v410 = vmul.f32 %v396, 1.442695
    %v411 = vpow.pop %v410
    %v412 = vmul.f32 %v397, 1.442695
    %v413 = vpow.pop %v412
    %v414 = vmul.f32 %v398, 1.442695
    %v415 = vpow.pop %v414
    %v416 = vmul.f32 %v399, 1.442695
    %v417 = vpow.pop %v416
    %v418 = vmul.f32 %v400, 1.442695
    %v419 = vpow.pop %v418
    %v420 = vmul.f32 %v401, 1.442695
    %v421 = vpow.pop %v420
    %v422 = vmul.f32 %v402, 1.442695
    %v423 = vpow.pop %v422
    %v424 = vmul.f32 %v403, 1.442695
    %v425 = vpow.pop %v424
    %v426 = vsel %vm358, %v405, 0.0
    %427 = vadd.xlane.f32.xlu0 %v426
    %v428 = vpop.xlane.xlu0 %427
    %v429 = vsel %vm358, %v407, 0.0
    %430 = vadd.xlane.f32.xlu0 %v429
    %v431 = vpop.xlane.xlu0 %430
    %v432 = vsel %vm358, %v409, 0.0
    %433 = vadd.xlane.f32.xlu0 %v432
    %v434 = vpop.xlane.xlu0 %433
    %v435 = vsel %vm358, %v411, 0.0
    %436 = vadd.xlane.f32.xlu0 %v435
    %v437 = vpop.xlane.xlu0 %436
    %v438 = vsel %vm358, %v413, 0.0
    %439 = vadd.xlane.f32.xlu0 %v438
    %v440 = vpop.xlane.xlu0 %439
    %v441 = vsel %vm358, %v415, 0.0
    %442 = vadd.xlane.f32.xlu0 %v441
    %v443 = vpop.xlane.xlu0 %442
    %v444 = vsel %vm358, %v417, 0.0
    %445 = vadd.xlane.f32.xlu0 %v444
    %v446 = vpop.xlane.xlu0 %445
    %v447 = vsel %vm358, %v419, 0.0
    %448 = vadd.xlane.f32.xlu0 %v447
    %v449 = vpop.xlane.xlu0 %448
    %v450 = vsel %vm358, %v421, 0.0
    %451 = vadd.xlane.f32.xlu0 %v450
    %v452 = vpop.xlane.xlu0 %451
    %v453 = vsel %vm358, %v423, 0.0
    %454 = vadd.xlane.f32.xlu0 %v453
    %v455 = vpop.xlane.xlu0 %454
    %v456 = vsel %vm389, %v425, 0.0
    %457 = vadd.xlane.f32.xlu0 %v456
    %v458 = vpop.xlane.xlu0 %457
    %v459 = vrcp.pop %v428
    %v460 = vmul.f32 %v428, %v459
    %v461 = vsub.f32 1.0, %v460
    %v462 = vmul.f32 %v459, %v461
    %v463 = vadd.f32 %v459, %v462
    %vm464 = vweird.f32 %v428
    %vm465 = vweird.f32 %v459
    %vm466 = vmor %vm464, %vm465
    %v467 = vsel %vm466, %v459, %v463
    %v468 = vand.u32 2147483647, %v428
    %vm469 = vcmp.eq.f32.partialorder %v468, 8.507059e+37
    %v470 = vand.u32 %v428, 2147483648
    %v471 = vor.u32 1.1754944e-38, %v470
    %v472 = vsel %vm469, %v471, %v467
    %v473 = vmul.f32 %v405, %v472
    %v474 = vrcp.pop %v431
    %v475 = vmul.f32 %v431, %v474
    %v476 = vsub.f32 1.0, %v475
    %v477 = vmul.f32 %v474, %v476
    %v478 = vadd.f32 %v474, %v477
    %vm479 = vweird.f32 %v431
    %vm480 = vweird.f32 %v474
    %vm481 = vmor %vm479, %vm480
    %v482 = vsel %vm481, %v474, %v478
    %v483 = vand.u32 2147483647, %v431
    %vm484 = vcmp.eq.f32.partialorder %v483, 8.507059e+37
    %v485 = vand.u32 %v431, 2147483648
    %v486 = vor.u32 1.1754944e-38, %v485
    %v487 = vsel %vm484, %v486, %v482
    %v488 = vmul.f32 %v407, %v487
    %v489 = vrcp.pop %v434
    %v490 = vmul.f32 %v434, %v489
    %v491 = vsub.f32 1.0, %v490
    %v492 = vmul.f32 %v489, %v491
    %v493 = vadd.f32 %v489, %v492
    %vm494 = vweird.f32 %v434
    %vm495 = vweird.f32 %v489
    %vm496 = vmor %vm494, %vm495
    %v497 = vsel %vm496, %v489, %v493
    %v498 = vand.u32 2147483647, %v434
    %vm499 = vcmp.eq.f32.partialorder %v498, 8.507059e+37
    %v500 = vand.u32 %v434, 2147483648
    %v501 = vor.u32 1.1754944e-38, %v500
    %v502 = vsel %vm499, %v501, %v497
    %v503 = vmul.f32 %v409, %v502
    %v504 = vrcp.pop %v437
    %v505 = vmul.f32 %v437, %v504
    %v506 = vsub.f32 1.0, %v505
    %v507 = vmul.f32 %v504, %v506
    %v508 = vadd.f32 %v504, %v507
    %vm509 = vweird.f32 %v437
    %vm510 = vweird.f32 %v504
    %vm511 = vmor %vm509, %vm510
    %v512 = vsel %vm511, %v504, %v508
    %v513 = vand.u32 2147483647, %v437
    %vm514 = vcmp.eq.f32.partialorder %v513, 8.507059e+37
    %v515 = vand.u32 %v437, 2147483648
    %v516 = vor.u32 1.1754944e-38, %v515
    %v517 = vsel %vm514, %v516, %v512
    %v518 = vmul.f32 %v411, %v517
    %v519 = vrcp.pop %v440
    %v520 = vmul.f32 %v440, %v519
    %v521 = vsub.f32 1.0, %v520
    %v522 = vmul.f32 %v519, %v521
    %v523 = vadd.f32 %v519, %v522
    %vm524 = vweird.f32 %v440
    %vm525 = vweird.f32 %v519
    %vm526 = vmor %vm524, %vm525
    %v527 = vsel %vm526, %v519, %v523
    %v528 = vand.u32 2147483647, %v440
    %vm529 = vcmp.eq.f32.partialorder %v528, 8.507059e+37
    %v530 = vand.u32 %v440, 2147483648
    %v531 = vor.u32 1.1754944e-38, %v530
    %v532 = vsel %vm529, %v531, %v527
    %v533 = vmul.f32 %v413, %v532
    %v534 = vrcp.pop %v443
    %v535 = vmul.f32 %v443, %v534
    %v536 = vsub.f32 1.0, %v535
    %v537 = vmul.f32 %v534, %v536
    %v538 = vadd.f32 %v534, %v537
    %vm539 = vweird.f32 %v443
    %vm540 = vweird.f32 %v534
    %vm541 = vmor %vm539, %vm540
    %v542 = vsel %vm541, %v534, %v538
    %v543 = vand.u32 2147483647, %v443
    %vm544 = vcmp.eq.f32.partialorder %v543, 8.507059e+37
    %v545 = vand.u32 %v443, 2147483648
    %v546 = vor.u32 1.1754944e-38, %v545
    %v547 = vsel %vm544, %v546, %v542
    %v548 = vmul.f32 %v415, %v547
    %v549 = vrcp.pop %v446
    %v550 = vmul.f32 %v446, %v549
    %v551 = vsub.f32 1.0, %v550
    %v552 = vmul.f32 %v549, %v551
    %v553 = vadd.f32 %v549, %v552
    %vm554 = vweird.f32 %v446
    %vm555 = vweird.f32 %v549
    %vm556 = vmor %vm554, %vm555
    %v557 = vsel %vm556, %v549, %v553
    %v558 = vand.u32 2147483647, %v446
    %vm559 = vcmp.eq.f32.partialorder %v558, 8.507059e+37
    %v560 = vand.u32 %v446, 2147483648
    %v561 = vor.u32 1.1754944e-38, %v560
    %v562 = vsel %vm559, %v561, %v557
    %v563 = vmul.f32 %v417, %v562
    %v564 = vrcp.pop %v449
    %v565 = vmul.f32 %v449, %v564
    %v566 = vsub.f32 1.0, %v565
    %v567 = vmul.f32 %v564, %v566
    %v568 = vadd.f32 %v564, %v567
    %vm569 = vweird.f32 %v449
    %vm570 = vweird.f32 %v564
    %vm571 = vmor %vm569, %vm570
    %v572 = vsel %vm571, %v564, %v568
    %v573 = vand.u32 2147483647, %v449
    %vm574 = vcmp.eq.f32.partialorder %v573, 8.507059e+37
    %v575 = vand.u32 %v449, 2147483648
    %v576 = vor.u32 1.1754944e-38, %v575
    %v577 = vsel %vm574, %v576, %v572
    %v578 = vmul.f32 %v419, %v577
    %v579 = vrcp.pop %v452
    %v580 = vmul.f32 %v452, %v579
    %v581 = vsub.f32 1.0, %v580
    %v582 = vmul.f32 %v579, %v581
    %v583 = vadd.f32 %v579, %v582
    %vm584 = vweird.f32 %v452
    %vm585 = vweird.f32 %v579
    %vm586 = vmor %vm584, %vm585
    %v587 = vsel %vm586, %v579, %v583
    %v588 = vand.u32 2147483647, %v452
    %vm589 = vcmp.eq.f32.partialorder %v588, 8.507059e+37
    %v590 = vand.u32 %v452, 2147483648
    %v591 = vor.u32 1.1754944e-38, %v590
    %v592 = vsel %vm589, %v591, %v587
    %v593 = vmul.f32 %v421, %v592
    %v594 = vrcp.pop %v455
    %v595 = vmul.f32 %v455, %v594
    %v596 = vsub.f32 1.0, %v595
    %v597 = vmul.f32 %v594, %v596
    %v598 = vadd.f32 %v594, %v597
    %vm599 = vweird.f32 %v455
    %vm600 = vweird.f32 %v594
    %vm601 = vmor %vm599, %vm600
    %v602 = vsel %vm601, %v594, %v598
    %v603 = vand.u32 2147483647, %v455
    %vm604 = vcmp.eq.f32.partialorder %v603, 8.507059e+37
    %v605 = vand.u32 %v455, 2147483648
    %v606 = vor.u32 1.1754944e-38, %v605
    %v607 = vsel %vm604, %v606, %v602
    %v608 = vmul.f32 %v423, %v607
    %v609 = vrcp.pop %v458
    %v610 = vmul.f32 %v458, %v609
    %v611 = vsub.f32 1.0, %v610
    %v612 = vmul.f32 %v609, %v611
    %v613 = vadd.f32 %v609, %v612
    %vm614 = vweird.f32 %v458
    %vm615 = vweird.f32 %v609
    %vm616 = vmor %vm614, %vm615
    %v617 = vsel %vm616, %v609, %v613
    %v618 = vand.u32 2147483647, %v458
    %vm619 = vcmp.eq.f32.partialorder %v618, 8.507059e+37
    %v620 = vand.u32 %v458, 2147483648
    %v621 = vor.u32 1.1754944e-38, %v620
    %v622 = vsel %vm619, %v621, %v617
    %v623 = vmul.f32 %v425, %v622
    %624 = vrot.lane.b32.xlu0 %v165, 112
    %v625 = vpop.permute.xlu0 %624
    %626 = vrot.lane.b32.xlu0 %v168, 112
    %v627 = vpop.permute.xlu0 %626
    %628 = vrot.lane.b32.xlu0 %v171, 112
    %v629 = vpop.permute.xlu0 %628
    %630 = vrot.lane.b32.xlu0 %v174, 112
    %v631 = vpop.permute.xlu0 %630
    %632 = vrot.lane.b32.xlu0 %v177, 112
    %v633 = vpop.permute.xlu0 %632
    %634 = vrot.lane.b32.xlu0 %v180, 112
    %v635 = vpop.permute.xlu0 %634
    %636 = vrot.lane.b32.xlu0 %v183, 112
    %v637 = vpop.permute.xlu0 %636
    %638 = vrot.lane.b32.xlu0 %v186, 112
    %v639 = vpop.permute.xlu0 %638
    %640 = vrot.lane.b32.xlu0 %v189, 112
    %v641 = vpop.permute.xlu0 %640
    %642 = vrot.lane.b32.xlu0 %v192, 112
    %v643 = vpop.permute.xlu0 %642
    %644 = vrot.lane.b32.xlu0 %v195, 112
    %v645 = vpop.permute.xlu0 %644
    %v657 = vsel %vm358, %v473, 0
    %v660 = vsel %vm358, %v488, 0
    %v663 = vsel %vm358, %v503, 0
    %v666 = vsel %vm358, %v518, 0
    %v669 = vsel %vm358, %v533, 0
    %v672 = vsel %vm358, %v548, 0
    %v675 = vsel %vm358, %v563, 0
    %v678 = vsel %vm358, %v578, 0
    %v681 = vsel %vm358, %v593, 0
    %v684 = vsel %vm358, %v608, 0
    %v687 = vsel %vm358, %v623, 0
    %vm689 = vcmask 1041408
    %v690 = vsel %vm689, %v645, 0
    %692 = vmatpush.msra.mxu0 0.0
    %693 = vmatpush.msra.mxu0 0.0
    %694 = vmatpush.msra.mxu0 0.0
    %695 = vmatpush.msra.mxu0 0.0
    %696 = vmatpush.msra.mxu0 0.0
    %697 = vmatpush.msra.mxu0 %v690
    %698 = vmatpush.msra.mxu0 %v643
    %699 = vmatpush.msra.mxu0 %v641
    %700 = vmatpush.msra.mxu0 %v639
    %701 = vmatpush.msra.mxu0 %v637
    %702 = vmatpush.msra.mxu0 %v635
    %703 = vmatpush.msra.mxu0 %v633
    %704 = vmatpush.msra.mxu0 %v631
    %705 = vmatpush.msra.mxu0 %v629
    %706 = vmatpush.msra.mxu0 %v627
    %707 = vmatpush.msra.mxu0 %v625
    %708 = vmatmul.f32.gmra.mxu0 %v657
    %v709 = vpop.f32.mrf.mxu0
    %v710 = vadd.f32 0.0, %v709
    %711 = vmatmul.f32.gmra.mxu0 %v660
    %v712 = vpop.f32.mrf.mxu0
    %v713 = vadd.f32 0.0, %v712
    %714 = vmatmul.f32.gmra.mxu0 %v663
    %v715 = vpop.f32.mrf.mxu0
    %v716 = vadd.f32 0.0, %v715
    %717 = vmatmul.f32.gmra.mxu0 %v666
    %v718 = vpop.f32.mrf.mxu0
    %v719 = vadd.f32 0.0, %v718
    %720 = vmatmul.f32.gmra.mxu0 %v669
    %v721 = vpop.f32.mrf.mxu0
    %v722 = vadd.f32 0.0, %v721
    %723 = vmatmul.f32.gmra.mxu0 %v672
    %v724 = vpop.f32.mrf.mxu0
    %v725 = vadd.f32 0.0, %v724
    %726 = vmatmul.f32.gmra.mxu0 %v675
    %v727 = vpop.f32.mrf.mxu0
    %v728 = vadd.f32 0.0, %v727
    %729 = vmatmul.f32.gmra.mxu0 %v678
    %v730 = vpop.f32.mrf.mxu0
    %v731 = vadd.f32 0.0, %v730
    %732 = vmatmul.f32.gmra.mxu0 %v681
    %v733 = vpop.f32.mrf.mxu0
    %v734 = vadd.f32 0.0, %v733
    %735 = vmatmul.f32.gmra.mxu0 %v684
    %v736 = vpop.f32.mrf.mxu0
    %v737 = vadd.f32 0.0, %v736
    %738 = vmatmul.f32.gmra.mxu0 %v687
    %v739 = vpop.f32.mrf.mxu0
    %v740 = vadd.f32 0.0, %v739
    %741 = vdwg.mxu0
    %742 = vrot.lane.b32.xlu0 %v165, 124
    %v743 = vpop.permute.xlu0 %742
    %744 = vrot.lane.b32.xlu0 %v168, 124
    %v745 = vpop.permute.xlu0 %744
    %746 = vrot.lane.b32.xlu0 %v171, 124
    %v747 = vpop.permute.xlu0 %746
    %748 = vrot.lane.b32.xlu0 %v174, 124
    %v749 = vpop.permute.xlu0 %748
    %750 = vrot.lane.b32.xlu0 %v177, 124
    %v751 = vpop.permute.xlu0 %750
    %752 = vrot.lane.b32.xlu0 %v180, 124
    %v753 = vpop.permute.xlu0 %752
    %754 = vrot.lane.b32.xlu0 %v183, 124
    %v755 = vpop.permute.xlu0 %754
    %756 = vrot.lane.b32.xlu0 %v186, 124
    %v757 = vpop.permute.xlu0 %756
    %758 = vrot.lane.b32.xlu0 %v189, 124
    %v759 = vpop.permute.xlu0 %758
    %760 = vrot.lane.b32.xlu0 %v192, 124
    %v761 = vpop.permute.xlu0 %760
    %762 = vrot.lane.b32.xlu0 %v195, 124
    %v763 = vpop.permute.xlu0 %762
    %764 = vrot.lane.b32.xlu0 %v165, 116
    %v765 = vpop.permute.xlu0 %764
    %766 = vrot.lane.b32.xlu0 %v168, 116
    %v767 = vpop.permute.xlu0 %766
    %768 = vrot.lane.b32.xlu0 %v171, 116
    %v769 = vpop.permute.xlu0 %768
    %770 = vrot.lane.b32.xlu0 %v174, 116
    %v771 = vpop.permute.xlu0 %770
    %772 = vrot.lane.b32.xlu0 %v177, 116
    %v773 = vpop.permute.xlu0 %772
    %774 = vrot.lane.b32.xlu0 %v180, 116
    %v775 = vpop.permute.xlu0 %774
    %776 = vrot.lane.b32.xlu0 %v183, 116
    %v777 = vpop.permute.xlu0 %776
    %778 = vrot.lane.b32.xlu0 %v186, 116
    %v779 = vpop.permute.xlu0 %778
    %780 = vrot.lane.b32.xlu0 %v189, 116
    %v781 = vpop.permute.xlu0 %780
    %782 = vrot.lane.b32.xlu0 %v192, 116
    %v783 = vpop.permute.xlu0 %782
    %784 = vrot.lane.b32.xlu0 %v195, 116
    %v785 = vpop.permute.xlu0 %784
    %v786 = vsel %vm241, %v743, 0
    %v788 = vsel %vm241, %v745, 0
    %v790 = vsel %vm241, %v747, 0
    %v792 = vsel %vm241, %v749, 0
    %v794 = vsel %vm241, %v751, 0
    %v796 = vsel %vm241, %v753, 0
    %v798 = vsel %vm241, %v755, 0
    %v800 = vsel %vm241, %v757, 0
    %v802 = vsel %vm241, %v759, 0
    %v804 = vsel %vm241, %v761, 0
    %v806 = vsel %vm241, %v763, 0
    %v808 = vsel %vm241, %v765, 0
    %v810 = vsel %vm241, %v767, 0
    %v812 = vsel %vm241, %v769, 0
    %v814 = vsel %vm241, %v771, 0
    %v816 = vsel %vm241, %v773, 0
    %v818 = vsel %vm241, %v775, 0
    %v820 = vsel %vm241, %v777, 0
    %v822 = vsel %vm241, %v779, 0
    %v824 = vsel %vm241, %v781, 0
    %v826 = vsel %vm241, %v783, 0
    %v828 = vsel %vm241, %v785, 0
    %830 = vmatpush.xpose.msra.mxu0 0.0
    %831 = vmatpush.xpose.msra.mxu0 0.0
    %832 = vmatpush.xpose.msra.mxu0 0.0
    %833 = vmatpush.xpose.msra.mxu0 0.0
    %834 = vmatpush.xpose.msra.mxu0 0.0
    %835 = vmatpush.xpose.msra.mxu0 %v828
    %836 = vmatpush.xpose.msra.mxu0 %v826
    %837 = vmatpush.xpose.msra.mxu0 %v824
    %838 = vmatpush.xpose.msra.mxu0 %v822
    %839 = vmatpush.xpose.msra.mxu0 %v820
    %840 = vmatpush.xpose.msra.mxu0 %v818
    %841 = vmatpush.xpose.msra.mxu0 %v816
    %842 = vmatpush.xpose.msra.mxu0 %v814
    %843 = vmatpush.xpose.msra.mxu0 %v812
    %844 = vmatpush.xpose.msra.mxu0 %v810
    %845 = vmatpush.xpose.msra.mxu0 %v808
    %846 = vmatmul.f32.gmra.mxu0 %v786
    %v847 = vpop.f32.mrf.mxu0
    %v848 = vadd.f32 0.0, %v847
    %849 = vmatmul.f32.gmra.mxu0 %v788
    %v850 = vpop.f32.mrf.mxu0
    %v851 = vadd.f32 0.0, %v850
    %852 = vmatmul.f32.gmra.mxu0 %v790
    %v853 = vpop.f32.mrf.mxu0
    %v854 = vadd.f32 0.0, %v853
    %855 = vmatmul.f32.gmra.mxu0 %v792
    %v856 = vpop.f32.mrf.mxu0
    %v857 = vadd.f32 0.0, %v856
    %858 = vmatmul.f32.gmra.mxu0 %v794
    %v859 = vpop.f32.mrf.mxu0
    %v860 = vadd.f32 0.0, %v859
    %861 = vmatmul.f32.gmra.mxu0 %v796
    %v862 = vpop.f32.mrf.mxu0
    %v863 = vadd.f32 0.0, %v862
    %864 = vmatmul.f32.gmra.mxu0 %v798
    %v865 = vpop.f32.mrf.mxu0
    %v866 = vadd.f32 0.0, %v865
    %867 = vmatmul.f32.gmra.mxu0 %v800
    %v868 = vpop.f32.mrf.mxu0
    %v869 = vadd.f32 0.0, %v868
    %870 = vmatmul.f32.gmra.mxu0 %v802
    %v871 = vpop.f32.mrf.mxu0
    %v872 = vadd.f32 0.0, %v871
    %873 = vmatmul.f32.gmra.mxu0 %v804
    %v874 = vpop.f32.mrf.mxu0
    %v875 = vadd.f32 0.0, %v874
    %876 = vmatmul.f32.gmra.mxu0 %v806
    %v877 = vpop.f32.mrf.mxu0
    %v878 = vadd.f32 0.0, %v877
    %879 = vdwg.mxu0
    %v880 = vmul.f32 %v848, 0.5
    %v881 = vmul.f32 %v851, 0.5
    %v882 = vmul.f32 %v854, 0.5
    %v883 = vmul.f32 %v857, 0.5
    %v884 = vmul.f32 %v860, 0.5
    %v885 = vmul.f32 %v863, 0.5
    %v886 = vmul.f32 %v866, 0.5
    %v887 = vmul.f32 %v869, 0.5
    %v888 = vmul.f32 %v872, 0.5
    %v889 = vmul.f32 %v875, 0.5
    %v890 = vmul.f32 %v878, 0.5
    %v891 = vadd.f32 %v880, %v197
    %v892 = vadd.f32 %v881, %v198
    %v893 = vadd.f32 %v882, %v199
    %v894 = vadd.f32 %v883, %v200
    %v895 = vadd.f32 %v884, %v201
    %v896 = vadd.f32 %v885, %v202
    %v897 = vadd.f32 %v886, %v203
    %v898 = vadd.f32 %v887, %v204
    %v899 = vadd.f32 %v888, %v205
    %v900 = vadd.f32 %v889, %v206
    %v901 = vadd.f32 %v890, %v207
    %v902 = vsel %vm358, %v891, -inf
    %903 = vmax.xlane.f32.xlu0 %v902
    %v904 = vpop.xlane.xlu0 %903
    %v905 = vsel %vm358, %v892, -inf
    %906 = vmax.xlane.f32.xlu0 %v905
    %v907 = vpop.xlane.xlu0 %906
    %v908 = vsel %vm358, %v893, -inf
    %909 = vmax.xlane.f32.xlu0 %v908
    %v910 = vpop.xlane.xlu0 %909
    %v911 = vsel %vm358, %v894, -inf
    %912 = vmax.xlane.f32.xlu0 %v911
    %v913 = vpop.xlane.xlu0 %912
    %v914 = vsel %vm358, %v895, -inf
    %915 = vmax.xlane.f32.xlu0 %v914
    %v916 = vpop.xlane.xlu0 %915
    %v917 = vsel %vm358, %v896, -inf
    %918 = vmax.xlane.f32.xlu0 %v917
    %v919 = vpop.xlane.xlu0 %918
    %v920 = vsel %vm358, %v897, -inf
    %921 = vmax.xlane.f32.xlu0 %v920
    %v922 = vpop.xlane.xlu0 %921
    %v923 = vsel %vm358, %v898, -inf
    %924 = vmax.xlane.f32.xlu0 %v923
    %v925 = vpop.xlane.xlu0 %924
    %v926 = vsel %vm358, %v899, -inf
    %927 = vmax.xlane.f32.xlu0 %v926
    %v928 = vpop.xlane.xlu0 %927
    %v929 = vsel %vm358, %v900, -inf
    %930 = vmax.xlane.f32.xlu0 %v929
    %v931 = vpop.xlane.xlu0 %930
    %v932 = vsel %vm389, %v901, -inf
    %933 = vmax.xlane.f32.xlu0 %v932
    %v934 = vpop.xlane.xlu0 %933
    %v935 = vsub.f32 %v891, %v904
    %v936 = vsub.f32 %v892, %v907
    %v937 = vsub.f32 %v893, %v910
    %v938 = vsub.f32 %v894, %v913
    %v939 = vsub.f32 %v895, %v916
    %v940 = vsub.f32 %v896, %v919
    %v941 = vsub.f32 %v897, %v922
    %v942 = vsub.f32 %v898, %v925
    %v943 = vsub.f32 %v899, %v928
    %v944 = vsub.f32 %v900, %v931
    %v945 = vsub.f32 %v901, %v934
    %v946 = vmul.f32 %v935, 1.442695
    %v947 = vpow.pop %v946
    %v948 = vmul.f32 %v936, 1.442695
    %v949 = vpow.pop %v948
    %v950 = vmul.f32 %v937, 1.442695
    %v951 = vpow.pop %v950
    %v952 = vmul.f32 %v938, 1.442695
    %v953 = vpow.pop %v952
    %v954 = vmul.f32 %v939, 1.442695
    %v955 = vpow.pop %v954
    %v956 = vmul.f32 %v940, 1.442695
    %v957 = vpow.pop %v956
    %v958 = vmul.f32 %v941, 1.442695
    %v959 = vpow.pop %v958
    %v960 = vmul.f32 %v942, 1.442695
    %v961 = vpow.pop %v960
    %v962 = vmul.f32 %v943, 1.442695
    %v963 = vpow.pop %v962
    %v964 = vmul.f32 %v944, 1.442695
    %v965 = vpow.pop %v964
    %v966 = vmul.f32 %v945, 1.442695
    %v967 = vpow.pop %v966
    %v968 = vsel %vm358, %v947, 0.0
    %969 = vadd.xlane.f32.xlu0 %v968
    %v970 = vpop.xlane.xlu0 %969
    %v971 = vsel %vm358, %v949, 0.0
    %972 = vadd.xlane.f32.xlu0 %v971
    %v973 = vpop.xlane.xlu0 %972
    %v974 = vsel %vm358, %v951, 0.0
    %975 = vadd.xlane.f32.xlu0 %v974
    %v976 = vpop.xlane.xlu0 %975
    %v977 = vsel %vm358, %v953, 0.0
    %978 = vadd.xlane.f32.xlu0 %v977
    %v979 = vpop.xlane.xlu0 %978
    %v980 = vsel %vm358, %v955, 0.0
    %981 = vadd.xlane.f32.xlu0 %v980
    %v982 = vpop.xlane.xlu0 %981
    %v983 = vsel %vm358, %v957, 0.0
    %984 = vadd.xlane.f32.xlu0 %v983
    %v985 = vpop.xlane.xlu0 %984
    %v986 = vsel %vm358, %v959, 0.0
    %987 = vadd.xlane.f32.xlu0 %v986
    %v988 = vpop.xlane.xlu0 %987
    %v989 = vsel %vm358, %v961, 0.0
    %990 = vadd.xlane.f32.xlu0 %v989
    %v991 = vpop.xlane.xlu0 %990
    %v992 = vsel %vm358, %v963, 0.0
    %993 = vadd.xlane.f32.xlu0 %v992
    %v994 = vpop.xlane.xlu0 %993
    %v995 = vsel %vm358, %v965, 0.0
    %996 = vadd.xlane.f32.xlu0 %v995
    %v997 = vpop.xlane.xlu0 %996
    %v998 = vsel %vm389, %v967, 0.0
    %999 = vadd.xlane.f32.xlu0 %v998
    %v1000 = vpop.xlane.xlu0 %999
    %v1001 = vrcp.pop %v970
    %v1002 = vmul.f32 %v970, %v1001
    %v1003 = vsub.f32 1.0, %v1002
    %v1004 = vmul.f32 %v1001, %v1003
    %v1005 = vadd.f32 %v1001, %v1004
    %vm1006 = vweird.f32 %v970
    %vm1007 = vweird.f32 %v1001
    %vm1008 = vmor %vm1006, %vm1007
    %v1009 = vsel %vm1008, %v1001, %v1005
    %v1010 = vand.u32 2147483647, %v970
    %vm1011 = vcmp.eq.f32.partialorder %v1010, 8.507059e+37
    %v1012 = vand.u32 %v970, 2147483648
    %v1013 = vor.u32 1.1754944e-38, %v1012
    %v1014 = vsel %vm1011, %v1013, %v1009
    %v1015 = vmul.f32 %v947, %v1014
    %v1016 = vrcp.pop %v973
    %v1017 = vmul.f32 %v973, %v1016
    %v1018 = vsub.f32 1.0, %v1017
    %v1019 = vmul.f32 %v1016, %v1018
    %v1020 = vadd.f32 %v1016, %v1019
    %vm1021 = vweird.f32 %v973
    %vm1022 = vweird.f32 %v1016
    %vm1023 = vmor %vm1021, %vm1022
    %v1024 = vsel %vm1023, %v1016, %v1020
    %v1025 = vand.u32 2147483647, %v973
    %vm1026 = vcmp.eq.f32.partialorder %v1025, 8.507059e+37
    %v1027 = vand.u32 %v973, 2147483648
    %v1028 = vor.u32 1.1754944e-38, %v1027
    %v1029 = vsel %vm1026, %v1028, %v1024
    %v1030 = vmul.f32 %v949, %v1029
    %v1031 = vrcp.pop %v976
    %v1032 = vmul.f32 %v976, %v1031
    %v1033 = vsub.f32 1.0, %v1032
    %v1034 = vmul.f32 %v1031, %v1033
    %v1035 = vadd.f32 %v1031, %v1034
    %vm1036 = vweird.f32 %v976
    %vm1037 = vweird.f32 %v1031
    %vm1038 = vmor %vm1036, %vm1037
    %v1039 = vsel %vm1038, %v1031, %v1035
    %v1040 = vand.u32 2147483647, %v976
    %vm1041 = vcmp.eq.f32.partialorder %v1040, 8.507059e+37
    %v1042 = vand.u32 %v976, 2147483648
    %v1043 = vor.u32 1.1754944e-38, %v1042
    %v1044 = vsel %vm1041, %v1043, %v1039
    %v1045 = vmul.f32 %v951, %v1044
    %v1046 = vrcp.pop %v979
    %v1047 = vmul.f32 %v979, %v1046
    %v1048 = vsub.f32 1.0, %v1047
    %v1049 = vmul.f32 %v1046, %v1048
    %v1050 = vadd.f32 %v1046, %v1049
    %vm1051 = vweird.f32 %v979
    %vm1052 = vweird.f32 %v1046
    %vm1053 = vmor %vm1051, %vm1052
    %v1054 = vsel %vm1053, %v1046, %v1050
    %v1055 = vand.u32 2147483647, %v979
    %vm1056 = vcmp.eq.f32.partialorder %v1055, 8.507059e+37
    %v1057 = vand.u32 %v979, 2147483648
    %v1058 = vor.u32 1.1754944e-38, %v1057
    %v1059 = vsel %vm1056, %v1058, %v1054
    %v1060 = vmul.f32 %v953, %v1059
    %v1061 = vrcp.pop %v982
    %v1062 = vmul.f32 %v982, %v1061
    %v1063 = vsub.f32 1.0, %v1062
    %v1064 = vmul.f32 %v1061, %v1063
    %v1065 = vadd.f32 %v1061, %v1064
    %vm1066 = vweird.f32 %v982
    %vm1067 = vweird.f32 %v1061
    %vm1068 = vmor %vm1066, %vm1067
    %v1069 = vsel %vm1068, %v1061, %v1065
    %v1070 = vand.u32 2147483647, %v982
    %vm1071 = vcmp.eq.f32.partialorder %v1070, 8.507059e+37
    %v1072 = vand.u32 %v982, 2147483648
    %v1073 = vor.u32 1.1754944e-38, %v1072
    %v1074 = vsel %vm1071, %v1073, %v1069
    %v1075 = vmul.f32 %v955, %v1074
    %v1076 = vrcp.pop %v985
    %v1077 = vmul.f32 %v985, %v1076
    %v1078 = vsub.f32 1.0, %v1077
    %v1079 = vmul.f32 %v1076, %v1078
    %v1080 = vadd.f32 %v1076, %v1079
    %vm1081 = vweird.f32 %v985
    %vm1082 = vweird.f32 %v1076
    %vm1083 = vmor %vm1081, %vm1082
    %v1084 = vsel %vm1083, %v1076, %v1080
    %v1085 = vand.u32 2147483647, %v985
    %vm1086 = vcmp.eq.f32.partialorder %v1085, 8.507059e+37
    %v1087 = vand.u32 %v985, 2147483648
    %v1088 = vor.u32 1.1754944e-38, %v1087
    %v1089 = vsel %vm1086, %v1088, %v1084
    %v1090 = vmul.f32 %v957, %v1089
    %v1091 = vrcp.pop %v988
    %v1092 = vmul.f32 %v988, %v1091
    %v1093 = vsub.f32 1.0, %v1092
    %v1094 = vmul.f32 %v1091, %v1093
    %v1095 = vadd.f32 %v1091, %v1094
    %vm1096 = vweird.f32 %v988
    %vm1097 = vweird.f32 %v1091
    %vm1098 = vmor %vm1096, %vm1097
    %v1099 = vsel %vm1098, %v1091, %v1095
    %v1100 = vand.u32 2147483647, %v988
    %vm1101 = vcmp.eq.f32.partialorder %v1100, 8.507059e+37
    %v1102 = vand.u32 %v988, 2147483648
    %v1103 = vor.u32 1.1754944e-38, %v1102
    %v1104 = vsel %vm1101, %v1103, %v1099
    %v1105 = vmul.f32 %v959, %v1104
    %v1106 = vrcp.pop %v991
    %v1107 = vmul.f32 %v991, %v1106
    %v1108 = vsub.f32 1.0, %v1107
    %v1109 = vmul.f32 %v1106, %v1108
    %v1110 = vadd.f32 %v1106, %v1109
    %vm1111 = vweird.f32 %v991
    %vm1112 = vweird.f32 %v1106
    %vm1113 = vmor %vm1111, %vm1112
    %v1114 = vsel %vm1113, %v1106, %v1110
    %v1115 = vand.u32 2147483647, %v991
    %vm1116 = vcmp.eq.f32.partialorder %v1115, 8.507059e+37
    %v1117 = vand.u32 %v991, 2147483648
    %v1118 = vor.u32 1.1754944e-38, %v1117
    %v1119 = vsel %vm1116, %v1118, %v1114
    %v1120 = vmul.f32 %v961, %v1119
    %v1121 = vrcp.pop %v994
    %v1122 = vmul.f32 %v994, %v1121
    %v1123 = vsub.f32 1.0, %v1122
    %v1124 = vmul.f32 %v1121, %v1123
    %v1125 = vadd.f32 %v1121, %v1124
    %vm1126 = vweird.f32 %v994
    %vm1127 = vweird.f32 %v1121
    %vm1128 = vmor %vm1126, %vm1127
    %v1129 = vsel %vm1128, %v1121, %v1125
    %v1130 = vand.u32 2147483647, %v994
    %vm1131 = vcmp.eq.f32.partialorder %v1130, 8.507059e+37
    %v1132 = vand.u32 %v994, 2147483648
    %v1133 = vor.u32 1.1754944e-38, %v1132
    %v1134 = vsel %vm1131, %v1133, %v1129
    %v1135 = vmul.f32 %v963, %v1134
    %v1136 = vrcp.pop %v997
    %v1137 = vmul.f32 %v997, %v1136
    %v1138 = vsub.f32 1.0, %v1137
    %v1139 = vmul.f32 %v1136, %v1138
    %v1140 = vadd.f32 %v1136, %v1139
    %vm1141 = vweird.f32 %v997
    %vm1142 = vweird.f32 %v1136
    %vm1143 = vmor %vm1141, %vm1142
    %v1144 = vsel %vm1143, %v1136, %v1140
    %v1145 = vand.u32 2147483647, %v997
    %vm1146 = vcmp.eq.f32.partialorder %v1145, 8.507059e+37
    %v1147 = vand.u32 %v997, 2147483648
    %v1148 = vor.u32 1.1754944e-38, %v1147
    %v1149 = vsel %vm1146, %v1148, %v1144
    %v1150 = vmul.f32 %v965, %v1149
    %v1151 = vrcp.pop %v1000
    %v1152 = vmul.f32 %v1000, %v1151
    %v1153 = vsub.f32 1.0, %v1152
    %v1154 = vmul.f32 %v1151, %v1153
    %v1155 = vadd.f32 %v1151, %v1154
    %vm1156 = vweird.f32 %v1000
    %vm1157 = vweird.f32 %v1151
    %vm1158 = vmor %vm1156, %vm1157
    %v1159 = vsel %vm1158, %v1151, %v1155
    %v1160 = vand.u32 2147483647, %v1000
    %vm1161 = vcmp.eq.f32.partialorder %v1160, 8.507059e+37
    %v1162 = vand.u32 %v1000, 2147483648
    %v1163 = vor.u32 1.1754944e-38, %v1162
    %v1164 = vsel %vm1161, %v1163, %v1159
    %v1165 = vmul.f32 %v967, %v1164
    %1166 = vrot.lane.b32.xlu0 %v165, 108
    %v1167 = vpop.permute.xlu0 %1166
    %1168 = vrot.lane.b32.xlu0 %v168, 108
    %v1169 = vpop.permute.xlu0 %1168
    %1170 = vrot.lane.b32.xlu0 %v171, 108
    %v1171 = vpop.permute.xlu0 %1170
    %1172 = vrot.lane.b32.xlu0 %v174, 108
    %v1173 = vpop.permute.xlu0 %1172
    %1174 = vrot.lane.b32.xlu0 %v177, 108
    %v1175 = vpop.permute.xlu0 %1174
    %1176 = vrot.lane.b32.xlu0 %v180, 108
    %v1177 = vpop.permute.xlu0 %1176
    %1178 = vrot.lane.b32.xlu0 %v183, 108
    %v1179 = vpop.permute.xlu0 %1178
    %1180 = vrot.lane.b32.xlu0 %v186, 108
    %v1181 = vpop.permute.xlu0 %1180
    %1182 = vrot.lane.b32.xlu0 %v189, 108
    %v1183 = vpop.permute.xlu0 %1182
    %1184 = vrot.lane.b32.xlu0 %v192, 108
    %v1185 = vpop.permute.xlu0 %1184
    %1186 = vrot.lane.b32.xlu0 %v195, 108
    %v1187 = vpop.permute.xlu0 %1186
    %v1199 = vsel %vm358, %v1015, 0
    %v1202 = vsel %vm358, %v1030, 0
    %v1205 = vsel %vm358, %v1045, 0
    %v1208 = vsel %vm358, %v1060, 0
    %v1211 = vsel %vm358, %v1075, 0
    %v1214 = vsel %vm358, %v1090, 0
    %v1217 = vsel %vm358, %v1105, 0
    %v1220 = vsel %vm358, %v1120, 0
    %v1223 = vsel %vm358, %v1135, 0
    %v1226 = vsel %vm358, %v1150, 0
    %v1229 = vsel %vm358, %v1165, 0
    %v1231 = vsel %vm689, %v1187, 0
    %1233 = vmatpush.msra.mxu0 0.0
    %1234 = vmatpush.msra.mxu0 0.0
    %1235 = vmatpush.msra.mxu0 0.0
    %1236 = vmatpush.msra.mxu0 0.0
    %1237 = vmatpush.msra.mxu0 0.0
    %1238 = vmatpush.msra.mxu0 %v1231
    %1239 = vmatpush.msra.mxu0 %v1185
    %1240 = vmatpush.msra.mxu0 %v1183
    %1241 = vmatpush.msra.mxu0 %v1181
    %1242 = vmatpush.msra.mxu0 %v1179
    %1243 = vmatpush.msra.mxu0 %v1177
    %1244 = vmatpush.msra.mxu0 %v1175
    %1245 = vmatpush.msra.mxu0 %v1173
    %1246 = vmatpush.msra.mxu0 %v1171
    %1247 = vmatpush.msra.mxu0 %v1169
    %1248 = vmatpush.msra.mxu0 %v1167
    %1249 = vmatmul.f32.gmra.mxu0 %v1199
    %v1250 = vpop.f32.mrf.mxu0
    %v1251 = vadd.f32 0.0, %v1250
    %1252 = vmatmul.f32.gmra.mxu0 %v1202
    %v1253 = vpop.f32.mrf.mxu0
    %v1254 = vadd.f32 0.0, %v1253
    %1255 = vmatmul.f32.gmra.mxu0 %v1205
    %v1256 = vpop.f32.mrf.mxu0
    %v1257 = vadd.f32 0.0, %v1256
    %1258 = vmatmul.f32.gmra.mxu0 %v1208
    %v1259 = vpop.f32.mrf.mxu0
    %v1260 = vadd.f32 0.0, %v1259
    %1261 = vmatmul.f32.gmra.mxu0 %v1211
    %v1262 = vpop.f32.mrf.mxu0
    %v1263 = vadd.f32 0.0, %v1262
    %1264 = vmatmul.f32.gmra.mxu0 %v1214
    %v1265 = vpop.f32.mrf.mxu0
    %v1266 = vadd.f32 0.0, %v1265
    %1267 = vmatmul.f32.gmra.mxu0 %v1217
    %v1268 = vpop.f32.mrf.mxu0
    %v1269 = vadd.f32 0.0, %v1268
    %1270 = vmatmul.f32.gmra.mxu0 %v1220
    %v1271 = vpop.f32.mrf.mxu0
    %v1272 = vadd.f32 0.0, %v1271
    %1273 = vmatmul.f32.gmra.mxu0 %v1223
    %v1274 = vpop.f32.mrf.mxu0
    %v1275 = vadd.f32 0.0, %v1274
    %1276 = vmatmul.f32.gmra.mxu0 %v1226
    %v1277 = vpop.f32.mrf.mxu0
    %v1278 = vadd.f32 0.0, %v1277
    %1279 = vmatmul.f32.gmra.mxu0 %v1229
    %v1280 = vpop.f32.mrf.mxu0
    %v1281 = vadd.f32 0.0, %v1280
    %1282 = vdwg.mxu0
    %1294 = vrot.lane.b32.xlu0 %v1251, 4
    %v1295 = vpop.permute.xlu0 %1294
    %1296 = vrot.lane.b32.xlu0 %v1254, 4
    %v1297 = vpop.permute.xlu0 %1296
    %1298 = vrot.lane.b32.xlu0 %v1257, 4
    %v1299 = vpop.permute.xlu0 %1298
    %1300 = vrot.lane.b32.xlu0 %v1260, 4
    %v1301 = vpop.permute.xlu0 %1300
    %1302 = vrot.lane.b32.xlu0 %v1263, 4
    %v1303 = vpop.permute.xlu0 %1302
    %1304 = vrot.lane.b32.xlu0 %v1266, 4
    %v1305 = vpop.permute.xlu0 %1304
    %1306 = vrot.lane.b32.xlu0 %v1269, 4
    %v1307 = vpop.permute.xlu0 %1306
    %1308 = vrot.lane.b32.xlu0 %v1272, 4
    %v1309 = vpop.permute.xlu0 %1308
    %1310 = vrot.lane.b32.xlu0 %v1275, 4
    %v1311 = vpop.permute.xlu0 %1310
    %1312 = vrot.lane.b32.xlu0 %v1278, 4
    %v1313 = vpop.permute.xlu0 %1312
    %1314 = vrot.lane.b32.xlu0 %v1281, 4
    %v1315 = vpop.permute.xlu0 %1314
    %v1327 = vsel %vm241, %v710, %v1295
    %v1328 = vsel %vm241, %v713, %v1297
    %v1329 = vsel %vm241, %v716, %v1299
    %v1330 = vsel %vm241, %v719, %v1301
    %v1331 = vsel %vm241, %v722, %v1303
    %v1332 = vsel %vm241, %v725, %v1305
    %v1333 = vsel %vm241, %v728, %v1307
    %v1334 = vsel %vm241, %v731, %v1309
    %v1335 = vsel %vm241, %v734, %v1311
    %v1336 = vsel %vm241, %v737, %v1313
    %v1337 = vsel %vm241, %v740, %v1315
    %v1338 = vld [vmem:[%s4] sm:$0xff]
    %v1339 = vld [vmem:[#allocation6] sm:$0x1]
    %v1341 = vperm.slane %v1339, 0
    %v1344 = vsel %vm113, %v1327, 0
    %v1347 = vsel %vm113, %v1328, 0
    %v1350 = vsel %vm113, %v1329, 0
    %v1353 = vsel %vm113, %v1330, 0
    %v1356 = vsel %vm113, %v1331, 0
    %v1359 = vsel %vm113, %v1332, 0
    %v1362 = vsel %vm113, %v1333, 0
    %v1365 = vsel %vm113, %v1334, 0
    %v1368 = vsel %vm113, %v1335, 0
    %v1371 = vsel %vm113, %v1336, 0
    %v1374 = vsel %vm113, %v1337, 0
    %1376 = vmatpush.msra.mxu0 0.0
    %1377 = vmatpush.msra.mxu0 0.0
    %1378 = vmatpush.msra.mxu0 0.0
    %1379 = vmatpush.msra.mxu0 0.0
    %1380 = vmatpush.msra.mxu0 0.0
    %1381 = vmatpush.msra.mxu0 0.0
    %1382 = vmatpush.msra.mxu0 0.0
    %1383 = vmatpush.msra.mxu0 0.0
    %1384 = vmatpush.msra.mxu0 0.0
    %1385 = vmatpush.msra.mxu0 0.0
    %1386 = vmatpush.msra.mxu0 0.0
    %1387 = vmatpush.msra.mxu0 0.0
    %1388 = vmatpush.msra.mxu0 0.0
    %1389 = vmatpush.msra.mxu0 0.0
    %1390 = vmatpush.msra.mxu0 0.0
    %1391 = vmatpush.msra.mxu0 %v1338
    %1392 = vmatmul.f32.gmra.mxu0 %v1344
    %v1393 = vpop.f32.mrf.mxu0
    %v1394 = vadd.f32 %v1341, %v1393
    %1395 = vmatmul.f32.gmra.mxu0 %v1347
    %v1396 = vpop.f32.mrf.mxu0
    %v1397 = vadd.f32 %v1341, %v1396
    %1398 = vmatmul.f32.gmra.mxu0 %v1350
    %v1399 = vpop.f32.mrf.mxu0
    %v1400 = vadd.f32 %v1341, %v1399
    %1401 = vmatmul.f32.gmra.mxu0 %v1353
    %v1402 = vpop.f32.mrf.mxu0
    %v1403 = vadd.f32 %v1341, %v1402
    %1404 = vmatmul.f32.gmra.mxu0 %v1356
    %v1405 = vpop.f32.mrf.mxu0
    %v1406 = vadd.f32 %v1341, %v1405
    %1407 = vmatmul.f32.gmra.mxu0 %v1359
    %v1408 = vpop.f32.mrf.mxu0
    %v1409 = vadd.f32 %v1341, %v1408
    %1410 = vmatmul.f32.gmra.mxu0 %v1362
    %v1411 = vpop.f32.mrf.mxu0
    %v1412 = vadd.f32 %v1341, %v1411
    %1413 = vmatmul.f32.gmra.mxu0 %v1365
    %v1414 = vpop.f32.mrf.mxu0
    %v1415 = vadd.f32 %v1341, %v1414
    %1416 = vmatmul.f32.gmra.mxu0 %v1368
    %v1417 = vpop.f32.mrf.mxu0
    %v1418 = vadd.f32 %v1341, %v1417
    %1419 = vmatmul.f32.gmra.mxu0 %v1371
    %v1420 = vpop.f32.mrf.mxu0
    %v1421 = vadd.f32 %v1341, %v1420
    %1422 = vmatmul.f32.gmra.mxu0 %v1374
    %v1423 = vpop.f32.mrf.mxu0
    %v1424 = vadd.f32 %v1341, %v1423
    %1425 = vdwg.mxu0
    %v1426 = vadd.f32 %v97, %v1394
    %v1427 = vadd.f32 %v98, %v1397
    %v1428 = vadd.f32 %v99, %v1400
    %v1429 = vadd.f32 %v100, %v1403
    %v1430 = vadd.f32 %v101, %v1406
    %v1431 = vadd.f32 %v102, %v1409
    %v1432 = vadd.f32 %v103, %v1412
    %v1433 = vadd.f32 %v104, %v1415
    %v1434 = vadd.f32 %v105, %v1418
    %v1435 = vadd.f32 %v106, %v1421
    %v1436 = vadd.f32 %v107, %v1424
    %v1437 = vsel %vm113, %v1426, 0.0
    %1438 = vadd.xlane.f32.xlu0 %v1437
    %v1439 = vpop.xlane.xlu0 %1438
    %v1440 = vsel %vm113, %v1427, 0.0
    %1441 = vadd.xlane.f32.xlu0 %v1440
    %v1442 = vpop.xlane.xlu0 %1441
    %v1443 = vsel %vm113, %v1428, 0.0
    %1444 = vadd.xlane.f32.xlu0 %v1443
    %v1445 = vpop.xlane.xlu0 %1444
    %v1446 = vsel %vm113, %v1429, 0.0
    %1447 = vadd.xlane.f32.xlu0 %v1446
    %v1448 = vpop.xlane.xlu0 %1447
    %v1449 = vsel %vm113, %v1430, 0.0
    %1450 = vadd.xlane.f32.xlu0 %v1449
    %v1451 = vpop.xlane.xlu0 %1450
    %v1452 = vsel %vm113, %v1431, 0.0
    %1453 = vadd.xlane.f32.xlu0 %v1452
    %v1454 = vpop.xlane.xlu0 %1453
    %v1455 = vsel %vm113, %v1432, 0.0
    %1456 = vadd.xlane.f32.xlu0 %v1455
    %v1457 = vpop.xlane.xlu0 %1456
    %v1458 = vsel %vm113, %v1433, 0.0
    %1459 = vadd.xlane.f32.xlu0 %v1458
    %v1460 = vpop.xlane.xlu0 %1459
    %v1461 = vsel %vm113, %v1434, 0.0
    %1462 = vadd.xlane.f32.xlu0 %v1461
    %v1463 = vpop.xlane.xlu0 %1462
    %v1464 = vsel %vm113, %v1435, 0.0
    %1465 = vadd.xlane.f32.xlu0 %v1464
    %v1466 = vpop.xlane.xlu0 %1465
    %vm1467 = vcmask 58368
    %v1468 = vsel %vm1467, %v1436, 0.0
    %1469 = vadd.xlane.f32.xlu0 %v1468
    %v1470 = vpop.xlane.xlu0 %1469
    %v1471 = vrcp.pop 8.0
    %v1472 = vmul.f32 8.0, %v1471
    %v1473 = vsub.f32 1.0, %v1472
    %v1474 = vmul.f32 %v1471, %v1473
    %v1475 = vadd.f32 %v1471, %v1474
    %vm1476 = vweird.f32 %v1471
    %v1477 = vsel %vm1476, %v1471, %v1475
    %v1478 = vmul.f32 %v1439, %v1477
    %v1479 = vmul.f32 %v1442, %v1477
    %v1480 = vmul.f32 %v1445, %v1477
    %v1481 = vmul.f32 %v1448, %v1477
    %v1482 = vmul.f32 %v1451, %v1477
    %v1483 = vmul.f32 %v1454, %v1477
    %v1484 = vmul.f32 %v1457, %v1477
    %v1485 = vmul.f32 %v1460, %v1477
    %v1486 = vmul.f32 %v1463, %v1477
    %v1487 = vmul.f32 %v1466, %v1477
    %v1488 = vmul.f32 %v1470, %v1477
    %v1489 = vsub.f32 %v1426, %v1478
    %v1490 = vsub.f32 %v1427, %v1479
    %v1491 = vsub.f32 %v1428, %v1480
    %v1492 = vsub.f32 %v1429, %v1481
    %v1493 = vsub.f32 %v1430, %v1482
    %v1494 = vsub.f32 %v1431, %v1483
    %v1495 = vsub.f32 %v1432, %v1484
    %v1496 = vsub.f32 %v1433, %v1485
    %v1497 = vsub.f32 %v1434, %v1486
    %v1498 = vsub.f32 %v1435, %v1487
    %v1499 = vsub.f32 %v1436, %v1488
    %v1500 = vmul.f32 %v1489, %v1489
    %v1501 = vmul.f32 %v1490, %v1490
    %v1502 = vmul.f32 %v1491, %v1491
    %v1503 = vmul.f32 %v1492, %v1492
    %v1504 = vmul.f32 %v1493, %v1493
    %v1505 = vmul.f32 %v1494, %v1494
    %v1506 = vmul.f32 %v1495, %v1495
    %v1507 = vmul.f32 %v1496, %v1496
    %v1508 = vmul.f32 %v1497, %v1497
    %v1509 = vmul.f32 %v1498, %v1498
    %v1510 = vmul.f32 %v1499, %v1499
    %v1511 = vsel %vm113, %v1500, 0.0
    %1512 = vadd.xlane.f32.xlu0 %v1511
    %v1513 = vpop.xlane.xlu0 %1512
    %v1514 = vsel %vm113, %v1501, 0.0
    %1515 = vadd.xlane.f32.xlu0 %v1514
    %v1516 = vpop.xlane.xlu0 %1515
    %v1517 = vsel %vm113, %v1502, 0.0
    %1518 = vadd.xlane.f32.xlu0 %v1517
    %v1519 = vpop.xlane.xlu0 %1518
    %v1520 = vsel %vm113, %v1503, 0.0
    %1521 = vadd.xlane.f32.xlu0 %v1520
    %v1522 = vpop.xlane.xlu0 %1521
    %v1523 = vsel %vm113, %v1504, 0.0
    %1524 = vadd.xlane.f32.xlu0 %v1523
    %v1525 = vpop.xlane.xlu0 %1524
    %v1526 = vsel %vm113, %v1505, 0.0
    %1527 = vadd.xlane.f32.xlu0 %v1526
    %v1528 = vpop.xlane.xlu0 %1527
    %v1529 = vsel %vm113, %v1506, 0.0
    %1530 = vadd.xlane.f32.xlu0 %v1529
    %v1531 = vpop.xlane.xlu0 %1530
    %v1532 = vsel %vm113, %v1507, 0.0
    %1533 = vadd.xlane.f32.xlu0 %v1532
    %v1534 = vpop.xlane.xlu0 %1533
    %v1535 = vsel %vm113, %v1508, 0.0
    %1536 = vadd.xlane.f32.xlu0 %v1535
    %v1537 = vpop.xlane.xlu0 %1536
    %v1538 = vsel %vm113, %v1509, 0.0
    %1539 = vadd.xlane.f32.xlu0 %v1538
    %v1540 = vpop.xlane.xlu0 %1539
    %v1541 = vsel %vm1467, %v1510, 0.0
    %1542 = vadd.xlane.f32.xlu0 %v1541
    %v1543 = vpop.xlane.xlu0 %1542
    %v1544 = vmul.f32 %v1513, %v1477
    %v1545 = vmul.f32 %v1516, %v1477
    %v1546 = vmul.f32 %v1519, %v1477
    %v1547 = vmul.f32 %v1522, %v1477
    %v1548 = vmul.f32 %v1525, %v1477
    %v1549 = vmul.f32 %v1528, %v1477
    %v1550 = vmul.f32 %v1531, %v1477
    %v1551 = vmul.f32 %v1534, %v1477
    %v1552 = vmul.f32 %v1537, %v1477
    %v1553 = vmul.f32 %v1540, %v1477
    %v1554 = vmul.f32 %v1543, %v1477
    %v1555 = vadd.f32 %v1544, 1e-05
    %v1556 = vadd.f32 %v1545, 1e-05
    %v1557 = vadd.f32 %v1546, 1e-05
    %v1558 = vadd.f32 %v1547, 1e-05
    %v1559 = vadd.f32 %v1548, 1e-05
    %v1560 = vadd.f32 %v1549, 1e-05
    %v1561 = vadd.f32 %v1550, 1e-05
    %v1562 = vadd.f32 %v1551, 1e-05
    %v1563 = vadd.f32 %v1552, 1e-05
    %v1564 = vadd.f32 %v1553, 1e-05
    %v1565 = vadd.f32 %v1554, 1e-05
    %v1566 = vrsqrt.pop %v1555
    %v1567 = vmul.f32 %v1566, %v1555
    %v1568 = vmul.f32 %v1567, %v1566
    %v1569 = vmul.f32 0.5, %v1568
    %v1570 = vsub.f32 1.5, %v1569
    %v1571 = vmul.f32 %v1566, %v1570
    %vm1572 = vweird.f32 %v1555
    %vm1573 = vweird.f32 %v1566
    %vm1574 = vmor %vm1572, %vm1573
    %v1575 = vsel %vm1574, %v1566, %v1571
    %v1576 = vrsqrt.pop %v1556
    %v1577 = vmul.f32 %v1576, %v1556
    %v1578 = vmul.f32 %v1577, %v1576
    %v1579 = vmul.f32 0.5, %v1578
    %v1580 = vsub.f32 1.5, %v1579
    %v1581 = vmul.f32 %v1576, %v1580
    %vm1582 = vweird.f32 %v1556
    %vm1583 = vweird.f32 %v1576
    %vm1584 = vmor %vm1582, %vm1583
    %v1585 = vsel %vm1584, %v1576, %v1581
    %v1586 = vrsqrt.pop %v1557
    %v1587 = vmul.f32 %v1586, %v1557
    %v1588 = vmul.f32 %v1587, %v1586
    %v1589 = vmul.f32 0.5, %v1588
    %v1590 = vsub.f32 1.5, %v1589
    %v1591 = vmul.f32 %v1586, %v1590
    %vm1592 = vweird.f32 %v1557
    %vm1593 = vweird.f32 %v1586
    %vm1594 = vmor %vm1592, %vm1593
    %v1595 = vsel %vm1594, %v1586, %v1591
    %v1596 = vrsqrt.pop %v1558
    %v1597 = vmul.f32 %v1596, %v1558
    %v1598 = vmul.f32 %v1597, %v1596
    %v1599 = vmul.f32 0.5, %v1598
    %v1600 = vsub.f32 1.5, %v1599
    %v1601 = vmul.f32 %v1596, %v1600
    %vm1602 = vweird.f32 %v1558
    %vm1603 = vweird.f32 %v1596
    %vm1604 = vmor %vm1602, %vm1603
    %v1605 = vsel %vm1604, %v1596, %v1601
    %v1606 = vrsqrt.pop %v1559
    %v1607 = vmul.f32 %v1606, %v1559
    %v1608 = vmul.f32 %v1607, %v1606
    %v1609 = vmul.f32 0.5, %v1608
    %v1610 = vsub.f32 1.5, %v1609
    %v1611 = vmul.f32 %v1606, %v1610
    %vm1612 = vweird.f32 %v1559
    %vm1613 = vweird.f32 %v1606
    %vm1614 = vmor %vm1612, %vm1613
    %v1615 = vsel %vm1614, %v1606, %v1611
    %v1616 = vrsqrt.pop %v1560
    %v1617 = vmul.f32 %v1616, %v1560
    %v1618 = vmul.f32 %v1617, %v1616
    %v1619 = vmul.f32 0.5, %v1618
    %v1620 = vsub.f32 1.5, %v1619
    %v1621 = vmul.f32 %v1616, %v1620
    %vm1622 = vweird.f32 %v1560
    %vm1623 = vweird.f32 %v1616
    %vm1624 = vmor %vm1622, %vm1623
    %v1625 = vsel %vm1624, %v1616, %v1621
    %v1626 = vrsqrt.pop %v1561
    %v1627 = vmul.f32 %v1626, %v1561
    %v1628 = vmul.f32 %v1627, %v1626
    %v1629 = vmul.f32 0.5, %v1628
    %v1630 = vsub.f32 1.5, %v1629
    %v1631 = vmul.f32 %v1626, %v1630
    %vm1632 = vweird.f32 %v1561
    %vm1633 = vweird.f32 %v1626
    %vm1634 = vmor %vm1632, %vm1633
    %v1635 = vsel %vm1634, %v1626, %v1631
    %v1636 = vrsqrt.pop %v1562
    %v1637 = vmul.f32 %v1636, %v1562
    %v1638 = vmul.f32 %v1637, %v1636
    %v1639 = vmul.f32 0.5, %v1638
    %v1640 = vsub.f32 1.5, %v1639
    %v1641 = vmul.f32 %v1636, %v1640
    %vm1642 = vweird.f32 %v1562
    %vm1643 = vweird.f32 %v1636
    %vm1644 = vmor %vm1642, %vm1643
    %v1645 = vsel %vm1644, %v1636, %v1641
    %v1646 = vrsqrt.pop %v1563
    %v1647 = vmul.f32 %v1646, %v1563
    %v1648 = vmul.f32 %v1647, %v1646
    %v1649 = vmul.f32 0.5, %v1648
    %v1650 = vsub.f32 1.5, %v1649
    %v1651 = vmul.f32 %v1646, %v1650
    %vm1652 = vweird.f32 %v1563
    %vm1653 = vweird.f32 %v1646
    %vm1654 = vmor %vm1652, %vm1653
    %v1655 = vsel %vm1654, %v1646, %v1651
    %v1656 = vrsqrt.pop %v1564
    %v1657 = vmul.f32 %v1656, %v1564
    %v1658 = vmul.f32 %v1657, %v1656
    %v1659 = vmul.f32 0.5, %v1658
    %v1660 = vsub.f32 1.5, %v1659
    %v1661 = vmul.f32 %v1656, %v1660
    %vm1662 = vweird.f32 %v1564
    %vm1663 = vweird.f32 %v1656
    %vm1664 = vmor %vm1662, %vm1663
    %v1665 = vsel %vm1664, %v1656, %v1661
    %v1666 = vrsqrt.pop %v1565
    %v1667 = vmul.f32 %v1666, %v1565
    %v1668 = vmul.f32 %v1667, %v1666
    %v1669 = vmul.f32 0.5, %v1668
    %v1670 = vsub.f32 1.5, %v1669
    %v1671 = vmul.f32 %v1666, %v1670
    %vm1672 = vweird.f32 %v1565
    %vm1673 = vweird.f32 %v1666
    %vm1674 = vmor %vm1672, %vm1673
    %v1675 = vsel %vm1674, %v1666, %v1671
    %v1676 = vmul.f32 %v1489, %v1575
    %v1677 = vmul.f32 %v1490, %v1585
    %v1678 = vmul.f32 %v1491, %v1595
    %v1679 = vmul.f32 %v1492, %v1605
    %v1680 = vmul.f32 %v1493, %v1615
    %v1681 = vmul.f32 %v1494, %v1625
    %v1682 = vmul.f32 %v1495, %v1635
    %v1683 = vmul.f32 %v1496, %v1645
    %v1684 = vmul.f32 %v1497, %v1655
    %v1685 = vmul.f32 %v1498, %v1665
    %v1686 = vmul.f32 %v1499, %v1675
    %v1687 = vld [vmem:[#allocation7] sm:$0x1]
    %v1689 = vperm.slane %v1687, 0
    %v1691 = vmul.f32 %v1676, %v1689
    %v1692 = vmul.f32 %v1677, %v1689
    %v1693 = vmul.f32 %v1678, %v1689
    %v1694 = vmul.f32 %v1679, %v1689
    %v1695 = vmul.f32 %v1680, %v1689
    %v1696 = vmul.f32 %v1681, %v1689
    %v1697 = vmul.f32 %v1682, %v1689
    %v1698 = vmul.f32 %v1683, %v1689
    %v1699 = vmul.f32 %v1684, %v1689
    %v1700 = vmul.f32 %v1685, %v1689
    %v1701 = vmul.f32 %v1686, %v1689
    %v1702 = vld [vmem:[#allocation9] sm:$0x1]
    %v1704 = vperm.slane %v1702, 0
    %v1706 = vadd.f32 %v1691, %v1704
    %v1707 = vadd.f32 %v1692, %v1704
    %v1708 = vadd.f32 %v1693, %v1704
    %v1709 = vadd.f32 %v1694, %v1704
    %v1710 = vadd.f32 %v1695, %v1704
    %v1711 = vadd.f32 %v1696, %v1704
    %v1712 = vadd.f32 %v1697, %v1704
    %v1713 = vadd.f32 %v1698, %v1704
    %v1714 = vadd.f32 %v1699, %v1704
    %v1715 = vadd.f32 %v1700, %v1704
    %v1716 = vadd.f32 %v1701, %v1704
    %1717 = vst.msk [vmem:[%s8] sm:$0xff] %vm113, %v1706
    %1718 = vst.msk [vmem:[%s8 + $0x8] sm:$0xff] %vm113, %v1707
    %1719 = vst.msk [vmem:[%s8 + $0x10] sm:$0xff] %vm113, %v1708
    %1720 = vst.msk [vmem:[%s8 + $0x18] sm:$0xff] %vm113, %v1709
    %1721 = vst.msk [vmem:[%s8 + $0x20] sm:$0xff] %vm113, %v1710
    %1722 = vst.msk [vmem:[%s8 + $0x28] sm:$0xff] %vm113, %v1711
    %1723 = vst.msk [vmem:[%s8 + $0x30] sm:$0xff] %vm113, %v1712
    %1724 = vst.msk [vmem:[%s8 + $0x38] sm:$0xff] %vm113, %v1713
    %1725 = vst.msk [vmem:[%s8 + $0x40] sm:$0xff] %vm113, %v1714
    %1726 = vst.msk [vmem:[%s8 + $0x48] sm:$0xff] %vm113, %v1715
    %1727 = vst.msk [vmem:[%s8 + $0x50] sm:$0x3] %vm1467, %v1716
    // Predicated region
    $region54: #{new_model2_forward.6} parent=1 // pred_check
      _
    $region55: #{new_model2_forward.6} parent=1 // pred_check_branch
      %1729 = sbr.rel (0) target = $region57
    $region56: #{new_model2_forward.6} parent=1 // pred_region
      _
    $region57: #{new_model2_forward.6} parent=1 // pred_fallthru
      _
    // Predicated region
    $region58: #{new_model2_forward.6} parent=1 // pred_check
      _
    $region59: #{new_model2_forward.6} parent=1 // pred_check_branch
      %1731 = sbr.rel (0) target = $region61
    $region60: #{new_model2_forward.6} parent=1 // pred_region
      _
    $region61: #{new_model2_forward.6} parent=1 // pred_fallthru
      _
    %1732 = vsyncpa [#allocation3], 1
    %1733 = vsyncpa [#allocation5], 1
    %1734 = vsyncpa [#allocation8], 1

// kernel: new_model2_forward.9
$region0: #{new_model2_forward.9}
  #allocation0 [shape = 'u32[]', space=smem, size = 0x4, offset = 0x4, fixed_abs, tag = 'smem constant byte address 0x4 - core index']
  #allocation1 [shape = 'u32[72,128]{1,0:T(1,128)}', space=vmem, size = 0x9000, scoped, tag = 'internal scratch']
  #allocation2 [shape = 'f32[2,32]{1,0:T(2,128)}', space=vmem, size = 0x400, scoped, tag = 'scratch operand']
  #allocation3 [shape = 'f32[2,32]{1,0:T(2,128)}', space=vmem, size = 0x400, scoped, tag = 'scratch operand']
  #allocation4 [shape = 'f32[2,32]{1,0:T(2,128)}', space=vmem, size = 0x400, scoped, tag = 'scratch operand']
  #allocation5 [shape = 'f32[2,32]{1,0:T(2,128)}', space=vmem, size = 0x400, scoped, tag = 'scratch operand']
  %s0 = inlined_call_operand.vmem [shape: f32[41,2,64], index: 0, kind: input, shape index: {}]
  %s1 = inlined_call_operand.hbm [shape: f32[64,128], index: 1, kind: input, shape index: {}]
  %s2 = inlined_call_operand.vmem [shape: f32[1,128], index: 2, kind: input, shape index: {}]
  %s3 = inlined_call_operand.hbm [shape: f32[32,128], index: 3, kind: input, shape index: {}]
  %s4 = inlined_call_operand.hbm [shape: f32[64,128], index: 4, kind: input, shape index: {}]
  %s5 = inlined_call_operand.vmem [shape: f32[1,128], index: 5, kind: input, shape index: {}]
  %s6 = inlined_call_operand.hbm [shape: f32[32,128], index: 6, kind: input, shape index: {}]
  %s7 = inlined_call_operand.vmem [shape: f32[41,2,32], index: 7, kind: output, shape index: {0}]
  %s8 = inlined_call_operand.vmem [shape: f32[41,2,32], index: 8, kind: output, shape index: {1}]
  %9 = xla_tuple %s7, %s8
  %s10 = sld [smem:[#allocation0]]
  $region69: #{new_model2_forward.9} parent=0
    _
  %s12 = ssub.s32 1, %s10
  %s13 = scalar_select 0, %s12, %s10
  $region1: #{new_model2_forward.9} parent=0
    #allocation6 [shape = 'u8[32768]{0}', space=vmem, size = 0x8000, scoped, tag = 'input window, operand 1, single buffered']
    #allocation7 [shape = 's32[1]{0}', space=sflag, size = 0x4, scoped, tag = 'scoped memory for new_model2_forward.9']
    #allocation8 [shape = 'u8[16384]{0}', space=vmem, size = 0x4000, scoped, tag = 'input window, operand 3, single buffered']
    #allocation9 [shape = 's32[1]{0}', space=sflag, size = 0x4, scoped, tag = 'scoped memory for new_model2_forward.9']
    #allocation10 [shape = 'u8[32768]{0}', space=vmem, size = 0x8000, scoped, tag = 'input window, operand 4, single buffered']
    #allocation11 [shape = 'u8[16384]{0}', space=vmem, size = 0x4000, scoped, tag = 'input window, operand 6, single buffered']
    #allocation12 [shape = 's32[1]{0}', space=sflag, size = 0x4, scoped, tag = 'scoped memory for new_model2_forward.9']
    %14 = vsyncpa [#allocation7], 0
    %15 = vsyncpa [#allocation9], 0
    %16 = vsyncpa [#allocation12], 0
    // Predicated region
    $region2: #{new_model2_forward.9} parent=1 // pred_check
      _
    $region3: #{new_model2_forward.9} parent=1 // pred_check_branch
      %18 = sbr.rel (0) target = $region5
    $region4: #{new_model2_forward.9} parent=1 // pred_region
      _
    $region5: #{new_model2_forward.9} parent=1 // pred_fallthru
      _
    // Predicated region
    $region6: #{new_model2_forward.9} parent=1 // pred_check
      _
    $region7: #{new_model2_forward.9} parent=1 // pred_check_branch
      %20 = sbr.rel (0) target = $region9
    $region8: #{new_model2_forward.9} parent=1 // pred_region
      %22 = vsyncadd [#allocation7], 0
      %s23 = sshll.u32 %s1, 4
      %s24 = int_to_ptr.hbm [resolvable:$true] %s23
      %s25 = sshll.u32 [#allocation6], 4
      %s26 = int_to_ptr.vmem [resolvable:$true] %s25
      %31 = dma.hbm_to_vmem [thread:$0]  %s24, 1024, %s26, [#allocation7], 128, 128, 8
    $region9: #{new_model2_forward.9} parent=1 // pred_fallthru
      _
    // Predicated region
    $region10: #{new_model2_forward.9} parent=1 // pred_check
      _
    $region11: #{new_model2_forward.9} parent=1 // pred_check_branch
      %33 = sbr.rel (0) target = $region13
    $region12: #{new_model2_forward.9} parent=1 // pred_region
      _
    $region13: #{new_model2_forward.9} parent=1 // pred_fallthru
      _
    // Predicated region
    $region14: #{new_model2_forward.9} parent=1 // pred_check
      _
    $region15: #{new_model2_forward.9} parent=1 // pred_check_branch
      %35 = sbr.rel (0) target = $region17
    $region16: #{new_model2_forward.9} parent=1 // pred_region
      %37 = vsyncadd [#allocation9], 0
      %s38 = sshll.u32 %s3, 4
      %s39 = int_to_ptr.hbm [resolvable:$true] %s38
      %s40 = sshll.u32 [#allocation8], 4
      %s41 = int_to_ptr.vmem [resolvable:$true] %s40
      %46 = dma.hbm_to_vmem [thread:$0]  %s39, 512, %s41, [#allocation9], 128, 128, 8
    $region17: #{new_model2_forward.9} parent=1 // pred_fallthru
      _
    // Predicated region
    $region18: #{new_model2_forward.9} parent=1 // pred_check
      _
    $region19: #{new_model2_forward.9} parent=1 // pred_check_branch
      %48 = sbr.rel (0) target = $region21
    $region20: #{new_model2_forward.9} parent=1 // pred_region
      %50 = vsyncadd [#allocation9], 0
      %s51 = sshll.u32 %s4, 4
      %s52 = int_to_ptr.hbm [resolvable:$true] %s51
      %s53 = sshll.u32 [#allocation10], 4
      %s54 = int_to_ptr.vmem [resolvable:$true] %s53
      %59 = dma.hbm_to_vmem [thread:$0]  %s52, 1024, %s54, [#allocation9], 128, 128, 8
    $region21: #{new_model2_forward.9} parent=1 // pred_fallthru
      _
    // Predicated region
    $region22: #{new_model2_forward.9} parent=1 // pred_check
      _
    $region23: #{new_model2_forward.9} parent=1 // pred_check_branch
      %61 = sbr.rel (0) target = $region25
    $region24: #{new_model2_forward.9} parent=1 // pred_region
      _
    $region25: #{new_model2_forward.9} parent=1 // pred_fallthru
      _
    // Predicated region
    $region26: #{new_model2_forward.9} parent=1 // pred_check
      _
    $region27: #{new_model2_forward.9} parent=1 // pred_check_branch
      %63 = sbr.rel (0) target = $region29
    $region28: #{new_model2_forward.9} parent=1 // pred_region
      %65 = vsyncadd [#allocation12], 0
      %s66 = sshll.u32 %s6, 4
      %s67 = int_to_ptr.hbm [resolvable:$true] %s66
      %s68 = sshll.u32 [#allocation11], 4
      %s69 = int_to_ptr.vmem [resolvable:$true] %s68
      %74 = dma.hbm_to_vmem [thread:$0]  %s67, 512, %s69, [#allocation12], 128, 128, 8
    $region29: #{new_model2_forward.9} parent=1 // pred_fallthru
      _
    // Predicated region
    $region30: #{new_model2_forward.9} parent=1 // pred_check
      _
    $region31: #{new_model2_forward.9} parent=1 // pred_check_branch
      %76 = sbr.rel (0) target = $region33
    $region32: #{new_model2_forward.9} parent=1 // pred_region
      %78 = dma.done [#allocation7], 1024
    $region33: #{new_model2_forward.9} parent=1 // pred_fallthru
      _
    // Predicated region
    $region34: #{new_model2_forward.9} parent=1 // pred_check
      _
    $region35: #{new_model2_forward.9} parent=1 // pred_check_branch
      %80 = sbr.rel (0) target = $region37
    $region36: #{new_model2_forward.9} parent=1 // pred_region
      %82 = dma.done [#allocation9], 512
    $region37: #{new_model2_forward.9} parent=1 // pred_fallthru
      _
    // Predicated region
    $region38: #{new_model2_forward.9} parent=1 // pred_check
      _
    $region39: #{new_model2_forward.9} parent=1 // pred_check_branch
      %84 = sbr.rel (0) target = $region41
    $region40: #{new_model2_forward.9} parent=1 // pred_region
      %86 = dma.done [#allocation9], 1024
    $region41: #{new_model2_forward.9} parent=1 // pred_fallthru
      _
    // Predicated region
    $region42: #{new_model2_forward.9} parent=1 // pred_check
      _
    $region43: #{new_model2_forward.9} parent=1 // pred_check_branch
      %88 = sbr.rel (0) target = $region45
    $region44: #{new_model2_forward.9} parent=1 // pred_region
      %90 = dma.done [#allocation12], 512
    $region45: #{new_model2_forward.9} parent=1 // pred_fallthru
      _
    %vm91 = vcmask 254976
    %92 = vst.msk [vmem:[#allocation2] sm:$0x3] %vm91, 0.0
    %93 = vst.msk [vmem:[#allocation3] sm:$0x3] %vm91, 0.0
    %94 = vst.msk [vmem:[#allocation4] sm:$0x3] %vm91, 0.0
    %95 = vst.msk [vmem:[#allocation5] sm:$0x3] %vm91, 0.0
    loop: start=0, step=1, limit=41
    $region46: #{new_model2_forward.9} parent=1 // loop_pre_header
      _
    $region47: #{new_model2_forward.9} parent=1 // loop_header
      %s97 = sphi 0, %s101
      %p98 = scmp.ge.s32.totalorder %s97, 41
    $region48: #{new_model2_forward.9} parent=1 // loop_header_branch
      %100 = sbr.rel (%p98) target = $region52
    $region49: #{new_model2_forward.9} parent=1 // loop_body
      %s102 = smul.u32 %s97, 2
      %s103 = scalar_lea.vmem %s0, %s102
      %v104 = vld [vmem:[%s103] sm:$0x3]
      %s105 = ssub.s32 40, %s97
      %s106 = smul.u32 %s105, 2
      %s107 = scalar_lea.vmem %s0, %s106
      %v108 = vld [vmem:[%s107] sm:$0x3]
      %v109 = vld [vmem:[#allocation6] sm:$0xff]
      %v110 = vld [vmem:[#allocation6 + $0x8] sm:$0xff]
      %v111 = vld [vmem:[#allocation6 + $0x10] sm:$0xff]
      %v112 = vld [vmem:[#allocation6 + $0x18] sm:$0xff]
      %v113 = vld [vmem:[#allocation6 + $0x20] sm:$0xff]
      %v114 = vld [vmem:[#allocation6 + $0x28] sm:$0xff]
      %v115 = vld [vmem:[#allocation6 + $0x30] sm:$0xff]
      %v116 = vld [vmem:[#allocation6 + $0x38] sm:$0xff]
      %v117 = vld [vmem:[%s2] sm:$0x1]
      %v119 = vperm.slane %v117, 0
      %vm121 = vcmask 523264
      %v123 = vsel %vm121, %v104, 0
      %125 = vmatpush.msra.mxu0 0.0
      %126 = vmatpush.msra.mxu0 0.0
      %127 = vmatpush.msra.mxu0 0.0
      %128 = vmatpush.msra.mxu0 0.0
      %129 = vmatpush.msra.mxu0 0.0
      %130 = vmatpush.msra.mxu0 0.0
      %131 = vmatpush.msra.mxu0 0.0
      %132 = vmatpush.msra.mxu0 0.0
      %133 = vmatpush.msra.mxu0 %v116
      %134 = vmatpush.msra.mxu0 %v115
      %135 = vmatpush.msra.mxu0 %v114
      %136 = vmatpush.msra.mxu0 %v113
      %137 = vmatpush.msra.mxu0 %v112
      %138 = vmatpush.msra.mxu0 %v111
      %139 = vmatpush.msra.mxu0 %v110
      %140 = vmatpush.msra.mxu0 %v109
      %141 = vmatmul.f32.gmra.mxu0 %v123
      %v142 = vpop.f32.mrf.mxu0
      %v143 = vadd.f32 %v119, %v142
      %144 = vdwg.mxu0
      %v145 = vld [vmem:[#allocation2] sm:$0x3]
      %v146 = vld [vmem:[#allocation8] sm:$0xff]
      %v147 = vld [vmem:[#allocation8 + $0x8] sm:$0xff]
      %v148 = vld [vmem:[#allocation8 + $0x10] sm:$0xff]
      %v149 = vld [vmem:[#allocation8 + $0x18] sm:$0xff]
      %vm150 = vcmask 261120
      %v152 = vsel %vm150, %v145, 0
      %154 = vmatpush.msra.mxu0 0.0
      %155 = vmatpush.msra.mxu0 0.0
      %156 = vmatpush.msra.mxu0 0.0
      %157 = vmatpush.msra.mxu0 0.0
      %158 = vmatpush.msra.mxu0 0.0
      %159 = vmatpush.msra.mxu0 0.0
      %160 = vmatpush.msra.mxu0 0.0
      %161 = vmatpush.msra.mxu0 0.0
      %162 = vmatpush.msra.mxu0 0.0
      %163 = vmatpush.msra.mxu0 0.0
      %164 = vmatpush.msra.mxu0 0.0
      %165 = vmatpush.msra.mxu0 0.0
      %166 = vmatpush.msra.mxu0 %v149
      %167 = vmatpush.msra.mxu0 %v148
      %168 = vmatpush.msra.mxu0 %v147
      %169 = vmatpush.msra.mxu0 %v146
      %170 = vmatmul.f32.gmra.mxu0 %v152
      %v171 = vpop.f32.mrf.mxu0
      %v172 = vadd.f32 0.0, %v171
      %173 = vdwg.mxu0
      %v174 = vadd.f32 %v143, %v172
      %v175 = vld [vmem:[#allocation10] sm:$0xff]
      %v176 = vld [vmem:[#allocation10 + $0x8] sm:$0xff]
      %v177 = vld [vmem:[#allocation10 + $0x10] sm:$0xff]
      %v178 = vld [vmem:[#allocation10 + $0x18] sm:$0xff]
      %v179 = vld [vmem:[#allocation10 + $0x20] sm:$0xff]
      %v180 = vld [vmem:[#allocation10 + $0x28] sm:$0xff]
      %v181 = vld [vmem:[#allocation10 + $0x30] sm:$0xff]
      %v182 = vld [vmem:[#allocation10 + $0x38] sm:$0xff]
      %v183 = vld [vmem:[%s5] sm:$0x1]
      %v185 = vperm.slane %v183, 0
      %v188 = vsel %vm121, %v108, 0
      %190 = vmatpush.msra.mxu0 0.0
      %191 = vmatpush.msra.mxu0 0.0
      %192 = vmatpush.msra.mxu0 0.0
      %193 = vmatpush.msra.mxu0 0.0
      %194 = vmatpush.msra.mxu0 0.0
      %195 = vmatpush.msra.mxu0 0.0
      %196 = vmatpush.msra.mxu0 0.0
      %197 = vmatpush.msra.mxu0 0.0
      %198 = vmatpush.msra.mxu0 %v182
      %199 = vmatpush.msra.mxu0 %v181
      %200 = vmatpush.msra.mxu0 %v180
      %201 = vmatpush.msra.mxu0 %v179
      %202 = vmatpush.msra.mxu0 %v178
      %203 = vmatpush.msra.mxu0 %v177
      %204 = vmatpush.msra.mxu0 %v176
      %205 = vmatpush.msra.mxu0 %v175
      %206 = vmatmul.f32.gmra.mxu0 %v188
      %v207 = vpop.f32.mrf.mxu0
      %v208 = vadd.f32 %v185, %v207
      %209 = vdwg.mxu0
      %v210 = vld [vmem:[#allocation4] sm:$0x3]
      %v211 = vld [vmem:[#allocation11] sm:$0xff]
      %v212 = vld [vmem:[#allocation11 + $0x8] sm:$0xff]
      %v213 = vld [vmem:[#allocation11 + $0x10] sm:$0xff]
      %v214 = vld [vmem:[#allocation11 + $0x18] sm:$0xff]
      %v216 = vsel %vm150, %v210, 0
      %218 = vmatpush.msra.mxu0 0.0
      %219 = vmatpush.msra.mxu0 0.0
      %220 = vmatpush.msra.mxu0 0.0
      %221 = vmatpush.msra.mxu0 0.0
      %222 = vmatpush.msra.mxu0 0.0
      %223 = vmatpush.msra.mxu0 0.0
      %224 = vmatpush.msra.mxu0 0.0
      %225 = vmatpush.msra.mxu0 0.0
      %226 = vmatpush.msra.mxu0 0.0
      %227 = vmatpush.msra.mxu0 0.0
      %228 = vmatpush.msra.mxu0 0.0
      %229 = vmatpush.msra.mxu0 0.0
      %230 = vmatpush.msra.mxu0 %v214
      %231 = vmatpush.msra.mxu0 %v213
      %232 = vmatpush.msra.mxu0 %v212
      %233 = vmatpush.msra.mxu0 %v211
      %234 = vmatmul.f32.gmra.mxu0 %v216
      %v235 = vpop.f32.mrf.mxu0
      %v236 = vadd.f32 0.0, %v235
      %237 = vdwg.mxu0
      %v238 = vadd.f32 %v208, %v236
      %v239 = vsub.f32 0.0, %v174
      %v240 = vmul.f32 %v239, 1.442695
      %v241 = vpow.pop %v240
      %v242 = vadd.f32 %v241, 1.0
      %v243 = vrcp.pop %v242
      %v244 = vmul.f32 %v242, %v243
      %v245 = vsub.f32 1.0, %v244
      %v246 = vmul.f32 %v243, %v245
      %v247 = vadd.f32 %v243, %v246
      %vm248 = vweird.f32 %v242
      %vm249 = vweird.f32 %v243
      %vm250 = vmor %vm248, %vm249
      %v251 = vsel %vm250, %v243, %v247
      %v252 = vand.u32 2147483647, %v242
      %vm253 = vcmp.eq.f32.partialorder %v252, 8.507059e+37
      %v254 = vand.u32 %v242, 2147483648
      %v255 = vor.u32 1.1754944e-38, %v254
      %v256 = vsel %vm253, %v255, %v251
      %v257 = vmul.f32 1.0, %v256
      %v258 = vtanh.pop %v174
      %v259 = vld [vmem:[#allocation3] sm:$0x3]
      %261 = vrot.lane.b32.xlu0 %v259, 32
      %v262 = vpop.permute.xlu0 %261
      %v264 = vmul.f32 %v257, %v262
      %266 = vrot.lane.b32.xlu0 %v258, 64
      %v267 = vpop.permute.xlu0 %266
      %v269 = vmul.f32 %v257, %v267
      %271 = vrot.lane.b32.xlu0 %v269, 32
      %v272 = vpop.permute.xlu0 %271
      %v274 = vadd.f32 %v264, %v272
      %v275 = vtanh.pop %v274
      %277 = vrot.lane.b32.xlu0 %v275, 64
      %v278 = vpop.permute.xlu0 %277
      %v280 = vmul.f32 %v257, %v278
      %282 = vrot.lane.b32.xlu0 %v274, 96
      %v283 = vpop.permute.xlu0 %282
      %285 = vst.msk [vmem:[#allocation3] sm:$0x3] %vm91, %v283
      %287 = vrot.lane.b32.xlu0 %v280, 32
      %v288 = vpop.permute.xlu0 %287
      %290 = vst.msk [vmem:[#allocation2] sm:$0x3] %vm91, %v288
      %s291 = scalar_lea.vmem %s7, %s102
      %292 = vst.msk [vmem:[%s291] sm:$0x3] %vm91, %v288
      %v293 = vsub.f32 0.0, %v238
      %v294 = vmul.f32 %v293, 1.442695
      %v295 = vpow.pop %v294
      %v296 = vadd.f32 %v295, 1.0
      %v297 = vrcp.pop %v296
      %v298 = vmul.f32 %v296, %v297
      %v299 = vsub.f32 1.0, %v298
      %v300 = vmul.f32 %v297, %v299
      %v301 = vadd.f32 %v297, %v300
      %vm302 = vweird.f32 %v296
      %vm303 = vweird.f32 %v297
      %vm304 = vmor %vm302, %vm303
      %v305 = vsel %vm304, %v297, %v301
      %v306 = vand.u32 2147483647, %v296
      %vm307 = vcmp.eq.f32.partialorder %v306, 8.507059e+37
      %v308 = vand.u32 %v296, 2147483648
      %v309 = vor.u32 1.1754944e-38, %v308
      %v310 = vsel %vm307, %v309, %v305
      %v311 = vmul.f32 1.0, %v310
      %v312 = vtanh.pop %v238
      %v313 = vld [vmem:[#allocation5] sm:$0x3]
      %315 = vrot.lane.b32.xlu0 %v313, 32
      %v316 = vpop.permute.xlu0 %315
      %v318 = vmul.f32 %v311, %v316
      %320 = vrot.lane.b32.xlu0 %v312, 64
      %v321 = vpop.permute.xlu0 %320
      %v323 = vmul.f32 %v311, %v321
      %325 = vrot.lane.b32.xlu0 %v323, 32
      %v326 = vpop.permute.xlu0 %325
      %v328 = vadd.f32 %v318, %v326
      %v329 = vtanh.pop %v328
      %331 = vrot.lane.b32.xlu0 %v329, 64
      %v332 = vpop.permute.xlu0 %331
      %v334 = vmul.f32 %v311, %v332
      %336 = vrot.lane.b32.xlu0 %v328, 96
      %v337 = vpop.permute.xlu0 %336
      %339 = vst.msk [vmem:[#allocation5] sm:$0x3] %vm91, %v337
      %341 = vrot.lane.b32.xlu0 %v334, 32
      %v342 = vpop.permute.xlu0 %341
      %344 = vst.msk [vmem:[#allocation4] sm:$0x3] %vm91, %v342
      %s345 = scalar_lea.vmem %s8, %s106
      %346 = vst.msk [vmem:[%s345] sm:$0x3] %vm91, %v342
    $region50: #{new_model2_forward.9} parent=1 // loop_footer
      %s101 = sadd.s32 1, %s97
    $region51: #{new_model2_forward.9} parent=1 // loop_footer_branch
      %96 = sbr.rel target = $region47
    $region52: #{new_model2_forward.9} parent=1 // loop_exit
      _
    // Predicated region
    $region53: #{new_model2_forward.9} parent=1 // pred_check
      _
    $region54: #{new_model2_forward.9} parent=1 // pred_check_branch
      %348 = sbr.rel (0) target = $region56
    $region55: #{new_model2_forward.9} parent=1 // pred_region
      _
    $region56: #{new_model2_forward.9} parent=1 // pred_fallthru
      _
    // Predicated region
    $region57: #{new_model2_forward.9} parent=1 // pred_check
      _
    $region58: #{new_model2_forward.9} parent=1 // pred_check_branch
      %350 = sbr.rel (0) target = $region60
    $region59: #{new_model2_forward.9} parent=1 // pred_region
      _
    $region60: #{new_model2_forward.9} parent=1 // pred_fallthru
      _
    // Predicated region
    $region61: #{new_model2_forward.9} parent=1 // pred_check
      _
    $region62: #{new_model2_forward.9} parent=1 // pred_check_branch
      %352 = sbr.rel (0) target = $region64
    $region63: #{new_model2_forward.9} parent=1 // pred_region
      _
    $region64: #{new_model2_forward.9} parent=1 // pred_fallthru
      _
    // Predicated region
    $region65: #{new_model2_forward.9} parent=1 // pred_check
      _
    $region66: #{new_model2_forward.9} parent=1 // pred_check_branch
      %354 = sbr.rel (0) target = $region68
    $region67: #{new_model2_forward.9} parent=1 // pred_region
      _
    $region68: #{new_model2_forward.9} parent=1 // pred_fallthru
      _
    %355 = vsyncpa [#allocation7], 1
    %356 = vsyncpa [#allocation9], 1
    %357 = vsyncpa [#allocation12], 1

// kernel: new_model2_forward.7
$region0: #{new_model2_forward.7}
  #allocation0 [shape = 'u32[]', space=smem, size = 0x4, offset = 0x4, fixed_abs, tag = 'smem constant byte address 0x4 - core index']
  #allocation1 [shape = 'u32[72,128]{1,0:T(1,128)}', space=vmem, size = 0x9000, scoped, tag = 'internal scratch']
  %s0 = inlined_call_operand.vmem [shape: f32[88,8], index: 0, kind: input, shape index: {}]
  %s1 = inlined_call_operand.hbm [shape: f32[8,2048], index: 1, kind: input, shape index: {}]
  %s2 = inlined_call_operand.hbm [shape: f32[1,2048], index: 2, kind: input, shape index: {}]
  %s3 = inlined_call_operand.vmem [shape: f32[2048,8], index: 3, kind: input, shape index: {}]
  %s4 = inlined_call_operand.hbm [shape: f32[1,8], index: 4, kind: input, shape index: {}]
  %s5 = inlined_call_operand.hbm [shape: f32[1,8], index: 5, kind: input, shape index: {}]
  %s6 = inlined_call_operand.hbm [shape: f32[1,8], index: 6, kind: input, shape index: {}]
  %s7 = inlined_call_operand.vmem [shape: f32[88,8], index: 7, kind: output, shape index: {}]
  %s8 = sld [smem:[#allocation0]]
  $region58: #{new_model2_forward.7} parent=0
    _
  %s10 = ssub.s32 1, %s8
  %s11 = scalar_select 0, %s10, %s8
  $region1: #{new_model2_forward.7} parent=0
    #allocation2 [shape = 'u8[65536]{0}', space=vmem, size = 0x10000, scoped, tag = 'input window, operand 1, single buffered']
    #allocation3 [shape = 's32[1]{0}', space=sflag, size = 0x4, scoped, tag = 'scoped memory for new_model2_forward.7']
    #allocation4 [shape = 'u8[8192]{0}', space=vmem, size = 0x2000, scoped, tag = 'input window, operand 2, single buffered']
    #allocation5 [shape = 's32[1]{0}', space=sflag, size = 0x4, scoped, tag = 'scoped memory for new_model2_forward.7']
    #allocation6 [shape = 'u8[512]{0}', space=vmem, size = 0x400, scoped, tag = 'input window, operand 4, single buffered']
    #allocation7 [shape = 'u8[512]{0}', space=vmem, size = 0x400, scoped, tag = 'input window, operand 5, single buffered']
    #allocation8 [shape = 's32[1]{0}', space=sflag, size = 0x4, scoped, tag = 'scoped memory for new_model2_forward.7']
    #allocation9 [shape = 'u8[512]{0}', space=vmem, size = 0x400, scoped, tag = 'input window, operand 6, single buffered']
    %12 = vsyncpa [#allocation3], 0
    %13 = vsyncpa [#allocation5], 0
    %14 = vsyncpa [#allocation8], 0
    // Predicated region
    $region2: #{new_model2_forward.7} parent=1 // pred_check
      _
    $region3: #{new_model2_forward.7} parent=1 // pred_check_branch
      %16 = sbr.rel (0) target = $region5
    $region4: #{new_model2_forward.7} parent=1 // pred_region
      _
    $region5: #{new_model2_forward.7} parent=1 // pred_fallthru
      _
    // Predicated region
    $region6: #{new_model2_forward.7} parent=1 // pred_check
      _
    $region7: #{new_model2_forward.7} parent=1 // pred_check_branch
      %18 = sbr.rel (0) target = $region9
    $region8: #{new_model2_forward.7} parent=1 // pred_region
      %20 = vsyncadd [#allocation3], 0
      %s22 = sshll.u32 %s1, 4
      %s23 = int_to_ptr.hbm [resolvable:$true] %s22
      %s24 = sshll.u32 [#allocation2], 4
      %s25 = int_to_ptr.vmem [resolvable:$true] %s24
      %27 = dma.hbm_to_vmem [thread:$0]  %s23, 2048, %s25, [#allocation3]
    $region9: #{new_model2_forward.7} parent=1 // pred_fallthru
      _
    // Predicated region
    $region10: #{new_model2_forward.7} parent=1 // pred_check
      _
    $region11: #{new_model2_forward.7} parent=1 // pred_check_branch
      %29 = sbr.rel (0) target = $region13
    $region12: #{new_model2_forward.7} parent=1 // pred_region
      %31 = vsyncadd [#allocation5], 0
      %s33 = sshll.u32 %s2, 4
      %s34 = int_to_ptr.hbm [resolvable:$true] %s33
      %s35 = sshll.u32 [#allocation4], 4
      %s36 = int_to_ptr.vmem [resolvable:$true] %s35
      %38 = dma.hbm_to_vmem [thread:$0]  %s34, 256, %s36, [#allocation5]
    $region13: #{new_model2_forward.7} parent=1 // pred_fallthru
      _
    // Predicated region
    $region14: #{new_model2_forward.7} parent=1 // pred_check
      _
    $region15: #{new_model2_forward.7} parent=1 // pred_check_branch
      %40 = sbr.rel (0) target = $region17
    $region16: #{new_model2_forward.7} parent=1 // pred_region
      _
    $region17: #{new_model2_forward.7} parent=1 // pred_fallthru
      _
    // Predicated region
    $region18: #{new_model2_forward.7} parent=1 // pred_check
      _
    $region19: #{new_model2_forward.7} parent=1 // pred_check_branch
      %42 = sbr.rel (0) target = $region21
    $region20: #{new_model2_forward.7} parent=1 // pred_region
      %44 = vsyncadd [#allocation5], 0
      %s46 = sshll.u32 %s4, 4
      %s47 = int_to_ptr.hbm [resolvable:$true] %s46
      %s48 = sshll.u32 [#allocation6], 4
      %s49 = int_to_ptr.vmem [resolvable:$true] %s48
      %51 = dma.hbm_to_vmem [thread:$0]  %s47, 16, %s49, [#allocation5]
    $region21: #{new_model2_forward.7} parent=1 // pred_fallthru
      _
    // Predicated region
    $region22: #{new_model2_forward.7} parent=1 // pred_check
      _
    $region23: #{new_model2_forward.7} parent=1 // pred_check_branch
      %53 = sbr.rel (0) target = $region25
    $region24: #{new_model2_forward.7} parent=1 // pred_region
      %55 = vsyncadd [#allocation8], 0
      %s57 = sshll.u32 %s5, 4
      %s58 = int_to_ptr.hbm [resolvable:$true] %s57
      %s59 = sshll.u32 [#allocation7], 4
      %s60 = int_to_ptr.vmem [resolvable:$true] %s59
      %62 = dma.hbm_to_vmem [thread:$0]  %s58, 16, %s60, [#allocation8]
    $region25: #{new_model2_forward.7} parent=1 // pred_fallthru
      _
    // Predicated region
    $region26: #{new_model2_forward.7} parent=1 // pred_check
      _
    $region27: #{new_model2_forward.7} parent=1 // pred_check_branch
      %64 = sbr.rel (0) target = $region29
    $region28: #{new_model2_forward.7} parent=1 // pred_region
      %66 = vsyncadd [#allocation8], 0
      %s68 = sshll.u32 %s6, 4
      %s69 = int_to_ptr.hbm [resolvable:$true] %s68
      %s70 = sshll.u32 [#allocation9], 4
      %s71 = int_to_ptr.vmem [resolvable:$true] %s70
      %73 = dma.hbm_to_vmem [thread:$0]  %s69, 16, %s71, [#allocation8]
    $region29: #{new_model2_forward.7} parent=1 // pred_fallthru
      _
    // Predicated region
    $region30: #{new_model2_forward.7} parent=1 // pred_check
      _
    $region31: #{new_model2_forward.7} parent=1 // pred_check_branch
      %75 = sbr.rel (0) target = $region33
    $region32: #{new_model2_forward.7} parent=1 // pred_region
      %77 = dma.done [#allocation3], 2048
    $region33: #{new_model2_forward.7} parent=1 // pred_fallthru
      _
    // Predicated region
    $region34: #{new_model2_forward.7} parent=1 // pred_check
      _
    $region35: #{new_model2_forward.7} parent=1 // pred_check_branch
      %79 = sbr.rel (0) target = $region37
    $region36: #{new_model2_forward.7} parent=1 // pred_region
      %81 = dma.done [#allocation5], 256
    $region37: #{new_model2_forward.7} parent=1 // pred_fallthru
      _
    // Predicated region
    $region38: #{new_model2_forward.7} parent=1 // pred_check
      _
    $region39: #{new_model2_forward.7} parent=1 // pred_check_branch
      %83 = sbr.rel (0) target = $region41
    $region40: #{new_model2_forward.7} parent=1 // pred_region
      %85 = dma.done [#allocation5], 16
    $region41: #{new_model2_forward.7} parent=1 // pred_fallthru
      _
    // Predicated region
    $region42: #{new_model2_forward.7} parent=1 // pred_check
      _
    $region43: #{new_model2_forward.7} parent=1 // pred_check_branch
      %87 = sbr.rel (0) target = $region45
    $region44: #{new_model2_forward.7} parent=1 // pred_region
      %89 = dma.done [#allocation8], 16
    $region45: #{new_model2_forward.7} parent=1 // pred_fallthru
      _
    // Predicated region
    $region46: #{new_model2_forward.7} parent=1 // pred_check
      _
    $region47: #{new_model2_forward.7} parent=1 // pred_check_branch
      %91 = sbr.rel (0) target = $region49
    $region48: #{new_model2_forward.7} parent=1 // pred_region
      %93 = dma.done [#allocation8], 16
    $region49: #{new_model2_forward.7} parent=1 // pred_fallthru
      _
    %v94 = vld [vmem:[%s0] sm:$0xff]
    %v95 = vld [vmem:[%s0 + $0x8] sm:$0xff]
    %v96 = vld [vmem:[%s0 + $0x10] sm:$0xff]
    %v97 = vld [vmem:[%s0 + $0x18] sm:$0xff]
    %v98 = vld [vmem:[%s0 + $0x20] sm:$0xff]
    %v99 = vld [vmem:[%s0 + $0x28] sm:$0xff]
    %v100 = vld [vmem:[%s0 + $0x30] sm:$0xff]
    %v101 = vld [vmem:[%s0 + $0x38] sm:$0xff]
    %v102 = vld [vmem:[%s0 + $0x40] sm:$0xff]
    %v103 = vld [vmem:[%s0 + $0x48] sm:$0xff]
    %v104 = vld [vmem:[%s0 + $0x50] sm:$0xff]
    %v105 = vld [vmem:[#allocation2] sm:$0xff]
    %v106 = vld [vmem:[#allocation2 + $0x8] sm:$0xff]
    %v107 = vld [vmem:[#allocation2 + $0x10] sm:$0xff]
    %v108 = vld [vmem:[#allocation2 + $0x18] sm:$0xff]
    %v109 = vld [vmem:[#allocation2 + $0x20] sm:$0xff]
    %v110 = vld [vmem:[#allocation2 + $0x28] sm:$0xff]
    %v111 = vld [vmem:[#allocation2 + $0x30] sm:$0xff]
    %v112 = vld [vmem:[#allocation2 + $0x38] sm:$0xff]
    %v113 = vld [vmem:[#allocation2 + $0x40] sm:$0xff]
    %v114 = vld [vmem:[#allocation2 + $0x48] sm:$0xff]
    %v115 = vld [vmem:[#allocation2 + $0x50] sm:$0xff]
    %v116 = vld [vmem:[#allocation2 + $0x58] sm:$0xff]
    %v117 = vld [vmem:[#allocation2 + $0x60] sm:$0xff]
    %v118 = vld [vmem:[#allocation2 + $0x68] sm:$0xff]
    %v119 = vld [vmem:[#allocation2 + $0x70] sm:$0xff]
    %v120 = vld [vmem:[#allocation2 + $0x78] sm:$0xff]
    %v121 = vld [vmem:[#allocation4] sm:$0xff]
    %v122 = vld [vmem:[#allocation4 + $0x8] sm:$0xff]
    %v125 = vperm.slane %v121, 0
    %v126 = vperm.slane %v121, 1
    %v127 = vperm.slane %v121, 2
    %v128 = vperm.slane %v121, 3
    %v129 = vperm.slane %v121, 4
    %v130 = vperm.slane %v121, 5
    %v131 = vperm.slane %v121, 6
    %v132 = vperm.slane %v121, 7
    %v133 = vperm.slane %v122, 0
    %v134 = vperm.slane %v122, 1
    %v135 = vperm.slane %v122, 2
    %v136 = vperm.slane %v122, 3
    %v137 = vperm.slane %v122, 4
    %v138 = vperm.slane %v122, 5
    %v139 = vperm.slane %v122, 6
    %v140 = vperm.slane %v122, 7
    %vm157 = vcmask 64512
    %v159 = vsel %vm157, %v94, 0
    %v162 = vsel %vm157, %v95, 0
    %v165 = vsel %vm157, %v96, 0
    %v168 = vsel %vm157, %v97, 0
    %v171 = vsel %vm157, %v98, 0
    %v174 = vsel %vm157, %v99, 0
    %v177 = vsel %vm157, %v100, 0
    %v180 = vsel %vm157, %v101, 0
    %v183 = vsel %vm157, %v102, 0
    %v186 = vsel %vm157, %v103, 0
    %v189 = vsel %vm157, %v104, 0
    %191 = vmatpush.msra.mxu0 0.0
    %192 = vmatpush.msra.mxu0 0.0
    %193 = vmatpush.msra.mxu0 0.0
    %194 = vmatpush.msra.mxu0 0.0
    %195 = vmatpush.msra.mxu0 0.0
    %196 = vmatpush.msra.mxu0 0.0
    %197 = vmatpush.msra.mxu0 0.0
    %198 = vmatpush.msra.mxu0 0.0
    %199 = vmatpush.msra.mxu0 0.0
    %200 = vmatpush.msra.mxu0 0.0
    %201 = vmatpush.msra.mxu0 0.0
    %202 = vmatpush.msra.mxu0 0.0
    %203 = vmatpush.msra.mxu0 0.0
    %204 = vmatpush.msra.mxu0 0.0
    %205 = vmatpush.msra.mxu0 0.0
    %206 = vmatpush.msra.mxu0 %v105
    %207 = vmatmul.f32.gmra.mxu0 %v159
    %v208 = vpop.f32.mrf.mxu0
    %v209 = vadd.f32 %v125, %v208
    %210 = vmatmul.f32.gmra.mxu0 %v162
    %v211 = vpop.f32.mrf.mxu0
    %v212 = vadd.f32 %v125, %v211
    %213 = vmatmul.f32.gmra.mxu0 %v165
    %v214 = vpop.f32.mrf.mxu0
    %v215 = vadd.f32 %v125, %v214
    %216 = vmatmul.f32.gmra.mxu0 %v168
    %v217 = vpop.f32.mrf.mxu0
    %v218 = vadd.f32 %v125, %v217
    %219 = vmatmul.f32.gmra.mxu0 %v171
    %v220 = vpop.f32.mrf.mxu0
    %v221 = vadd.f32 %v125, %v220
    %222 = vmatmul.f32.gmra.mxu0 %v174
    %v223 = vpop.f32.mrf.mxu0
    %v224 = vadd.f32 %v125, %v223
    %225 = vmatmul.f32.gmra.mxu0 %v177
    %v226 = vpop.f32.mrf.mxu0
    %v227 = vadd.f32 %v125, %v226
    %228 = vmatmul.f32.gmra.mxu0 %v180
    %v229 = vpop.f32.mrf.mxu0
    %v230 = vadd.f32 %v125, %v229
    %231 = vmatmul.f32.gmra.mxu0 %v183
    %v232 = vpop.f32.mrf.mxu0
    %v233 = vadd.f32 %v125, %v232
    %234 = vmatmul.f32.gmra.mxu0 %v186
    %v235 = vpop.f32.mrf.mxu0
    %v236 = vadd.f32 %v125, %v235
    %237 = vmatmul.f32.gmra.mxu0 %v189
    %v238 = vpop.f32.mrf.mxu0
    %v239 = vadd.f32 %v125, %v238
    %240 = vdwg.mxu0
    %241 = vmatpush.msra.mxu0 0.0
    %242 = vmatpush.msra.mxu0 0.0
    %243 = vmatpush.msra.mxu0 0.0
    %244 = vmatpush.msra.mxu0 0.0
    %245 = vmatpush.msra.mxu0 0.0
    %246 = vmatpush.msra.mxu0 0.0
    %247 = vmatpush.msra.mxu0 0.0
    %248 = vmatpush.msra.mxu0 0.0
    %249 = vmatpush.msra.mxu0 0.0
    %250 = vmatpush.msra.mxu0 0.0
    %251 = vmatpush.msra.mxu0 0.0
    %252 = vmatpush.msra.mxu0 0.0
    %253 = vmatpush.msra.mxu0 0.0
    %254 = vmatpush.msra.mxu0 0.0
    %255 = vmatpush.msra.mxu0 0.0
    %256 = vmatpush.msra.mxu0 %v106
    %257 = vmatmul.f32.gmra.mxu0 %v159
    %v258 = vpop.f32.mrf.mxu0
    %v259 = vadd.f32 %v126, %v258
    %260 = vmatmul.f32.gmra.mxu0 %v162
    %v261 = vpop.f32.mrf.mxu0
    %v262 = vadd.f32 %v126, %v261
    %263 = vmatmul.f32.gmra.mxu0 %v165
    %v264 = vpop.f32.mrf.mxu0
    %v265 = vadd.f32 %v126, %v264
    %266 = vmatmul.f32.gmra.mxu0 %v168
    %v267 = vpop.f32.mrf.mxu0
    %v268 = vadd.f32 %v126, %v267
    %269 = vmatmul.f32.gmra.mxu0 %v171
    %v270 = vpop.f32.mrf.mxu0
    %v271 = vadd.f32 %v126, %v270
    %272 = vmatmul.f32.gmra.mxu0 %v174
    %v273 = vpop.f32.mrf.mxu0
    %v274 = vadd.f32 %v126, %v273
    %275 = vmatmul.f32.gmra.mxu0 %v177
    %v276 = vpop.f32.mrf.mxu0
    %v277 = vadd.f32 %v126, %v276
    %278 = vmatmul.f32.gmra.mxu0 %v180
    %v279 = vpop.f32.mrf.mxu0
    %v280 = vadd.f32 %v126, %v279
    %281 = vmatmul.f32.gmra.mxu0 %v183
    %v282 = vpop.f32.mrf.mxu0
    %v283 = vadd.f32 %v126, %v282
    %284 = vmatmul.f32.gmra.mxu0 %v186
    %v285 = vpop.f32.mrf.mxu0
    %v286 = vadd.f32 %v126, %v285
    %287 = vmatmul.f32.gmra.mxu0 %v189
    %v288 = vpop.f32.mrf.mxu0
    %v289 = vadd.f32 %v126, %v288
    %290 = vdwg.mxu0
    %291 = vmatpush.msra.mxu0 0.0
    %292 = vmatpush.msra.mxu0 0.0
    %293 = vmatpush.msra.mxu0 0.0
    %294 = vmatpush.msra.mxu0 0.0
    %295 = vmatpush.msra.mxu0 0.0
    %296 = vmatpush.msra.mxu0 0.0
    %297 = vmatpush.msra.mxu0 0.0
    %298 = vmatpush.msra.mxu0 0.0
    %299 = vmatpush.msra.mxu0 0.0
    %300 = vmatpush.msra.mxu0 0.0
    %301 = vmatpush.msra.mxu0 0.0
    %302 = vmatpush.msra.mxu0 0.0
    %303 = vmatpush.msra.mxu0 0.0
    %304 = vmatpush.msra.mxu0 0.0
    %305 = vmatpush.msra.mxu0 0.0
    %306 = vmatpush.msra.mxu0 %v107
    %307 = vmatmul.f32.gmra.mxu0 %v159
    %v308 = vpop.f32.mrf.mxu0
    %v309 = vadd.f32 %v127, %v308
    %310 = vmatmul.f32.gmra.mxu0 %v162
    %v311 = vpop.f32.mrf.mxu0
    %v312 = vadd.f32 %v127, %v311
    %313 = vmatmul.f32.gmra.mxu0 %v165
    %v314 = vpop.f32.mrf.mxu0
    %v315 = vadd.f32 %v127, %v314
    %316 = vmatmul.f32.gmra.mxu0 %v168
    %v317 = vpop.f32.mrf.mxu0
    %v318 = vadd.f32 %v127, %v317
    %319 = vmatmul.f32.gmra.mxu0 %v171
    %v320 = vpop.f32.mrf.mxu0
    %v321 = vadd.f32 %v127, %v320
    %322 = vmatmul.f32.gmra.mxu0 %v174
    %v323 = vpop.f32.mrf.mxu0
    %v324 = vadd.f32 %v127, %v323
    %325 = vmatmul.f32.gmra.mxu0 %v177
    %v326 = vpop.f32.mrf.mxu0
    %v327 = vadd.f32 %v127, %v326
    %328 = vmatmul.f32.gmra.mxu0 %v180
    %v329 = vpop.f32.mrf.mxu0
    %v330 = vadd.f32 %v127, %v329
    %331 = vmatmul.f32.gmra.mxu0 %v183
    %v332 = vpop.f32.mrf.mxu0
    %v333 = vadd.f32 %v127, %v332
    %334 = vmatmul.f32.gmra.mxu0 %v186
    %v335 = vpop.f32.mrf.mxu0
    %v336 = vadd.f32 %v127, %v335
    %337 = vmatmul.f32.gmra.mxu0 %v189
    %v338 = vpop.f32.mrf.mxu0
    %v339 = vadd.f32 %v127, %v338
    %340 = vdwg.mxu0
    %341 = vmatpush.msra.mxu0 0.0
    %342 = vmatpush.msra.mxu0 0.0
    %343 = vmatpush.msra.mxu0 0.0
    %344 = vmatpush.msra.mxu0 0.0
    %345 = vmatpush.msra.mxu0 0.0
    %346 = vmatpush.msra.mxu0 0.0
    %347 = vmatpush.msra.mxu0 0.0
    %348 = vmatpush.msra.mxu0 0.0
    %349 = vmatpush.msra.mxu0 0.0
    %350 = vmatpush.msra.mxu0 0.0
    %351 = vmatpush.msra.mxu0 0.0
    %352 = vmatpush.msra.mxu0 0.0
    %353 = vmatpush.msra.mxu0 0.0
    %354 = vmatpush.msra.mxu0 0.0
    %355 = vmatpush.msra.mxu0 0.0
    %356 = vmatpush.msra.mxu0 %v108
    %357 = vmatmul.f32.gmra.mxu0 %v159
    %v358 = vpop.f32.mrf.mxu0
    %v359 = vadd.f32 %v128, %v358
    %360 = vmatmul.f32.gmra.mxu0 %v162
    %v361 = vpop.f32.mrf.mxu0
    %v362 = vadd.f32 %v128, %v361
    %363 = vmatmul.f32.gmra.mxu0 %v165
    %v364 = vpop.f32.mrf.mxu0
    %v365 = vadd.f32 %v128, %v364
    %366 = vmatmul.f32.gmra.mxu0 %v168
    %v367 = vpop.f32.mrf.mxu0
    %v368 = vadd.f32 %v128, %v367
    %369 = vmatmul.f32.gmra.mxu0 %v171
    %v370 = vpop.f32.mrf.mxu0
    %v371 = vadd.f32 %v128, %v370
    %372 = vmatmul.f32.gmra.mxu0 %v174
    %v373 = vpop.f32.mrf.mxu0
    %v374 = vadd.f32 %v128, %v373
    %375 = vmatmul.f32.gmra.mxu0 %v177
    %v376 = vpop.f32.mrf.mxu0
    %v377 = vadd.f32 %v128, %v376
    %378 = vmatmul.f32.gmra.mxu0 %v180
    %v379 = vpop.f32.mrf.mxu0
    %v380 = vadd.f32 %v128, %v379
    %381 = vmatmul.f32.gmra.mxu0 %v183
    %v382 = vpop.f32.mrf.mxu0
    %v383 = vadd.f32 %v128, %v382
    %384 = vmatmul.f32.gmra.mxu0 %v186
    %v385 = vpop.f32.mrf.mxu0
    %v386 = vadd.f32 %v128, %v385
    %387 = vmatmul.f32.gmra.mxu0 %v189
    %v388 = vpop.f32.mrf.mxu0
    %v389 = vadd.f32 %v128, %v388
    %390 = vdwg.mxu0
    %391 = vmatpush.msra.mxu0 0.0
    %392 = vmatpush.msra.mxu0 0.0
    %393 = vmatpush.msra.mxu0 0.0
    %394 = vmatpush.msra.mxu0 0.0
    %395 = vmatpush.msra.mxu0 0.0
    %396 = vmatpush.msra.mxu0 0.0
    %397 = vmatpush.msra.mxu0 0.0
    %398 = vmatpush.msra.mxu0 0.0
    %399 = vmatpush.msra.mxu0 0.0
    %400 = vmatpush.msra.mxu0 0.0
    %401 = vmatpush.msra.mxu0 0.0
    %402 = vmatpush.msra.mxu0 0.0
    %403 = vmatpush.msra.mxu0 0.0
    %404 = vmatpush.msra.mxu0 0.0
    %405 = vmatpush.msra.mxu0 0.0
    %406 = vmatpush.msra.mxu0 %v109
    %407 = vmatmul.f32.gmra.mxu0 %v159
    %v408 = vpop.f32.mrf.mxu0
    %v409 = vadd.f32 %v129, %v408
    %410 = vmatmul.f32.gmra.mxu0 %v162
    %v411 = vpop.f32.mrf.mxu0
    %v412 = vadd.f32 %v129, %v411
    %413 = vmatmul.f32.gmra.mxu0 %v165
    %v414 = vpop.f32.mrf.mxu0
    %v415 = vadd.f32 %v129, %v414
    %416 = vmatmul.f32.gmra.mxu0 %v168
    %v417 = vpop.f32.mrf.mxu0
    %v418 = vadd.f32 %v129, %v417
    %419 = vmatmul.f32.gmra.mxu0 %v171
    %v420 = vpop.f32.mrf.mxu0
    %v421 = vadd.f32 %v129, %v420
    %422 = vmatmul.f32.gmra.mxu0 %v174
    %v423 = vpop.f32.mrf.mxu0
    %v424 = vadd.f32 %v129, %v423
    %425 = vmatmul.f32.gmra.mxu0 %v177
    %v426 = vpop.f32.mrf.mxu0
    %v427 = vadd.f32 %v129, %v426
    %428 = vmatmul.f32.gmra.mxu0 %v180
    %v429 = vpop.f32.mrf.mxu0
    %v430 = vadd.f32 %v129, %v429
    %431 = vmatmul.f32.gmra.mxu0 %v183
    %v432 = vpop.f32.mrf.mxu0
    %v433 = vadd.f32 %v129, %v432
    %434 = vmatmul.f32.gmra.mxu0 %v186
    %v435 = vpop.f32.mrf.mxu0
    %v436 = vadd.f32 %v129, %v435
    %437 = vmatmul.f32.gmra.mxu0 %v189
    %v438 = vpop.f32.mrf.mxu0
    %v439 = vadd.f32 %v129, %v438
    %440 = vdwg.mxu0
    %441 = vmatpush.msra.mxu0 0.0
    %442 = vmatpush.msra.mxu0 0.0
    %443 = vmatpush.msra.mxu0 0.0
    %444 = vmatpush.msra.mxu0 0.0
    %445 = vmatpush.msra.mxu0 0.0
    %446 = vmatpush.msra.mxu0 0.0
    %447 = vmatpush.msra.mxu0 0.0
    %448 = vmatpush.msra.mxu0 0.0
    %449 = vmatpush.msra.mxu0 0.0
    %450 = vmatpush.msra.mxu0 0.0
    %451 = vmatpush.msra.mxu0 0.0
    %452 = vmatpush.msra.mxu0 0.0
    %453 = vmatpush.msra.mxu0 0.0
    %454 = vmatpush.msra.mxu0 0.0
    %455 = vmatpush.msra.mxu0 0.0
    %456 = vmatpush.msra.mxu0 %v110
    %457 = vmatmul.f32.gmra.mxu0 %v159
    %v458 = vpop.f32.mrf.mxu0
    %v459 = vadd.f32 %v130, %v458
    %460 = vmatmul.f32.gmra.mxu0 %v162
    %v461 = vpop.f32.mrf.mxu0
    %v462 = vadd.f32 %v130, %v461
    %463 = vmatmul.f32.gmra.mxu0 %v165
    %v464 = vpop.f32.mrf.mxu0
    %v465 = vadd.f32 %v130, %v464
    %466 = vmatmul.f32.gmra.mxu0 %v168
    %v467 = vpop.f32.mrf.mxu0
    %v468 = vadd.f32 %v130, %v467
    %469 = vmatmul.f32.gmra.mxu0 %v171
    %v470 = vpop.f32.mrf.mxu0
    %v471 = vadd.f32 %v130, %v470
    %472 = vmatmul.f32.gmra.mxu0 %v174
    %v473 = vpop.f32.mrf.mxu0
    %v474 = vadd.f32 %v130, %v473
    %475 = vmatmul.f32.gmra.mxu0 %v177
    %v476 = vpop.f32.mrf.mxu0
    %v477 = vadd.f32 %v130, %v476
    %478 = vmatmul.f32.gmra.mxu0 %v180
    %v479 = vpop.f32.mrf.mxu0
    %v480 = vadd.f32 %v130, %v479
    %481 = vmatmul.f32.gmra.mxu0 %v183
    %v482 = vpop.f32.mrf.mxu0
    %v483 = vadd.f32 %v130, %v482
    %484 = vmatmul.f32.gmra.mxu0 %v186
    %v485 = vpop.f32.mrf.mxu0
    %v486 = vadd.f32 %v130, %v485
    %487 = vmatmul.f32.gmra.mxu0 %v189
    %v488 = vpop.f32.mrf.mxu0
    %v489 = vadd.f32 %v130, %v488
    %490 = vdwg.mxu0
    %491 = vmatpush.msra.mxu0 0.0
    %492 = vmatpush.msra.mxu0 0.0
    %493 = vmatpush.msra.mxu0 0.0
    %494 = vmatpush.msra.mxu0 0.0
    %495 = vmatpush.msra.mxu0 0.0
    %496 = vmatpush.msra.mxu0 0.0
    %497 = vmatpush.msra.mxu0 0.0
    %498 = vmatpush.msra.mxu0 0.0
    %499 = vmatpush.msra.mxu0 0.0
    %500 = vmatpush.msra.mxu0 0.0
    %501 = vmatpush.msra.mxu0 0.0
    %502 = vmatpush.msra.mxu0 0.0
    %503 = vmatpush.msra.mxu0 0.0
    %504 = vmatpush.msra.mxu0 0.0
    %505 = vmatpush.msra.mxu0 0.0
    %506 = vmatpush.msra.mxu0 %v111
    %507 = vmatmul.f32.gmra.mxu0 %v159
    %v508 = vpop.f32.mrf.mxu0
    %v509 = vadd.f32 %v131, %v508
    %510 = vmatmul.f32.gmra.mxu0 %v162
    %v511 = vpop.f32.mrf.mxu0
    %v512 = vadd.f32 %v131, %v511
    %513 = vmatmul.f32.gmra.mxu0 %v165
    %v514 = vpop.f32.mrf.mxu0
    %v515 = vadd.f32 %v131, %v514
    %516 = vmatmul.f32.gmra.mxu0 %v168
    %v517 = vpop.f32.mrf.mxu0
    %v518 = vadd.f32 %v131, %v517
    %519 = vmatmul.f32.gmra.mxu0 %v171
    %v520 = vpop.f32.mrf.mxu0
    %v521 = vadd.f32 %v131, %v520
    %522 = vmatmul.f32.gmra.mxu0 %v174
    %v523 = vpop.f32.mrf.mxu0
    %v524 = vadd.f32 %v131, %v523
    %525 = vmatmul.f32.gmra.mxu0 %v177
    %v526 = vpop.f32.mrf.mxu0
    %v527 = vadd.f32 %v131, %v526
    %528 = vmatmul.f32.gmra.mxu0 %v180
    %v529 = vpop.f32.mrf.mxu0
    %v530 = vadd.f32 %v131, %v529
    %531 = vmatmul.f32.gmra.mxu0 %v183
    %v532 = vpop.f32.mrf.mxu0
    %v533 = vadd.f32 %v131, %v532
    %534 = vmatmul.f32.gmra.mxu0 %v186
    %v535 = vpop.f32.mrf.mxu0
    %v536 = vadd.f32 %v131, %v535
    %537 = vmatmul.f32.gmra.mxu0 %v189
    %v538 = vpop.f32.mrf.mxu0
    %v539 = vadd.f32 %v131, %v538
    %540 = vdwg.mxu0
    %541 = vmatpush.msra.mxu0 0.0
    %542 = vmatpush.msra.mxu0 0.0
    %543 = vmatpush.msra.mxu0 0.0
    %544 = vmatpush.msra.mxu0 0.0
    %545 = vmatpush.msra.mxu0 0.0
    %546 = vmatpush.msra.mxu0 0.0
    %547 = vmatpush.msra.mxu0 0.0
    %548 = vmatpush.msra.mxu0 0.0
    %549 = vmatpush.msra.mxu0 0.0
    %550 = vmatpush.msra.mxu0 0.0
    %551 = vmatpush.msra.mxu0 0.0
    %552 = vmatpush.msra.mxu0 0.0
    %553 = vmatpush.msra.mxu0 0.0
    %554 = vmatpush.msra.mxu0 0.0
    %555 = vmatpush.msra.mxu0 0.0
    %556 = vmatpush.msra.mxu0 %v112
    %557 = vmatmul.f32.gmra.mxu0 %v159
    %v558 = vpop.f32.mrf.mxu0
    %v559 = vadd.f32 %v132, %v558
    %560 = vmatmul.f32.gmra.mxu0 %v162
    %v561 = vpop.f32.mrf.mxu0
    %v562 = vadd.f32 %v132, %v561
    %563 = vmatmul.f32.gmra.mxu0 %v165
    %v564 = vpop.f32.mrf.mxu0
    %v565 = vadd.f32 %v132, %v564
    %566 = vmatmul.f32.gmra.mxu0 %v168
    %v567 = vpop.f32.mrf.mxu0
    %v568 = vadd.f32 %v132, %v567
    %569 = vmatmul.f32.gmra.mxu0 %v171
    %v570 = vpop.f32.mrf.mxu0
    %v571 = vadd.f32 %v132, %v570
    %572 = vmatmul.f32.gmra.mxu0 %v174
    %v573 = vpop.f32.mrf.mxu0
    %v574 = vadd.f32 %v132, %v573
    %575 = vmatmul.f32.gmra.mxu0 %v177
    %v576 = vpop.f32.mrf.mxu0
    %v577 = vadd.f32 %v132, %v576
    %578 = vmatmul.f32.gmra.mxu0 %v180
    %v579 = vpop.f32.mrf.mxu0
    %v580 = vadd.f32 %v132, %v579
    %581 = vmatmul.f32.gmra.mxu0 %v183
    %v582 = vpop.f32.mrf.mxu0
    %v583 = vadd.f32 %v132, %v582
    %584 = vmatmul.f32.gmra.mxu0 %v186
    %v585 = vpop.f32.mrf.mxu0
    %v586 = vadd.f32 %v132, %v585
    %587 = vmatmul.f32.gmra.mxu0 %v189
    %v588 = vpop.f32.mrf.mxu0
    %v589 = vadd.f32 %v132, %v588
    %590 = vdwg.mxu0
    %591 = vmatpush.msra.mxu0 0.0
    %592 = vmatpush.msra.mxu0 0.0
    %593 = vmatpush.msra.mxu0 0.0
    %594 = vmatpush.msra.mxu0 0.0
    %595 = vmatpush.msra.mxu0 0.0
    %596 = vmatpush.msra.mxu0 0.0
    %597 = vmatpush.msra.mxu0 0.0
    %598 = vmatpush.msra.mxu0 0.0
    %599 = vmatpush.msra.mxu0 0.0
    %600 = vmatpush.msra.mxu0 0.0
    %601 = vmatpush.msra.mxu0 0.0
    %602 = vmatpush.msra.mxu0 0.0
    %603 = vmatpush.msra.mxu0 0.0
    %604 = vmatpush.msra.mxu0 0.0
    %605 = vmatpush.msra.mxu0 0.0
    %606 = vmatpush.msra.mxu0 %v113
    %607 = vmatmul.f32.gmra.mxu0 %v159
    %v608 = vpop.f32.mrf.mxu0
    %v609 = vadd.f32 %v133, %v608
    %610 = vmatmul.f32.gmra.mxu0 %v162
    %v611 = vpop.f32.mrf.mxu0
    %v612 = vadd.f32 %v133, %v611
    %613 = vmatmul.f32.gmra.mxu0 %v165
    %v614 = vpop.f32.mrf.mxu0
    %v615 = vadd.f32 %v133, %v614
    %616 = vmatmul.f32.gmra.mxu0 %v168
    %v617 = vpop.f32.mrf.mxu0
    %v618 = vadd.f32 %v133, %v617
    %619 = vmatmul.f32.gmra.mxu0 %v171
    %v620 = vpop.f32.mrf.mxu0
    %v621 = vadd.f32 %v133, %v620
    %622 = vmatmul.f32.gmra.mxu0 %v174
    %v623 = vpop.f32.mrf.mxu0
    %v624 = vadd.f32 %v133, %v623
    %625 = vmatmul.f32.gmra.mxu0 %v177
    %v626 = vpop.f32.mrf.mxu0
    %v627 = vadd.f32 %v133, %v626
    %628 = vmatmul.f32.gmra.mxu0 %v180
    %v629 = vpop.f32.mrf.mxu0
    %v630 = vadd.f32 %v133, %v629
    %631 = vmatmul.f32.gmra.mxu0 %v183
    %v632 = vpop.f32.mrf.mxu0
    %v633 = vadd.f32 %v133, %v632
    %634 = vmatmul.f32.gmra.mxu0 %v186
    %v635 = vpop.f32.mrf.mxu0
    %v636 = vadd.f32 %v133, %v635
    %637 = vmatmul.f32.gmra.mxu0 %v189
    %v638 = vpop.f32.mrf.mxu0
    %v639 = vadd.f32 %v133, %v638
    %640 = vdwg.mxu0
    %641 = vmatpush.msra.mxu0 0.0
    %642 = vmatpush.msra.mxu0 0.0
    %643 = vmatpush.msra.mxu0 0.0
    %644 = vmatpush.msra.mxu0 0.0
    %645 = vmatpush.msra.mxu0 0.0
    %646 = vmatpush.msra.mxu0 0.0
    %647 = vmatpush.msra.mxu0 0.0
    %648 = vmatpush.msra.mxu0 0.0
    %649 = vmatpush.msra.mxu0 0.0
    %650 = vmatpush.msra.mxu0 0.0
    %651 = vmatpush.msra.mxu0 0.0
    %652 = vmatpush.msra.mxu0 0.0
    %653 = vmatpush.msra.mxu0 0.0
    %654 = vmatpush.msra.mxu0 0.0
    %655 = vmatpush.msra.mxu0 0.0
    %656 = vmatpush.msra.mxu0 %v114
    %657 = vmatmul.f32.gmra.mxu0 %v159
    %v658 = vpop.f32.mrf.mxu0
    %v659 = vadd.f32 %v134, %v658
    %660 = vmatmul.f32.gmra.mxu0 %v162
    %v661 = vpop.f32.mrf.mxu0
    %v662 = vadd.f32 %v134, %v661
    %663 = vmatmul.f32.gmra.mxu0 %v165
    %v664 = vpop.f32.mrf.mxu0
    %v665 = vadd.f32 %v134, %v664
    %666 = vmatmul.f32.gmra.mxu0 %v168
    %v667 = vpop.f32.mrf.mxu0
    %v668 = vadd.f32 %v134, %v667
    %669 = vmatmul.f32.gmra.mxu0 %v171
    %v670 = vpop.f32.mrf.mxu0
    %v671 = vadd.f32 %v134, %v670
    %672 = vmatmul.f32.gmra.mxu0 %v174
    %v673 = vpop.f32.mrf.mxu0
    %v674 = vadd.f32 %v134, %v673
    %675 = vmatmul.f32.gmra.mxu0 %v177
    %v676 = vpop.f32.mrf.mxu0
    %v677 = vadd.f32 %v134, %v676
    %678 = vmatmul.f32.gmra.mxu0 %v180
    %v679 = vpop.f32.mrf.mxu0
    %v680 = vadd.f32 %v134, %v679
    %681 = vmatmul.f32.gmra.mxu0 %v183
    %v682 = vpop.f32.mrf.mxu0
    %v683 = vadd.f32 %v134, %v682
    %684 = vmatmul.f32.gmra.mxu0 %v186
    %v685 = vpop.f32.mrf.mxu0
    %v686 = vadd.f32 %v134, %v685
    %687 = vmatmul.f32.gmra.mxu0 %v189
    %v688 = vpop.f32.mrf.mxu0
    %v689 = vadd.f32 %v134, %v688
    %690 = vdwg.mxu0
    %691 = vmatpush.msra.mxu0 0.0
    %692 = vmatpush.msra.mxu0 0.0
    %693 = vmatpush.msra.mxu0 0.0
    %694 = vmatpush.msra.mxu0 0.0
    %695 = vmatpush.msra.mxu0 0.0
    %696 = vmatpush.msra.mxu0 0.0
    %697 = vmatpush.msra.mxu0 0.0
    %698 = vmatpush.msra.mxu0 0.0
    %699 = vmatpush.msra.mxu0 0.0
    %700 = vmatpush.msra.mxu0 0.0
    %701 = vmatpush.msra.mxu0 0.0
    %702 = vmatpush.msra.mxu0 0.0
    %703 = vmatpush.msra.mxu0 0.0
    %704 = vmatpush.msra.mxu0 0.0
    %705 = vmatpush.msra.mxu0 0.0
    %706 = vmatpush.msra.mxu0 %v115
    %707 = vmatmul.f32.gmra.mxu0 %v159
    %v708 = vpop.f32.mrf.mxu0
    %v709 = vadd.f32 %v135, %v708
    %710 = vmatmul.f32.gmra.mxu0 %v162
    %v711 = vpop.f32.mrf.mxu0
    %v712 = vadd.f32 %v135, %v711
    %713 = vmatmul.f32.gmra.mxu0 %v165
    %v714 = vpop.f32.mrf.mxu0
    %v715 = vadd.f32 %v135, %v714
    %716 = vmatmul.f32.gmra.mxu0 %v168
    %v717 = vpop.f32.mrf.mxu0
    %v718 = vadd.f32 %v135, %v717
    %719 = vmatmul.f32.gmra.mxu0 %v171
    %v720 = vpop.f32.mrf.mxu0
    %v721 = vadd.f32 %v135, %v720
    %722 = vmatmul.f32.gmra.mxu0 %v174
    %v723 = vpop.f32.mrf.mxu0
    %v724 = vadd.f32 %v135, %v723
    %725 = vmatmul.f32.gmra.mxu0 %v177
    %v726 = vpop.f32.mrf.mxu0
    %v727 = vadd.f32 %v135, %v726
    %728 = vmatmul.f32.gmra.mxu0 %v180
    %v729 = vpop.f32.mrf.mxu0
    %v730 = vadd.f32 %v135, %v729
    %731 = vmatmul.f32.gmra.mxu0 %v183
    %v732 = vpop.f32.mrf.mxu0
    %v733 = vadd.f32 %v135, %v732
    %734 = vmatmul.f32.gmra.mxu0 %v186
    %v735 = vpop.f32.mrf.mxu0
    %v736 = vadd.f32 %v135, %v735
    %737 = vmatmul.f32.gmra.mxu0 %v189
    %v738 = vpop.f32.mrf.mxu0
    %v739 = vadd.f32 %v135, %v738
    %740 = vdwg.mxu0
    %741 = vmatpush.msra.mxu0 0.0
    %742 = vmatpush.msra.mxu0 0.0
    %743 = vmatpush.msra.mxu0 0.0
    %744 = vmatpush.msra.mxu0 0.0
    %745 = vmatpush.msra.mxu0 0.0
    %746 = vmatpush.msra.mxu0 0.0
    %747 = vmatpush.msra.mxu0 0.0
    %748 = vmatpush.msra.mxu0 0.0
    %749 = vmatpush.msra.mxu0 0.0
    %750 = vmatpush.msra.mxu0 0.0
    %751 = vmatpush.msra.mxu0 0.0
    %752 = vmatpush.msra.mxu0 0.0
    %753 = vmatpush.msra.mxu0 0.0
    %754 = vmatpush.msra.mxu0 0.0
    %755 = vmatpush.msra.mxu0 0.0
    %756 = vmatpush.msra.mxu0 %v116
    %757 = vmatmul.f32.gmra.mxu0 %v159
    %v758 = vpop.f32.mrf.mxu0
    %v759 = vadd.f32 %v136, %v758
    %760 = vmatmul.f32.gmra.mxu0 %v162
    %v761 = vpop.f32.mrf.mxu0
    %v762 = vadd.f32 %v136, %v761
    %763 = vmatmul.f32.gmra.mxu0 %v165
    %v764 = vpop.f32.mrf.mxu0
    %v765 = vadd.f32 %v136, %v764
    %766 = vmatmul.f32.gmra.mxu0 %v168
    %v767 = vpop.f32.mrf.mxu0
    %v768 = vadd.f32 %v136, %v767
    %769 = vmatmul.f32.gmra.mxu0 %v171
    %v770 = vpop.f32.mrf.mxu0
    %v771 = vadd.f32 %v136, %v770
    %772 = vmatmul.f32.gmra.mxu0 %v174
    %v773 = vpop.f32.mrf.mxu0
    %v774 = vadd.f32 %v136, %v773
    %775 = vmatmul.f32.gmra.mxu0 %v177
    %v776 = vpop.f32.mrf.mxu0
    %v777 = vadd.f32 %v136, %v776
    %778 = vmatmul.f32.gmra.mxu0 %v180
    %v779 = vpop.f32.mrf.mxu0
    %v780 = vadd.f32 %v136, %v779
    %781 = vmatmul.f32.gmra.mxu0 %v183
    %v782 = vpop.f32.mrf.mxu0
    %v783 = vadd.f32 %v136, %v782
    %784 = vmatmul.f32.gmra.mxu0 %v186
    %v785 = vpop.f32.mrf.mxu0
    %v786 = vadd.f32 %v136, %v785
    %787 = vmatmul.f32.gmra.mxu0 %v189
    %v788 = vpop.f32.mrf.mxu0
    %v789 = vadd.f32 %v136, %v788
    %790 = vdwg.mxu0
    %791 = vmatpush.msra.mxu0 0.0
    %792 = vmatpush.msra.mxu0 0.0
    %793 = vmatpush.msra.mxu0 0.0
    %794 = vmatpush.msra.mxu0 0.0
    %795 = vmatpush.msra.mxu0 0.0
    %796 = vmatpush.msra.mxu0 0.0
    %797 = vmatpush.msra.mxu0 0.0
    %798 = vmatpush.msra.mxu0 0.0
    %799 = vmatpush.msra.mxu0 0.0
    %800 = vmatpush.msra.mxu0 0.0
    %801 = vmatpush.msra.mxu0 0.0
    %802 = vmatpush.msra.mxu0 0.0
    %803 = vmatpush.msra.mxu0 0.0
    %804 = vmatpush.msra.mxu0 0.0
    %805 = vmatpush.msra.mxu0 0.0
    %806 = vmatpush.msra.mxu0 %v117
    %807 = vmatmul.f32.gmra.mxu0 %v159
    %v808 = vpop.f32.mrf.mxu0
    %v809 = vadd.f32 %v137, %v808
    %810 = vmatmul.f32.gmra.mxu0 %v162
    %v811 = vpop.f32.mrf.mxu0
    %v812 = vadd.f32 %v137, %v811
    %813 = vmatmul.f32.gmra.mxu0 %v165
    %v814 = vpop.f32.mrf.mxu0
    %v815 = vadd.f32 %v137, %v814
    %816 = vmatmul.f32.gmra.mxu0 %v168
    %v817 = vpop.f32.mrf.mxu0
    %v818 = vadd.f32 %v137, %v817
    %819 = vmatmul.f32.gmra.mxu0 %v171
    %v820 = vpop.f32.mrf.mxu0
    %v821 = vadd.f32 %v137, %v820
    %822 = vmatmul.f32.gmra.mxu0 %v174
    %v823 = vpop.f32.mrf.mxu0
    %v824 = vadd.f32 %v137, %v823
    %825 = vmatmul.f32.gmra.mxu0 %v177
    %v826 = vpop.f32.mrf.mxu0
    %v827 = vadd.f32 %v137, %v826
    %828 = vmatmul.f32.gmra.mxu0 %v180
    %v829 = vpop.f32.mrf.mxu0
    %v830 = vadd.f32 %v137, %v829
    %831 = vmatmul.f32.gmra.mxu0 %v183
    %v832 = vpop.f32.mrf.mxu0
    %v833 = vadd.f32 %v137, %v832
    %834 = vmatmul.f32.gmra.mxu0 %v186
    %v835 = vpop.f32.mrf.mxu0
    %v836 = vadd.f32 %v137, %v835
    %837 = vmatmul.f32.gmra.mxu0 %v189
    %v838 = vpop.f32.mrf.mxu0
    %v839 = vadd.f32 %v137, %v838
    %840 = vdwg.mxu0
    %841 = vmatpush.msra.mxu0 0.0
    %842 = vmatpush.msra.mxu0 0.0
    %843 = vmatpush.msra.mxu0 0.0
    %844 = vmatpush.msra.mxu0 0.0
    %845 = vmatpush.msra.mxu0 0.0
    %846 = vmatpush.msra.mxu0 0.0
    %847 = vmatpush.msra.mxu0 0.0
    %848 = vmatpush.msra.mxu0 0.0
    %849 = vmatpush.msra.mxu0 0.0
    %850 = vmatpush.msra.mxu0 0.0
    %851 = vmatpush.msra.mxu0 0.0
    %852 = vmatpush.msra.mxu0 0.0
    %853 = vmatpush.msra.mxu0 0.0
    %854 = vmatpush.msra.mxu0 0.0
    %855 = vmatpush.msra.mxu0 0.0
    %856 = vmatpush.msra.mxu0 %v118
    %857 = vmatmul.f32.gmra.mxu0 %v159
    %v858 = vpop.f32.mrf.mxu0
    %v859 = vadd.f32 %v138, %v858
    %860 = vmatmul.f32.gmra.mxu0 %v162
    %v861 = vpop.f32.mrf.mxu0
    %v862 = vadd.f32 %v138, %v861
    %863 = vmatmul.f32.gmra.mxu0 %v165
    %v864 = vpop.f32.mrf.mxu0
    %v865 = vadd.f32 %v138, %v864
    %866 = vmatmul.f32.gmra.mxu0 %v168
    %v867 = vpop.f32.mrf.mxu0
    %v868 = vadd.f32 %v138, %v867
    %869 = vmatmul.f32.gmra.mxu0 %v171
    %v870 = vpop.f32.mrf.mxu0
    %v871 = vadd.f32 %v138, %v870
    %872 = vmatmul.f32.gmra.mxu0 %v174
    %v873 = vpop.f32.mrf.mxu0
    %v874 = vadd.f32 %v138, %v873
    %875 = vmatmul.f32.gmra.mxu0 %v177
    %v876 = vpop.f32.mrf.mxu0
    %v877 = vadd.f32 %v138, %v876
    %878 = vmatmul.f32.gmra.mxu0 %v180
    %v879 = vpop.f32.mrf.mxu0
    %v880 = vadd.f32 %v138, %v879
    %881 = vmatmul.f32.gmra.mxu0 %v183
    %v882 = vpop.f32.mrf.mxu0
    %v883 = vadd.f32 %v138, %v882
    %884 = vmatmul.f32.gmra.mxu0 %v186
    %v885 = vpop.f32.mrf.mxu0
    %v886 = vadd.f32 %v138, %v885
    %887 = vmatmul.f32.gmra.mxu0 %v189
    %v888 = vpop.f32.mrf.mxu0
    %v889 = vadd.f32 %v138, %v888
    %890 = vdwg.mxu0
    %891 = vmatpush.msra.mxu0 0.0
    %892 = vmatpush.msra.mxu0 0.0
    %893 = vmatpush.msra.mxu0 0.0
    %894 = vmatpush.msra.mxu0 0.0
    %895 = vmatpush.msra.mxu0 0.0
    %896 = vmatpush.msra.mxu0 0.0
    %897 = vmatpush.msra.mxu0 0.0
    %898 = vmatpush.msra.mxu0 0.0
    %899 = vmatpush.msra.mxu0 0.0
    %900 = vmatpush.msra.mxu0 0.0
    %901 = vmatpush.msra.mxu0 0.0
    %902 = vmatpush.msra.mxu0 0.0
    %903 = vmatpush.msra.mxu0 0.0
    %904 = vmatpush.msra.mxu0 0.0
    %905 = vmatpush.msra.mxu0 0.0
    %906 = vmatpush.msra.mxu0 %v119
    %907 = vmatmul.f32.gmra.mxu0 %v159
    %v908 = vpop.f32.mrf.mxu0
    %v909 = vadd.f32 %v139, %v908
    %910 = vmatmul.f32.gmra.mxu0 %v162
    %v911 = vpop.f32.mrf.mxu0
    %v912 = vadd.f32 %v139, %v911
    %913 = vmatmul.f32.gmra.mxu0 %v165
    %v914 = vpop.f32.mrf.mxu0
    %v915 = vadd.f32 %v139, %v914
    %916 = vmatmul.f32.gmra.mxu0 %v168
    %v917 = vpop.f32.mrf.mxu0
    %v918 = vadd.f32 %v139, %v917
    %919 = vmatmul.f32.gmra.mxu0 %v171
    %v920 = vpop.f32.mrf.mxu0
    %v921 = vadd.f32 %v139, %v920
    %922 = vmatmul.f32.gmra.mxu0 %v174
    %v923 = vpop.f32.mrf.mxu0
    %v924 = vadd.f32 %v139, %v923
    %925 = vmatmul.f32.gmra.mxu0 %v177
    %v926 = vpop.f32.mrf.mxu0
    %v927 = vadd.f32 %v139, %v926
    %928 = vmatmul.f32.gmra.mxu0 %v180
    %v929 = vpop.f32.mrf.mxu0
    %v930 = vadd.f32 %v139, %v929
    %931 = vmatmul.f32.gmra.mxu0 %v183
    %v932 = vpop.f32.mrf.mxu0
    %v933 = vadd.f32 %v139, %v932
    %934 = vmatmul.f32.gmra.mxu0 %v186
    %v935 = vpop.f32.mrf.mxu0
    %v936 = vadd.f32 %v139, %v935
    %937 = vmatmul.f32.gmra.mxu0 %v189
    %v938 = vpop.f32.mrf.mxu0
    %v939 = vadd.f32 %v139, %v938
    %940 = vdwg.mxu0
    %941 = vmatpush.msra.mxu0 0.0
    %942 = vmatpush.msra.mxu0 0.0
    %943 = vmatpush.msra.mxu0 0.0
    %944 = vmatpush.msra.mxu0 0.0
    %945 = vmatpush.msra.mxu0 0.0
    %946 = vmatpush.msra.mxu0 0.0
    %947 = vmatpush.msra.mxu0 0.0
    %948 = vmatpush.msra.mxu0 0.0
    %949 = vmatpush.msra.mxu0 0.0
    %950 = vmatpush.msra.mxu0 0.0
    %951 = vmatpush.msra.mxu0 0.0
    %952 = vmatpush.msra.mxu0 0.0
    %953 = vmatpush.msra.mxu0 0.0
    %954 = vmatpush.msra.mxu0 0.0
    %955 = vmatpush.msra.mxu0 0.0
    %956 = vmatpush.msra.mxu0 %v120
    %957 = vmatmul.f32.gmra.mxu0 %v159
    %v958 = vpop.f32.mrf.mxu0
    %v959 = vadd.f32 %v140, %v958
    %960 = vmatmul.f32.gmra.mxu0 %v162
    %v961 = vpop.f32.mrf.mxu0
    %v962 = vadd.f32 %v140, %v961
    %963 = vmatmul.f32.gmra.mxu0 %v165
    %v964 = vpop.f32.mrf.mxu0
    %v965 = vadd.f32 %v140, %v964
    %966 = vmatmul.f32.gmra.mxu0 %v168
    %v967 = vpop.f32.mrf.mxu0
    %v968 = vadd.f32 %v140, %v967
    %969 = vmatmul.f32.gmra.mxu0 %v171
    %v970 = vpop.f32.mrf.mxu0
    %v971 = vadd.f32 %v140, %v970
    %972 = vmatmul.f32.gmra.mxu0 %v174
    %v973 = vpop.f32.mrf.mxu0
    %v974 = vadd.f32 %v140, %v973
    %975 = vmatmul.f32.gmra.mxu0 %v177
    %v976 = vpop.f32.mrf.mxu0
    %v977 = vadd.f32 %v140, %v976
    %978 = vmatmul.f32.gmra.mxu0 %v180
    %v979 = vpop.f32.mrf.mxu0
    %v980 = vadd.f32 %v140, %v979
    %981 = vmatmul.f32.gmra.mxu0 %v183
    %v982 = vpop.f32.mrf.mxu0
    %v983 = vadd.f32 %v140, %v982
    %984 = vmatmul.f32.gmra.mxu0 %v186
    %v985 = vpop.f32.mrf.mxu0
    %v986 = vadd.f32 %v140, %v985
    %987 = vmatmul.f32.gmra.mxu0 %v189
    %v988 = vpop.f32.mrf.mxu0
    %v989 = vadd.f32 %v140, %v988
    %990 = vdwg.mxu0
    %v991 = vmax.f32 %v209, 0.0
    %v992 = vmax.f32 %v259, 0.0
    %v993 = vmax.f32 %v309, 0.0
    %v994 = vmax.f32 %v359, 0.0
    %v995 = vmax.f32 %v409, 0.0
    %v996 = vmax.f32 %v459, 0.0
    %v997 = vmax.f32 %v509, 0.0
    %v998 = vmax.f32 %v559, 0.0
    %v999 = vmax.f32 %v609, 0.0
    %v1000 = vmax.f32 %v659, 0.0
    %v1001 = vmax.f32 %v709, 0.0
    %v1002 = vmax.f32 %v759, 0.0
    %v1003 = vmax.f32 %v809, 0.0
    %v1004 = vmax.f32 %v859, 0.0
    %v1005 = vmax.f32 %v909, 0.0
    %v1006 = vmax.f32 %v959, 0.0
    %v1007 = vmax.f32 %v212, 0.0
    %v1008 = vmax.f32 %v262, 0.0
    %v1009 = vmax.f32 %v312, 0.0
    %v1010 = vmax.f32 %v362, 0.0
    %v1011 = vmax.f32 %v412, 0.0
    %v1012 = vmax.f32 %v462, 0.0
    %v1013 = vmax.f32 %v512, 0.0
    %v1014 = vmax.f32 %v562, 0.0
    %v1015 = vmax.f32 %v612, 0.0
    %v1016 = vmax.f32 %v662, 0.0
    %v1017 = vmax.f32 %v712, 0.0
    %v1018 = vmax.f32 %v762, 0.0
    %v1019 = vmax.f32 %v812, 0.0
    %v1020 = vmax.f32 %v862, 0.0
    %v1021 = vmax.f32 %v912, 0.0
    %v1022 = vmax.f32 %v962, 0.0
    %v1023 = vmax.f32 %v215, 0.0
    %v1024 = vmax.f32 %v265, 0.0
    %v1025 = vmax.f32 %v315, 0.0
    %v1026 = vmax.f32 %v365, 0.0
    %v1027 = vmax.f32 %v415, 0.0
    %v1028 = vmax.f32 %v465, 0.0
    %v1029 = vmax.f32 %v515, 0.0
    %v1030 = vmax.f32 %v565, 0.0
    %v1031 = vmax.f32 %v615, 0.0
    %v1032 = vmax.f32 %v665, 0.0
    %v1033 = vmax.f32 %v715, 0.0
    %v1034 = vmax.f32 %v765, 0.0
    %v1035 = vmax.f32 %v815, 0.0
    %v1036 = vmax.f32 %v865, 0.0
    %v1037 = vmax.f32 %v915, 0.0
    %v1038 = vmax.f32 %v965, 0.0
    %v1039 = vmax.f32 %v218, 0.0
    %v1040 = vmax.f32 %v268, 0.0
    %v1041 = vmax.f32 %v318, 0.0
    %v1042 = vmax.f32 %v368, 0.0
    %v1043 = vmax.f32 %v418, 0.0
    %v1044 = vmax.f32 %v468, 0.0
    %v1045 = vmax.f32 %v518, 0.0
    %v1046 = vmax.f32 %v568, 0.0
    %v1047 = vmax.f32 %v618, 0.0
    %v1048 = vmax.f32 %v668, 0.0
    %v1049 = vmax.f32 %v718, 0.0
    %v1050 = vmax.f32 %v768, 0.0
    %v1051 = vmax.f32 %v818, 0.0
    %v1052 = vmax.f32 %v868, 0.0
    %v1053 = vmax.f32 %v918, 0.0
    %v1054 = vmax.f32 %v968, 0.0
    %v1055 = vmax.f32 %v221, 0.0
    %v1056 = vmax.f32 %v271, 0.0
    %v1057 = vmax.f32 %v321, 0.0
    %v1058 = vmax.f32 %v371, 0.0
    %v1059 = vmax.f32 %v421, 0.0
    %v1060 = vmax.f32 %v471, 0.0
    %v1061 = vmax.f32 %v521, 0.0
    %v1062 = vmax.f32 %v571, 0.0
    %v1063 = vmax.f32 %v621, 0.0
    %v1064 = vmax.f32 %v671, 0.0
    %v1065 = vmax.f32 %v721, 0.0
    %v1066 = vmax.f32 %v771, 0.0
    %v1067 = vmax.f32 %v821, 0.0
    %v1068 = vmax.f32 %v871, 0.0
    %v1069 = vmax.f32 %v921, 0.0
    %v1070 = vmax.f32 %v971, 0.0
    %v1071 = vmax.f32 %v224, 0.0
    %v1072 = vmax.f32 %v274, 0.0
    %v1073 = vmax.f32 %v324, 0.0
    %v1074 = vmax.f32 %v374, 0.0
    %v1075 = vmax.f32 %v424, 0.0
    %v1076 = vmax.f32 %v474, 0.0
    %v1077 = vmax.f32 %v524, 0.0
    %v1078 = vmax.f32 %v574, 0.0
    %v1079 = vmax.f32 %v624, 0.0
    %v1080 = vmax.f32 %v674, 0.0
    %v1081 = vmax.f32 %v724, 0.0
    %v1082 = vmax.f32 %v774, 0.0
    %v1083 = vmax.f32 %v824, 0.0
    %v1084 = vmax.f32 %v874, 0.0
    %v1085 = vmax.f32 %v924, 0.0
    %v1086 = vmax.f32 %v974, 0.0
    %v1087 = vmax.f32 %v227, 0.0
    %v1088 = vmax.f32 %v277, 0.0
    %v1089 = vmax.f32 %v327, 0.0
    %v1090 = vmax.f32 %v377, 0.0
    %v1091 = vmax.f32 %v427, 0.0
    %v1092 = vmax.f32 %v477, 0.0
    %v1093 = vmax.f32 %v527, 0.0
    %v1094 = vmax.f32 %v577, 0.0
    %v1095 = vmax.f32 %v627, 0.0
    %v1096 = vmax.f32 %v677, 0.0
    %v1097 = vmax.f32 %v727, 0.0
    %v1098 = vmax.f32 %v777, 0.0
    %v1099 = vmax.f32 %v827, 0.0
    %v1100 = vmax.f32 %v877, 0.0
    %v1101 = vmax.f32 %v927, 0.0
    %v1102 = vmax.f32 %v977, 0.0
    %v1103 = vmax.f32 %v230, 0.0
    %v1104 = vmax.f32 %v280, 0.0
    %v1105 = vmax.f32 %v330, 0.0
    %v1106 = vmax.f32 %v380, 0.0
    %v1107 = vmax.f32 %v430, 0.0
    %v1108 = vmax.f32 %v480, 0.0
    %v1109 = vmax.f32 %v530, 0.0
    %v1110 = vmax.f32 %v580, 0.0
    %v1111 = vmax.f32 %v630, 0.0
    %v1112 = vmax.f32 %v680, 0.0
    %v1113 = vmax.f32 %v730, 0.0
    %v1114 = vmax.f32 %v780, 0.0
    %v1115 = vmax.f32 %v830, 0.0
    %v1116 = vmax.f32 %v880, 0.0
    %v1117 = vmax.f32 %v930, 0.0
    %v1118 = vmax.f32 %v980, 0.0
    %v1119 = vmax.f32 %v233, 0.0
    %v1120 = vmax.f32 %v283, 0.0
    %v1121 = vmax.f32 %v333, 0.0
    %v1122 = vmax.f32 %v383, 0.0
    %v1123 = vmax.f32 %v433, 0.0
    %v1124 = vmax.f32 %v483, 0.0
    %v1125 = vmax.f32 %v533, 0.0
    %v1126 = vmax.f32 %v583, 0.0
    %v1127 = vmax.f32 %v633, 0.0
    %v1128 = vmax.f32 %v683, 0.0
    %v1129 = vmax.f32 %v733, 0.0
    %v1130 = vmax.f32 %v783, 0.0
    %v1131 = vmax.f32 %v833, 0.0
    %v1132 = vmax.f32 %v883, 0.0
    %v1133 = vmax.f32 %v933, 0.0
    %v1134 = vmax.f32 %v983, 0.0
    %v1135 = vmax.f32 %v236, 0.0
    %v1136 = vmax.f32 %v286, 0.0
    %v1137 = vmax.f32 %v336, 0.0
    %v1138 = vmax.f32 %v386, 0.0
    %v1139 = vmax.f32 %v436, 0.0
    %v1140 = vmax.f32 %v486, 0.0
    %v1141 = vmax.f32 %v536, 0.0
    %v1142 = vmax.f32 %v586, 0.0
    %v1143 = vmax.f32 %v636, 0.0
    %v1144 = vmax.f32 %v686, 0.0
    %v1145 = vmax.f32 %v736, 0.0
    %v1146 = vmax.f32 %v786, 0.0
    %v1147 = vmax.f32 %v836, 0.0
    %v1148 = vmax.f32 %v886, 0.0
    %v1149 = vmax.f32 %v936, 0.0
    %v1150 = vmax.f32 %v986, 0.0
    %v1151 = vmax.f32 %v239, 0.0
    %v1152 = vmax.f32 %v289, 0.0
    %v1153 = vmax.f32 %v339, 0.0
    %v1154 = vmax.f32 %v389, 0.0
    %v1155 = vmax.f32 %v439, 0.0
    %v1156 = vmax.f32 %v489, 0.0
    %v1157 = vmax.f32 %v539, 0.0
    %v1158 = vmax.f32 %v589, 0.0
    %v1159 = vmax.f32 %v639, 0.0
    %v1160 = vmax.f32 %v689, 0.0
    %v1161 = vmax.f32 %v739, 0.0
    %v1162 = vmax.f32 %v789, 0.0
    %v1163 = vmax.f32 %v839, 0.0
    %v1164 = vmax.f32 %v889, 0.0
    %v1165 = vmax.f32 %v939, 0.0
    %v1166 = vmax.f32 %v989, 0.0
    %v1167 = vld [vmem:[%s3] sm:$0xff]
    %v1168 = vld [vmem:[%s3 + $0x8] sm:$0xff]
    %v1169 = vld [vmem:[%s3 + $0x10] sm:$0xff]
    %v1170 = vld [vmem:[%s3 + $0x18] sm:$0xff]
    %v1171 = vld [vmem:[%s3 + $0x20] sm:$0xff]
    %v1172 = vld [vmem:[%s3 + $0x28] sm:$0xff]
    %v1173 = vld [vmem:[%s3 + $0x30] sm:$0xff]
    %v1174 = vld [vmem:[%s3 + $0x38] sm:$0xff]
    %v1175 = vld [vmem:[%s3 + $0x40] sm:$0xff]
    %v1176 = vld [vmem:[%s3 + $0x48] sm:$0xff]
    %v1177 = vld [vmem:[%s3 + $0x50] sm:$0xff]
    %v1178 = vld [vmem:[%s3 + $0x58] sm:$0xff]
    %v1179 = vld [vmem:[%s3 + $0x60] sm:$0xff]
    %v1180 = vld [vmem:[%s3 + $0x68] sm:$0xff]
    %v1181 = vld [vmem:[%s3 + $0x70] sm:$0xff]
    %v1182 = vld [vmem:[%s3 + $0x78] sm:$0xff]
    %v1183 = vld [vmem:[%s3 + $0x80] sm:$0xff]
    %v1184 = vld [vmem:[%s3 + $0x88] sm:$0xff]
    %v1185 = vld [vmem:[%s3 + $0x90] sm:$0xff]
    %v1186 = vld [vmem:[%s3 + $0x98] sm:$0xff]
    %v1187 = vld [vmem:[%s3 + $0xa0] sm:$0xff]
    %v1188 = vld [vmem:[%s3 + $0xa8] sm:$0xff]
    %v1189 = vld [vmem:[%s3 + $0xb0] sm:$0xff]
    %v1190 = vld [vmem:[%s3 + $0xb8] sm:$0xff]
    %v1191 = vld [vmem:[%s3 + $0xc0] sm:$0xff]
    %v1192 = vld [vmem:[%s3 + $0xc8] sm:$0xff]
    %v1193 = vld [vmem:[%s3 + $0xd0] sm:$0xff]
    %v1194 = vld [vmem:[%s3 + $0xd8] sm:$0xff]
    %v1195 = vld [vmem:[%s3 + $0xe0] sm:$0xff]
    %v1196 = vld [vmem:[%s3 + $0xe8] sm:$0xff]
    %v1197 = vld [vmem:[%s3 + $0xf0] sm:$0xff]
    %v1198 = vld [vmem:[%s3 + $0xf8] sm:$0xff]
    %v1199 = vld [vmem:[%s3 + $0x100] sm:$0xff]
    %v1200 = vld [vmem:[%s3 + $0x108] sm:$0xff]
    %v1201 = vld [vmem:[%s3 + $0x110] sm:$0xff]
    %v1202 = vld [vmem:[%s3 + $0x118] sm:$0xff]
    %v1203 = vld [vmem:[%s3 + $0x120] sm:$0xff]
    %v1204 = vld [vmem:[%s3 + $0x128] sm:$0xff]
    %v1205 = vld [vmem:[%s3 + $0x130] sm:$0xff]
    %v1206 = vld [vmem:[%s3 + $0x138] sm:$0xff]
    %v1207 = vld [vmem:[%s3 + $0x140] sm:$0xff]
    %v1208 = vld [vmem:[%s3 + $0x148] sm:$0xff]
    %v1209 = vld [vmem:[%s3 + $0x150] sm:$0xff]
    %v1210 = vld [vmem:[%s3 + $0x158] sm:$0xff]
    %v1211 = vld [vmem:[%s3 + $0x160] sm:$0xff]
    %v1212 = vld [vmem:[%s3 + $0x168] sm:$0xff]
    %v1213 = vld [vmem:[%s3 + $0x170] sm:$0xff]
    %v1214 = vld [vmem:[%s3 + $0x178] sm:$0xff]
    %v1215 = vld [vmem:[%s3 + $0x180] sm:$0xff]
    %v1216 = vld [vmem:[%s3 + $0x188] sm:$0xff]
    %v1217 = vld [vmem:[%s3 + $0x190] sm:$0xff]
    %v1218 = vld [vmem:[%s3 + $0x198] sm:$0xff]
    %v1219 = vld [vmem:[%s3 + $0x1a0] sm:$0xff]
    %v1220 = vld [vmem:[%s3 + $0x1a8] sm:$0xff]
    %v1221 = vld [vmem:[%s3 + $0x1b0] sm:$0xff]
    %v1222 = vld [vmem:[%s3 + $0x1b8] sm:$0xff]
    %v1223 = vld [vmem:[%s3 + $0x1c0] sm:$0xff]
    %v1224 = vld [vmem:[%s3 + $0x1c8] sm:$0xff]
    %v1225 = vld [vmem:[%s3 + $0x1d0] sm:$0xff]
    %v1226 = vld [vmem:[%s3 + $0x1d8] sm:$0xff]
    %v1227 = vld [vmem:[%s3 + $0x1e0] sm:$0xff]
    %v1228 = vld [vmem:[%s3 + $0x1e8] sm:$0xff]
    %v1229 = vld [vmem:[%s3 + $0x1f0] sm:$0xff]
    %v1230 = vld [vmem:[%s3 + $0x1f8] sm:$0xff]
    %v1231 = vld [vmem:[%s3 + $0x200] sm:$0xff]
    %v1232 = vld [vmem:[%s3 + $0x208] sm:$0xff]
    %v1233 = vld [vmem:[%s3 + $0x210] sm:$0xff]
    %v1234 = vld [vmem:[%s3 + $0x218] sm:$0xff]
    %v1235 = vld [vmem:[%s3 + $0x220] sm:$0xff]
    %v1236 = vld [vmem:[%s3 + $0x228] sm:$0xff]
    %v1237 = vld [vmem:[%s3 + $0x230] sm:$0xff]
    %v1238 = vld [vmem:[%s3 + $0x238] sm:$0xff]
    %v1239 = vld [vmem:[%s3 + $0x240] sm:$0xff]
    %v1240 = vld [vmem:[%s3 + $0x248] sm:$0xff]
    %v1241 = vld [vmem:[%s3 + $0x250] sm:$0xff]
    %v1242 = vld [vmem:[%s3 + $0x258] sm:$0xff]
    %v1243 = vld [vmem:[%s3 + $0x260] sm:$0xff]
    %v1244 = vld [vmem:[%s3 + $0x268] sm:$0xff]
    %v1245 = vld [vmem:[%s3 + $0x270] sm:$0xff]
    %v1246 = vld [vmem:[%s3 + $0x278] sm:$0xff]
    %v1247 = vld [vmem:[%s3 + $0x280] sm:$0xff]
    %v1248 = vld [vmem:[%s3 + $0x288] sm:$0xff]
    %v1249 = vld [vmem:[%s3 + $0x290] sm:$0xff]
    %v1250 = vld [vmem:[%s3 + $0x298] sm:$0xff]
    %v1251 = vld [vmem:[%s3 + $0x2a0] sm:$0xff]
    %v1252 = vld [vmem:[%s3 + $0x2a8] sm:$0xff]
    %v1253 = vld [vmem:[%s3 + $0x2b0] sm:$0xff]
    %v1254 = vld [vmem:[%s3 + $0x2b8] sm:$0xff]
    %v1255 = vld [vmem:[%s3 + $0x2c0] sm:$0xff]
    %v1256 = vld [vmem:[%s3 + $0x2c8] sm:$0xff]
    %v1257 = vld [vmem:[%s3 + $0x2d0] sm:$0xff]
    %v1258 = vld [vmem:[%s3 + $0x2d8] sm:$0xff]
    %v1259 = vld [vmem:[%s3 + $0x2e0] sm:$0xff]
    %v1260 = vld [vmem:[%s3 + $0x2e8] sm:$0xff]
    %v1261 = vld [vmem:[%s3 + $0x2f0] sm:$0xff]
    %v1262 = vld [vmem:[%s3 + $0x2f8] sm:$0xff]
    %v1263 = vld [vmem:[%s3 + $0x300] sm:$0xff]
    %v1264 = vld [vmem:[%s3 + $0x308] sm:$0xff]
    %v1265 = vld [vmem:[%s3 + $0x310] sm:$0xff]
    %v1266 = vld [vmem:[%s3 + $0x318] sm:$0xff]
    %v1267 = vld [vmem:[%s3 + $0x320] sm:$0xff]
    %v1268 = vld [vmem:[%s3 + $0x328] sm:$0xff]
    %v1269 = vld [vmem:[%s3 + $0x330] sm:$0xff]
    %v1270 = vld [vmem:[%s3 + $0x338] sm:$0xff]
    %v1271 = vld [vmem:[%s3 + $0x340] sm:$0xff]
    %v1272 = vld [vmem:[%s3 + $0x348] sm:$0xff]
    %v1273 = vld [vmem:[%s3 + $0x350] sm:$0xff]
    %v1274 = vld [vmem:[%s3 + $0x358] sm:$0xff]
    %v1275 = vld [vmem:[%s3 + $0x360] sm:$0xff]
    %v1276 = vld [vmem:[%s3 + $0x368] sm:$0xff]
    %v1277 = vld [vmem:[%s3 + $0x370] sm:$0xff]
    %v1278 = vld [vmem:[%s3 + $0x378] sm:$0xff]
    %v1279 = vld [vmem:[%s3 + $0x380] sm:$0xff]
    %v1280 = vld [vmem:[%s3 + $0x388] sm:$0xff]
    %v1281 = vld [vmem:[%s3 + $0x390] sm:$0xff]
    %v1282 = vld [vmem:[%s3 + $0x398] sm:$0xff]
    %v1283 = vld [vmem:[%s3 + $0x3a0] sm:$0xff]
    %v1284 = vld [vmem:[%s3 + $0x3a8] sm:$0xff]
    %v1285 = vld [vmem:[%s3 + $0x3b0] sm:$0xff]
    %v1286 = vld [vmem:[%s3 + $0x3b8] sm:$0xff]
    %v1287 = vld [vmem:[%s3 + $0x3c0] sm:$0xff]
    %v1288 = vld [vmem:[%s3 + $0x3c8] sm:$0xff]
    %v1289 = vld [vmem:[%s3 + $0x3d0] sm:$0xff]
    %v1290 = vld [vmem:[%s3 + $0x3d8] sm:$0xff]
    %v1291 = vld [vmem:[%s3 + $0x3e0] sm:$0xff]
    %v1292 = vld [vmem:[%s3 + $0x3e8] sm:$0xff]
    %v1293 = vld [vmem:[%s3 + $0x3f0] sm:$0xff]
    %v1294 = vld [vmem:[%s3 + $0x3f8] sm:$0xff]
    %v1295 = vld [vmem:[%s3 + $0x400] sm:$0xff]
    %v1296 = vld [vmem:[%s3 + $0x408] sm:$0xff]
    %v1297 = vld [vmem:[%s3 + $0x410] sm:$0xff]
    %v1298 = vld [vmem:[%s3 + $0x418] sm:$0xff]
    %v1299 = vld [vmem:[%s3 + $0x420] sm:$0xff]
    %v1300 = vld [vmem:[%s3 + $0x428] sm:$0xff]
    %v1301 = vld [vmem:[%s3 + $0x430] sm:$0xff]
    %v1302 = vld [vmem:[%s3 + $0x438] sm:$0xff]
    %v1303 = vld [vmem:[%s3 + $0x440] sm:$0xff]
    %v1304 = vld [vmem:[%s3 + $0x448] sm:$0xff]
    %v1305 = vld [vmem:[%s3 + $0x450] sm:$0xff]
    %v1306 = vld [vmem:[%s3 + $0x458] sm:$0xff]
    %v1307 = vld [vmem:[%s3 + $0x460] sm:$0xff]
    %v1308 = vld [vmem:[%s3 + $0x468] sm:$0xff]
    %v1309 = vld [vmem:[%s3 + $0x470] sm:$0xff]
    %v1310 = vld [vmem:[%s3 + $0x478] sm:$0xff]
    %v1311 = vld [vmem:[%s3 + $0x480] sm:$0xff]
    %v1312 = vld [vmem:[%s3 + $0x488] sm:$0xff]
    %v1313 = vld [vmem:[%s3 + $0x490] sm:$0xff]
    %v1314 = vld [vmem:[%s3 + $0x498] sm:$0xff]
    %v1315 = vld [vmem:[%s3 + $0x4a0] sm:$0xff]
    %v1316 = vld [vmem:[%s3 + $0x4a8] sm:$0xff]
    %v1317 = vld [vmem:[%s3 + $0x4b0] sm:$0xff]
    %v1318 = vld [vmem:[%s3 + $0x4b8] sm:$0xff]
    %v1319 = vld [vmem:[%s3 + $0x4c0] sm:$0xff]
    %v1320 = vld [vmem:[%s3 + $0x4c8] sm:$0xff]
    %v1321 = vld [vmem:[%s3 + $0x4d0] sm:$0xff]
    %v1322 = vld [vmem:[%s3 + $0x4d8] sm:$0xff]
    %v1323 = vld [vmem:[%s3 + $0x4e0] sm:$0xff]
    %v1324 = vld [vmem:[%s3 + $0x4e8] sm:$0xff]
    %v1325 = vld [vmem:[%s3 + $0x4f0] sm:$0xff]
    %v1326 = vld [vmem:[%s3 + $0x4f8] sm:$0xff]
    %v1327 = vld [vmem:[%s3 + $0x500] sm:$0xff]
    %v1328 = vld [vmem:[%s3 + $0x508] sm:$0xff]
    %v1329 = vld [vmem:[%s3 + $0x510] sm:$0xff]
    %v1330 = vld [vmem:[%s3 + $0x518] sm:$0xff]
    %v1331 = vld [vmem:[%s3 + $0x520] sm:$0xff]
    %v1332 = vld [vmem:[%s3 + $0x528] sm:$0xff]
    %v1333 = vld [vmem:[%s3 + $0x530] sm:$0xff]
    %v1334 = vld [vmem:[%s3 + $0x538] sm:$0xff]
    %v1335 = vld [vmem:[%s3 + $0x540] sm:$0xff]
    %v1336 = vld [vmem:[%s3 + $0x548] sm:$0xff]
    %v1337 = vld [vmem:[%s3 + $0x550] sm:$0xff]
    %v1338 = vld [vmem:[%s3 + $0x558] sm:$0xff]
    %v1339 = vld [vmem:[%s3 + $0x560] sm:$0xff]
    %v1340 = vld [vmem:[%s3 + $0x568] sm:$0xff]
    %v1341 = vld [vmem:[%s3 + $0x570] sm:$0xff]
    %v1342 = vld [vmem:[%s3 + $0x578] sm:$0xff]
    %v1343 = vld [vmem:[%s3 + $0x580] sm:$0xff]
    %v1344 = vld [vmem:[%s3 + $0x588] sm:$0xff]
    %v1345 = vld [vmem:[%s3 + $0x590] sm:$0xff]
    %v1346 = vld [vmem:[%s3 + $0x598] sm:$0xff]
    %v1347 = vld [vmem:[%s3 + $0x5a0] sm:$0xff]
    %v1348 = vld [vmem:[%s3 + $0x5a8] sm:$0xff]
    %v1349 = vld [vmem:[%s3 + $0x5b0] sm:$0xff]
    %v1350 = vld [vmem:[%s3 + $0x5b8] sm:$0xff]
    %v1351 = vld [vmem:[%s3 + $0x5c0] sm:$0xff]
    %v1352 = vld [vmem:[%s3 + $0x5c8] sm:$0xff]
    %v1353 = vld [vmem:[%s3 + $0x5d0] sm:$0xff]
    %v1354 = vld [vmem:[%s3 + $0x5d8] sm:$0xff]
    %v1355 = vld [vmem:[%s3 + $0x5e0] sm:$0xff]
    %v1356 = vld [vmem:[%s3 + $0x5e8] sm:$0xff]
    %v1357 = vld [vmem:[%s3 + $0x5f0] sm:$0xff]
    %v1358 = vld [vmem:[%s3 + $0x5f8] sm:$0xff]
    %v1359 = vld [vmem:[%s3 + $0x600] sm:$0xff]
    %v1360 = vld [vmem:[%s3 + $0x608] sm:$0xff]
    %v1361 = vld [vmem:[%s3 + $0x610] sm:$0xff]
    %v1362 = vld [vmem:[%s3 + $0x618] sm:$0xff]
    %v1363 = vld [vmem:[%s3 + $0x620] sm:$0xff]
    %v1364 = vld [vmem:[%s3 + $0x628] sm:$0xff]
    %v1365 = vld [vmem:[%s3 + $0x630] sm:$0xff]
    %v1366 = vld [vmem:[%s3 + $0x638] sm:$0xff]
    %v1367 = vld [vmem:[%s3 + $0x640] sm:$0xff]
    %v1368 = vld [vmem:[%s3 + $0x648] sm:$0xff]
    %v1369 = vld [vmem:[%s3 + $0x650] sm:$0xff]
    %v1370 = vld [vmem:[%s3 + $0x658] sm:$0xff]
    %v1371 = vld [vmem:[%s3 + $0x660] sm:$0xff]
    %v1372 = vld [vmem:[%s3 + $0x668] sm:$0xff]
    %v1373 = vld [vmem:[%s3 + $0x670] sm:$0xff]
    %v1374 = vld [vmem:[%s3 + $0x678] sm:$0xff]
    %v1375 = vld [vmem:[%s3 + $0x680] sm:$0xff]
    %v1376 = vld [vmem:[%s3 + $0x688] sm:$0xff]
    %v1377 = vld [vmem:[%s3 + $0x690] sm:$0xff]
    %v1378 = vld [vmem:[%s3 + $0x698] sm:$0xff]
    %v1379 = vld [vmem:[%s3 + $0x6a0] sm:$0xff]
    %v1380 = vld [vmem:[%s3 + $0x6a8] sm:$0xff]
    %v1381 = vld [vmem:[%s3 + $0x6b0] sm:$0xff]
    %v1382 = vld [vmem:[%s3 + $0x6b8] sm:$0xff]
    %v1383 = vld [vmem:[%s3 + $0x6c0] sm:$0xff]
    %v1384 = vld [vmem:[%s3 + $0x6c8] sm:$0xff]
    %v1385 = vld [vmem:[%s3 + $0x6d0] sm:$0xff]
    %v1386 = vld [vmem:[%s3 + $0x6d8] sm:$0xff]
    %v1387 = vld [vmem:[%s3 + $0x6e0] sm:$0xff]
    %v1388 = vld [vmem:[%s3 + $0x6e8] sm:$0xff]
    %v1389 = vld [vmem:[%s3 + $0x6f0] sm:$0xff]
    %v1390 = vld [vmem:[%s3 + $0x6f8] sm:$0xff]
    %v1391 = vld [vmem:[%s3 + $0x700] sm:$0xff]
    %v1392 = vld [vmem:[%s3 + $0x708] sm:$0xff]
    %v1393 = vld [vmem:[%s3 + $0x710] sm:$0xff]
    %v1394 = vld [vmem:[%s3 + $0x718] sm:$0xff]
    %v1395 = vld [vmem:[%s3 + $0x720] sm:$0xff]
    %v1396 = vld [vmem:[%s3 + $0x728] sm:$0xff]
    %v1397 = vld [vmem:[%s3 + $0x730] sm:$0xff]
    %v1398 = vld [vmem:[%s3 + $0x738] sm:$0xff]
    %v1399 = vld [vmem:[%s3 + $0x740] sm:$0xff]
    %v1400 = vld [vmem:[%s3 + $0x748] sm:$0xff]
    %v1401 = vld [vmem:[%s3 + $0x750] sm:$0xff]
    %v1402 = vld [vmem:[%s3 + $0x758] sm:$0xff]
    %v1403 = vld [vmem:[%s3 + $0x760] sm:$0xff]
    %v1404 = vld [vmem:[%s3 + $0x768] sm:$0xff]
    %v1405 = vld [vmem:[%s3 + $0x770] sm:$0xff]
    %v1406 = vld [vmem:[%s3 + $0x778] sm:$0xff]
    %v1407 = vld [vmem:[%s3 + $0x780] sm:$0xff]
    %v1408 = vld [vmem:[%s3 + $0x788] sm:$0xff]
    %v1409 = vld [vmem:[%s3 + $0x790] sm:$0xff]
    %v1410 = vld [vmem:[%s3 + $0x798] sm:$0xff]
    %v1411 = vld [vmem:[%s3 + $0x7a0] sm:$0xff]
    %v1412 = vld [vmem:[%s3 + $0x7a8] sm:$0xff]
    %v1413 = vld [vmem:[%s3 + $0x7b0] sm:$0xff]
    %v1414 = vld [vmem:[%s3 + $0x7b8] sm:$0xff]
    %v1415 = vld [vmem:[%s3 + $0x7c0] sm:$0xff]
    %v1416 = vld [vmem:[%s3 + $0x7c8] sm:$0xff]
    %v1417 = vld [vmem:[%s3 + $0x7d0] sm:$0xff]
    %v1418 = vld [vmem:[%s3 + $0x7d8] sm:$0xff]
    %v1419 = vld [vmem:[%s3 + $0x7e0] sm:$0xff]
    %v1420 = vld [vmem:[%s3 + $0x7e8] sm:$0xff]
    %v1421 = vld [vmem:[%s3 + $0x7f0] sm:$0xff]
    %v1422 = vld [vmem:[%s3 + $0x7f8] sm:$0xff]
    %v1423 = vld [vmem:[#allocation6] sm:$0x1]
    %v1425 = vperm.slane %v1423, 0
    %1427 = vmatpush.msra.mxu0 %v1182
    %1428 = vmatpush.msra.mxu0 %v1181
    %1429 = vmatpush.msra.mxu0 %v1180
    %1430 = vmatpush.msra.mxu0 %v1179
    %1431 = vmatpush.msra.mxu0 %v1178
    %1432 = vmatpush.msra.mxu0 %v1177
    %1433 = vmatpush.msra.mxu0 %v1176
    %1434 = vmatpush.msra.mxu0 %v1175
    %1435 = vmatpush.msra.mxu0 %v1174
    %1436 = vmatpush.msra.mxu0 %v1173
    %1437 = vmatpush.msra.mxu0 %v1172
    %1438 = vmatpush.msra.mxu0 %v1171
    %1439 = vmatpush.msra.mxu0 %v1170
    %1440 = vmatpush.msra.mxu0 %v1169
    %1441 = vmatpush.msra.mxu0 %v1168
    %1442 = vmatpush.msra.mxu0 %v1167
    %1443 = vmatmul.f32.gmra.mxu0 %v991
    %v1444 = vpop.f32.mrf.mxu0
    %v1445 = vadd.f32 %v1425, %v1444
    %1446 = vmatmul.f32.gmra.mxu0 %v1007
    %v1447 = vpop.f32.mrf.mxu0
    %v1448 = vadd.f32 %v1425, %v1447
    %1449 = vmatmul.f32.gmra.mxu0 %v1023
    %v1450 = vpop.f32.mrf.mxu0
    %v1451 = vadd.f32 %v1425, %v1450
    %1452 = vmatmul.f32.gmra.mxu0 %v1039
    %v1453 = vpop.f32.mrf.mxu0
    %v1454 = vadd.f32 %v1425, %v1453
    %1455 = vmatmul.f32.gmra.mxu0 %v1055
    %v1456 = vpop.f32.mrf.mxu0
    %v1457 = vadd.f32 %v1425, %v1456
    %1458 = vmatmul.f32.gmra.mxu0 %v1071
    %v1459 = vpop.f32.mrf.mxu0
    %v1460 = vadd.f32 %v1425, %v1459
    %1461 = vmatmul.f32.gmra.mxu0 %v1087
    %v1462 = vpop.f32.mrf.mxu0
    %v1463 = vadd.f32 %v1425, %v1462
    %1464 = vmatmul.f32.gmra.mxu0 %v1103
    %v1465 = vpop.f32.mrf.mxu0
    %v1466 = vadd.f32 %v1425, %v1465
    %1467 = vmatmul.f32.gmra.mxu0 %v1119
    %v1468 = vpop.f32.mrf.mxu0
    %v1469 = vadd.f32 %v1425, %v1468
    %1470 = vmatmul.f32.gmra.mxu0 %v1135
    %v1471 = vpop.f32.mrf.mxu0
    %v1472 = vadd.f32 %v1425, %v1471
    %1473 = vmatmul.f32.gmra.mxu0 %v1151
    %v1474 = vpop.f32.mrf.mxu0
    %v1475 = vadd.f32 %v1425, %v1474
    %1476 = vdwg.mxu0
    %1477 = vmatpush.msra.mxu0 %v1198
    %1478 = vmatpush.msra.mxu0 %v1197
    %1479 = vmatpush.msra.mxu0 %v1196
    %1480 = vmatpush.msra.mxu0 %v1195
    %1481 = vmatpush.msra.mxu0 %v1194
    %1482 = vmatpush.msra.mxu0 %v1193
    %1483 = vmatpush.msra.mxu0 %v1192
    %1484 = vmatpush.msra.mxu0 %v1191
    %1485 = vmatpush.msra.mxu0 %v1190
    %1486 = vmatpush.msra.mxu0 %v1189
    %1487 = vmatpush.msra.mxu0 %v1188
    %1488 = vmatpush.msra.mxu0 %v1187
    %1489 = vmatpush.msra.mxu0 %v1186
    %1490 = vmatpush.msra.mxu0 %v1185
    %1491 = vmatpush.msra.mxu0 %v1184
    %1492 = vmatpush.msra.mxu0 %v1183
    %1493 = vmatmul.f32.gmra.mxu0 %v992
    %v1494 = vpop.f32.mrf.mxu0
    %v1495 = vadd.f32 %v1445, %v1494
    %1496 = vmatmul.f32.gmra.mxu0 %v1008
    %v1497 = vpop.f32.mrf.mxu0
    %v1498 = vadd.f32 %v1448, %v1497
    %1499 = vmatmul.f32.gmra.mxu0 %v1024
    %v1500 = vpop.f32.mrf.mxu0
    %v1501 = vadd.f32 %v1451, %v1500
    %1502 = vmatmul.f32.gmra.mxu0 %v1040
    %v1503 = vpop.f32.mrf.mxu0
    %v1504 = vadd.f32 %v1454, %v1503
    %1505 = vmatmul.f32.gmra.mxu0 %v1056
    %v1506 = vpop.f32.mrf.mxu0
    %v1507 = vadd.f32 %v1457, %v1506
    %1508 = vmatmul.f32.gmra.mxu0 %v1072
    %v1509 = vpop.f32.mrf.mxu0
    %v1510 = vadd.f32 %v1460, %v1509
    %1511 = vmatmul.f32.gmra.mxu0 %v1088
    %v1512 = vpop.f32.mrf.mxu0
    %v1513 = vadd.f32 %v1463, %v1512
    %1514 = vmatmul.f32.gmra.mxu0 %v1104
    %v1515 = vpop.f32.mrf.mxu0
    %v1516 = vadd.f32 %v1466, %v1515
    %1517 = vmatmul.f32.gmra.mxu0 %v1120
    %v1518 = vpop.f32.mrf.mxu0
    %v1519 = vadd.f32 %v1469, %v1518
    %1520 = vmatmul.f32.gmra.mxu0 %v1136
    %v1521 = vpop.f32.mrf.mxu0
    %v1522 = vadd.f32 %v1472, %v1521
    %1523 = vmatmul.f32.gmra.mxu0 %v1152
    %v1524 = vpop.f32.mrf.mxu0
    %v1525 = vadd.f32 %v1475, %v1524
    %1526 = vdwg.mxu0
    %1527 = vmatpush.msra.mxu0 %v1214
    %1528 = vmatpush.msra.mxu0 %v1213
    %1529 = vmatpush.msra.mxu0 %v1212
    %1530 = vmatpush.msra.mxu0 %v1211
    %1531 = vmatpush.msra.mxu0 %v1210
    %1532 = vmatpush.msra.mxu0 %v1209
    %1533 = vmatpush.msra.mxu0 %v1208
    %1534 = vmatpush.msra.mxu0 %v1207
    %1535 = vmatpush.msra.mxu0 %v1206
    %1536 = vmatpush.msra.mxu0 %v1205
    %1537 = vmatpush.msra.mxu0 %v1204
    %1538 = vmatpush.msra.mxu0 %v1203
    %1539 = vmatpush.msra.mxu0 %v1202
    %1540 = vmatpush.msra.mxu0 %v1201
    %1541 = vmatpush.msra.mxu0 %v1200
    %1542 = vmatpush.msra.mxu0 %v1199
    %1543 = vmatmul.f32.gmra.mxu0 %v993
    %v1544 = vpop.f32.mrf.mxu0
    %v1545 = vadd.f32 %v1495, %v1544
    %1546 = vmatmul.f32.gmra.mxu0 %v1009
    %v1547 = vpop.f32.mrf.mxu0
    %v1548 = vadd.f32 %v1498, %v1547
    %1549 = vmatmul.f32.gmra.mxu0 %v1025
    %v1550 = vpop.f32.mrf.mxu0
    %v1551 = vadd.f32 %v1501, %v1550
    %1552 = vmatmul.f32.gmra.mxu0 %v1041
    %v1553 = vpop.f32.mrf.mxu0
    %v1554 = vadd.f32 %v1504, %v1553
    %1555 = vmatmul.f32.gmra.mxu0 %v1057
    %v1556 = vpop.f32.mrf.mxu0
    %v1557 = vadd.f32 %v1507, %v1556
    %1558 = vmatmul.f32.gmra.mxu0 %v1073
    %v1559 = vpop.f32.mrf.mxu0
    %v1560 = vadd.f32 %v1510, %v1559
    %1561 = vmatmul.f32.gmra.mxu0 %v1089
    %v1562 = vpop.f32.mrf.mxu0
    %v1563 = vadd.f32 %v1513, %v1562
    %1564 = vmatmul.f32.gmra.mxu0 %v1105
    %v1565 = vpop.f32.mrf.mxu0
    %v1566 = vadd.f32 %v1516, %v1565
    %1567 = vmatmul.f32.gmra.mxu0 %v1121
    %v1568 = vpop.f32.mrf.mxu0
    %v1569 = vadd.f32 %v1519, %v1568
    %1570 = vmatmul.f32.gmra.mxu0 %v1137
    %v1571 = vpop.f32.mrf.mxu0
    %v1572 = vadd.f32 %v1522, %v1571
    %1573 = vmatmul.f32.gmra.mxu0 %v1153
    %v1574 = vpop.f32.mrf.mxu0
    %v1575 = vadd.f32 %v1525, %v1574
    %1576 = vdwg.mxu0
    %1577 = vmatpush.msra.mxu0 %v1230
    %1578 = vmatpush.msra.mxu0 %v1229
    %1579 = vmatpush.msra.mxu0 %v1228
    %1580 = vmatpush.msra.mxu0 %v1227
    %1581 = vmatpush.msra.mxu0 %v1226
    %1582 = vmatpush.msra.mxu0 %v1225
    %1583 = vmatpush.msra.mxu0 %v1224
    %1584 = vmatpush.msra.mxu0 %v1223
    %1585 = vmatpush.msra.mxu0 %v1222
    %1586 = vmatpush.msra.mxu0 %v1221
    %1587 = vmatpush.msra.mxu0 %v1220
    %1588 = vmatpush.msra.mxu0 %v1219
    %1589 = vmatpush.msra.mxu0 %v1218
    %1590 = vmatpush.msra.mxu0 %v1217
    %1591 = vmatpush.msra.mxu0 %v1216
    %1592 = vmatpush.msra.mxu0 %v1215
    %1593 = vmatmul.f32.gmra.mxu0 %v994
    %v1594 = vpop.f32.mrf.mxu0
    %v1595 = vadd.f32 %v1545, %v1594
    %1596 = vmatmul.f32.gmra.mxu0 %v1010
    %v1597 = vpop.f32.mrf.mxu0
    %v1598 = vadd.f32 %v1548, %v1597
    %1599 = vmatmul.f32.gmra.mxu0 %v1026
    %v1600 = vpop.f32.mrf.mxu0
    %v1601 = vadd.f32 %v1551, %v1600
    %1602 = vmatmul.f32.gmra.mxu0 %v1042
    %v1603 = vpop.f32.mrf.mxu0
    %v1604 = vadd.f32 %v1554, %v1603
    %1605 = vmatmul.f32.gmra.mxu0 %v1058
    %v1606 = vpop.f32.mrf.mxu0
    %v1607 = vadd.f32 %v1557, %v1606
    %1608 = vmatmul.f32.gmra.mxu0 %v1074
    %v1609 = vpop.f32.mrf.mxu0
    %v1610 = vadd.f32 %v1560, %v1609
    %1611 = vmatmul.f32.gmra.mxu0 %v1090
    %v1612 = vpop.f32.mrf.mxu0
    %v1613 = vadd.f32 %v1563, %v1612
    %1614 = vmatmul.f32.gmra.mxu0 %v1106
    %v1615 = vpop.f32.mrf.mxu0
    %v1616 = vadd.f32 %v1566, %v1615
    %1617 = vmatmul.f32.gmra.mxu0 %v1122
    %v1618 = vpop.f32.mrf.mxu0
    %v1619 = vadd.f32 %v1569, %v1618
    %1620 = vmatmul.f32.gmra.mxu0 %v1138
    %v1621 = vpop.f32.mrf.mxu0
    %v1622 = vadd.f32 %v1572, %v1621
    %1623 = vmatmul.f32.gmra.mxu0 %v1154
    %v1624 = vpop.f32.mrf.mxu0
    %v1625 = vadd.f32 %v1575, %v1624
    %1626 = vdwg.mxu0
    %1627 = vmatpush.msra.mxu0 %v1246
    %1628 = vmatpush.msra.mxu0 %v1245
    %1629 = vmatpush.msra.mxu0 %v1244
    %1630 = vmatpush.msra.mxu0 %v1243
    %1631 = vmatpush.msra.mxu0 %v1242
    %1632 = vmatpush.msra.mxu0 %v1241
    %1633 = vmatpush.msra.mxu0 %v1240
    %1634 = vmatpush.msra.mxu0 %v1239
    %1635 = vmatpush.msra.mxu0 %v1238
    %1636 = vmatpush.msra.mxu0 %v1237
    %1637 = vmatpush.msra.mxu0 %v1236
    %1638 = vmatpush.msra.mxu0 %v1235
    %1639 = vmatpush.msra.mxu0 %v1234
    %1640 = vmatpush.msra.mxu0 %v1233
    %1641 = vmatpush.msra.mxu0 %v1232
    %1642 = vmatpush.msra.mxu0 %v1231
    %1643 = vmatmul.f32.gmra.mxu0 %v995
    %v1644 = vpop.f32.mrf.mxu0
    %v1645 = vadd.f32 %v1595, %v1644
    %1646 = vmatmul.f32.gmra.mxu0 %v1011
    %v1647 = vpop.f32.mrf.mxu0
    %v1648 = vadd.f32 %v1598, %v1647
    %1649 = vmatmul.f32.gmra.mxu0 %v1027
    %v1650 = vpop.f32.mrf.mxu0
    %v1651 = vadd.f32 %v1601, %v1650
    %1652 = vmatmul.f32.gmra.mxu0 %v1043
    %v1653 = vpop.f32.mrf.mxu0
    %v1654 = vadd.f32 %v1604, %v1653
    %1655 = vmatmul.f32.gmra.mxu0 %v1059
    %v1656 = vpop.f32.mrf.mxu0
    %v1657 = vadd.f32 %v1607, %v1656
    %1658 = vmatmul.f32.gmra.mxu0 %v1075
    %v1659 = vpop.f32.mrf.mxu0
    %v1660 = vadd.f32 %v1610, %v1659
    %1661 = vmatmul.f32.gmra.mxu0 %v1091
    %v1662 = vpop.f32.mrf.mxu0
    %v1663 = vadd.f32 %v1613, %v1662
    %1664 = vmatmul.f32.gmra.mxu0 %v1107
    %v1665 = vpop.f32.mrf.mxu0
    %v1666 = vadd.f32 %v1616, %v1665
    %1667 = vmatmul.f32.gmra.mxu0 %v1123
    %v1668 = vpop.f32.mrf.mxu0
    %v1669 = vadd.f32 %v1619, %v1668
    %1670 = vmatmul.f32.gmra.mxu0 %v1139
    %v1671 = vpop.f32.mrf.mxu0
    %v1672 = vadd.f32 %v1622, %v1671
    %1673 = vmatmul.f32.gmra.mxu0 %v1155
    %v1674 = vpop.f32.mrf.mxu0
    %v1675 = vadd.f32 %v1625, %v1674
    %1676 = vdwg.mxu0
    %1677 = vmatpush.msra.mxu0 %v1262
    %1678 = vmatpush.msra.mxu0 %v1261
    %1679 = vmatpush.msra.mxu0 %v1260
    %1680 = vmatpush.msra.mxu0 %v1259
    %1681 = vmatpush.msra.mxu0 %v1258
    %1682 = vmatpush.msra.mxu0 %v1257
    %1683 = vmatpush.msra.mxu0 %v1256
    %1684 = vmatpush.msra.mxu0 %v1255
    %1685 = vmatpush.msra.mxu0 %v1254
    %1686 = vmatpush.msra.mxu0 %v1253
    %1687 = vmatpush.msra.mxu0 %v1252
    %1688 = vmatpush.msra.mxu0 %v1251
    %1689 = vmatpush.msra.mxu0 %v1250
    %1690 = vmatpush.msra.mxu0 %v1249
    %1691 = vmatpush.msra.mxu0 %v1248
    %1692 = vmatpush.msra.mxu0 %v1247
    %1693 = vmatmul.f32.gmra.mxu0 %v996
    %v1694 = vpop.f32.mrf.mxu0
    %v1695 = vadd.f32 %v1645, %v1694
    %1696 = vmatmul.f32.gmra.mxu0 %v1012
    %v1697 = vpop.f32.mrf.mxu0
    %v1698 = vadd.f32 %v1648, %v1697
    %1699 = vmatmul.f32.gmra.mxu0 %v1028
    %v1700 = vpop.f32.mrf.mxu0
    %v1701 = vadd.f32 %v1651, %v1700
    %1702 = vmatmul.f32.gmra.mxu0 %v1044
    %v1703 = vpop.f32.mrf.mxu0
    %v1704 = vadd.f32 %v1654, %v1703
    %1705 = vmatmul.f32.gmra.mxu0 %v1060
    %v1706 = vpop.f32.mrf.mxu0
    %v1707 = vadd.f32 %v1657, %v1706
    %1708 = vmatmul.f32.gmra.mxu0 %v1076
    %v1709 = vpop.f32.mrf.mxu0
    %v1710 = vadd.f32 %v1660, %v1709
    %1711 = vmatmul.f32.gmra.mxu0 %v1092
    %v1712 = vpop.f32.mrf.mxu0
    %v1713 = vadd.f32 %v1663, %v1712
    %1714 = vmatmul.f32.gmra.mxu0 %v1108
    %v1715 = vpop.f32.mrf.mxu0
    %v1716 = vadd.f32 %v1666, %v1715
    %1717 = vmatmul.f32.gmra.mxu0 %v1124
    %v1718 = vpop.f32.mrf.mxu0
    %v1719 = vadd.f32 %v1669, %v1718
    %1720 = vmatmul.f32.gmra.mxu0 %v1140
    %v1721 = vpop.f32.mrf.mxu0
    %v1722 = vadd.f32 %v1672, %v1721
    %1723 = vmatmul.f32.gmra.mxu0 %v1156
    %v1724 = vpop.f32.mrf.mxu0
    %v1725 = vadd.f32 %v1675, %v1724
    %1726 = vdwg.mxu0
    %1727 = vmatpush.msra.mxu0 %v1278
    %1728 = vmatpush.msra.mxu0 %v1277
    %1729 = vmatpush.msra.mxu0 %v1276
    %1730 = vmatpush.msra.mxu0 %v1275
    %1731 = vmatpush.msra.mxu0 %v1274
    %1732 = vmatpush.msra.mxu0 %v1273
    %1733 = vmatpush.msra.mxu0 %v1272
    %1734 = vmatpush.msra.mxu0 %v1271
    %1735 = vmatpush.msra.mxu0 %v1270
    %1736 = vmatpush.msra.mxu0 %v1269
    %1737 = vmatpush.msra.mxu0 %v1268
    %1738 = vmatpush.msra.mxu0 %v1267
    %1739 = vmatpush.msra.mxu0 %v1266
    %1740 = vmatpush.msra.mxu0 %v1265
    %1741 = vmatpush.msra.mxu0 %v1264
    %1742 = vmatpush.msra.mxu0 %v1263
    %1743 = vmatmul.f32.gmra.mxu0 %v997
    %v1744 = vpop.f32.mrf.mxu0
    %v1745 = vadd.f32 %v1695, %v1744
    %1746 = vmatmul.f32.gmra.mxu0 %v1013
    %v1747 = vpop.f32.mrf.mxu0
    %v1748 = vadd.f32 %v1698, %v1747
    %1749 = vmatmul.f32.gmra.mxu0 %v1029
    %v1750 = vpop.f32.mrf.mxu0
    %v1751 = vadd.f32 %v1701, %v1750
    %1752 = vmatmul.f32.gmra.mxu0 %v1045
    %v1753 = vpop.f32.mrf.mxu0
    %v1754 = vadd.f32 %v1704, %v1753
    %1755 = vmatmul.f32.gmra.mxu0 %v1061
    %v1756 = vpop.f32.mrf.mxu0
    %v1757 = vadd.f32 %v1707, %v1756
    %1758 = vmatmul.f32.gmra.mxu0 %v1077
    %v1759 = vpop.f32.mrf.mxu0
    %v1760 = vadd.f32 %v1710, %v1759
    %1761 = vmatmul.f32.gmra.mxu0 %v1093
    %v1762 = vpop.f32.mrf.mxu0
    %v1763 = vadd.f32 %v1713, %v1762
    %1764 = vmatmul.f32.gmra.mxu0 %v1109
    %v1765 = vpop.f32.mrf.mxu0
    %v1766 = vadd.f32 %v1716, %v1765
    %1767 = vmatmul.f32.gmra.mxu0 %v1125
    %v1768 = vpop.f32.mrf.mxu0
    %v1769 = vadd.f32 %v1719, %v1768
    %1770 = vmatmul.f32.gmra.mxu0 %v1141
    %v1771 = vpop.f32.mrf.mxu0
    %v1772 = vadd.f32 %v1722, %v1771
    %1773 = vmatmul.f32.gmra.mxu0 %v1157
    %v1774 = vpop.f32.mrf.mxu0
    %v1775 = vadd.f32 %v1725, %v1774
    %1776 = vdwg.mxu0
    %1777 = vmatpush.msra.mxu0 %v1294
    %1778 = vmatpush.msra.mxu0 %v1293
    %1779 = vmatpush.msra.mxu0 %v1292
    %1780 = vmatpush.msra.mxu0 %v1291
    %1781 = vmatpush.msra.mxu0 %v1290
    %1782 = vmatpush.msra.mxu0 %v1289
    %1783 = vmatpush.msra.mxu0 %v1288
    %1784 = vmatpush.msra.mxu0 %v1287
    %1785 = vmatpush.msra.mxu0 %v1286
    %1786 = vmatpush.msra.mxu0 %v1285
    %1787 = vmatpush.msra.mxu0 %v1284
    %1788 = vmatpush.msra.mxu0 %v1283
    %1789 = vmatpush.msra.mxu0 %v1282
    %1790 = vmatpush.msra.mxu0 %v1281
    %1791 = vmatpush.msra.mxu0 %v1280
    %1792 = vmatpush.msra.mxu0 %v1279
    %1793 = vmatmul.f32.gmra.mxu0 %v998
    %v1794 = vpop.f32.mrf.mxu0
    %v1795 = vadd.f32 %v1745, %v1794
    %1796 = vmatmul.f32.gmra.mxu0 %v1014
    %v1797 = vpop.f32.mrf.mxu0
    %v1798 = vadd.f32 %v1748, %v1797
    %1799 = vmatmul.f32.gmra.mxu0 %v1030
    %v1800 = vpop.f32.mrf.mxu0
    %v1801 = vadd.f32 %v1751, %v1800
    %1802 = vmatmul.f32.gmra.mxu0 %v1046
    %v1803 = vpop.f32.mrf.mxu0
    %v1804 = vadd.f32 %v1754, %v1803
    %1805 = vmatmul.f32.gmra.mxu0 %v1062
    %v1806 = vpop.f32.mrf.mxu0
    %v1807 = vadd.f32 %v1757, %v1806
    %1808 = vmatmul.f32.gmra.mxu0 %v1078
    %v1809 = vpop.f32.mrf.mxu0
    %v1810 = vadd.f32 %v1760, %v1809
    %1811 = vmatmul.f32.gmra.mxu0 %v1094
    %v1812 = vpop.f32.mrf.mxu0
    %v1813 = vadd.f32 %v1763, %v1812
    %1814 = vmatmul.f32.gmra.mxu0 %v1110
    %v1815 = vpop.f32.mrf.mxu0
    %v1816 = vadd.f32 %v1766, %v1815
    %1817 = vmatmul.f32.gmra.mxu0 %v1126
    %v1818 = vpop.f32.mrf.mxu0
    %v1819 = vadd.f32 %v1769, %v1818
    %1820 = vmatmul.f32.gmra.mxu0 %v1142
    %v1821 = vpop.f32.mrf.mxu0
    %v1822 = vadd.f32 %v1772, %v1821
    %1823 = vmatmul.f32.gmra.mxu0 %v1158
    %v1824 = vpop.f32.mrf.mxu0
    %v1825 = vadd.f32 %v1775, %v1824
    %1826 = vdwg.mxu0
    %1827 = vmatpush.msra.mxu0 %v1310
    %1828 = vmatpush.msra.mxu0 %v1309
    %1829 = vmatpush.msra.mxu0 %v1308
    %1830 = vmatpush.msra.mxu0 %v1307
    %1831 = vmatpush.msra.mxu0 %v1306
    %1832 = vmatpush.msra.mxu0 %v1305
    %1833 = vmatpush.msra.mxu0 %v1304
    %1834 = vmatpush.msra.mxu0 %v1303
    %1835 = vmatpush.msra.mxu0 %v1302
    %1836 = vmatpush.msra.mxu0 %v1301
    %1837 = vmatpush.msra.mxu0 %v1300
    %1838 = vmatpush.msra.mxu0 %v1299
    %1839 = vmatpush.msra.mxu0 %v1298
    %1840 = vmatpush.msra.mxu0 %v1297
    %1841 = vmatpush.msra.mxu0 %v1296
    %1842 = vmatpush.msra.mxu0 %v1295
    %1843 = vmatmul.f32.gmra.mxu0 %v999
    %v1844 = vpop.f32.mrf.mxu0
    %v1845 = vadd.f32 %v1795, %v1844
    %1846 = vmatmul.f32.gmra.mxu0 %v1015
    %v1847 = vpop.f32.mrf.mxu0
    %v1848 = vadd.f32 %v1798, %v1847
    %1849 = vmatmul.f32.gmra.mxu0 %v1031
    %v1850 = vpop.f32.mrf.mxu0
    %v1851 = vadd.f32 %v1801, %v1850
    %1852 = vmatmul.f32.gmra.mxu0 %v1047
    %v1853 = vpop.f32.mrf.mxu0
    %v1854 = vadd.f32 %v1804, %v1853
    %1855 = vmatmul.f32.gmra.mxu0 %v1063
    %v1856 = vpop.f32.mrf.mxu0
    %v1857 = vadd.f32 %v1807, %v1856
    %1858 = vmatmul.f32.gmra.mxu0 %v1079
    %v1859 = vpop.f32.mrf.mxu0
    %v1860 = vadd.f32 %v1810, %v1859
    %1861 = vmatmul.f32.gmra.mxu0 %v1095
    %v1862 = vpop.f32.mrf.mxu0
    %v1863 = vadd.f32 %v1813, %v1862
    %1864 = vmatmul.f32.gmra.mxu0 %v1111
    %v1865 = vpop.f32.mrf.mxu0
    %v1866 = vadd.f32 %v1816, %v1865
    %1867 = vmatmul.f32.gmra.mxu0 %v1127
    %v1868 = vpop.f32.mrf.mxu0
    %v1869 = vadd.f32 %v1819, %v1868
    %1870 = vmatmul.f32.gmra.mxu0 %v1143
    %v1871 = vpop.f32.mrf.mxu0
    %v1872 = vadd.f32 %v1822, %v1871
    %1873 = vmatmul.f32.gmra.mxu0 %v1159
    %v1874 = vpop.f32.mrf.mxu0
    %v1875 = vadd.f32 %v1825, %v1874
    %1876 = vdwg.mxu0
    %1877 = vmatpush.msra.mxu0 %v1326
    %1878 = vmatpush.msra.mxu0 %v1325
    %1879 = vmatpush.msra.mxu0 %v1324
    %1880 = vmatpush.msra.mxu0 %v1323
    %1881 = vmatpush.msra.mxu0 %v1322
    %1882 = vmatpush.msra.mxu0 %v1321
    %1883 = vmatpush.msra.mxu0 %v1320
    %1884 = vmatpush.msra.mxu0 %v1319
    %1885 = vmatpush.msra.mxu0 %v1318
    %1886 = vmatpush.msra.mxu0 %v1317
    %1887 = vmatpush.msra.mxu0 %v1316
    %1888 = vmatpush.msra.mxu0 %v1315
    %1889 = vmatpush.msra.mxu0 %v1314
    %1890 = vmatpush.msra.mxu0 %v1313
    %1891 = vmatpush.msra.mxu0 %v1312
    %1892 = vmatpush.msra.mxu0 %v1311
    %1893 = vmatmul.f32.gmra.mxu0 %v1000
    %v1894 = vpop.f32.mrf.mxu0
    %v1895 = vadd.f32 %v1845, %v1894
    %1896 = vmatmul.f32.gmra.mxu0 %v1016
    %v1897 = vpop.f32.mrf.mxu0
    %v1898 = vadd.f32 %v1848, %v1897
    %1899 = vmatmul.f32.gmra.mxu0 %v1032
    %v1900 = vpop.f32.mrf.mxu0
    %v1901 = vadd.f32 %v1851, %v1900
    %1902 = vmatmul.f32.gmra.mxu0 %v1048
    %v1903 = vpop.f32.mrf.mxu0
    %v1904 = vadd.f32 %v1854, %v1903
    %1905 = vmatmul.f32.gmra.mxu0 %v1064
    %v1906 = vpop.f32.mrf.mxu0
    %v1907 = vadd.f32 %v1857, %v1906
    %1908 = vmatmul.f32.gmra.mxu0 %v1080
    %v1909 = vpop.f32.mrf.mxu0
    %v1910 = vadd.f32 %v1860, %v1909
    %1911 = vmatmul.f32.gmra.mxu0 %v1096
    %v1912 = vpop.f32.mrf.mxu0
    %v1913 = vadd.f32 %v1863, %v1912
    %1914 = vmatmul.f32.gmra.mxu0 %v1112
    %v1915 = vpop.f32.mrf.mxu0
    %v1916 = vadd.f32 %v1866, %v1915
    %1917 = vmatmul.f32.gmra.mxu0 %v1128
    %v1918 = vpop.f32.mrf.mxu0
    %v1919 = vadd.f32 %v1869, %v1918
    %1920 = vmatmul.f32.gmra.mxu0 %v1144
    %v1921 = vpop.f32.mrf.mxu0
    %v1922 = vadd.f32 %v1872, %v1921
    %1923 = vmatmul.f32.gmra.mxu0 %v1160
    %v1924 = vpop.f32.mrf.mxu0
    %v1925 = vadd.f32 %v1875, %v1924
    %1926 = vdwg.mxu0
    %1927 = vmatpush.msra.mxu0 %v1342
    %1928 = vmatpush.msra.mxu0 %v1341
    %1929 = vmatpush.msra.mxu0 %v1340
    %1930 = vmatpush.msra.mxu0 %v1339
    %1931 = vmatpush.msra.mxu0 %v1338
    %1932 = vmatpush.msra.mxu0 %v1337
    %1933 = vmatpush.msra.mxu0 %v1336
    %1934 = vmatpush.msra.mxu0 %v1335
    %1935 = vmatpush.msra.mxu0 %v1334
    %1936 = vmatpush.msra.mxu0 %v1333
    %1937 = vmatpush.msra.mxu0 %v1332
    %1938 = vmatpush.msra.mxu0 %v1331
    %1939 = vmatpush.msra.mxu0 %v1330
    %1940 = vmatpush.msra.mxu0 %v1329
    %1941 = vmatpush.msra.mxu0 %v1328
    %1942 = vmatpush.msra.mxu0 %v1327
    %1943 = vmatmul.f32.gmra.mxu0 %v1001
    %v1944 = vpop.f32.mrf.mxu0
    %v1945 = vadd.f32 %v1895, %v1944
    %1946 = vmatmul.f32.gmra.mxu0 %v1017
    %v1947 = vpop.f32.mrf.mxu0
    %v1948 = vadd.f32 %v1898, %v1947
    %1949 = vmatmul.f32.gmra.mxu0 %v1033
    %v1950 = vpop.f32.mrf.mxu0
    %v1951 = vadd.f32 %v1901, %v1950
    %1952 = vmatmul.f32.gmra.mxu0 %v1049
    %v1953 = vpop.f32.mrf.mxu0
    %v1954 = vadd.f32 %v1904, %v1953
    %1955 = vmatmul.f32.gmra.mxu0 %v1065
    %v1956 = vpop.f32.mrf.mxu0
    %v1957 = vadd.f32 %v1907, %v1956
    %1958 = vmatmul.f32.gmra.mxu0 %v1081
    %v1959 = vpop.f32.mrf.mxu0
    %v1960 = vadd.f32 %v1910, %v1959
    %1961 = vmatmul.f32.gmra.mxu0 %v1097
    %v1962 = vpop.f32.mrf.mxu0
    %v1963 = vadd.f32 %v1913, %v1962
    %1964 = vmatmul.f32.gmra.mxu0 %v1113
    %v1965 = vpop.f32.mrf.mxu0
    %v1966 = vadd.f32 %v1916, %v1965
    %1967 = vmatmul.f32.gmra.mxu0 %v1129
    %v1968 = vpop.f32.mrf.mxu0
    %v1969 = vadd.f32 %v1919, %v1968
    %1970 = vmatmul.f32.gmra.mxu0 %v1145
    %v1971 = vpop.f32.mrf.mxu0
    %v1972 = vadd.f32 %v1922, %v1971
    %1973 = vmatmul.f32.gmra.mxu0 %v1161
    %v1974 = vpop.f32.mrf.mxu0
    %v1975 = vadd.f32 %v1925, %v1974
    %1976 = vdwg.mxu0
    %1977 = vmatpush.msra.mxu0 %v1358
    %1978 = vmatpush.msra.mxu0 %v1357
    %1979 = vmatpush.msra.mxu0 %v1356
    %1980 = vmatpush.msra.mxu0 %v1355
    %1981 = vmatpush.msra.mxu0 %v1354
    %1982 = vmatpush.msra.mxu0 %v1353
    %1983 = vmatpush.msra.mxu0 %v1352
    %1984 = vmatpush.msra.mxu0 %v1351
    %1985 = vmatpush.msra.mxu0 %v1350
    %1986 = vmatpush.msra.mxu0 %v1349
    %1987 = vmatpush.msra.mxu0 %v1348
    %1988 = vmatpush.msra.mxu0 %v1347
    %1989 = vmatpush.msra.mxu0 %v1346
    %1990 = vmatpush.msra.mxu0 %v1345
    %1991 = vmatpush.msra.mxu0 %v1344
    %1992 = vmatpush.msra.mxu0 %v1343
    %1993 = vmatmul.f32.gmra.mxu0 %v1002
    %v1994 = vpop.f32.mrf.mxu0
    %v1995 = vadd.f32 %v1945, %v1994
    %1996 = vmatmul.f32.gmra.mxu0 %v1018
    %v1997 = vpop.f32.mrf.mxu0
    %v1998 = vadd.f32 %v1948, %v1997
    %1999 = vmatmul.f32.gmra.mxu0 %v1034
    %v2000 = vpop.f32.mrf.mxu0
    %v2001 = vadd.f32 %v1951, %v2000
    %2002 = vmatmul.f32.gmra.mxu0 %v1050
    %v2003 = vpop.f32.mrf.mxu0
    %v2004 = vadd.f32 %v1954, %v2003
    %2005 = vmatmul.f32.gmra.mxu0 %v1066
    %v2006 = vpop.f32.mrf.mxu0
    %v2007 = vadd.f32 %v1957, %v2006
    %2008 = vmatmul.f32.gmra.mxu0 %v1082
    %v2009 = vpop.f32.mrf.mxu0
    %v2010 = vadd.f32 %v1960, %v2009
    %2011 = vmatmul.f32.gmra.mxu0 %v1098
    %v2012 = vpop.f32.mrf.mxu0
    %v2013 = vadd.f32 %v1963, %v2012
    %2014 = vmatmul.f32.gmra.mxu0 %v1114
    %v2015 = vpop.f32.mrf.mxu0
    %v2016 = vadd.f32 %v1966, %v2015
    %2017 = vmatmul.f32.gmra.mxu0 %v1130
    %v2018 = vpop.f32.mrf.mxu0
    %v2019 = vadd.f32 %v1969, %v2018
    %2020 = vmatmul.f32.gmra.mxu0 %v1146
    %v2021 = vpop.f32.mrf.mxu0
    %v2022 = vadd.f32 %v1972, %v2021
    %2023 = vmatmul.f32.gmra.mxu0 %v1162
    %v2024 = vpop.f32.mrf.mxu0
    %v2025 = vadd.f32 %v1975, %v2024
    %2026 = vdwg.mxu0
    %2027 = vmatpush.msra.mxu0 %v1374
    %2028 = vmatpush.msra.mxu0 %v1373
    %2029 = vmatpush.msra.mxu0 %v1372
    %2030 = vmatpush.msra.mxu0 %v1371
    %2031 = vmatpush.msra.mxu0 %v1370
    %2032 = vmatpush.msra.mxu0 %v1369
    %2033 = vmatpush.msra.mxu0 %v1368
    %2034 = vmatpush.msra.mxu0 %v1367
    %2035 = vmatpush.msra.mxu0 %v1366
    %2036 = vmatpush.msra.mxu0 %v1365
    %2037 = vmatpush.msra.mxu0 %v1364
    %2038 = vmatpush.msra.mxu0 %v1363
    %2039 = vmatpush.msra.mxu0 %v1362
    %2040 = vmatpush.msra.mxu0 %v1361
    %2041 = vmatpush.msra.mxu0 %v1360
    %2042 = vmatpush.msra.mxu0 %v1359
    %2043 = vmatmul.f32.gmra.mxu0 %v1003
    %v2044 = vpop.f32.mrf.mxu0
    %v2045 = vadd.f32 %v1995, %v2044
    %2046 = vmatmul.f32.gmra.mxu0 %v1019
    %v2047 = vpop.f32.mrf.mxu0
    %v2048 = vadd.f32 %v1998, %v2047
    %2049 = vmatmul.f32.gmra.mxu0 %v1035
    %v2050 = vpop.f32.mrf.mxu0
    %v2051 = vadd.f32 %v2001, %v2050
    %2052 = vmatmul.f32.gmra.mxu0 %v1051
    %v2053 = vpop.f32.mrf.mxu0
    %v2054 = vadd.f32 %v2004, %v2053
    %2055 = vmatmul.f32.gmra.mxu0 %v1067
    %v2056 = vpop.f32.mrf.mxu0
    %v2057 = vadd.f32 %v2007, %v2056
    %2058 = vmatmul.f32.gmra.mxu0 %v1083
    %v2059 = vpop.f32.mrf.mxu0
    %v2060 = vadd.f32 %v2010, %v2059
    %2061 = vmatmul.f32.gmra.mxu0 %v1099
    %v2062 = vpop.f32.mrf.mxu0
    %v2063 = vadd.f32 %v2013, %v2062
    %2064 = vmatmul.f32.gmra.mxu0 %v1115
    %v2065 = vpop.f32.mrf.mxu0
    %v2066 = vadd.f32 %v2016, %v2065
    %2067 = vmatmul.f32.gmra.mxu0 %v1131
    %v2068 = vpop.f32.mrf.mxu0
    %v2069 = vadd.f32 %v2019, %v2068
    %2070 = vmatmul.f32.gmra.mxu0 %v1147
    %v2071 = vpop.f32.mrf.mxu0
    %v2072 = vadd.f32 %v2022, %v2071
    %2073 = vmatmul.f32.gmra.mxu0 %v1163
    %v2074 = vpop.f32.mrf.mxu0
    %v2075 = vadd.f32 %v2025, %v2074
    %2076 = vdwg.mxu0
    %2077 = vmatpush.msra.mxu0 %v1390
    %2078 = vmatpush.msra.mxu0 %v1389
    %2079 = vmatpush.msra.mxu0 %v1388
    %2080 = vmatpush.msra.mxu0 %v1387
    %2081 = vmatpush.msra.mxu0 %v1386
    %2082 = vmatpush.msra.mxu0 %v1385
    %2083 = vmatpush.msra.mxu0 %v1384
    %2084 = vmatpush.msra.mxu0 %v1383
    %2085 = vmatpush.msra.mxu0 %v1382
    %2086 = vmatpush.msra.mxu0 %v1381
    %2087 = vmatpush.msra.mxu0 %v1380
    %2088 = vmatpush.msra.mxu0 %v1379
    %2089 = vmatpush.msra.mxu0 %v1378
    %2090 = vmatpush.msra.mxu0 %v1377
    %2091 = vmatpush.msra.mxu0 %v1376
    %2092 = vmatpush.msra.mxu0 %v1375
    %2093 = vmatmul.f32.gmra.mxu0 %v1004
    %v2094 = vpop.f32.mrf.mxu0
    %v2095 = vadd.f32 %v2045, %v2094
    %2096 = vmatmul.f32.gmra.mxu0 %v1020
    %v2097 = vpop.f32.mrf.mxu0
    %v2098 = vadd.f32 %v2048, %v2097
    %2099 = vmatmul.f32.gmra.mxu0 %v1036
    %v2100 = vpop.f32.mrf.mxu0
    %v2101 = vadd.f32 %v2051, %v2100
    %2102 = vmatmul.f32.gmra.mxu0 %v1052
    %v2103 = vpop.f32.mrf.mxu0
    %v2104 = vadd.f32 %v2054, %v2103
    %2105 = vmatmul.f32.gmra.mxu0 %v1068
    %v2106 = vpop.f32.mrf.mxu0
    %v2107 = vadd.f32 %v2057, %v2106
    %2108 = vmatmul.f32.gmra.mxu0 %v1084
    %v2109 = vpop.f32.mrf.mxu0
    %v2110 = vadd.f32 %v2060, %v2109
    %2111 = vmatmul.f32.gmra.mxu0 %v1100
    %v2112 = vpop.f32.mrf.mxu0
    %v2113 = vadd.f32 %v2063, %v2112
    %2114 = vmatmul.f32.gmra.mxu0 %v1116
    %v2115 = vpop.f32.mrf.mxu0
    %v2116 = vadd.f32 %v2066, %v2115
    %2117 = vmatmul.f32.gmra.mxu0 %v1132
    %v2118 = vpop.f32.mrf.mxu0
    %v2119 = vadd.f32 %v2069, %v2118
    %2120 = vmatmul.f32.gmra.mxu0 %v1148
    %v2121 = vpop.f32.mrf.mxu0
    %v2122 = vadd.f32 %v2072, %v2121
    %2123 = vmatmul.f32.gmra.mxu0 %v1164
    %v2124 = vpop.f32.mrf.mxu0
    %v2125 = vadd.f32 %v2075, %v2124
    %2126 = vdwg.mxu0
    %2127 = vmatpush.msra.mxu0 %v1406
    %2128 = vmatpush.msra.mxu0 %v1405
    %2129 = vmatpush.msra.mxu0 %v1404
    %2130 = vmatpush.msra.mxu0 %v1403
    %2131 = vmatpush.msra.mxu0 %v1402
    %2132 = vmatpush.msra.mxu0 %v1401
    %2133 = vmatpush.msra.mxu0 %v1400
    %2134 = vmatpush.msra.mxu0 %v1399
    %2135 = vmatpush.msra.mxu0 %v1398
    %2136 = vmatpush.msra.mxu0 %v1397
    %2137 = vmatpush.msra.mxu0 %v1396
    %2138 = vmatpush.msra.mxu0 %v1395
    %2139 = vmatpush.msra.mxu0 %v1394
    %2140 = vmatpush.msra.mxu0 %v1393
    %2141 = vmatpush.msra.mxu0 %v1392
    %2142 = vmatpush.msra.mxu0 %v1391
    %2143 = vmatmul.f32.gmra.mxu0 %v1005
    %v2144 = vpop.f32.mrf.mxu0
    %v2145 = vadd.f32 %v2095, %v2144
    %2146 = vmatmul.f32.gmra.mxu0 %v1021
    %v2147 = vpop.f32.mrf.mxu0
    %v2148 = vadd.f32 %v2098, %v2147
    %2149 = vmatmul.f32.gmra.mxu0 %v1037
    %v2150 = vpop.f32.mrf.mxu0
    %v2151 = vadd.f32 %v2101, %v2150
    %2152 = vmatmul.f32.gmra.mxu0 %v1053
    %v2153 = vpop.f32.mrf.mxu0
    %v2154 = vadd.f32 %v2104, %v2153
    %2155 = vmatmul.f32.gmra.mxu0 %v1069
    %v2156 = vpop.f32.mrf.mxu0
    %v2157 = vadd.f32 %v2107, %v2156
    %2158 = vmatmul.f32.gmra.mxu0 %v1085
    %v2159 = vpop.f32.mrf.mxu0
    %v2160 = vadd.f32 %v2110, %v2159
    %2161 = vmatmul.f32.gmra.mxu0 %v1101
    %v2162 = vpop.f32.mrf.mxu0
    %v2163 = vadd.f32 %v2113, %v2162
    %2164 = vmatmul.f32.gmra.mxu0 %v1117
    %v2165 = vpop.f32.mrf.mxu0
    %v2166 = vadd.f32 %v2116, %v2165
    %2167 = vmatmul.f32.gmra.mxu0 %v1133
    %v2168 = vpop.f32.mrf.mxu0
    %v2169 = vadd.f32 %v2119, %v2168
    %2170 = vmatmul.f32.gmra.mxu0 %v1149
    %v2171 = vpop.f32.mrf.mxu0
    %v2172 = vadd.f32 %v2122, %v2171
    %2173 = vmatmul.f32.gmra.mxu0 %v1165
    %v2174 = vpop.f32.mrf.mxu0
    %v2175 = vadd.f32 %v2125, %v2174
    %2176 = vdwg.mxu0
    %2177 = vmatpush.msra.mxu0 %v1422
    %2178 = vmatpush.msra.mxu0 %v1421
    %2179 = vmatpush.msra.mxu0 %v1420
    %2180 = vmatpush.msra.mxu0 %v1419
    %2181 = vmatpush.msra.mxu0 %v1418
    %2182 = vmatpush.msra.mxu0 %v1417
    %2183 = vmatpush.msra.mxu0 %v1416
    %2184 = vmatpush.msra.mxu0 %v1415
    %2185 = vmatpush.msra.mxu0 %v1414
    %2186 = vmatpush.msra.mxu0 %v1413
    %2187 = vmatpush.msra.mxu0 %v1412
    %2188 = vmatpush.msra.mxu0 %v1411
    %2189 = vmatpush.msra.mxu0 %v1410
    %2190 = vmatpush.msra.mxu0 %v1409
    %2191 = vmatpush.msra.mxu0 %v1408
    %2192 = vmatpush.msra.mxu0 %v1407
    %2193 = vmatmul.f32.gmra.mxu0 %v1006
    %v2194 = vpop.f32.mrf.mxu0
    %v2195 = vadd.f32 %v2145, %v2194
    %2196 = vmatmul.f32.gmra.mxu0 %v1022
    %v2197 = vpop.f32.mrf.mxu0
    %v2198 = vadd.f32 %v2148, %v2197
    %2199 = vmatmul.f32.gmra.mxu0 %v1038
    %v2200 = vpop.f32.mrf.mxu0
    %v2201 = vadd.f32 %v2151, %v2200
    %2202 = vmatmul.f32.gmra.mxu0 %v1054
    %v2203 = vpop.f32.mrf.mxu0
    %v2204 = vadd.f32 %v2154, %v2203
    %2205 = vmatmul.f32.gmra.mxu0 %v1070
    %v2206 = vpop.f32.mrf.mxu0
    %v2207 = vadd.f32 %v2157, %v2206
    %2208 = vmatmul.f32.gmra.mxu0 %v1086
    %v2209 = vpop.f32.mrf.mxu0
    %v2210 = vadd.f32 %v2160, %v2209
    %2211 = vmatmul.f32.gmra.mxu0 %v1102
    %v2212 = vpop.f32.mrf.mxu0
    %v2213 = vadd.f32 %v2163, %v2212
    %2214 = vmatmul.f32.gmra.mxu0 %v1118
    %v2215 = vpop.f32.mrf.mxu0
    %v2216 = vadd.f32 %v2166, %v2215
    %2217 = vmatmul.f32.gmra.mxu0 %v1134
    %v2218 = vpop.f32.mrf.mxu0
    %v2219 = vadd.f32 %v2169, %v2218
    %2220 = vmatmul.f32.gmra.mxu0 %v1150
    %v2221 = vpop.f32.mrf.mxu0
    %v2222 = vadd.f32 %v2172, %v2221
    %2223 = vmatmul.f32.gmra.mxu0 %v1166
    %v2224 = vpop.f32.mrf.mxu0
    %v2225 = vadd.f32 %v2175, %v2224
    %2226 = vdwg.mxu0
    %v2227 = vadd.f32 %v94, %v2195
    %v2228 = vadd.f32 %v95, %v2198
    %v2229 = vadd.f32 %v96, %v2201
    %v2230 = vadd.f32 %v97, %v2204
    %v2231 = vadd.f32 %v98, %v2207
    %v2232 = vadd.f32 %v99, %v2210
    %v2233 = vadd.f32 %v100, %v2213
    %v2234 = vadd.f32 %v101, %v2216
    %v2235 = vadd.f32 %v102, %v2219
    %v2236 = vadd.f32 %v103, %v2222
    %v2237 = vadd.f32 %v104, %v2225
    %v2238 = vsel %vm157, %v2227, 0.0
    %2239 = vadd.xlane.f32.xlu0 %v2238
    %v2240 = vpop.xlane.xlu0 %2239
    %v2241 = vsel %vm157, %v2228, 0.0
    %2242 = vadd.xlane.f32.xlu0 %v2241
    %v2243 = vpop.xlane.xlu0 %2242
    %v2244 = vsel %vm157, %v2229, 0.0
    %2245 = vadd.xlane.f32.xlu0 %v2244
    %v2246 = vpop.xlane.xlu0 %2245
    %v2247 = vsel %vm157, %v2230, 0.0
    %2248 = vadd.xlane.f32.xlu0 %v2247
    %v2249 = vpop.xlane.xlu0 %2248
    %v2250 = vsel %vm157, %v2231, 0.0
    %2251 = vadd.xlane.f32.xlu0 %v2250
    %v2252 = vpop.xlane.xlu0 %2251
    %v2253 = vsel %vm157, %v2232, 0.0
    %2254 = vadd.xlane.f32.xlu0 %v2253
    %v2255 = vpop.xlane.xlu0 %2254
    %v2256 = vsel %vm157, %v2233, 0.0
    %2257 = vadd.xlane.f32.xlu0 %v2256
    %v2258 = vpop.xlane.xlu0 %2257
    %v2259 = vsel %vm157, %v2234, 0.0
    %2260 = vadd.xlane.f32.xlu0 %v2259
    %v2261 = vpop.xlane.xlu0 %2260
    %v2262 = vsel %vm157, %v2235, 0.0
    %2263 = vadd.xlane.f32.xlu0 %v2262
    %v2264 = vpop.xlane.xlu0 %2263
    %v2265 = vsel %vm157, %v2236, 0.0
    %2266 = vadd.xlane.f32.xlu0 %v2265
    %v2267 = vpop.xlane.xlu0 %2266
    %v2268 = vsel %vm157, %v2237, 0.0
    %2269 = vadd.xlane.f32.xlu0 %v2268
    %v2270 = vpop.xlane.xlu0 %2269
    %v2271 = vrcp.pop 8.0
    %v2272 = vmul.f32 8.0, %v2271
    %v2273 = vsub.f32 1.0, %v2272
    %v2274 = vmul.f32 %v2271, %v2273
    %v2275 = vadd.f32 %v2271, %v2274
    %vm2276 = vweird.f32 %v2271
    %v2277 = vsel %vm2276, %v2271, %v2275
    %v2278 = vmul.f32 %v2240, %v2277
    %v2279 = vmul.f32 %v2243, %v2277
    %v2280 = vmul.f32 %v2246, %v2277
    %v2281 = vmul.f32 %v2249, %v2277
    %v2282 = vmul.f32 %v2252, %v2277
    %v2283 = vmul.f32 %v2255, %v2277
    %v2284 = vmul.f32 %v2258, %v2277
    %v2285 = vmul.f32 %v2261, %v2277
    %v2286 = vmul.f32 %v2264, %v2277
    %v2287 = vmul.f32 %v2267, %v2277
    %v2288 = vmul.f32 %v2270, %v2277
    %v2289 = vsub.f32 %v2227, %v2278
    %v2290 = vsub.f32 %v2228, %v2279
    %v2291 = vsub.f32 %v2229, %v2280
    %v2292 = vsub.f32 %v2230, %v2281
    %v2293 = vsub.f32 %v2231, %v2282
    %v2294 = vsub.f32 %v2232, %v2283
    %v2295 = vsub.f32 %v2233, %v2284
    %v2296 = vsub.f32 %v2234, %v2285
    %v2297 = vsub.f32 %v2235, %v2286
    %v2298 = vsub.f32 %v2236, %v2287
    %v2299 = vsub.f32 %v2237, %v2288
    %v2300 = vmul.f32 %v2289, %v2289
    %v2301 = vmul.f32 %v2290, %v2290
    %v2302 = vmul.f32 %v2291, %v2291
    %v2303 = vmul.f32 %v2292, %v2292
    %v2304 = vmul.f32 %v2293, %v2293
    %v2305 = vmul.f32 %v2294, %v2294
    %v2306 = vmul.f32 %v2295, %v2295
    %v2307 = vmul.f32 %v2296, %v2296
    %v2308 = vmul.f32 %v2297, %v2297
    %v2309 = vmul.f32 %v2298, %v2298
    %v2310 = vmul.f32 %v2299, %v2299
    %v2311 = vsel %vm157, %v2300, 0.0
    %2312 = vadd.xlane.f32.xlu0 %v2311
    %v2313 = vpop.xlane.xlu0 %2312
    %v2314 = vsel %vm157, %v2301, 0.0
    %2315 = vadd.xlane.f32.xlu0 %v2314
    %v2316 = vpop.xlane.xlu0 %2315
    %v2317 = vsel %vm157, %v2302, 0.0
    %2318 = vadd.xlane.f32.xlu0 %v2317
    %v2319 = vpop.xlane.xlu0 %2318
    %v2320 = vsel %vm157, %v2303, 0.0
    %2321 = vadd.xlane.f32.xlu0 %v2320
    %v2322 = vpop.xlane.xlu0 %2321
    %v2323 = vsel %vm157, %v2304, 0.0
    %2324 = vadd.xlane.f32.xlu0 %v2323
    %v2325 = vpop.xlane.xlu0 %2324
    %v2326 = vsel %vm157, %v2305, 0.0
    %2327 = vadd.xlane.f32.xlu0 %v2326
    %v2328 = vpop.xlane.xlu0 %2327
    %v2329 = vsel %vm157, %v2306, 0.0
    %2330 = vadd.xlane.f32.xlu0 %v2329
    %v2331 = vpop.xlane.xlu0 %2330
    %v2332 = vsel %vm157, %v2307, 0.0
    %2333 = vadd.xlane.f32.xlu0 %v2332
    %v2334 = vpop.xlane.xlu0 %2333
    %v2335 = vsel %vm157, %v2308, 0.0
    %2336 = vadd.xlane.f32.xlu0 %v2335
    %v2337 = vpop.xlane.xlu0 %2336
    %v2338 = vsel %vm157, %v2309, 0.0
    %2339 = vadd.xlane.f32.xlu0 %v2338
    %v2340 = vpop.xlane.xlu0 %2339
    %v2341 = vsel %vm157, %v2310, 0.0
    %2342 = vadd.xlane.f32.xlu0 %v2341
    %v2343 = vpop.xlane.xlu0 %2342
    %v2344 = vmul.f32 %v2313, %v2277
    %v2345 = vmul.f32 %v2316, %v2277
    %v2346 = vmul.f32 %v2319, %v2277
    %v2347 = vmul.f32 %v2322, %v2277
    %v2348 = vmul.f32 %v2325, %v2277
    %v2349 = vmul.f32 %v2328, %v2277
    %v2350 = vmul.f32 %v2331, %v2277
    %v2351 = vmul.f32 %v2334, %v2277
    %v2352 = vmul.f32 %v2337, %v2277
    %v2353 = vmul.f32 %v2340, %v2277
    %v2354 = vmul.f32 %v2343, %v2277
    %v2355 = vadd.f32 %v2344, 1e-05
    %v2356 = vadd.f32 %v2345, 1e-05
    %v2357 = vadd.f32 %v2346, 1e-05
    %v2358 = vadd.f32 %v2347, 1e-05
    %v2359 = vadd.f32 %v2348, 1e-05
    %v2360 = vadd.f32 %v2349, 1e-05
    %v2361 = vadd.f32 %v2350, 1e-05
    %v2362 = vadd.f32 %v2351, 1e-05
    %v2363 = vadd.f32 %v2352, 1e-05
    %v2364 = vadd.f32 %v2353, 1e-05
    %v2365 = vadd.f32 %v2354, 1e-05
    %v2366 = vrsqrt.pop %v2355
    %v2367 = vmul.f32 %v2366, %v2355
    %v2368 = vmul.f32 %v2367, %v2366
    %v2369 = vmul.f32 0.5, %v2368
    %v2370 = vsub.f32 1.5, %v2369
    %v2371 = vmul.f32 %v2366, %v2370
    %vm2372 = vweird.f32 %v2355
    %vm2373 = vweird.f32 %v2366
    %vm2374 = vmor %vm2372, %vm2373
    %v2375 = vsel %vm2374, %v2366, %v2371
    %v2376 = vrsqrt.pop %v2356
    %v2377 = vmul.f32 %v2376, %v2356
    %v2378 = vmul.f32 %v2377, %v2376
    %v2379 = vmul.f32 0.5, %v2378
    %v2380 = vsub.f32 1.5, %v2379
    %v2381 = vmul.f32 %v2376, %v2380
    %vm2382 = vweird.f32 %v2356
    %vm2383 = vweird.f32 %v2376
    %vm2384 = vmor %vm2382, %vm2383
    %v2385 = vsel %vm2384, %v2376, %v2381
    %v2386 = vrsqrt.pop %v2357
    %v2387 = vmul.f32 %v2386, %v2357
    %v2388 = vmul.f32 %v2387, %v2386
    %v2389 = vmul.f32 0.5, %v2388
    %v2390 = vsub.f32 1.5, %v2389
    %v2391 = vmul.f32 %v2386, %v2390
    %vm2392 = vweird.f32 %v2357
    %vm2393 = vweird.f32 %v2386
    %vm2394 = vmor %vm2392, %vm2393
    %v2395 = vsel %vm2394, %v2386, %v2391
    %v2396 = vrsqrt.pop %v2358
    %v2397 = vmul.f32 %v2396, %v2358
    %v2398 = vmul.f32 %v2397, %v2396
    %v2399 = vmul.f32 0.5, %v2398
    %v2400 = vsub.f32 1.5, %v2399
    %v2401 = vmul.f32 %v2396, %v2400
    %vm2402 = vweird.f32 %v2358
    %vm2403 = vweird.f32 %v2396
    %vm2404 = vmor %vm2402, %vm2403
    %v2405 = vsel %vm2404, %v2396, %v2401
    %v2406 = vrsqrt.pop %v2359
    %v2407 = vmul.f32 %v2406, %v2359
    %v2408 = vmul.f32 %v2407, %v2406
    %v2409 = vmul.f32 0.5, %v2408
    %v2410 = vsub.f32 1.5, %v2409
    %v2411 = vmul.f32 %v2406, %v2410
    %vm2412 = vweird.f32 %v2359
    %vm2413 = vweird.f32 %v2406
    %vm2414 = vmor %vm2412, %vm2413
    %v2415 = vsel %vm2414, %v2406, %v2411
    %v2416 = vrsqrt.pop %v2360
    %v2417 = vmul.f32 %v2416, %v2360
    %v2418 = vmul.f32 %v2417, %v2416
    %v2419 = vmul.f32 0.5, %v2418
    %v2420 = vsub.f32 1.5, %v2419
    %v2421 = vmul.f32 %v2416, %v2420
    %vm2422 = vweird.f32 %v2360
    %vm2423 = vweird.f32 %v2416
    %vm2424 = vmor %vm2422, %vm2423
    %v2425 = vsel %vm2424, %v2416, %v2421
    %v2426 = vrsqrt.pop %v2361
    %v2427 = vmul.f32 %v2426, %v2361
    %v2428 = vmul.f32 %v2427, %v2426
    %v2429 = vmul.f32 0.5, %v2428
    %v2430 = vsub.f32 1.5, %v2429
    %v2431 = vmul.f32 %v2426, %v2430
    %vm2432 = vweird.f32 %v2361
    %vm2433 = vweird.f32 %v2426
    %vm2434 = vmor %vm2432, %vm2433
    %v2435 = vsel %vm2434, %v2426, %v2431
    %v2436 = vrsqrt.pop %v2362
    %v2437 = vmul.f32 %v2436, %v2362
    %v2438 = vmul.f32 %v2437, %v2436
    %v2439 = vmul.f32 0.5, %v2438
    %v2440 = vsub.f32 1.5, %v2439
    %v2441 = vmul.f32 %v2436, %v2440
    %vm2442 = vweird.f32 %v2362
    %vm2443 = vweird.f32 %v2436
    %vm2444 = vmor %vm2442, %vm2443
    %v2445 = vsel %vm2444, %v2436, %v2441
    %v2446 = vrsqrt.pop %v2363
    %v2447 = vmul.f32 %v2446, %v2363
    %v2448 = vmul.f32 %v2447, %v2446
    %v2449 = vmul.f32 0.5, %v2448
    %v2450 = vsub.f32 1.5, %v2449
    %v2451 = vmul.f32 %v2446, %v2450
    %vm2452 = vweird.f32 %v2363
    %vm2453 = vweird.f32 %v2446
    %vm2454 = vmor %vm2452, %vm2453
    %v2455 = vsel %vm2454, %v2446, %v2451
    %v2456 = vrsqrt.pop %v2364
    %v2457 = vmul.f32 %v2456, %v2364
    %v2458 = vmul.f32 %v2457, %v2456
    %v2459 = vmul.f32 0.5, %v2458
    %v2460 = vsub.f32 1.5, %v2459
    %v2461 = vmul.f32 %v2456, %v2460
    %vm2462 = vweird.f32 %v2364
    %vm2463 = vweird.f32 %v2456
    %vm2464 = vmor %vm2462, %vm2463
    %v2465 = vsel %vm2464, %v2456, %v2461
    %v2466 = vrsqrt.pop %v2365
    %v2467 = vmul.f32 %v2466, %v2365
    %v2468 = vmul.f32 %v2467, %v2466
    %v2469 = vmul.f32 0.5, %v2468
    %v2470 = vsub.f32 1.5, %v2469
    %v2471 = vmul.f32 %v2466, %v2470
    %vm2472 = vweird.f32 %v2365
    %vm2473 = vweird.f32 %v2466
    %vm2474 = vmor %vm2472, %vm2473
    %v2475 = vsel %vm2474, %v2466, %v2471
    %v2476 = vmul.f32 %v2289, %v2375
    %v2477 = vmul.f32 %v2290, %v2385
    %v2478 = vmul.f32 %v2291, %v2395
    %v2479 = vmul.f32 %v2292, %v2405
    %v2480 = vmul.f32 %v2293, %v2415
    %v2481 = vmul.f32 %v2294, %v2425
    %v2482 = vmul.f32 %v2295, %v2435
    %v2483 = vmul.f32 %v2296, %v2445
    %v2484 = vmul.f32 %v2297, %v2455
    %v2485 = vmul.f32 %v2298, %v2465
    %v2486 = vmul.f32 %v2299, %v2475
    %v2487 = vld [vmem:[#allocation7] sm:$0x1]
    %v2489 = vperm.slane %v2487, 0
    %v2491 = vmul.f32 %v2476, %v2489
    %v2492 = vmul.f32 %v2477, %v2489
    %v2493 = vmul.f32 %v2478, %v2489
    %v2494 = vmul.f32 %v2479, %v2489
    %v2495 = vmul.f32 %v2480, %v2489
    %v2496 = vmul.f32 %v2481, %v2489
    %v2497 = vmul.f32 %v2482, %v2489
    %v2498 = vmul.f32 %v2483, %v2489
    %v2499 = vmul.f32 %v2484, %v2489
    %v2500 = vmul.f32 %v2485, %v2489
    %v2501 = vmul.f32 %v2486, %v2489
    %v2502 = vld [vmem:[#allocation9] sm:$0x1]
    %v2504 = vperm.slane %v2502, 0
    %v2506 = vadd.f32 %v2491, %v2504
    %v2507 = vadd.f32 %v2492, %v2504
    %v2508 = vadd.f32 %v2493, %v2504
    %v2509 = vadd.f32 %v2494, %v2504
    %v2510 = vadd.f32 %v2495, %v2504
    %v2511 = vadd.f32 %v2496, %v2504
    %v2512 = vadd.f32 %v2497, %v2504
    %v2513 = vadd.f32 %v2498, %v2504
    %v2514 = vadd.f32 %v2499, %v2504
    %v2515 = vadd.f32 %v2500, %v2504
    %v2516 = vadd.f32 %v2501, %v2504
    %2517 = vst.msk [vmem:[%s7] sm:$0xff] %vm157, %v2506
    %2518 = vst.msk [vmem:[%s7 + $0x8] sm:$0xff] %vm157, %v2507
    %2519 = vst.msk [vmem:[%s7 + $0x10] sm:$0xff] %vm157, %v2508
    %2520 = vst.msk [vmem:[%s7 + $0x18] sm:$0xff] %vm157, %v2509
    %2521 = vst.msk [vmem:[%s7 + $0x20] sm:$0xff] %vm157, %v2510
    %2522 = vst.msk [vmem:[%s7 + $0x28] sm:$0xff] %vm157, %v2511
    %2523 = vst.msk [vmem:[%s7 + $0x30] sm:$0xff] %vm157, %v2512
    %2524 = vst.msk [vmem:[%s7 + $0x38] sm:$0xff] %vm157, %v2513
    %2525 = vst.msk [vmem:[%s7 + $0x40] sm:$0xff] %vm157, %v2514
    %2526 = vst.msk [vmem:[%s7 + $0x48] sm:$0xff] %vm157, %v2515
    %2527 = vst.msk [vmem:[%s7 + $0x50] sm:$0xff] %vm157, %v2516
    // Predicated region
    $region50: #{new_model2_forward.7} parent=1 // pred_check
      _
    $region51: #{new_model2_forward.7} parent=1 // pred_check_branch
      %2529 = sbr.rel (0) target = $region53
    $region52: #{new_model2_forward.7} parent=1 // pred_region
      _
    $region53: #{new_model2_forward.7} parent=1 // pred_fallthru
      _
    // Predicated region
    $region54: #{new_model2_forward.7} parent=1 // pred_check
      _
    $region55: #{new_model2_forward.7} parent=1 // pred_check_branch
      %2531 = sbr.rel (0) target = $region57
    $region56: #{new_model2_forward.7} parent=1 // pred_region
      _
    $region57: #{new_model2_forward.7} parent=1 // pred_fallthru
      _
    %2532 = vsyncpa [#allocation3], 1
    %2533 = vsyncpa [#allocation5], 1
    %2534 = vsyncpa [#allocation8], 1

// kernel: new_model2_forward.10
$region0: #{new_model2_forward.10}
  #allocation0 [shape = 'u32[]', space=smem, size = 0x4, offset = 0x4, fixed_abs, tag = 'smem constant byte address 0x4 - core index']
  #allocation1 [shape = 'u32[72,128]{1,0:T(1,128)}', space=vmem, size = 0x9000, scoped, tag = 'internal scratch']
  %s0 = inlined_call_operand.vmem [shape: f32[2,41,8], index: 0, kind: input, shape index: {}]
  %s1 = inlined_call_operand.vmem [shape: f32[16,32], index: 1, kind: input, shape index: {}]
  %s2 = inlined_call_operand.vmem [shape: f32[1,32], index: 2, kind: input, shape index: {}]
  %s3 = inlined_call_operand.vmem [shape: f32[512,64], index: 3, kind: input, shape index: {}]
  %s4 = inlined_call_operand.vmem [shape: f32[1,64], index: 4, kind: input, shape index: {}]
  %s5 = inlined_call_operand.vmem [shape: f32[2,17,64], index: 5, kind: output, shape index: {}]
  %s6 = sld [smem:[#allocation0]]
  $region53: #{new_model2_forward.10} parent=0
    _
  %s8 = ssub.s32 1, %s6
  %s9 = scalar_select 0, %s8, %s6
  loop: start=0, step=1, limit=4
  $region2: #{new_model2_forward.10} parent=0 // loop_pre_header
    _
  $region3: #{new_model2_forward.10} parent=0 // loop_header
    %s11 = sphi 0, %s15
    %p12 = scmp.ge.s32.totalorder %s11, 4
    %s21 = sphi 0, %s23
    %s24 = sphi 0, %s21
    %s25 = sphi 0, %s24
    %s41 = sphi 0, %s25
    %s45 = sphi 0, %s45
    %s47 = sphi 0, %s45
    %s48 = sphi 0, %s47
    %s62 = sphi 0, %s48
    %s66 = sphi 0, %s66
    %s68 = sphi 0, %s66
    %s69 = sphi 0, %s68
    %s83 = sphi 0, %s69
    %s87 = sphi 0, %s87
    %s89 = sphi 0, %s87
    %s90 = sphi 0, %s89
    %s104 = sphi 0, %s90
    %s108 = sphi 0, %s108
    %s110 = sphi 0, %s108
    %s111 = sphi 0, %s110
    %s125 = sphi 0, %s111
    %s131 = sphi 0, %s133
    %s134 = sphi 0, %s131
    %s135 = sphi 0, %s134
    %s151 = sphi 0, %s135
  $region4: #{new_model2_forward.10} parent=0 // loop_header_branch
    %14 = sbr.rel (%p12) target = $region8
  $region5: #{new_model2_forward.10} parent=0 // loop_body
    %s16 = ssub.s32 %s11, 1
    %s17 = ssub.s32 %s11, 2
    %s18 = sadd.s32 %s11, 1
    %s19 = ssub.s32 %s11, %s18
    %p20 = scmp.eq.s32.totalorder %s19, 0
    %s22 = sadd.s32 %s21, 1
    %s23 = scalar_select %p20, %s21, %s22
    %p26 = pneg %p20
    %p27 = scmp.eq.s32.totalorder %s11, 1
    %p28 = por %p26, %p27
    %p29 = scmp.ne.s32.totalorder %s21, %s24
    %p30 = scmp.eq.s32.totalorder %s11, 0
    %p31 = por %p29, %p30
    %p32 = scmp.ne.s32.totalorder %s21, %s24
    %p33 = scmp.eq.s32.totalorder %s16, 1
    %p34 = por %p32, %p33
    %p35 = scmp.ne.s32.totalorder %s24, %s25
    %p36 = scmp.eq.s32.totalorder %s16, 0
    %p37 = por %p35, %p36
    %p38 = scmp.ne.s32.totalorder %s24, %s25
    %p39 = scmp.eq.s32.totalorder %s17, 1
    %p40 = por %p38, %p39
    %p42 = scmp.ne.s32.totalorder %s25, %s41
    %p43 = scmp.eq.s32.totalorder %s17, 0
    %p44 = por %p42, %p43
    %s46 = sadd.s32 %s45, 1
    %p49 = scmp.eq.s32.totalorder %s11, 1
    %p50 = scmp.ne.s32.totalorder %s45, %s47
    %p51 = scmp.eq.s32.totalorder %s11, 0
    %p52 = por %p50, %p51
    %p53 = scmp.ne.s32.totalorder %s45, %s47
    %p54 = scmp.eq.s32.totalorder %s16, 1
    %p55 = por %p53, %p54
    %p56 = scmp.ne.s32.totalorder %s47, %s48
    %p57 = scmp.eq.s32.totalorder %s16, 0
    %p58 = por %p56, %p57
    %p59 = scmp.ne.s32.totalorder %s47, %s48
    %p60 = scmp.eq.s32.totalorder %s17, 1
    %p61 = por %p59, %p60
    %p63 = scmp.ne.s32.totalorder %s48, %s62
    %p64 = scmp.eq.s32.totalorder %s17, 0
    %p65 = por %p63, %p64
    %s67 = sadd.s32 %s66, 1
    %p70 = scmp.eq.s32.totalorder %s11, 1
    %p71 = scmp.ne.s32.totalorder %s66, %s68
    %p72 = scmp.eq.s32.totalorder %s11, 0
    %p73 = por %p71, %p72
    %p74 = scmp.ne.s32.totalorder %s66, %s68
    %p75 = scmp.eq.s32.totalorder %s16, 1
    %p76 = por %p74, %p75
    %p77 = scmp.ne.s32.totalorder %s68, %s69
    %p78 = scmp.eq.s32.totalorder %s16, 0
    %p79 = por %p77, %p78
    %p80 = scmp.ne.s32.totalorder %s68, %s69
    %p81 = scmp.eq.s32.totalorder %s17, 1
    %p82 = por %p80, %p81
    %p84 = scmp.ne.s32.totalorder %s69, %s83
    %p85 = scmp.eq.s32.totalorder %s17, 0
    %p86 = por %p84, %p85
    %s88 = sadd.s32 %s87, 1
    %p91 = scmp.eq.s32.totalorder %s11, 1
    %p92 = scmp.ne.s32.totalorder %s87, %s89
    %p93 = scmp.eq.s32.totalorder %s11, 0
    %p94 = por %p92, %p93
    %p95 = scmp.ne.s32.totalorder %s87, %s89
    %p96 = scmp.eq.s32.totalorder %s16, 1
    %p97 = por %p95, %p96
    %p98 = scmp.ne.s32.totalorder %s89, %s90
    %p99 = scmp.eq.s32.totalorder %s16, 0
    %p100 = por %p98, %p99
    %p101 = scmp.ne.s32.totalorder %s89, %s90
    %p102 = scmp.eq.s32.totalorder %s17, 1
    %p103 = por %p101, %p102
    %p105 = scmp.ne.s32.totalorder %s90, %s104
    %p106 = scmp.eq.s32.totalorder %s17, 0
    %p107 = por %p105, %p106
    %s109 = sadd.s32 %s108, 1
    %p112 = scmp.eq.s32.totalorder %s11, 1
    %p113 = scmp.ne.s32.totalorder %s108, %s110
    %p114 = scmp.eq.s32.totalorder %s11, 0
    %p115 = por %p113, %p114
    %p116 = scmp.ne.s32.totalorder %s108, %s110
    %p117 = scmp.eq.s32.totalorder %s16, 1
    %p118 = por %p116, %p117
    %p119 = scmp.ne.s32.totalorder %s110, %s111
    %p120 = scmp.eq.s32.totalorder %s16, 0
    %p121 = por %p119, %p120
    %p122 = scmp.ne.s32.totalorder %s110, %s111
    %p123 = scmp.eq.s32.totalorder %s17, 1
    %p124 = por %p122, %p123
    %p126 = scmp.ne.s32.totalorder %s111, %s125
    %p127 = scmp.eq.s32.totalorder %s17, 0
    %p128 = por %p126, %p127
    %s129 = ssub.s32 %s11, %s18
    %p130 = scmp.eq.s32.totalorder %s129, 0
    %s132 = sadd.s32 %s131, 1
    %s133 = scalar_select %p130, %s131, %s132
    %p136 = pneg %p130
    %p137 = scmp.eq.s32.totalorder %s11, 1
    %p138 = por %p136, %p137
    %p139 = scmp.ne.s32.totalorder %s131, %s134
    %p140 = scmp.eq.s32.totalorder %s11, 0
    %p141 = por %p139, %p140
    %p142 = scmp.ne.s32.totalorder %s131, %s134
    %p143 = scmp.eq.s32.totalorder %s16, 1
    %p144 = por %p142, %p143
    %p145 = scmp.ne.s32.totalorder %s134, %s135
    %p146 = scmp.eq.s32.totalorder %s16, 0
    %p147 = por %p145, %p146
    %p148 = scmp.ne.s32.totalorder %s134, %s135
    %p149 = scmp.eq.s32.totalorder %s17, 1
    %p150 = por %p148, %p149
    %p152 = scmp.ne.s32.totalorder %s135, %s151
    %p153 = scmp.eq.s32.totalorder %s17, 0
    %p154 = por %p152, %p153
    %p155 = scmp.le.s32.totalorder 1, %s11
    %p156 = scmp.lt.s32.totalorder %s11, 3
    %p157 = pnand %p155, %p156
    %p158 = pneg %p157
    // Predicated region
    $region9: #{new_model2_forward.10} parent=5 // pred_check
      _
    $region10: #{new_model2_forward.10} parent=5 // pred_check_branch
      %160 = sbr.rel (%p157) target = $region12
    $region11: #{new_model2_forward.10} parent=5 // pred_region
      %s161 = ssub.s32 %s11, 1
      // Predicated region
      $region13: #{new_model2_forward.10} parent=11 // pred_check
        %p162 = pneg %p58
      $region14: #{new_model2_forward.10} parent=11 // pred_check_branch
        %164 = sbr.rel (%p162) target = $region16
      $region15: #{new_model2_forward.10} parent=11 // pred_region
        _
      $region16: #{new_model2_forward.10} parent=11 // pred_fallthru
        _
      // Predicated region
      $region17: #{new_model2_forward.10} parent=11 // pred_check
        %p165 = pneg %p79
      $region18: #{new_model2_forward.10} parent=11 // pred_check_branch
        %167 = sbr.rel (%p165) target = $region20
      $region19: #{new_model2_forward.10} parent=11 // pred_region
        _
      $region20: #{new_model2_forward.10} parent=11 // pred_fallthru
        _
      // Predicated region
      $region21: #{new_model2_forward.10} parent=11 // pred_check
        %p168 = pneg %p100
      $region22: #{new_model2_forward.10} parent=11 // pred_check_branch
        %170 = sbr.rel (%p168) target = $region24
      $region23: #{new_model2_forward.10} parent=11 // pred_region
        _
      $region24: #{new_model2_forward.10} parent=11 // pred_fallthru
        _
      // Predicated region
      $region25: #{new_model2_forward.10} parent=11 // pred_check
        %p171 = pneg %p121
      $region26: #{new_model2_forward.10} parent=11 // pred_check_branch
        %173 = sbr.rel (%p171) target = $region28
      $region27: #{new_model2_forward.10} parent=11 // pred_region
        _
      $region28: #{new_model2_forward.10} parent=11 // pred_fallthru
        _
    $region12: #{new_model2_forward.10} parent=5 // pred_fallthru
      _
    %p174 = scmp.lt.s32.totalorder %s11, 2
    // Predicated region
    $region29: #{new_model2_forward.10} parent=5 // pred_check
      %p175 = pneg %p174
    $region30: #{new_model2_forward.10} parent=5 // pred_check_branch
      %177 = sbr.rel (%p175) target = $region32
    $region31: #{new_model2_forward.10} parent=5 // pred_region
      // Predicated region
      $region33: #{new_model2_forward.10} parent=31 // pred_check
        %p178 = pneg %p31
      $region34: #{new_model2_forward.10} parent=31 // pred_check_branch
        %180 = sbr.rel (%p178) target = $region36
      $region35: #{new_model2_forward.10} parent=31 // pred_region
        %p181 = scmp.lt.s32.totalorder %s11, 1
        %s182 = scalar_select %p181, %s11, 1
        %s183 = smul.addr %s182, 6
        %s184 = smul.addr %s183, 8
        %s185 = scalar_lea.vmem %s0, %s184
      $region36: #{new_model2_forward.10} parent=31 // pred_fallthru
        _
    $region32: #{new_model2_forward.10} parent=5 // pred_fallthru
      _
    %p186 = scmp.le.s32.totalorder 1, %s11
    %p187 = scmp.lt.s32.totalorder %s11, 3
    %p188 = pnand %p186, %p187
    %p189 = pneg %p188
    // Predicated region
    $region37: #{new_model2_forward.10} parent=5 // pred_check
      _
    $region38: #{new_model2_forward.10} parent=5 // pred_check_branch
      %191 = sbr.rel (%p188) target = $region40
    $region39: #{new_model2_forward.10} parent=5 // pred_region
      %s192 = ssub.s32 %s11, 1
      %p193 = scmp.lt.s32.totalorder %s16, 1
      %s194 = scalar_select %p193, %s16, 1
      %s195 = smul.addr %s194, 6
      %s196 = smul.addr %s195, 8
      %s197 = scalar_lea.vmem %s0, %s196
      %p198 = pneg %p37
      %p199 = pneg %p34
      %p200 = pneg %p58
      %p201 = pneg %p55
      %p202 = pneg %p79
      %p203 = pneg %p76
      %p204 = pneg %p100
      %p205 = pneg %p97
      %p206 = pneg %p121
      %p207 = pneg %p118
      %p208 = pneg %p147
      %p209 = pneg %p144
      %p210 = scmp.lt.s32.totalorder %s16, 1
      %s211 = scalar_select %p210, %s16, 1
      %s212 = smul.addr %s211, 3
      %s213 = smul.addr %s212, 8
      %s214 = scalar_lea.vmem %s5, %s213
      %p215 = scmp.lt.s32.totalorder %s16, 1
      %s216 = scalar_select %p215, %s16, 1
      %s217 = smul.addr %s216, 6
      %s218 = smul.addr %s217, 8
      %s219 = scalar_lea.vmem %s0, %s218
      %p220 = scmp.lt.s32.totalorder %s16, 1
      %s221 = scalar_select %p220, %s16, 1
      %s222 = smul.addr %s221, 3
      %s223 = smul.addr %s222, 8
      %s224 = scalar_lea.vmem %s5, %s223
      %v225 = vld [vmem:[%s219] sm:$0xff]
      %v226 = vld [vmem:[%s219 + $0x8] sm:$0xff]
      %v227 = vld [vmem:[%s219 + $0x10] sm:$0xff]
      %v228 = vld [vmem:[%s219 + $0x18] sm:$0xff]
      %v229 = vld [vmem:[%s219 + $0x20] sm:$0xff]
      %v230 = vld [vmem:[%s219 + $0x28] sm:$0x1]
      %v231 = vld [vmem:[%s1] sm:$0xff]
      %v232 = vld [vmem:[%s1 + $0x8] sm:$0xff]
      %v233 = vld [vmem:[%s2] sm:$0x1]
      %vm239 = vcmask 1046528
      %v240 = vrot.slane %v225, 1
      %v241 = vrot.slane %v226, 1
      %v242 = vsel %vm239, %v240, %v241
      %v243 = vrot.slane %v227, 1
      %v244 = vsel %vm239, %v241, %v243
      %v245 = vrot.slane %v228, 1
      %v246 = vsel %vm239, %v243, %v245
      %v247 = vrot.slane %v229, 1
      %v248 = vsel %vm239, %v245, %v247
      %249 = vrot.lane.b32.xlu0 %v242, 4
      %v250 = vpop.permute.xlu0 %249
      %251 = vrot.lane.b32.xlu0 %v244, 4
      %v252 = vpop.permute.xlu0 %251
      %253 = vrot.lane.b32.xlu0 %v246, 4
      %v254 = vpop.permute.xlu0 %253
      %255 = vrot.lane.b32.xlu0 %v248, 4
      %v256 = vpop.permute.xlu0 %255
      %257 = vrot.lane.b32.xlu0 %v247, 4
      %v258 = vpop.permute.xlu0 %257
      %vm264 = vcmask 1045504
      %v265 = vrot.slane %v225, 2
      %v266 = vrot.slane %v226, 2
      %v267 = vsel %vm264, %v265, %v266
      %v268 = vrot.slane %v227, 2
      %v269 = vsel %vm264, %v266, %v268
      %v270 = vrot.slane %v228, 2
      %v271 = vsel %vm264, %v268, %v270
      %v272 = vrot.slane %v229, 2
      %v273 = vsel %vm264, %v270, %v272
      %274 = vrot.lane.b32.xlu0 %v267, 8
      %v275 = vpop.permute.xlu0 %274
      %276 = vrot.lane.b32.xlu0 %v269, 8
      %v277 = vpop.permute.xlu0 %276
      %278 = vrot.lane.b32.xlu0 %v271, 8
      %v279 = vpop.permute.xlu0 %278
      %280 = vrot.lane.b32.xlu0 %v273, 8
      %v281 = vpop.permute.xlu0 %280
      %282 = vrot.lane.b32.xlu0 %v272, 8
      %v283 = vpop.permute.xlu0 %282
      %vm290 = vcmask 1044480
      %v291 = vrot.slane %v225, 3
      %v292 = vrot.slane %v226, 3
      %v293 = vsel %vm290, %v291, %v292
      %v294 = vrot.slane %v227, 3
      %v295 = vsel %vm290, %v292, %v294
      %v296 = vrot.slane %v228, 3
      %v297 = vsel %vm290, %v294, %v296
      %v298 = vrot.slane %v229, 3
      %v299 = vsel %vm290, %v296, %v298
      %v300 = vrot.slane %v230, 3
      %v301 = vsel %vm290, %v298, %v300
      %302 = vrot.lane.b32.xlu0 %v293, 12
      %v303 = vpop.permute.xlu0 %302
      %304 = vrot.lane.b32.xlu0 %v295, 12
      %v305 = vpop.permute.xlu0 %304
      %306 = vrot.lane.b32.xlu0 %v297, 12
      %v307 = vpop.permute.xlu0 %306
      %308 = vrot.lane.b32.xlu0 %v299, 12
      %v309 = vpop.permute.xlu0 %308
      %310 = vrot.lane.b32.xlu0 %v301, 12
      %v311 = vpop.permute.xlu0 %310
      %vm317 = vcmask 31744
      %v318 = vsel %vm317, %v225, %v250
      %v319 = vsel %vm317, %v226, %v252
      %v320 = vsel %vm317, %v227, %v254
      %v321 = vsel %vm317, %v228, %v256
      %v322 = vsel %vm317, %v229, %v258
      %vm323 = vcmask 64512
      %v324 = vsel %vm323, %v318, %v275
      %v325 = vsel %vm323, %v319, %v277
      %v326 = vsel %vm323, %v320, %v279
      %v327 = vsel %vm323, %v321, %v281
      %v328 = vsel %vm323, %v322, %v283
      %vm329 = vcmask 97280
      %v330 = vsel %vm329, %v324, %v303
      %v331 = vsel %vm329, %v325, %v305
      %v332 = vsel %vm329, %v326, %v307
      %v333 = vsel %vm329, %v327, %v309
      %v334 = vsel %vm329, %v328, %v311
      %v336 = vperm.slane %v233, 0
      %vm338 = vcmask 130048
      %v340 = vsel %vm338, %v330, 0
      %v343 = vsel %vm338, %v331, 0
      %v346 = vsel %vm338, %v332, 0
      %v349 = vsel %vm338, %v333, 0
      %v352 = vsel %vm338, %v334, 0
      %354 = vmatpush.msra.mxu0 0.0
      %355 = vmatpush.msra.mxu0 0.0
      %356 = vmatpush.msra.mxu0 0.0
      %357 = vmatpush.msra.mxu0 0.0
      %358 = vmatpush.msra.mxu0 0.0
      %359 = vmatpush.msra.mxu0 0.0
      %360 = vmatpush.msra.mxu0 0.0
      %361 = vmatpush.msra.mxu0 0.0
      %362 = vmatpush.msra.mxu0 0.0
      %363 = vmatpush.msra.mxu0 0.0
      %364 = vmatpush.msra.mxu0 0.0
      %365 = vmatpush.msra.mxu0 0.0
      %366 = vmatpush.msra.mxu0 0.0
      %367 = vmatpush.msra.mxu0 0.0
      %368 = vmatpush.msra.mxu0 %v232
      %369 = vmatpush.msra.mxu0 %v231
      %370 = vmatmul.f32.gmra.mxu0 %v340
      %v371 = vpop.f32.mrf.mxu0
      %v372 = vadd.f32 %v336, %v371
      %373 = vmatmul.f32.gmra.mxu0 %v343
      %v374 = vpop.f32.mrf.mxu0
      %v375 = vadd.f32 %v336, %v374
      %376 = vmatmul.f32.gmra.mxu0 %v346
      %v377 = vpop.f32.mrf.mxu0
      %v378 = vadd.f32 %v336, %v377
      %379 = vmatmul.f32.gmra.mxu0 %v349
      %v380 = vpop.f32.mrf.mxu0
      %v381 = vadd.f32 %v336, %v380
      %382 = vmatmul.f32.gmra.mxu0 %v352
      %v383 = vpop.f32.mrf.mxu0
      %v384 = vadd.f32 %v336, %v383
      %385 = vdwg.mxu0
      %386 = vrot.lane.b32.xlu0 %v225, 127
      %v387 = vpop.permute.xlu0 %386
      %388 = vrot.lane.b32.xlu0 %v226, 127
      %v389 = vpop.permute.xlu0 %388
      %390 = vrot.lane.b32.xlu0 %v227, 127
      %v391 = vpop.permute.xlu0 %390
      %392 = vrot.lane.b32.xlu0 %v228, 127
      %v393 = vpop.permute.xlu0 %392
      %394 = vrot.lane.b32.xlu0 %v229, 127
      %v395 = vpop.permute.xlu0 %394
      %401 = vrot.lane.b32.xlu0 %v242, 3
      %v402 = vpop.permute.xlu0 %401
      %403 = vrot.lane.b32.xlu0 %v244, 3
      %v404 = vpop.permute.xlu0 %403
      %405 = vrot.lane.b32.xlu0 %v246, 3
      %v406 = vpop.permute.xlu0 %405
      %407 = vrot.lane.b32.xlu0 %v248, 3
      %v408 = vpop.permute.xlu0 %407
      %409 = vrot.lane.b32.xlu0 %v247, 3
      %v410 = vpop.permute.xlu0 %409
      %416 = vrot.lane.b32.xlu0 %v267, 7
      %v417 = vpop.permute.xlu0 %416
      %418 = vrot.lane.b32.xlu0 %v269, 7
      %v419 = vpop.permute.xlu0 %418
      %420 = vrot.lane.b32.xlu0 %v271, 7
      %v421 = vpop.permute.xlu0 %420
      %422 = vrot.lane.b32.xlu0 %v273, 7
      %v423 = vpop.permute.xlu0 %422
      %424 = vrot.lane.b32.xlu0 %v272, 7
      %v425 = vpop.permute.xlu0 %424
      %431 = vrot.lane.b32.xlu0 %v293, 11
      %v432 = vpop.permute.xlu0 %431
      %433 = vrot.lane.b32.xlu0 %v295, 11
      %v434 = vpop.permute.xlu0 %433
      %435 = vrot.lane.b32.xlu0 %v297, 11
      %v436 = vpop.permute.xlu0 %435
      %437 = vrot.lane.b32.xlu0 %v299, 11
      %v438 = vpop.permute.xlu0 %437
      %439 = vrot.lane.b32.xlu0 %v301, 11
      %v440 = vpop.permute.xlu0 %439
      %v446 = vsel %vm317, %v387, %v402
      %v447 = vsel %vm317, %v389, %v404
      %v448 = vsel %vm317, %v391, %v406
      %v449 = vsel %vm317, %v393, %v408
      %v450 = vsel %vm317, %v395, %v410
      %v451 = vsel %vm323, %v446, %v417
      %v452 = vsel %vm323, %v447, %v419
      %v453 = vsel %vm323, %v448, %v421
      %v454 = vsel %vm323, %v449, %v423
      %v455 = vsel %vm323, %v450, %v425
      %v456 = vsel %vm329, %v451, %v432
      %v457 = vsel %vm329, %v452, %v434
      %v458 = vsel %vm329, %v453, %v436
      %v459 = vsel %vm329, %v454, %v438
      %v460 = vsel %vm329, %v455, %v440
      %v462 = vsel %vm338, %v456, 0
      %v465 = vsel %vm338, %v457, 0
      %v468 = vsel %vm338, %v458, 0
      %v471 = vsel %vm338, %v459, 0
      %v474 = vsel %vm338, %v460, 0
      %476 = vmatpush.msra.mxu0 0.0
      %477 = vmatpush.msra.mxu0 0.0
      %478 = vmatpush.msra.mxu0 0.0
      %479 = vmatpush.msra.mxu0 0.0
      %480 = vmatpush.msra.mxu0 0.0
      %481 = vmatpush.msra.mxu0 0.0
      %482 = vmatpush.msra.mxu0 0.0
      %483 = vmatpush.msra.mxu0 0.0
      %484 = vmatpush.msra.mxu0 0.0
      %485 = vmatpush.msra.mxu0 0.0
      %486 = vmatpush.msra.mxu0 0.0
      %487 = vmatpush.msra.mxu0 0.0
      %488 = vmatpush.msra.mxu0 0.0
      %489 = vmatpush.msra.mxu0 0.0
      %490 = vmatpush.msra.mxu0 %v232
      %491 = vmatpush.msra.mxu0 %v231
      %492 = vmatmul.f32.gmra.mxu0 %v462
      %v493 = vpop.f32.mrf.mxu0
      %v494 = vadd.f32 %v336, %v493
      %495 = vmatmul.f32.gmra.mxu0 %v465
      %v496 = vpop.f32.mrf.mxu0
      %v497 = vadd.f32 %v336, %v496
      %498 = vmatmul.f32.gmra.mxu0 %v468
      %v499 = vpop.f32.mrf.mxu0
      %v500 = vadd.f32 %v336, %v499
      %501 = vmatmul.f32.gmra.mxu0 %v471
      %v502 = vpop.f32.mrf.mxu0
      %v503 = vadd.f32 %v336, %v502
      %504 = vmatmul.f32.gmra.mxu0 %v474
      %v505 = vpop.f32.mrf.mxu0
      %v506 = vadd.f32 %v336, %v505
      %507 = vdwg.mxu0
      %508 = vrot.lane.b32.xlu0 %v225, 126
      %v509 = vpop.permute.xlu0 %508
      %510 = vrot.lane.b32.xlu0 %v226, 126
      %v511 = vpop.permute.xlu0 %510
      %512 = vrot.lane.b32.xlu0 %v227, 126
      %v513 = vpop.permute.xlu0 %512
      %514 = vrot.lane.b32.xlu0 %v228, 126
      %v515 = vpop.permute.xlu0 %514
      %516 = vrot.lane.b32.xlu0 %v229, 126
      %v517 = vpop.permute.xlu0 %516
      %523 = vrot.lane.b32.xlu0 %v242, 2
      %v524 = vpop.permute.xlu0 %523
      %525 = vrot.lane.b32.xlu0 %v244, 2
      %v526 = vpop.permute.xlu0 %525
      %527 = vrot.lane.b32.xlu0 %v246, 2
      %v528 = vpop.permute.xlu0 %527
      %529 = vrot.lane.b32.xlu0 %v248, 2
      %v530 = vpop.permute.xlu0 %529
      %531 = vrot.lane.b32.xlu0 %v247, 2
      %v532 = vpop.permute.xlu0 %531
      %538 = vrot.lane.b32.xlu0 %v267, 6
      %v539 = vpop.permute.xlu0 %538
      %540 = vrot.lane.b32.xlu0 %v269, 6
      %v541 = vpop.permute.xlu0 %540
      %542 = vrot.lane.b32.xlu0 %v271, 6
      %v543 = vpop.permute.xlu0 %542
      %544 = vrot.lane.b32.xlu0 %v273, 6
      %v545 = vpop.permute.xlu0 %544
      %546 = vrot.lane.b32.xlu0 %v272, 6
      %v547 = vpop.permute.xlu0 %546
      %553 = vrot.lane.b32.xlu0 %v293, 10
      %v554 = vpop.permute.xlu0 %553
      %555 = vrot.lane.b32.xlu0 %v295, 10
      %v556 = vpop.permute.xlu0 %555
      %557 = vrot.lane.b32.xlu0 %v297, 10
      %v558 = vpop.permute.xlu0 %557
      %559 = vrot.lane.b32.xlu0 %v299, 10
      %v560 = vpop.permute.xlu0 %559
      %561 = vrot.lane.b32.xlu0 %v301, 10
      %v562 = vpop.permute.xlu0 %561
      %v568 = vsel %vm317, %v509, %v524
      %v569 = vsel %vm317, %v511, %v526
      %v570 = vsel %vm317, %v513, %v528
      %v571 = vsel %vm317, %v515, %v530
      %v572 = vsel %vm317, %v517, %v532
      %v573 = vsel %vm323, %v568, %v539
      %v574 = vsel %vm323, %v569, %v541
      %v575 = vsel %vm323, %v570, %v543
      %v576 = vsel %vm323, %v571, %v545
      %v577 = vsel %vm323, %v572, %v547
      %v578 = vsel %vm329, %v573, %v554
      %v579 = vsel %vm329, %v574, %v556
      %v580 = vsel %vm329, %v575, %v558
      %v581 = vsel %vm329, %v576, %v560
      %v582 = vsel %vm329, %v577, %v562
      %v584 = vsel %vm338, %v578, 0
      %v587 = vsel %vm338, %v579, 0
      %v590 = vsel %vm338, %v580, 0
      %v593 = vsel %vm338, %v581, 0
      %v596 = vsel %vm338, %v582, 0
      %598 = vmatpush.msra.mxu0 0.0
      %599 = vmatpush.msra.mxu0 0.0
      %600 = vmatpush.msra.mxu0 0.0
      %601 = vmatpush.msra.mxu0 0.0
      %602 = vmatpush.msra.mxu0 0.0
      %603 = vmatpush.msra.mxu0 0.0
      %604 = vmatpush.msra.mxu0 0.0
      %605 = vmatpush.msra.mxu0 0.0
      %606 = vmatpush.msra.mxu0 0.0
      %607 = vmatpush.msra.mxu0 0.0
      %608 = vmatpush.msra.mxu0 0.0
      %609 = vmatpush.msra.mxu0 0.0
      %610 = vmatpush.msra.mxu0 0.0
      %611 = vmatpush.msra.mxu0 0.0
      %612 = vmatpush.msra.mxu0 %v232
      %613 = vmatpush.msra.mxu0 %v231
      %614 = vmatmul.f32.gmra.mxu0 %v584
      %v615 = vpop.f32.mrf.mxu0
      %v616 = vadd.f32 %v336, %v615
      %617 = vmatmul.f32.gmra.mxu0 %v587
      %v618 = vpop.f32.mrf.mxu0
      %v619 = vadd.f32 %v336, %v618
      %620 = vmatmul.f32.gmra.mxu0 %v590
      %v621 = vpop.f32.mrf.mxu0
      %v622 = vadd.f32 %v336, %v621
      %623 = vmatmul.f32.gmra.mxu0 %v593
      %v624 = vpop.f32.mrf.mxu0
      %v625 = vadd.f32 %v336, %v624
      %626 = vmatmul.f32.gmra.mxu0 %v596
      %v627 = vpop.f32.mrf.mxu0
      %v628 = vadd.f32 %v336, %v627
      %629 = vdwg.mxu0
      %630 = vrot.lane.b32.xlu0 %v225, 125
      %v631 = vpop.permute.xlu0 %630
      %632 = vrot.lane.b32.xlu0 %v226, 125
      %v633 = vpop.permute.xlu0 %632
      %634 = vrot.lane.b32.xlu0 %v227, 125
      %v635 = vpop.permute.xlu0 %634
      %636 = vrot.lane.b32.xlu0 %v228, 125
      %v637 = vpop.permute.xlu0 %636
      %638 = vrot.lane.b32.xlu0 %v229, 125
      %v639 = vpop.permute.xlu0 %638
      %645 = vrot.lane.b32.xlu0 %v242, 1
      %v646 = vpop.permute.xlu0 %645
      %647 = vrot.lane.b32.xlu0 %v244, 1
      %v648 = vpop.permute.xlu0 %647
      %649 = vrot.lane.b32.xlu0 %v246, 1
      %v650 = vpop.permute.xlu0 %649
      %651 = vrot.lane.b32.xlu0 %v248, 1
      %v652 = vpop.permute.xlu0 %651
      %653 = vrot.lane.b32.xlu0 %v247, 1
      %v654 = vpop.permute.xlu0 %653
      %660 = vrot.lane.b32.xlu0 %v267, 5
      %v661 = vpop.permute.xlu0 %660
      %662 = vrot.lane.b32.xlu0 %v269, 5
      %v663 = vpop.permute.xlu0 %662
      %664 = vrot.lane.b32.xlu0 %v271, 5
      %v665 = vpop.permute.xlu0 %664
      %666 = vrot.lane.b32.xlu0 %v273, 5
      %v667 = vpop.permute.xlu0 %666
      %668 = vrot.lane.b32.xlu0 %v272, 5
      %v669 = vpop.permute.xlu0 %668
      %675 = vrot.lane.b32.xlu0 %v293, 9
      %v676 = vpop.permute.xlu0 %675
      %677 = vrot.lane.b32.xlu0 %v295, 9
      %v678 = vpop.permute.xlu0 %677
      %679 = vrot.lane.b32.xlu0 %v297, 9
      %v680 = vpop.permute.xlu0 %679
      %681 = vrot.lane.b32.xlu0 %v299, 9
      %v682 = vpop.permute.xlu0 %681
      %683 = vrot.lane.b32.xlu0 %v301, 9
      %v684 = vpop.permute.xlu0 %683
      %v690 = vsel %vm317, %v631, %v646
      %v691 = vsel %vm317, %v633, %v648
      %v692 = vsel %vm317, %v635, %v650
      %v693 = vsel %vm317, %v637, %v652
      %v694 = vsel %vm317, %v639, %v654
      %v695 = vsel %vm323, %v690, %v661
      %v696 = vsel %vm323, %v691, %v663
      %v697 = vsel %vm323, %v692, %v665
      %v698 = vsel %vm323, %v693, %v667
      %v699 = vsel %vm323, %v694, %v669
      %v700 = vsel %vm329, %v695, %v676
      %v701 = vsel %vm329, %v696, %v678
      %v702 = vsel %vm329, %v697, %v680
      %v703 = vsel %vm329, %v698, %v682
      %v704 = vsel %vm329, %v699, %v684
      %v706 = vsel %vm338, %v700, 0
      %v709 = vsel %vm338, %v701, 0
      %v712 = vsel %vm338, %v702, 0
      %v715 = vsel %vm338, %v703, 0
      %v718 = vsel %vm338, %v704, 0
      %720 = vmatpush.msra.mxu0 0.0
      %721 = vmatpush.msra.mxu0 0.0
      %722 = vmatpush.msra.mxu0 0.0
      %723 = vmatpush.msra.mxu0 0.0
      %724 = vmatpush.msra.mxu0 0.0
      %725 = vmatpush.msra.mxu0 0.0
      %726 = vmatpush.msra.mxu0 0.0
      %727 = vmatpush.msra.mxu0 0.0
      %728 = vmatpush.msra.mxu0 0.0
      %729 = vmatpush.msra.mxu0 0.0
      %730 = vmatpush.msra.mxu0 0.0
      %731 = vmatpush.msra.mxu0 0.0
      %732 = vmatpush.msra.mxu0 0.0
      %733 = vmatpush.msra.mxu0 0.0
      %734 = vmatpush.msra.mxu0 %v232
      %735 = vmatpush.msra.mxu0 %v231
      %736 = vmatmul.f32.gmra.mxu0 %v706
      %v737 = vpop.f32.mrf.mxu0
      %v738 = vadd.f32 %v336, %v737
      %739 = vmatmul.f32.gmra.mxu0 %v709
      %v740 = vpop.f32.mrf.mxu0
      %v741 = vadd.f32 %v336, %v740
      %742 = vmatmul.f32.gmra.mxu0 %v712
      %v743 = vpop.f32.mrf.mxu0
      %v744 = vadd.f32 %v336, %v743
      %745 = vmatmul.f32.gmra.mxu0 %v715
      %v746 = vpop.f32.mrf.mxu0
      %v747 = vadd.f32 %v336, %v746
      %748 = vmatmul.f32.gmra.mxu0 %v718
      %v749 = vpop.f32.mrf.mxu0
      %v750 = vadd.f32 %v336, %v749
      %751 = vdwg.mxu0
      %752 = vrot.lane.b32.xlu0 %v225, 124
      %v753 = vpop.permute.xlu0 %752
      %754 = vrot.lane.b32.xlu0 %v226, 124
      %v755 = vpop.permute.xlu0 %754
      %756 = vrot.lane.b32.xlu0 %v227, 124
      %v757 = vpop.permute.xlu0 %756
      %758 = vrot.lane.b32.xlu0 %v228, 124
      %v759 = vpop.permute.xlu0 %758
      %760 = vrot.lane.b32.xlu0 %v229, 124
      %v761 = vpop.permute.xlu0 %760
      %772 = vrot.lane.b32.xlu0 %v267, 4
      %v773 = vpop.permute.xlu0 %772
      %774 = vrot.lane.b32.xlu0 %v269, 4
      %v775 = vpop.permute.xlu0 %774
      %776 = vrot.lane.b32.xlu0 %v271, 4
      %v777 = vpop.permute.xlu0 %776
      %778 = vrot.lane.b32.xlu0 %v273, 4
      %v779 = vpop.permute.xlu0 %778
      %780 = vrot.lane.b32.xlu0 %v272, 4
      %v781 = vpop.permute.xlu0 %780
      %787 = vrot.lane.b32.xlu0 %v293, 8
      %v788 = vpop.permute.xlu0 %787
      %789 = vrot.lane.b32.xlu0 %v295, 8
      %v790 = vpop.permute.xlu0 %789
      %791 = vrot.lane.b32.xlu0 %v297, 8
      %v792 = vpop.permute.xlu0 %791
      %793 = vrot.lane.b32.xlu0 %v299, 8
      %v794 = vpop.permute.xlu0 %793
      %795 = vrot.lane.b32.xlu0 %v301, 8
      %v796 = vpop.permute.xlu0 %795
      %v802 = vsel %vm317, %v753, %v242
      %v803 = vsel %vm317, %v755, %v244
      %v804 = vsel %vm317, %v757, %v246
      %v805 = vsel %vm317, %v759, %v248
      %v806 = vsel %vm317, %v761, %v247
      %v807 = vsel %vm323, %v802, %v773
      %v808 = vsel %vm323, %v803, %v775
      %v809 = vsel %vm323, %v804, %v777
      %v810 = vsel %vm323, %v805, %v779
      %v811 = vsel %vm323, %v806, %v781
      %v812 = vsel %vm329, %v807, %v788
      %v813 = vsel %vm329, %v808, %v790
      %v814 = vsel %vm329, %v809, %v792
      %v815 = vsel %vm329, %v810, %v794
      %v816 = vsel %vm329, %v811, %v796
      %v818 = vsel %vm338, %v812, 0
      %v821 = vsel %vm338, %v813, 0
      %v824 = vsel %vm338, %v814, 0
      %v827 = vsel %vm338, %v815, 0
      %v830 = vsel %vm338, %v816, 0
      %832 = vmatpush.msra.mxu0 0.0
      %833 = vmatpush.msra.mxu0 0.0
      %834 = vmatpush.msra.mxu0 0.0
      %835 = vmatpush.msra.mxu0 0.0
      %836 = vmatpush.msra.mxu0 0.0
      %837 = vmatpush.msra.mxu0 0.0
      %838 = vmatpush.msra.mxu0 0.0
      %839 = vmatpush.msra.mxu0 0.0
      %840 = vmatpush.msra.mxu0 0.0
      %841 = vmatpush.msra.mxu0 0.0
      %842 = vmatpush.msra.mxu0 0.0
      %843 = vmatpush.msra.mxu0 0.0
      %844 = vmatpush.msra.mxu0 0.0
      %845 = vmatpush.msra.mxu0 0.0
      %846 = vmatpush.msra.mxu0 %v232
      %847 = vmatpush.msra.mxu0 %v231
      %848 = vmatmul.f32.gmra.mxu0 %v818
      %v849 = vpop.f32.mrf.mxu0
      %v850 = vadd.f32 %v336, %v849
      %851 = vmatmul.f32.gmra.mxu0 %v821
      %v852 = vpop.f32.mrf.mxu0
      %v853 = vadd.f32 %v336, %v852
      %854 = vmatmul.f32.gmra.mxu0 %v824
      %v855 = vpop.f32.mrf.mxu0
      %v856 = vadd.f32 %v336, %v855
      %857 = vmatmul.f32.gmra.mxu0 %v827
      %v858 = vpop.f32.mrf.mxu0
      %v859 = vadd.f32 %v336, %v858
      %860 = vmatmul.f32.gmra.mxu0 %v830
      %v861 = vpop.f32.mrf.mxu0
      %v862 = vadd.f32 %v336, %v861
      %863 = vdwg.mxu0
      %869 = vrot.lane.b32.xlu0 %v494, 32
      %v870 = vpop.permute.xlu0 %869
      %871 = vrot.lane.b32.xlu0 %v497, 32
      %v872 = vpop.permute.xlu0 %871
      %873 = vrot.lane.b32.xlu0 %v500, 32
      %v874 = vpop.permute.xlu0 %873
      %875 = vrot.lane.b32.xlu0 %v503, 32
      %v876 = vpop.permute.xlu0 %875
      %877 = vrot.lane.b32.xlu0 %v506, 32
      %v878 = vpop.permute.xlu0 %877
      %889 = vrot.lane.b32.xlu0 %v616, 64
      %v890 = vpop.permute.xlu0 %889
      %891 = vrot.lane.b32.xlu0 %v619, 64
      %v892 = vpop.permute.xlu0 %891
      %893 = vrot.lane.b32.xlu0 %v622, 64
      %v894 = vpop.permute.xlu0 %893
      %895 = vrot.lane.b32.xlu0 %v625, 64
      %v896 = vpop.permute.xlu0 %895
      %897 = vrot.lane.b32.xlu0 %v628, 64
      %v898 = vpop.permute.xlu0 %897
      %909 = vrot.lane.b32.xlu0 %v738, 96
      %v910 = vpop.permute.xlu0 %909
      %911 = vrot.lane.b32.xlu0 %v741, 96
      %v912 = vpop.permute.xlu0 %911
      %913 = vrot.lane.b32.xlu0 %v744, 96
      %v914 = vpop.permute.xlu0 %913
      %915 = vrot.lane.b32.xlu0 %v747, 96
      %v916 = vpop.permute.xlu0 %915
      %917 = vrot.lane.b32.xlu0 %v750, 96
      %v918 = vpop.permute.xlu0 %917
      %vm924 = vcmask 261120
      %v925 = vsel %vm924, %v372, %v870
      %v926 = vsel %vm924, %v375, %v872
      %v927 = vsel %vm924, %v378, %v874
      %v928 = vsel %vm924, %v381, %v876
      %v929 = vsel %vm924, %v384, %v878
      %vm930 = vcmask 523264
      %v931 = vsel %vm930, %v925, %v890
      %v932 = vsel %vm930, %v926, %v892
      %v933 = vsel %vm930, %v927, %v894
      %v934 = vsel %vm930, %v928, %v896
      %v935 = vsel %vm930, %v929, %v898
      %vm936 = vcmask 785408
      %v937 = vsel %vm936, %v931, %v910
      %v938 = vsel %vm936, %v932, %v912
      %v939 = vsel %vm936, %v933, %v914
      %v940 = vsel %vm936, %v934, %v916
      %v941 = vsel %vm936, %v935, %v918
      %v947 = vrot.slane %v937, 1
      %v948 = vrot.slane %v938, 1
      %v949 = vsel %vm239, %v947, %v948
      %v950 = vrot.slane %v939, 1
      %v951 = vsel %vm239, %v948, %v950
      %v952 = vrot.slane %v940, 1
      %v953 = vsel %vm239, %v950, %v952
      %v954 = vrot.slane %v941, 1
      %v955 = vsel %vm239, %v952, %v954
      %v961 = vrot.slane %v937, 2
      %v962 = vrot.slane %v938, 2
      %v963 = vsel %vm264, %v961, %v962
      %v964 = vrot.slane %v939, 2
      %v965 = vsel %vm264, %v962, %v964
      %v966 = vrot.slane %v940, 2
      %v967 = vsel %vm264, %v964, %v966
      %v968 = vrot.slane %v941, 2
      %v969 = vsel %vm264, %v966, %v968
      %v975 = vrot.slane %v937, 3
      %v976 = vrot.slane %v938, 3
      %v977 = vsel %vm290, %v975, %v976
      %v978 = vrot.slane %v939, 3
      %v979 = vsel %vm290, %v976, %v978
      %v980 = vrot.slane %v940, 3
      %v981 = vsel %vm290, %v978, %v980
      %v982 = vrot.slane %v941, 3
      %v983 = vsel %vm290, %v980, %v982
      %994 = vrot.lane.b32.xlu0 %v937, 96
      %v995 = vpop.permute.xlu0 %994
      %996 = vrot.lane.b32.xlu0 %v850, 96
      %v997 = vpop.permute.xlu0 %996
      %998 = vrot.lane.b32.xlu0 %v938, 96
      %v999 = vpop.permute.xlu0 %998
      %1000 = vrot.lane.b32.xlu0 %v853, 96
      %v1001 = vpop.permute.xlu0 %1000
      %1002 = vrot.lane.b32.xlu0 %v939, 96
      %v1003 = vpop.permute.xlu0 %1002
      %1004 = vrot.lane.b32.xlu0 %v856, 96
      %v1005 = vpop.permute.xlu0 %1004
      %1006 = vrot.lane.b32.xlu0 %v940, 96
      %v1007 = vpop.permute.xlu0 %1006
      %1008 = vrot.lane.b32.xlu0 %v859, 96
      %v1009 = vpop.permute.xlu0 %1008
      %1010 = vrot.lane.b32.xlu0 %v941, 96
      %v1011 = vpop.permute.xlu0 %1010
      %1012 = vrot.lane.b32.xlu0 %v862, 96
      %v1013 = vpop.permute.xlu0 %1012
      %v1014 = vsel %vm936, %v995, %v997
      %v1015 = vsel %vm936, %v999, %v1001
      %v1016 = vsel %vm936, %v1003, %v1005
      %v1017 = vsel %vm936, %v1007, %v1009
      %v1018 = vsel %vm936, %v1011, %v1013
      %v1019 = vrot.slane %v850, 1
      %v1020 = vrot.slane %v853, 1
      %v1021 = vsel %vm239, %v1019, %v1020
      %v1022 = vrot.slane %v856, 1
      %v1023 = vsel %vm239, %v1020, %v1022
      %v1024 = vrot.slane %v859, 1
      %v1025 = vsel %vm239, %v1022, %v1024
      %v1026 = vrot.slane %v862, 1
      %v1027 = vsel %vm239, %v1024, %v1026
      %1028 = vrot.lane.b32.xlu0 %v949, 96
      %v1029 = vpop.permute.xlu0 %1028
      %1030 = vrot.lane.b32.xlu0 %v1021, 96
      %v1031 = vpop.permute.xlu0 %1030
      %1032 = vrot.lane.b32.xlu0 %v951, 96
      %v1033 = vpop.permute.xlu0 %1032
      %1034 = vrot.lane.b32.xlu0 %v1023, 96
      %v1035 = vpop.permute.xlu0 %1034
      %1036 = vrot.lane.b32.xlu0 %v953, 96
      %v1037 = vpop.permute.xlu0 %1036
      %1038 = vrot.lane.b32.xlu0 %v1025, 96
      %v1039 = vpop.permute.xlu0 %1038
      %1040 = vrot.lane.b32.xlu0 %v955, 96
      %v1041 = vpop.permute.xlu0 %1040
      %1042 = vrot.lane.b32.xlu0 %v1027, 96
      %v1043 = vpop.permute.xlu0 %1042
      %1044 = vrot.lane.b32.xlu0 %v954, 96
      %v1045 = vpop.permute.xlu0 %1044
      %1046 = vrot.lane.b32.xlu0 %v1026, 96
      %v1047 = vpop.permute.xlu0 %1046
      %v1048 = vsel %vm936, %v1029, %v1031
      %v1049 = vsel %vm936, %v1033, %v1035
      %v1050 = vsel %vm936, %v1037, %v1039
      %v1051 = vsel %vm936, %v1041, %v1043
      %v1052 = vsel %vm936, %v1045, %v1047
      %v1053 = vrot.slane %v850, 2
      %v1054 = vrot.slane %v853, 2
      %v1055 = vsel %vm264, %v1053, %v1054
      %v1056 = vrot.slane %v856, 2
      %v1057 = vsel %vm264, %v1054, %v1056
      %v1058 = vrot.slane %v859, 2
      %v1059 = vsel %vm264, %v1056, %v1058
      %v1060 = vrot.slane %v862, 2
      %v1061 = vsel %vm264, %v1058, %v1060
      %1062 = vrot.lane.b32.xlu0 %v963, 96
      %v1063 = vpop.permute.xlu0 %1062
      %1064 = vrot.lane.b32.xlu0 %v1055, 96
      %v1065 = vpop.permute.xlu0 %1064
      %1066 = vrot.lane.b32.xlu0 %v965, 96
      %v1067 = vpop.permute.xlu0 %1066
      %1068 = vrot.lane.b32.xlu0 %v1057, 96
      %v1069 = vpop.permute.xlu0 %1068
      %1070 = vrot.lane.b32.xlu0 %v967, 96
      %v1071 = vpop.permute.xlu0 %1070
      %1072 = vrot.lane.b32.xlu0 %v1059, 96
      %v1073 = vpop.permute.xlu0 %1072
      %1074 = vrot.lane.b32.xlu0 %v969, 96
      %v1075 = vpop.permute.xlu0 %1074
      %1076 = vrot.lane.b32.xlu0 %v1061, 96
      %v1077 = vpop.permute.xlu0 %1076
      %1078 = vrot.lane.b32.xlu0 %v968, 96
      %v1079 = vpop.permute.xlu0 %1078
      %1080 = vrot.lane.b32.xlu0 %v1060, 96
      %v1081 = vpop.permute.xlu0 %1080
      %v1082 = vsel %vm936, %v1063, %v1065
      %v1083 = vsel %vm936, %v1067, %v1069
      %v1084 = vsel %vm936, %v1071, %v1073
      %v1085 = vsel %vm936, %v1075, %v1077
      %v1086 = vsel %vm936, %v1079, %v1081
      %v1087 = vrot.slane %v850, 3
      %v1088 = vrot.slane %v853, 3
      %v1089 = vsel %vm290, %v1087, %v1088
      %v1090 = vrot.slane %v856, 3
      %v1091 = vsel %vm290, %v1088, %v1090
      %v1092 = vrot.slane %v859, 3
      %v1093 = vsel %vm290, %v1090, %v1092
      %v1094 = vrot.slane %v862, 3
      %v1095 = vsel %vm290, %v1092, %v1094
      %1096 = vrot.lane.b32.xlu0 %v977, 96
      %v1097 = vpop.permute.xlu0 %1096
      %1098 = vrot.lane.b32.xlu0 %v1089, 96
      %v1099 = vpop.permute.xlu0 %1098
      %1100 = vrot.lane.b32.xlu0 %v979, 96
      %v1101 = vpop.permute.xlu0 %1100
      %1102 = vrot.lane.b32.xlu0 %v1091, 96
      %v1103 = vpop.permute.xlu0 %1102
      %1104 = vrot.lane.b32.xlu0 %v981, 96
      %v1105 = vpop.permute.xlu0 %1104
      %1106 = vrot.lane.b32.xlu0 %v1093, 96
      %v1107 = vpop.permute.xlu0 %1106
      %1108 = vrot.lane.b32.xlu0 %v983, 96
      %v1109 = vpop.permute.xlu0 %1108
      %1110 = vrot.lane.b32.xlu0 %v1095, 96
      %v1111 = vpop.permute.xlu0 %1110
      %1112 = vrot.lane.b32.xlu0 %v982, 96
      %v1113 = vpop.permute.xlu0 %1112
      %1114 = vrot.lane.b32.xlu0 %v1094, 96
      %v1115 = vpop.permute.xlu0 %1114
      %v1116 = vsel %vm936, %v1097, %v1099
      %v1117 = vsel %vm936, %v1101, %v1103
      %v1118 = vsel %vm936, %v1105, %v1107
      %v1119 = vsel %vm936, %v1109, %v1111
      %v1120 = vsel %vm936, %v1113, %v1115
      %vm1121 = vcmask 1042432
      %v1122 = vrot.slane %v1014, 5
      %v1123 = vrot.slane %v1048, 5
      %v1124 = vrot.slane %v1082, 5
      %v1125 = vrot.slane %v1116, 5
      %v1126 = vrot.slane %v1015, 5
      %v1127 = vsel %vm1121, %v1122, %v1126
      %v1128 = vrot.slane %v1049, 5
      %v1129 = vsel %vm1121, %v1123, %v1128
      %v1130 = vrot.slane %v1083, 5
      %v1131 = vsel %vm1121, %v1124, %v1130
      %v1132 = vrot.slane %v1117, 5
      %v1133 = vsel %vm1121, %v1125, %v1132
      %v1134 = vrot.slane %v1016, 5
      %v1135 = vsel %vm1121, %v1126, %v1134
      %v1136 = vrot.slane %v1050, 5
      %v1137 = vsel %vm1121, %v1128, %v1136
      %v1138 = vrot.slane %v1084, 5
      %v1139 = vsel %vm1121, %v1130, %v1138
      %v1140 = vrot.slane %v1118, 5
      %v1141 = vsel %vm1121, %v1132, %v1140
      %v1142 = vrot.slane %v1017, 5
      %v1143 = vsel %vm1121, %v1134, %v1142
      %v1144 = vrot.slane %v1051, 5
      %v1145 = vsel %vm1121, %v1136, %v1144
      %v1146 = vrot.slane %v1085, 5
      %v1147 = vsel %vm1121, %v1138, %v1146
      %v1148 = vrot.slane %v1119, 5
      %v1149 = vsel %vm1121, %v1140, %v1148
      %v1150 = vrot.slane %v1018, 5
      %v1151 = vsel %vm1121, %v1142, %v1150
      %v1152 = vrot.slane %v1052, 5
      %v1153 = vsel %vm1121, %v1144, %v1152
      %v1154 = vrot.slane %v1086, 5
      %v1155 = vsel %vm1121, %v1146, %v1154
      %v1156 = vrot.slane %v1120, 5
      %v1157 = vsel %vm1121, %v1148, %v1156
      %v1178 = vsel %vm1121, %v941, %v1122
      %v1179 = vsel %vm1121, %v954, %v1123
      %v1180 = vsel %vm1121, %v968, %v1124
      %v1181 = vsel %vm1121, %v982, %v1125
      %v1182 = vld [vmem:[%s3] sm:$0xff]
      %v1183 = vld [vmem:[%s3 + $0x8] sm:$0xff]
      %v1184 = vld [vmem:[%s3 + $0x10] sm:$0xff]
      %v1185 = vld [vmem:[%s3 + $0x18] sm:$0xff]
      %v1186 = vld [vmem:[%s3 + $0x20] sm:$0xff]
      %v1187 = vld [vmem:[%s3 + $0x28] sm:$0xff]
      %v1188 = vld [vmem:[%s3 + $0x30] sm:$0xff]
      %v1189 = vld [vmem:[%s3 + $0x38] sm:$0xff]
      %v1190 = vld [vmem:[%s3 + $0x40] sm:$0xff]
      %v1191 = vld [vmem:[%s3 + $0x48] sm:$0xff]
      %v1192 = vld [vmem:[%s3 + $0x50] sm:$0xff]
      %v1193 = vld [vmem:[%s3 + $0x58] sm:$0xff]
      %v1194 = vld [vmem:[%s3 + $0x60] sm:$0xff]
      %v1195 = vld [vmem:[%s3 + $0x68] sm:$0xff]
      %v1196 = vld [vmem:[%s3 + $0x70] sm:$0xff]
      %v1197 = vld [vmem:[%s3 + $0x78] sm:$0xff]
      %v1198 = vld [vmem:[%s3 + $0x80] sm:$0xff]
      %v1199 = vld [vmem:[%s3 + $0x88] sm:$0xff]
      %v1200 = vld [vmem:[%s3 + $0x90] sm:$0xff]
      %v1201 = vld [vmem:[%s3 + $0x98] sm:$0xff]
      %v1202 = vld [vmem:[%s3 + $0xa0] sm:$0xff]
      %v1203 = vld [vmem:[%s3 + $0xa8] sm:$0xff]
      %v1204 = vld [vmem:[%s3 + $0xb0] sm:$0xff]
      %v1205 = vld [vmem:[%s3 + $0xb8] sm:$0xff]
      %v1206 = vld [vmem:[%s3 + $0xc0] sm:$0xff]
      %v1207 = vld [vmem:[%s3 + $0xc8] sm:$0xff]
      %v1208 = vld [vmem:[%s3 + $0xd0] sm:$0xff]
      %v1209 = vld [vmem:[%s3 + $0xd8] sm:$0xff]
      %v1210 = vld [vmem:[%s3 + $0xe0] sm:$0xff]
      %v1211 = vld [vmem:[%s3 + $0xe8] sm:$0xff]
      %v1212 = vld [vmem:[%s3 + $0xf0] sm:$0xff]
      %v1213 = vld [vmem:[%s3 + $0xf8] sm:$0xff]
      %v1214 = vld [vmem:[%s3 + $0x100] sm:$0xff]
      %v1215 = vld [vmem:[%s3 + $0x108] sm:$0xff]
      %v1216 = vld [vmem:[%s3 + $0x110] sm:$0xff]
      %v1217 = vld [vmem:[%s3 + $0x118] sm:$0xff]
      %v1218 = vld [vmem:[%s3 + $0x120] sm:$0xff]
      %v1219 = vld [vmem:[%s3 + $0x128] sm:$0xff]
      %v1220 = vld [vmem:[%s3 + $0x130] sm:$0xff]
      %v1221 = vld [vmem:[%s3 + $0x138] sm:$0xff]
      %v1222 = vld [vmem:[%s3 + $0x140] sm:$0xff]
      %v1223 = vld [vmem:[%s3 + $0x148] sm:$0xff]
      %v1224 = vld [vmem:[%s3 + $0x150] sm:$0xff]
      %v1225 = vld [vmem:[%s3 + $0x158] sm:$0xff]
      %v1226 = vld [vmem:[%s3 + $0x160] sm:$0xff]
      %v1227 = vld [vmem:[%s3 + $0x168] sm:$0xff]
      %v1228 = vld [vmem:[%s3 + $0x170] sm:$0xff]
      %v1229 = vld [vmem:[%s3 + $0x178] sm:$0xff]
      %v1230 = vld [vmem:[%s3 + $0x180] sm:$0xff]
      %v1231 = vld [vmem:[%s3 + $0x188] sm:$0xff]
      %v1232 = vld [vmem:[%s3 + $0x190] sm:$0xff]
      %v1233 = vld [vmem:[%s3 + $0x198] sm:$0xff]
      %v1234 = vld [vmem:[%s3 + $0x1a0] sm:$0xff]
      %v1235 = vld [vmem:[%s3 + $0x1a8] sm:$0xff]
      %v1236 = vld [vmem:[%s3 + $0x1b0] sm:$0xff]
      %v1237 = vld [vmem:[%s3 + $0x1b8] sm:$0xff]
      %v1238 = vld [vmem:[%s3 + $0x1c0] sm:$0xff]
      %v1239 = vld [vmem:[%s3 + $0x1c8] sm:$0xff]
      %v1240 = vld [vmem:[%s3 + $0x1d0] sm:$0xff]
      %v1241 = vld [vmem:[%s3 + $0x1d8] sm:$0xff]
      %v1242 = vld [vmem:[%s3 + $0x1e0] sm:$0xff]
      %v1243 = vld [vmem:[%s3 + $0x1e8] sm:$0xff]
      %v1244 = vld [vmem:[%s3 + $0x1f0] sm:$0xff]
      %v1245 = vld [vmem:[%s3 + $0x1f8] sm:$0xff]
      %v1246 = vld [vmem:[%s4] sm:$0x1]
      %v1248 = vperm.slane %v1246, 0
      %1250 = vmatpush.msra.mxu0 %v1197
      %1251 = vmatpush.msra.mxu0 %v1196
      %1252 = vmatpush.msra.mxu0 %v1195
      %1253 = vmatpush.msra.mxu0 %v1194
      %1254 = vmatpush.msra.mxu0 %v1193
      %1255 = vmatpush.msra.mxu0 %v1192
      %1256 = vmatpush.msra.mxu0 %v1191
      %1257 = vmatpush.msra.mxu0 %v1190
      %1258 = vmatpush.msra.mxu0 %v1189
      %1259 = vmatpush.msra.mxu0 %v1188
      %1260 = vmatpush.msra.mxu0 %v1187
      %1261 = vmatpush.msra.mxu0 %v1186
      %1262 = vmatpush.msra.mxu0 %v1185
      %1263 = vmatpush.msra.mxu0 %v1184
      %1264 = vmatpush.msra.mxu0 %v1183
      %1265 = vmatpush.msra.mxu0 %v1182
      %1266 = vmatmul.f32.gmra.mxu0 %v937
      %v1267 = vpop.f32.mrf.mxu0
      %v1268 = vadd.f32 %v1248, %v1267
      %1269 = vmatmul.f32.gmra.mxu0 %v938
      %v1270 = vpop.f32.mrf.mxu0
      %v1271 = vadd.f32 %v1248, %v1270
      %1272 = vmatmul.f32.gmra.mxu0 %v939
      %v1273 = vpop.f32.mrf.mxu0
      %v1274 = vadd.f32 %v1248, %v1273
      %1275 = vmatmul.f32.gmra.mxu0 %v940
      %v1276 = vpop.f32.mrf.mxu0
      %v1277 = vadd.f32 %v1248, %v1276
      %1278 = vmatmul.f32.gmra.mxu0 %v1178
      %v1279 = vpop.f32.mrf.mxu0
      %v1280 = vadd.f32 %v1248, %v1279
      %1281 = vmatmul.f32.gmra.mxu0 %v1127
      %v1282 = vpop.f32.mrf.mxu0
      %v1283 = vadd.f32 %v1248, %v1282
      %1284 = vmatmul.f32.gmra.mxu0 %v1135
      %v1285 = vpop.f32.mrf.mxu0
      %v1286 = vadd.f32 %v1248, %v1285
      %1287 = vmatmul.f32.gmra.mxu0 %v1143
      %v1288 = vpop.f32.mrf.mxu0
      %v1289 = vadd.f32 %v1248, %v1288
      %1290 = vmatmul.f32.gmra.mxu0 %v1151
      %v1291 = vpop.f32.mrf.mxu0
      %v1292 = vadd.f32 %v1248, %v1291
      %1293 = vdwg.mxu0
      %1294 = vmatpush.msra.mxu0 %v1213
      %1295 = vmatpush.msra.mxu0 %v1212
      %1296 = vmatpush.msra.mxu0 %v1211
      %1297 = vmatpush.msra.mxu0 %v1210
      %1298 = vmatpush.msra.mxu0 %v1209
      %1299 = vmatpush.msra.mxu0 %v1208
      %1300 = vmatpush.msra.mxu0 %v1207
      %1301 = vmatpush.msra.mxu0 %v1206
      %1302 = vmatpush.msra.mxu0 %v1205
      %1303 = vmatpush.msra.mxu0 %v1204
      %1304 = vmatpush.msra.mxu0 %v1203
      %1305 = vmatpush.msra.mxu0 %v1202
      %1306 = vmatpush.msra.mxu0 %v1201
      %1307 = vmatpush.msra.mxu0 %v1200
      %1308 = vmatpush.msra.mxu0 %v1199
      %1309 = vmatpush.msra.mxu0 %v1198
      %1310 = vmatmul.f32.gmra.mxu0 %v949
      %v1311 = vpop.f32.mrf.mxu0
      %v1312 = vadd.f32 %v1268, %v1311
      %1313 = vmatmul.f32.gmra.mxu0 %v951
      %v1314 = vpop.f32.mrf.mxu0
      %v1315 = vadd.f32 %v1271, %v1314
      %1316 = vmatmul.f32.gmra.mxu0 %v953
      %v1317 = vpop.f32.mrf.mxu0
      %v1318 = vadd.f32 %v1274, %v1317
      %1319 = vmatmul.f32.gmra.mxu0 %v955
      %v1320 = vpop.f32.mrf.mxu0
      %v1321 = vadd.f32 %v1277, %v1320
      %1322 = vmatmul.f32.gmra.mxu0 %v1179
      %v1323 = vpop.f32.mrf.mxu0
      %v1324 = vadd.f32 %v1280, %v1323
      %1325 = vmatmul.f32.gmra.mxu0 %v1129
      %v1326 = vpop.f32.mrf.mxu0
      %v1327 = vadd.f32 %v1283, %v1326
      %1328 = vmatmul.f32.gmra.mxu0 %v1137
      %v1329 = vpop.f32.mrf.mxu0
      %v1330 = vadd.f32 %v1286, %v1329
      %1331 = vmatmul.f32.gmra.mxu0 %v1145
      %v1332 = vpop.f32.mrf.mxu0
      %v1333 = vadd.f32 %v1289, %v1332
      %1334 = vmatmul.f32.gmra.mxu0 %v1153
      %v1335 = vpop.f32.mrf.mxu0
      %v1336 = vadd.f32 %v1292, %v1335
      %1337 = vdwg.mxu0
      %1338 = vmatpush.msra.mxu0 %v1229
      %1339 = vmatpush.msra.mxu0 %v1228
      %1340 = vmatpush.msra.mxu0 %v1227
      %1341 = vmatpush.msra.mxu0 %v1226
      %1342 = vmatpush.msra.mxu0 %v1225
      %1343 = vmatpush.msra.mxu0 %v1224
      %1344 = vmatpush.msra.mxu0 %v1223
      %1345 = vmatpush.msra.mxu0 %v1222
      %1346 = vmatpush.msra.mxu0 %v1221
      %1347 = vmatpush.msra.mxu0 %v1220
      %1348 = vmatpush.msra.mxu0 %v1219
      %1349 = vmatpush.msra.mxu0 %v1218
      %1350 = vmatpush.msra.mxu0 %v1217
      %1351 = vmatpush.msra.mxu0 %v1216
      %1352 = vmatpush.msra.mxu0 %v1215
      %1353 = vmatpush.msra.mxu0 %v1214
      %1354 = vmatmul.f32.gmra.mxu0 %v963
      %v1355 = vpop.f32.mrf.mxu0
      %v1356 = vadd.f32 %v1312, %v1355
      %1357 = vmatmul.f32.gmra.mxu0 %v965
      %v1358 = vpop.f32.mrf.mxu0
      %v1359 = vadd.f32 %v1315, %v1358
      %1360 = vmatmul.f32.gmra.mxu0 %v967
      %v1361 = vpop.f32.mrf.mxu0
      %v1362 = vadd.f32 %v1318, %v1361
      %1363 = vmatmul.f32.gmra.mxu0 %v969
      %v1364 = vpop.f32.mrf.mxu0
      %v1365 = vadd.f32 %v1321, %v1364
      %1366 = vmatmul.f32.gmra.mxu0 %v1180
      %v1367 = vpop.f32.mrf.mxu0
      %v1368 = vadd.f32 %v1324, %v1367
      %1369 = vmatmul.f32.gmra.mxu0 %v1131
      %v1370 = vpop.f32.mrf.mxu0
      %v1371 = vadd.f32 %v1327, %v1370
      %1372 = vmatmul.f32.gmra.mxu0 %v1139
      %v1373 = vpop.f32.mrf.mxu0
      %v1374 = vadd.f32 %v1330, %v1373
      %1375 = vmatmul.f32.gmra.mxu0 %v1147
      %v1376 = vpop.f32.mrf.mxu0
      %v1377 = vadd.f32 %v1333, %v1376
      %1378 = vmatmul.f32.gmra.mxu0 %v1155
      %v1379 = vpop.f32.mrf.mxu0
      %v1380 = vadd.f32 %v1336, %v1379
      %1381 = vdwg.mxu0
      %1382 = vmatpush.msra.mxu0 %v1245
      %1383 = vmatpush.msra.mxu0 %v1244
      %1384 = vmatpush.msra.mxu0 %v1243
      %1385 = vmatpush.msra.mxu0 %v1242
      %1386 = vmatpush.msra.mxu0 %v1241
      %1387 = vmatpush.msra.mxu0 %v1240
      %1388 = vmatpush.msra.mxu0 %v1239
      %1389 = vmatpush.msra.mxu0 %v1238
      %1390 = vmatpush.msra.mxu0 %v1237
      %1391 = vmatpush.msra.mxu0 %v1236
      %1392 = vmatpush.msra.mxu0 %v1235
      %1393 = vmatpush.msra.mxu0 %v1234
      %1394 = vmatpush.msra.mxu0 %v1233
      %1395 = vmatpush.msra.mxu0 %v1232
      %1396 = vmatpush.msra.mxu0 %v1231
      %1397 = vmatpush.msra.mxu0 %v1230
      %1398 = vmatmul.f32.gmra.mxu0 %v977
      %v1399 = vpop.f32.mrf.mxu0
      %v1400 = vadd.f32 %v1356, %v1399
      %1401 = vmatmul.f32.gmra.mxu0 %v979
      %v1402 = vpop.f32.mrf.mxu0
      %v1403 = vadd.f32 %v1359, %v1402
      %1404 = vmatmul.f32.gmra.mxu0 %v981
      %v1405 = vpop.f32.mrf.mxu0
      %v1406 = vadd.f32 %v1362, %v1405
      %1407 = vmatmul.f32.gmra.mxu0 %v983
      %v1408 = vpop.f32.mrf.mxu0
      %v1409 = vadd.f32 %v1365, %v1408
      %1410 = vmatmul.f32.gmra.mxu0 %v1181
      %v1411 = vpop.f32.mrf.mxu0
      %v1412 = vadd.f32 %v1368, %v1411
      %1413 = vmatmul.f32.gmra.mxu0 %v1133
      %v1414 = vpop.f32.mrf.mxu0
      %v1415 = vadd.f32 %v1371, %v1414
      %1416 = vmatmul.f32.gmra.mxu0 %v1141
      %v1417 = vpop.f32.mrf.mxu0
      %v1418 = vadd.f32 %v1374, %v1417
      %1419 = vmatmul.f32.gmra.mxu0 %v1149
      %v1420 = vpop.f32.mrf.mxu0
      %v1421 = vadd.f32 %v1377, %v1420
      %1422 = vmatmul.f32.gmra.mxu0 %v1157
      %v1423 = vpop.f32.mrf.mxu0
      %v1424 = vadd.f32 %v1380, %v1423
      %1425 = vdwg.mxu0
      %v1431 = vrot.slane %v1412, 3
      %v1432 = vrot.slane %v1415, 3
      %v1433 = vsel %vm290, %v1431, %v1432
      %v1434 = vrot.slane %v1418, 3
      %v1435 = vsel %vm290, %v1432, %v1434
      %v1436 = vrot.slane %v1421, 3
      %v1437 = vsel %vm290, %v1434, %v1436
      %v1438 = vrot.slane %v1424, 3
      %v1439 = vsel %vm290, %v1436, %v1438
      %v1445 = vmax.f32 %v1400, %v1433
      %v1446 = vmax.f32 %v1403, %v1435
      %v1447 = vmax.f32 %v1406, %v1437
      %v1448 = vmax.f32 %v1409, %v1439
      %v1449 = vmax.f32 %v1412, %v1438
      %v1455 = vrot.slane %v1445, 1
      %v1456 = vrot.slane %v1446, 1
      %v1457 = vsel %vm239, %v1455, %v1456
      %v1458 = vrot.slane %v1447, 1
      %v1459 = vsel %vm239, %v1456, %v1458
      %v1460 = vrot.slane %v1448, 1
      %v1461 = vsel %vm239, %v1458, %v1460
      %v1462 = vrot.slane %v1449, 1
      %v1463 = vsel %vm239, %v1460, %v1462
      %v1469 = vmax.f32 %v1445, %v1457
      %v1470 = vmax.f32 %v1446, %v1459
      %v1471 = vmax.f32 %v1447, %v1461
      %v1472 = vmax.f32 %v1448, %v1463
      %v1473 = vmax.f32 %v1449, %v1462
      %v1474 = vlaneseq
      %v1475 = vshrl.u32 %v1474, 7
      %v1476 = vadd.s32 %v1475, 8
      %v1477 = vadd.s32 %v1475, 16
      %v1478 = vlaneseq
      %v1479 = vand.u32 %v1478, 127
      %v1480 = vmul.u32 %v1475, 2
      %v1481 = vmul.u32 %v1476, 2
      %v1482 = vmul.u32 %v1477, 2
      %vm1483 = vcmp.eq.s32.totalorder %v1479, %v1480
      %vm1484 = vcmp.eq.s32.totalorder %v1479, %v1481
      %vm1485 = vcmp.eq.s32.totalorder %v1479, %v1482
      %v1486 = vsel %vm1483, 1, 0
      %v1487 = vsel %vm1484, 1, 0
      %v1488 = vsel %vm1485, 1, 0
      %v1489 = vcvt.s32.f32 %v1486
      %v1490 = vcvt.s32.f32 %v1487
      %v1491 = vcvt.s32.f32 %v1488
      %vm1492 = vcmask 277504
      %v1494 = vsel %vm1492, %v1489, 0
      %v1497 = vsel %vm1492, %v1490, 0
      %v1500 = vsel %vm1492, %v1491, 0
      %vm1502 = vcmask 1041408
      %v1504 = vsel %vm1502, %v1473, 0
      %1506 = vmatpush.msra.mxu0 0.0
      %1507 = vmatpush.msra.mxu0 0.0
      %1508 = vmatpush.msra.mxu0 0.0
      %1509 = vmatpush.msra.mxu0 0.0
      %1510 = vmatpush.msra.mxu0 0.0
      %1511 = vmatpush.msra.mxu0 0.0
      %1512 = vmatpush.msra.mxu0 0.0
      %1513 = vmatpush.msra.mxu0 0.0
      %1514 = vmatpush.msra.mxu0 0.0
      %1515 = vmatpush.msra.mxu0 0.0
      %1516 = vmatpush.msra.mxu0 0.0
      %1517 = vmatpush.msra.mxu0 %v1504
      %1518 = vmatpush.msra.mxu0 %v1472
      %1519 = vmatpush.msra.mxu0 %v1471
      %1520 = vmatpush.msra.mxu0 %v1470
      %1521 = vmatpush.msra.mxu0 %v1469
      %1522 = vmatmul.f32.gmra.mxu0 %v1494
      %v1523 = vpop.f32.mrf.mxu0
      %v1524 = vadd.f32 0.0, %v1523
      %1525 = vmatmul.f32.gmra.mxu0 %v1497
      %v1526 = vpop.f32.mrf.mxu0
      %v1527 = vadd.f32 0.0, %v1526
      %1528 = vmatmul.f32.gmra.mxu0 %v1500
      %v1529 = vpop.f32.mrf.mxu0
      %v1530 = vadd.f32 0.0, %v1529
      %1531 = vdwg.mxu0
      %1532 = vst.msk [vmem:[%s224] sm:$0xff] %vm930, %v1524
      %1533 = vst.msk [vmem:[%s224 + $0x8] sm:$0xff] %vm930, %v1527
      %vm1534 = vcmask 516096
      %1535 = vst.msk [vmem:[%s224 + $0x10] sm:$0x1] %vm1534, %v1530
      %p1536 = scmp.lt.s32.totalorder %s16, 1
      %s1537 = scalar_select %p1536, %s16, 1
      %s1538 = smul.addr %s1537, 3
      %s1539 = smul.addr %s1538, 8
      %s1540 = scalar_lea.vmem %s5, %s1539
      // Predicated region
      $region41: #{new_model2_forward.10} parent=39 // pred_check
        %p1541 = pneg %p144
      $region42: #{new_model2_forward.10} parent=39 // pred_check_branch
        %1543 = sbr.rel (%p1541) target = $region44
      $region43: #{new_model2_forward.10} parent=39 // pred_region
        _
      $region44: #{new_model2_forward.10} parent=39 // pred_fallthru
        _
    $region40: #{new_model2_forward.10} parent=5 // pred_fallthru
      _
    %p1544 = scmp.le.s32.totalorder 2, %s11
    // Predicated region
    $region45: #{new_model2_forward.10} parent=5 // pred_check
      %p1545 = pneg %p1544
    $region46: #{new_model2_forward.10} parent=5 // pred_check_branch
      %1547 = sbr.rel (%p1545) target = $region48
    $region47: #{new_model2_forward.10} parent=5 // pred_region
      %s1548 = ssub.s32 %s11, 2
      // Predicated region
      $region49: #{new_model2_forward.10} parent=47 // pred_check
        %p1549 = pneg %p150
      $region50: #{new_model2_forward.10} parent=47 // pred_check_branch
        %1551 = sbr.rel (%p1549) target = $region52
      $region51: #{new_model2_forward.10} parent=47 // pred_region
        %p1552 = scmp.lt.s32.totalorder %s17, 1
        %s1553 = scalar_select %p1552, %s17, 1
        %s1554 = smul.addr %s1553, 3
        %s1555 = smul.addr %s1554, 8
        %s1556 = scalar_lea.vmem %s5, %s1555
      $region52: #{new_model2_forward.10} parent=47 // pred_fallthru
        _
    $region48: #{new_model2_forward.10} parent=5 // pred_fallthru
      _
  $region6: #{new_model2_forward.10} parent=0 // loop_footer
    %s15 = sadd.s32 1, %s11
  $region7: #{new_model2_forward.10} parent=0 // loop_footer_branch
    %10 = sbr.rel target = $region3
  $region8: #{new_model2_forward.10} parent=0 // loop_exit
    _

// kernel: new_model2_forward.11
$region0: #{new_model2_forward.11}
  #allocation0 [shape = 'u32[]', space=smem, size = 0x4, offset = 0x4, fixed_abs, tag = 'smem constant byte address 0x4 - core index']
  #allocation1 [shape = 'u32[72,128]{1,0:T(1,128)}', space=vmem, size = 0x9000, scoped, tag = 'internal scratch']
  %s0 = inlined_call_operand.vmem [shape: f32[8,2624], index: 0, kind: input, shape index: {}]
  %s1 = inlined_call_operand.vmem [shape: f32[8,1088], index: 1, kind: input, shape index: {}]
  %s2 = inlined_call_operand.vmem [shape: f32[2624,256], index: 2, kind: input, shape index: {}]
  %s3 = inlined_call_operand.vmem [shape: f32[1,256], index: 3, kind: input, shape index: {}]
  %s4 = inlined_call_operand.vmem [shape: f32[1088,128], index: 4, kind: input, shape index: {}]
  %s5 = inlined_call_operand.vmem [shape: f32[256,128], index: 5, kind: input, shape index: {}]
  %s6 = inlined_call_operand.vmem [shape: f32[1,128], index: 6, kind: input, shape index: {}]
  %s7 = inlined_call_operand.vmem [shape: f32[128,12], index: 7, kind: input, shape index: {}]
  %s8 = inlined_call_operand.vmem [shape: f32[1,12], index: 8, kind: input, shape index: {}]
  %s9 = inlined_call_operand.vmem [shape: f32[12,2], index: 9, kind: input, shape index: {}]
  %s10 = inlined_call_operand.vmem [shape: f32[1,2], index: 10, kind: input, shape index: {}]
  %s11 = inlined_call_operand.vmem [shape: f32[8,2], index: 11, kind: output, shape index: {}]
  %s12 = sld [smem:[#allocation0]]
  $region54: #{new_model2_forward.11} parent=0
    _
  %s14 = ssub.s32 1, %s12
  %s15 = scalar_select 0, %s14, %s12
  // Predicated region
  $region2: #{new_model2_forward.11} parent=0 // pred_check
    _
  $region3: #{new_model2_forward.11} parent=0 // pred_check_branch
    %17 = sbr.rel (0) target = $region5
  $region4: #{new_model2_forward.11} parent=0 // pred_region
    _
  $region5: #{new_model2_forward.11} parent=0 // pred_fallthru
    _
  // Predicated region
  $region6: #{new_model2_forward.11} parent=0 // pred_check
    _
  $region7: #{new_model2_forward.11} parent=0 // pred_check_branch
    %19 = sbr.rel (0) target = $region9
  $region8: #{new_model2_forward.11} parent=0 // pred_region
    _
  $region9: #{new_model2_forward.11} parent=0 // pred_fallthru
    _
  // Predicated region
  $region10: #{new_model2_forward.11} parent=0 // pred_check
    _
  $region11: #{new_model2_forward.11} parent=0 // pred_check_branch
    %21 = sbr.rel (0) target = $region13
  $region12: #{new_model2_forward.11} parent=0 // pred_region
    _
  $region13: #{new_model2_forward.11} parent=0 // pred_fallthru
    _
  // Predicated region
  $region14: #{new_model2_forward.11} parent=0 // pred_check
    _
  $region15: #{new_model2_forward.11} parent=0 // pred_check_branch
    %23 = sbr.rel (0) target = $region17
  $region16: #{new_model2_forward.11} parent=0 // pred_region
    _
  $region17: #{new_model2_forward.11} parent=0 // pred_fallthru
    _
  // Predicated region
  $region18: #{new_model2_forward.11} parent=0 // pred_check
    _
  $region19: #{new_model2_forward.11} parent=0 // pred_check_branch
    %25 = sbr.rel (0) target = $region21
  $region20: #{new_model2_forward.11} parent=0 // pred_region
    _
  $region21: #{new_model2_forward.11} parent=0 // pred_fallthru
    _
  // Predicated region
  $region22: #{new_model2_forward.11} parent=0 // pred_check
    _
  $region23: #{new_model2_forward.11} parent=0 // pred_check_branch
    %27 = sbr.rel (0) target = $region25
  $region24: #{new_model2_forward.11} parent=0 // pred_region
    _
  $region25: #{new_model2_forward.11} parent=0 // pred_fallthru
    _
  // Predicated region
  $region26: #{new_model2_forward.11} parent=0 // pred_check
    _
  $region27: #{new_model2_forward.11} parent=0 // pred_check_branch
    %29 = sbr.rel (0) target = $region29
  $region28: #{new_model2_forward.11} parent=0 // pred_region
    _
  $region29: #{new_model2_forward.11} parent=0 // pred_fallthru
    _
  // Predicated region
  $region30: #{new_model2_forward.11} parent=0 // pred_check
    _
  $region31: #{new_model2_forward.11} parent=0 // pred_check_branch
    %31 = sbr.rel (0) target = $region33
  $region32: #{new_model2_forward.11} parent=0 // pred_region
    _
  $region33: #{new_model2_forward.11} parent=0 // pred_fallthru
    _
  // Predicated region
  $region34: #{new_model2_forward.11} parent=0 // pred_check
    _
  $region35: #{new_model2_forward.11} parent=0 // pred_check_branch
    %33 = sbr.rel (0) target = $region37
  $region36: #{new_model2_forward.11} parent=0 // pred_region
    _
  $region37: #{new_model2_forward.11} parent=0 // pred_fallthru
    _
  // Predicated region
  $region38: #{new_model2_forward.11} parent=0 // pred_check
    _
  $region39: #{new_model2_forward.11} parent=0 // pred_check_branch
    %35 = sbr.rel (0) target = $region41
  $region40: #{new_model2_forward.11} parent=0 // pred_region
    _
  $region41: #{new_model2_forward.11} parent=0 // pred_fallthru
    _
  // Predicated region
  $region42: #{new_model2_forward.11} parent=0 // pred_check
    _
  $region43: #{new_model2_forward.11} parent=0 // pred_check_branch
    %37 = sbr.rel (0) target = $region45
  $region44: #{new_model2_forward.11} parent=0 // pred_region
    _
  $region45: #{new_model2_forward.11} parent=0 // pred_fallthru
    _
  %v38 = vld [vmem:[%s0] sm:$0xff]
  %v39 = vld [vmem:[%s0 + $0x8] sm:$0xff]
  %v40 = vld [vmem:[%s0 + $0x10] sm:$0xff]
  %v41 = vld [vmem:[%s0 + $0x18] sm:$0xff]
  %v42 = vld [vmem:[%s0 + $0x20] sm:$0xff]
  %v43 = vld [vmem:[%s0 + $0x28] sm:$0xff]
  %v44 = vld [vmem:[%s0 + $0x30] sm:$0xff]
  %v45 = vld [vmem:[%s0 + $0x38] sm:$0xff]
  %v46 = vld [vmem:[%s0 + $0x40] sm:$0xff]
  %v47 = vld [vmem:[%s0 + $0x48] sm:$0xff]
  %v48 = vld [vmem:[%s0 + $0x50] sm:$0xff]
  %v49 = vld [vmem:[%s0 + $0x58] sm:$0xff]
  %v50 = vld [vmem:[%s0 + $0x60] sm:$0xff]
  %v51 = vld [vmem:[%s0 + $0x68] sm:$0xff]
  %v52 = vld [vmem:[%s0 + $0x70] sm:$0xff]
  %v53 = vld [vmem:[%s0 + $0x78] sm:$0xff]
  %v54 = vld [vmem:[%s0 + $0x80] sm:$0xff]
  %v55 = vld [vmem:[%s0 + $0x88] sm:$0xff]
  %v56 = vld [vmem:[%s0 + $0x90] sm:$0xff]
  %v57 = vld [vmem:[%s0 + $0x98] sm:$0xff]
  %v58 = vld [vmem:[%s0 + $0xa0] sm:$0xff]
  %v59 = vld [vmem:[%s2] sm:$0xff]
  %v60 = vld [vmem:[%s2 + $0x8] sm:$0xff]
  %v61 = vld [vmem:[%s2 + $0x10] sm:$0xff]
  %v62 = vld [vmem:[%s2 + $0x18] sm:$0xff]
  %v63 = vld [vmem:[%s2 + $0x20] sm:$0xff]
  %v64 = vld [vmem:[%s2 + $0x28] sm:$0xff]
  %v65 = vld [vmem:[%s2 + $0x30] sm:$0xff]
  %v66 = vld [vmem:[%s2 + $0x38] sm:$0xff]
  %v67 = vld [vmem:[%s2 + $0x40] sm:$0xff]
  %v68 = vld [vmem:[%s2 + $0x48] sm:$0xff]
  %v69 = vld [vmem:[%s2 + $0x50] sm:$0xff]
  %v70 = vld [vmem:[%s2 + $0x58] sm:$0xff]
  %v71 = vld [vmem:[%s2 + $0x60] sm:$0xff]
  %v72 = vld [vmem:[%s2 + $0x68] sm:$0xff]
  %v73 = vld [vmem:[%s2 + $0x70] sm:$0xff]
  %v74 = vld [vmem:[%s2 + $0x78] sm:$0xff]
  %v75 = vld [vmem:[%s2 + $0x80] sm:$0xff]
  %v76 = vld [vmem:[%s2 + $0x88] sm:$0xff]
  %v77 = vld [vmem:[%s2 + $0x90] sm:$0xff]
  %v78 = vld [vmem:[%s2 + $0x98] sm:$0xff]
  %v79 = vld [vmem:[%s2 + $0xa0] sm:$0xff]
  %v80 = vld [vmem:[%s2 + $0xa8] sm:$0xff]
  %v81 = vld [vmem:[%s2 + $0xb0] sm:$0xff]
  %v82 = vld [vmem:[%s2 + $0xb8] sm:$0xff]
  %v83 = vld [vmem:[%s2 + $0xc0] sm:$0xff]
  %v84 = vld [vmem:[%s2 + $0xc8] sm:$0xff]
  %v85 = vld [vmem:[%s2 + $0xd0] sm:$0xff]
  %v86 = vld [vmem:[%s2 + $0xd8] sm:$0xff]
  %v87 = vld [vmem:[%s2 + $0xe0] sm:$0xff]
  %v88 = vld [vmem:[%s2 + $0xe8] sm:$0xff]
  %v89 = vld [vmem:[%s2 + $0xf0] sm:$0xff]
  %v90 = vld [vmem:[%s2 + $0xf8] sm:$0xff]
  %v91 = vld [vmem:[%s2 + $0x100] sm:$0xff]
  %v92 = vld [vmem:[%s2 + $0x108] sm:$0xff]
  %v93 = vld [vmem:[%s2 + $0x110] sm:$0xff]
  %v94 = vld [vmem:[%s2 + $0x118] sm:$0xff]
  %v95 = vld [vmem:[%s2 + $0x120] sm:$0xff]
  %v96 = vld [vmem:[%s2 + $0x128] sm:$0xff]
  %v97 = vld [vmem:[%s2 + $0x130] sm:$0xff]
  %v98 = vld [vmem:[%s2 + $0x138] sm:$0xff]
  %v99 = vld [vmem:[%s2 + $0x140] sm:$0xff]
  %v100 = vld [vmem:[%s2 + $0x148] sm:$0xff]
  %v101 = vld [vmem:[%s2 + $0x150] sm:$0xff]
  %v102 = vld [vmem:[%s2 + $0x158] sm:$0xff]
  %v103 = vld [vmem:[%s2 + $0x160] sm:$0xff]
  %v104 = vld [vmem:[%s2 + $0x168] sm:$0xff]
  %v105 = vld [vmem:[%s2 + $0x170] sm:$0xff]
  %v106 = vld [vmem:[%s2 + $0x178] sm:$0xff]
  %v107 = vld [vmem:[%s2 + $0x180] sm:$0xff]
  %v108 = vld [vmem:[%s2 + $0x188] sm:$0xff]
  %v109 = vld [vmem:[%s2 + $0x190] sm:$0xff]
  %v110 = vld [vmem:[%s2 + $0x198] sm:$0xff]
  %v111 = vld [vmem:[%s2 + $0x1a0] sm:$0xff]
  %v112 = vld [vmem:[%s2 + $0x1a8] sm:$0xff]
  %v113 = vld [vmem:[%s2 + $0x1b0] sm:$0xff]
  %v114 = vld [vmem:[%s2 + $0x1b8] sm:$0xff]
  %v115 = vld [vmem:[%s2 + $0x1c0] sm:$0xff]
  %v116 = vld [vmem:[%s2 + $0x1c8] sm:$0xff]
  %v117 = vld [vmem:[%s2 + $0x1d0] sm:$0xff]
  %v118 = vld [vmem:[%s2 + $0x1d8] sm:$0xff]
  %v119 = vld [vmem:[%s2 + $0x1e0] sm:$0xff]
  %v120 = vld [vmem:[%s2 + $0x1e8] sm:$0xff]
  %v121 = vld [vmem:[%s2 + $0x1f0] sm:$0xff]
  %v122 = vld [vmem:[%s2 + $0x1f8] sm:$0xff]
  %v123 = vld [vmem:[%s2 + $0x200] sm:$0xff]
  %v124 = vld [vmem:[%s2 + $0x208] sm:$0xff]
  %v125 = vld [vmem:[%s2 + $0x210] sm:$0xff]
  %v126 = vld [vmem:[%s2 + $0x218] sm:$0xff]
  %v127 = vld [vmem:[%s2 + $0x220] sm:$0xff]
  %v128 = vld [vmem:[%s2 + $0x228] sm:$0xff]
  %v129 = vld [vmem:[%s2 + $0x230] sm:$0xff]
  %v130 = vld [vmem:[%s2 + $0x238] sm:$0xff]
  %v131 = vld [vmem:[%s2 + $0x240] sm:$0xff]
  %v132 = vld [vmem:[%s2 + $0x248] sm:$0xff]
  %v133 = vld [vmem:[%s2 + $0x250] sm:$0xff]
  %v134 = vld [vmem:[%s2 + $0x258] sm:$0xff]
  %v135 = vld [vmem:[%s2 + $0x260] sm:$0xff]
  %v136 = vld [vmem:[%s2 + $0x268] sm:$0xff]
  %v137 = vld [vmem:[%s2 + $0x270] sm:$0xff]
  %v138 = vld [vmem:[%s2 + $0x278] sm:$0xff]
  %v139 = vld [vmem:[%s2 + $0x280] sm:$0xff]
  %v140 = vld [vmem:[%s2 + $0x288] sm:$0xff]
  %v141 = vld [vmem:[%s2 + $0x290] sm:$0xff]
  %v142 = vld [vmem:[%s2 + $0x298] sm:$0xff]
  %v143 = vld [vmem:[%s2 + $0x2a0] sm:$0xff]
  %v144 = vld [vmem:[%s2 + $0x2a8] sm:$0xff]
  %v145 = vld [vmem:[%s2 + $0x2b0] sm:$0xff]
  %v146 = vld [vmem:[%s2 + $0x2b8] sm:$0xff]
  %v147 = vld [vmem:[%s2 + $0x2c0] sm:$0xff]
  %v148 = vld [vmem:[%s2 + $0x2c8] sm:$0xff]
  %v149 = vld [vmem:[%s2 + $0x2d0] sm:$0xff]
  %v150 = vld [vmem:[%s2 + $0x2d8] sm:$0xff]
  %v151 = vld [vmem:[%s2 + $0x2e0] sm:$0xff]
  %v152 = vld [vmem:[%s2 + $0x2e8] sm:$0xff]
  %v153 = vld [vmem:[%s2 + $0x2f0] sm:$0xff]
  %v154 = vld [vmem:[%s2 + $0x2f8] sm:$0xff]
  %v155 = vld [vmem:[%s2 + $0x300] sm:$0xff]
  %v156 = vld [vmem:[%s2 + $0x308] sm:$0xff]
  %v157 = vld [vmem:[%s2 + $0x310] sm:$0xff]
  %v158 = vld [vmem:[%s2 + $0x318] sm:$0xff]
  %v159 = vld [vmem:[%s2 + $0x320] sm:$0xff]
  %v160 = vld [vmem:[%s2 + $0x328] sm:$0xff]
  %v161 = vld [vmem:[%s2 + $0x330] sm:$0xff]
  %v162 = vld [vmem:[%s2 + $0x338] sm:$0xff]
  %v163 = vld [vmem:[%s2 + $0x340] sm:$0xff]
  %v164 = vld [vmem:[%s2 + $0x348] sm:$0xff]
  %v165 = vld [vmem:[%s2 + $0x350] sm:$0xff]
  %v166 = vld [vmem:[%s2 + $0x358] sm:$0xff]
  %v167 = vld [vmem:[%s2 + $0x360] sm:$0xff]
  %v168 = vld [vmem:[%s2 + $0x368] sm:$0xff]
  %v169 = vld [vmem:[%s2 + $0x370] sm:$0xff]
  %v170 = vld [vmem:[%s2 + $0x378] sm:$0xff]
  %v171 = vld [vmem:[%s2 + $0x380] sm:$0xff]
  %v172 = vld [vmem:[%s2 + $0x388] sm:$0xff]
  %v173 = vld [vmem:[%s2 + $0x390] sm:$0xff]
  %v174 = vld [vmem:[%s2 + $0x398] sm:$0xff]
  %v175 = vld [vmem:[%s2 + $0x3a0] sm:$0xff]
  %v176 = vld [vmem:[%s2 + $0x3a8] sm:$0xff]
  %v177 = vld [vmem:[%s2 + $0x3b0] sm:$0xff]
  %v178 = vld [vmem:[%s2 + $0x3b8] sm:$0xff]
  %v179 = vld [vmem:[%s2 + $0x3c0] sm:$0xff]
  %v180 = vld [vmem:[%s2 + $0x3c8] sm:$0xff]
  %v181 = vld [vmem:[%s2 + $0x3d0] sm:$0xff]
  %v182 = vld [vmem:[%s2 + $0x3d8] sm:$0xff]
  %v183 = vld [vmem:[%s2 + $0x3e0] sm:$0xff]
  %v184 = vld [vmem:[%s2 + $0x3e8] sm:$0xff]
  %v185 = vld [vmem:[%s2 + $0x3f0] sm:$0xff]
  %v186 = vld [vmem:[%s2 + $0x3f8] sm:$0xff]
  %v187 = vld [vmem:[%s2 + $0x400] sm:$0xff]
  %v188 = vld [vmem:[%s2 + $0x408] sm:$0xff]
  %v189 = vld [vmem:[%s2 + $0x410] sm:$0xff]
  %v190 = vld [vmem:[%s2 + $0x418] sm:$0xff]
  %v191 = vld [vmem:[%s2 + $0x420] sm:$0xff]
  %v192 = vld [vmem:[%s2 + $0x428] sm:$0xff]
  %v193 = vld [vmem:[%s2 + $0x430] sm:$0xff]
  %v194 = vld [vmem:[%s2 + $0x438] sm:$0xff]
  %v195 = vld [vmem:[%s2 + $0x440] sm:$0xff]
  %v196 = vld [vmem:[%s2 + $0x448] sm:$0xff]
  %v197 = vld [vmem:[%s2 + $0x450] sm:$0xff]
  %v198 = vld [vmem:[%s2 + $0x458] sm:$0xff]
  %v199 = vld [vmem:[%s2 + $0x460] sm:$0xff]
  %v200 = vld [vmem:[%s2 + $0x468] sm:$0xff]
  %v201 = vld [vmem:[%s2 + $0x470] sm:$0xff]
  %v202 = vld [vmem:[%s2 + $0x478] sm:$0xff]
  %v203 = vld [vmem:[%s2 + $0x480] sm:$0xff]
  %v204 = vld [vmem:[%s2 + $0x488] sm:$0xff]
  %v205 = vld [vmem:[%s2 + $0x490] sm:$0xff]
  %v206 = vld [vmem:[%s2 + $0x498] sm:$0xff]
  %v207 = vld [vmem:[%s2 + $0x4a0] sm:$0xff]
  %v208 = vld [vmem:[%s2 + $0x4a8] sm:$0xff]
  %v209 = vld [vmem:[%s2 + $0x4b0] sm:$0xff]
  %v210 = vld [vmem:[%s2 + $0x4b8] sm:$0xff]
  %v211 = vld [vmem:[%s2 + $0x4c0] sm:$0xff]
  %v212 = vld [vmem:[%s2 + $0x4c8] sm:$0xff]
  %v213 = vld [vmem:[%s2 + $0x4d0] sm:$0xff]
  %v214 = vld [vmem:[%s2 + $0x4d8] sm:$0xff]
  %v215 = vld [vmem:[%s2 + $0x4e0] sm:$0xff]
  %v216 = vld [vmem:[%s2 + $0x4e8] sm:$0xff]
  %v217 = vld [vmem:[%s2 + $0x4f0] sm:$0xff]
  %v218 = vld [vmem:[%s2 + $0x4f8] sm:$0xff]
  %v219 = vld [vmem:[%s2 + $0x500] sm:$0xff]
  %v220 = vld [vmem:[%s2 + $0x508] sm:$0xff]
  %v221 = vld [vmem:[%s2 + $0x510] sm:$0xff]
  %v222 = vld [vmem:[%s2 + $0x518] sm:$0xff]
  %v223 = vld [vmem:[%s2 + $0x520] sm:$0xff]
  %v224 = vld [vmem:[%s2 + $0x528] sm:$0xff]
  %v225 = vld [vmem:[%s2 + $0x530] sm:$0xff]
  %v226 = vld [vmem:[%s2 + $0x538] sm:$0xff]
  %v227 = vld [vmem:[%s2 + $0x540] sm:$0xff]
  %v228 = vld [vmem:[%s2 + $0x548] sm:$0xff]
  %v229 = vld [vmem:[%s2 + $0x550] sm:$0xff]
  %v230 = vld [vmem:[%s2 + $0x558] sm:$0xff]
  %v231 = vld [vmem:[%s2 + $0x560] sm:$0xff]
  %v232 = vld [vmem:[%s2 + $0x568] sm:$0xff]
  %v233 = vld [vmem:[%s2 + $0x570] sm:$0xff]
  %v234 = vld [vmem:[%s2 + $0x578] sm:$0xff]
  %v235 = vld [vmem:[%s2 + $0x580] sm:$0xff]
  %v236 = vld [vmem:[%s2 + $0x588] sm:$0xff]
  %v237 = vld [vmem:[%s2 + $0x590] sm:$0xff]
  %v238 = vld [vmem:[%s2 + $0x598] sm:$0xff]
  %v239 = vld [vmem:[%s2 + $0x5a0] sm:$0xff]
  %v240 = vld [vmem:[%s2 + $0x5a8] sm:$0xff]
  %v241 = vld [vmem:[%s2 + $0x5b0] sm:$0xff]
  %v242 = vld [vmem:[%s2 + $0x5b8] sm:$0xff]
  %v243 = vld [vmem:[%s2 + $0x5c0] sm:$0xff]
  %v244 = vld [vmem:[%s2 + $0x5c8] sm:$0xff]
  %v245 = vld [vmem:[%s2 + $0x5d0] sm:$0xff]
  %v246 = vld [vmem:[%s2 + $0x5d8] sm:$0xff]
  %v247 = vld [vmem:[%s2 + $0x5e0] sm:$0xff]
  %v248 = vld [vmem:[%s2 + $0x5e8] sm:$0xff]
  %v249 = vld [vmem:[%s2 + $0x5f0] sm:$0xff]
  %v250 = vld [vmem:[%s2 + $0x5f8] sm:$0xff]
  %v251 = vld [vmem:[%s2 + $0x600] sm:$0xff]
  %v252 = vld [vmem:[%s2 + $0x608] sm:$0xff]
  %v253 = vld [vmem:[%s2 + $0x610] sm:$0xff]
  %v254 = vld [vmem:[%s2 + $0x618] sm:$0xff]
  %v255 = vld [vmem:[%s2 + $0x620] sm:$0xff]
  %v256 = vld [vmem:[%s2 + $0x628] sm:$0xff]
  %v257 = vld [vmem:[%s2 + $0x630] sm:$0xff]
  %v258 = vld [vmem:[%s2 + $0x638] sm:$0xff]
  %v259 = vld [vmem:[%s2 + $0x640] sm:$0xff]
  %v260 = vld [vmem:[%s2 + $0x648] sm:$0xff]
  %v261 = vld [vmem:[%s2 + $0x650] sm:$0xff]
  %v262 = vld [vmem:[%s2 + $0x658] sm:$0xff]
  %v263 = vld [vmem:[%s2 + $0x660] sm:$0xff]
  %v264 = vld [vmem:[%s2 + $0x668] sm:$0xff]
  %v265 = vld [vmem:[%s2 + $0x670] sm:$0xff]
  %v266 = vld [vmem:[%s2 + $0x678] sm:$0xff]
  %v267 = vld [vmem:[%s2 + $0x680] sm:$0xff]
  %v268 = vld [vmem:[%s2 + $0x688] sm:$0xff]
  %v269 = vld [vmem:[%s2 + $0x690] sm:$0xff]
  %v270 = vld [vmem:[%s2 + $0x698] sm:$0xff]
  %v271 = vld [vmem:[%s2 + $0x6a0] sm:$0xff]
  %v272 = vld [vmem:[%s2 + $0x6a8] sm:$0xff]
  %v273 = vld [vmem:[%s2 + $0x6b0] sm:$0xff]
  %v274 = vld [vmem:[%s2 + $0x6b8] sm:$0xff]
  %v275 = vld [vmem:[%s2 + $0x6c0] sm:$0xff]
  %v276 = vld [vmem:[%s2 + $0x6c8] sm:$0xff]
  %v277 = vld [vmem:[%s2 + $0x6d0] sm:$0xff]
  %v278 = vld [vmem:[%s2 + $0x6d8] sm:$0xff]
  %v279 = vld [vmem:[%s2 + $0x6e0] sm:$0xff]
  %v280 = vld [vmem:[%s2 + $0x6e8] sm:$0xff]
  %v281 = vld [vmem:[%s2 + $0x6f0] sm:$0xff]
  %v282 = vld [vmem:[%s2 + $0x6f8] sm:$0xff]
  %v283 = vld [vmem:[%s2 + $0x700] sm:$0xff]
  %v284 = vld [vmem:[%s2 + $0x708] sm:$0xff]
  %v285 = vld [vmem:[%s2 + $0x710] sm:$0xff]
  %v286 = vld [vmem:[%s2 + $0x718] sm:$0xff]
  %v287 = vld [vmem:[%s2 + $0x720] sm:$0xff]
  %v288 = vld [vmem:[%s2 + $0x728] sm:$0xff]
  %v289 = vld [vmem:[%s2 + $0x730] sm:$0xff]
  %v290 = vld [vmem:[%s2 + $0x738] sm:$0xff]
  %v291 = vld [vmem:[%s2 + $0x740] sm:$0xff]
  %v292 = vld [vmem:[%s2 + $0x748] sm:$0xff]
  %v293 = vld [vmem:[%s2 + $0x750] sm:$0xff]
  %v294 = vld [vmem:[%s2 + $0x758] sm:$0xff]
  %v295 = vld [vmem:[%s2 + $0x760] sm:$0xff]
  %v296 = vld [vmem:[%s2 + $0x768] sm:$0xff]
  %v297 = vld [vmem:[%s2 + $0x770] sm:$0xff]
  %v298 = vld [vmem:[%s2 + $0x778] sm:$0xff]
  %v299 = vld [vmem:[%s2 + $0x780] sm:$0xff]
  %v300 = vld [vmem:[%s2 + $0x788] sm:$0xff]
  %v301 = vld [vmem:[%s2 + $0x790] sm:$0xff]
  %v302 = vld [vmem:[%s2 + $0x798] sm:$0xff]
  %v303 = vld [vmem:[%s2 + $0x7a0] sm:$0xff]
  %v304 = vld [vmem:[%s2 + $0x7a8] sm:$0xff]
  %v305 = vld [vmem:[%s2 + $0x7b0] sm:$0xff]
  %v306 = vld [vmem:[%s2 + $0x7b8] sm:$0xff]
  %v307 = vld [vmem:[%s2 + $0x7c0] sm:$0xff]
  %v308 = vld [vmem:[%s2 + $0x7c8] sm:$0xff]
  %v309 = vld [vmem:[%s2 + $0x7d0] sm:$0xff]
  %v310 = vld [vmem:[%s2 + $0x7d8] sm:$0xff]
  %v311 = vld [vmem:[%s2 + $0x7e0] sm:$0xff]
  %v312 = vld [vmem:[%s2 + $0x7e8] sm:$0xff]
  %v313 = vld [vmem:[%s2 + $0x7f0] sm:$0xff]
  %v314 = vld [vmem:[%s2 + $0x7f8] sm:$0xff]
  %v315 = vld [vmem:[%s2 + $0x800] sm:$0xff]
  %v316 = vld [vmem:[%s2 + $0x808] sm:$0xff]
  %v317 = vld [vmem:[%s2 + $0x810] sm:$0xff]
  %v318 = vld [vmem:[%s2 + $0x818] sm:$0xff]
  %v319 = vld [vmem:[%s2 + $0x820] sm:$0xff]
  %v320 = vld [vmem:[%s2 + $0x828] sm:$0xff]
  %v321 = vld [vmem:[%s2 + $0x830] sm:$0xff]
  %v322 = vld [vmem:[%s2 + $0x838] sm:$0xff]
  %v323 = vld [vmem:[%s2 + $0x840] sm:$0xff]
  %v324 = vld [vmem:[%s2 + $0x848] sm:$0xff]
  %v325 = vld [vmem:[%s2 + $0x850] sm:$0xff]
  %v326 = vld [vmem:[%s2 + $0x858] sm:$0xff]
  %v327 = vld [vmem:[%s2 + $0x860] sm:$0xff]
  %v328 = vld [vmem:[%s2 + $0x868] sm:$0xff]
  %v329 = vld [vmem:[%s2 + $0x870] sm:$0xff]
  %v330 = vld [vmem:[%s2 + $0x878] sm:$0xff]
  %v331 = vld [vmem:[%s2 + $0x880] sm:$0xff]
  %v332 = vld [vmem:[%s2 + $0x888] sm:$0xff]
  %v333 = vld [vmem:[%s2 + $0x890] sm:$0xff]
  %v334 = vld [vmem:[%s2 + $0x898] sm:$0xff]
  %v335 = vld [vmem:[%s2 + $0x8a0] sm:$0xff]
  %v336 = vld [vmem:[%s2 + $0x8a8] sm:$0xff]
  %v337 = vld [vmem:[%s2 + $0x8b0] sm:$0xff]
  %v338 = vld [vmem:[%s2 + $0x8b8] sm:$0xff]
  %v339 = vld [vmem:[%s2 + $0x8c0] sm:$0xff]
  %v340 = vld [vmem:[%s2 + $0x8c8] sm:$0xff]
  %v341 = vld [vmem:[%s2 + $0x8d0] sm:$0xff]
  %v342 = vld [vmem:[%s2 + $0x8d8] sm:$0xff]
  %v343 = vld [vmem:[%s2 + $0x8e0] sm:$0xff]
  %v344 = vld [vmem:[%s2 + $0x8e8] sm:$0xff]
  %v345 = vld [vmem:[%s2 + $0x8f0] sm:$0xff]
  %v346 = vld [vmem:[%s2 + $0x8f8] sm:$0xff]
  %v347 = vld [vmem:[%s2 + $0x900] sm:$0xff]
  %v348 = vld [vmem:[%s2 + $0x908] sm:$0xff]
  %v349 = vld [vmem:[%s2 + $0x910] sm:$0xff]
  %v350 = vld [vmem:[%s2 + $0x918] sm:$0xff]
  %v351 = vld [vmem:[%s2 + $0x920] sm:$0xff]
  %v352 = vld [vmem:[%s2 + $0x928] sm:$0xff]
  %v353 = vld [vmem:[%s2 + $0x930] sm:$0xff]
  %v354 = vld [vmem:[%s2 + $0x938] sm:$0xff]
  %v355 = vld [vmem:[%s2 + $0x940] sm:$0xff]
  %v356 = vld [vmem:[%s2 + $0x948] sm:$0xff]
  %v357 = vld [vmem:[%s2 + $0x950] sm:$0xff]
  %v358 = vld [vmem:[%s2 + $0x958] sm:$0xff]
  %v359 = vld [vmem:[%s2 + $0x960] sm:$0xff]
  %v360 = vld [vmem:[%s2 + $0x968] sm:$0xff]
  %v361 = vld [vmem:[%s2 + $0x970] sm:$0xff]
  %v362 = vld [vmem:[%s2 + $0x978] sm:$0xff]
  %v363 = vld [vmem:[%s2 + $0x980] sm:$0xff]
  %v364 = vld [vmem:[%s2 + $0x988] sm:$0xff]
  %v365 = vld [vmem:[%s2 + $0x990] sm:$0xff]
  %v366 = vld [vmem:[%s2 + $0x998] sm:$0xff]
  %v367 = vld [vmem:[%s2 + $0x9a0] sm:$0xff]
  %v368 = vld [vmem:[%s2 + $0x9a8] sm:$0xff]
  %v369 = vld [vmem:[%s2 + $0x9b0] sm:$0xff]
  %v370 = vld [vmem:[%s2 + $0x9b8] sm:$0xff]
  %v371 = vld [vmem:[%s2 + $0x9c0] sm:$0xff]
  %v372 = vld [vmem:[%s2 + $0x9c8] sm:$0xff]
  %v373 = vld [vmem:[%s2 + $0x9d0] sm:$0xff]
  %v374 = vld [vmem:[%s2 + $0x9d8] sm:$0xff]
  %v375 = vld [vmem:[%s2 + $0x9e0] sm:$0xff]
  %v376 = vld [vmem:[%s2 + $0x9e8] sm:$0xff]
  %v377 = vld [vmem:[%s2 + $0x9f0] sm:$0xff]
  %v378 = vld [vmem:[%s2 + $0x9f8] sm:$0xff]
  %v379 = vld [vmem:[%s2 + $0xa00] sm:$0xff]
  %v380 = vld [vmem:[%s2 + $0xa08] sm:$0xff]
  %v381 = vld [vmem:[%s2 + $0xa10] sm:$0xff]
  %v382 = vld [vmem:[%s2 + $0xa18] sm:$0xff]
  %v383 = vld [vmem:[%s2 + $0xa20] sm:$0xff]
  %v384 = vld [vmem:[%s2 + $0xa28] sm:$0xff]
  %v385 = vld [vmem:[%s2 + $0xa30] sm:$0xff]
  %v386 = vld [vmem:[%s2 + $0xa38] sm:$0xff]
  %v387 = vld [vmem:[%s2 + $0xa40] sm:$0xff]
  %v388 = vld [vmem:[%s2 + $0xa48] sm:$0xff]
  %v389 = vld [vmem:[%s2 + $0xa50] sm:$0xff]
  %v390 = vld [vmem:[%s2 + $0xa58] sm:$0xff]
  %v391 = vld [vmem:[%s2 + $0xa60] sm:$0xff]
  %v392 = vld [vmem:[%s2 + $0xa68] sm:$0xff]
  %v393 = vld [vmem:[%s2 + $0xa70] sm:$0xff]
  %v394 = vld [vmem:[%s2 + $0xa78] sm:$0xff]
  %v395 = vld [vmem:[%s2 + $0xa80] sm:$0xff]
  %v396 = vld [vmem:[%s2 + $0xa88] sm:$0xff]
  %v397 = vld [vmem:[%s2 + $0xa90] sm:$0xff]
  %v398 = vld [vmem:[%s2 + $0xa98] sm:$0xff]
  %v399 = vld [vmem:[%s2 + $0xaa0] sm:$0xff]
  %v400 = vld [vmem:[%s2 + $0xaa8] sm:$0xff]
  %v401 = vld [vmem:[%s2 + $0xab0] sm:$0xff]
  %v402 = vld [vmem:[%s2 + $0xab8] sm:$0xff]
  %v403 = vld [vmem:[%s2 + $0xac0] sm:$0xff]
  %v404 = vld [vmem:[%s2 + $0xac8] sm:$0xff]
  %v405 = vld [vmem:[%s2 + $0xad0] sm:$0xff]
  %v406 = vld [vmem:[%s2 + $0xad8] sm:$0xff]
  %v407 = vld [vmem:[%s2 + $0xae0] sm:$0xff]
  %v408 = vld [vmem:[%s2 + $0xae8] sm:$0xff]
  %v409 = vld [vmem:[%s2 + $0xaf0] sm:$0xff]
  %v410 = vld [vmem:[%s2 + $0xaf8] sm:$0xff]
  %v411 = vld [vmem:[%s2 + $0xb00] sm:$0xff]
  %v412 = vld [vmem:[%s2 + $0xb08] sm:$0xff]
  %v413 = vld [vmem:[%s2 + $0xb10] sm:$0xff]
  %v414 = vld [vmem:[%s2 + $0xb18] sm:$0xff]
  %v415 = vld [vmem:[%s2 + $0xb20] sm:$0xff]
  %v416 = vld [vmem:[%s2 + $0xb28] sm:$0xff]
  %v417 = vld [vmem:[%s2 + $0xb30] sm:$0xff]
  %v418 = vld [vmem:[%s2 + $0xb38] sm:$0xff]
  %v419 = vld [vmem:[%s2 + $0xb40] sm:$0xff]
  %v420 = vld [vmem:[%s2 + $0xb48] sm:$0xff]
  %v421 = vld [vmem:[%s2 + $0xb50] sm:$0xff]
  %v422 = vld [vmem:[%s2 + $0xb58] sm:$0xff]
  %v423 = vld [vmem:[%s2 + $0xb60] sm:$0xff]
  %v424 = vld [vmem:[%s2 + $0xb68] sm:$0xff]
  %v425 = vld [vmem:[%s2 + $0xb70] sm:$0xff]
  %v426 = vld [vmem:[%s2 + $0xb78] sm:$0xff]
  %v427 = vld [vmem:[%s2 + $0xb80] sm:$0xff]
  %v428 = vld [vmem:[%s2 + $0xb88] sm:$0xff]
  %v429 = vld [vmem:[%s2 + $0xb90] sm:$0xff]
  %v430 = vld [vmem:[%s2 + $0xb98] sm:$0xff]
  %v431 = vld [vmem:[%s2 + $0xba0] sm:$0xff]
  %v432 = vld [vmem:[%s2 + $0xba8] sm:$0xff]
  %v433 = vld [vmem:[%s2 + $0xbb0] sm:$0xff]
  %v434 = vld [vmem:[%s2 + $0xbb8] sm:$0xff]
  %v435 = vld [vmem:[%s2 + $0xbc0] sm:$0xff]
  %v436 = vld [vmem:[%s2 + $0xbc8] sm:$0xff]
  %v437 = vld [vmem:[%s2 + $0xbd0] sm:$0xff]
  %v438 = vld [vmem:[%s2 + $0xbd8] sm:$0xff]
  %v439 = vld [vmem:[%s2 + $0xbe0] sm:$0xff]
  %v440 = vld [vmem:[%s2 + $0xbe8] sm:$0xff]
  %v441 = vld [vmem:[%s2 + $0xbf0] sm:$0xff]
  %v442 = vld [vmem:[%s2 + $0xbf8] sm:$0xff]
  %v443 = vld [vmem:[%s2 + $0xc00] sm:$0xff]
  %v444 = vld [vmem:[%s2 + $0xc08] sm:$0xff]
  %v445 = vld [vmem:[%s2 + $0xc10] sm:$0xff]
  %v446 = vld [vmem:[%s2 + $0xc18] sm:$0xff]
  %v447 = vld [vmem:[%s2 + $0xc20] sm:$0xff]
  %v448 = vld [vmem:[%s2 + $0xc28] sm:$0xff]
  %v449 = vld [vmem:[%s2 + $0xc30] sm:$0xff]
  %v450 = vld [vmem:[%s2 + $0xc38] sm:$0xff]
  %v451 = vld [vmem:[%s2 + $0xc40] sm:$0xff]
  %v452 = vld [vmem:[%s2 + $0xc48] sm:$0xff]
  %v453 = vld [vmem:[%s2 + $0xc50] sm:$0xff]
  %v454 = vld [vmem:[%s2 + $0xc58] sm:$0xff]
  %v455 = vld [vmem:[%s2 + $0xc60] sm:$0xff]
  %v456 = vld [vmem:[%s2 + $0xc68] sm:$0xff]
  %v457 = vld [vmem:[%s2 + $0xc70] sm:$0xff]
  %v458 = vld [vmem:[%s2 + $0xc78] sm:$0xff]
  %v459 = vld [vmem:[%s2 + $0xc80] sm:$0xff]
  %v460 = vld [vmem:[%s2 + $0xc88] sm:$0xff]
  %v461 = vld [vmem:[%s2 + $0xc90] sm:$0xff]
  %v462 = vld [vmem:[%s2 + $0xc98] sm:$0xff]
  %v463 = vld [vmem:[%s2 + $0xca0] sm:$0xff]
  %v464 = vld [vmem:[%s2 + $0xca8] sm:$0xff]
  %v465 = vld [vmem:[%s2 + $0xcb0] sm:$0xff]
  %v466 = vld [vmem:[%s2 + $0xcb8] sm:$0xff]
  %v467 = vld [vmem:[%s2 + $0xcc0] sm:$0xff]
  %v468 = vld [vmem:[%s2 + $0xcc8] sm:$0xff]
  %v469 = vld [vmem:[%s2 + $0xcd0] sm:$0xff]
  %v470 = vld [vmem:[%s2 + $0xcd8] sm:$0xff]
  %v471 = vld [vmem:[%s2 + $0xce0] sm:$0xff]
  %v472 = vld [vmem:[%s2 + $0xce8] sm:$0xff]
  %v473 = vld [vmem:[%s2 + $0xcf0] sm:$0xff]
  %v474 = vld [vmem:[%s2 + $0xcf8] sm:$0xff]
  %v475 = vld [vmem:[%s2 + $0xd00] sm:$0xff]
  %v476 = vld [vmem:[%s2 + $0xd08] sm:$0xff]
  %v477 = vld [vmem:[%s2 + $0xd10] sm:$0xff]
  %v478 = vld [vmem:[%s2 + $0xd18] sm:$0xff]
  %v479 = vld [vmem:[%s2 + $0xd20] sm:$0xff]
  %v480 = vld [vmem:[%s2 + $0xd28] sm:$0xff]
  %v481 = vld [vmem:[%s2 + $0xd30] sm:$0xff]
  %v482 = vld [vmem:[%s2 + $0xd38] sm:$0xff]
  %v483 = vld [vmem:[%s2 + $0xd40] sm:$0xff]
  %v484 = vld [vmem:[%s2 + $0xd48] sm:$0xff]
  %v485 = vld [vmem:[%s2 + $0xd50] sm:$0xff]
  %v486 = vld [vmem:[%s2 + $0xd58] sm:$0xff]
  %v487 = vld [vmem:[%s2 + $0xd60] sm:$0xff]
  %v488 = vld [vmem:[%s2 + $0xd68] sm:$0xff]
  %v489 = vld [vmem:[%s2 + $0xd70] sm:$0xff]
  %v490 = vld [vmem:[%s2 + $0xd78] sm:$0xff]
  %v491 = vld [vmem:[%s2 + $0xd80] sm:$0xff]
  %v492 = vld [vmem:[%s2 + $0xd88] sm:$0xff]
  %v493 = vld [vmem:[%s2 + $0xd90] sm:$0xff]
  %v494 = vld [vmem:[%s2 + $0xd98] sm:$0xff]
  %v495 = vld [vmem:[%s2 + $0xda0] sm:$0xff]
  %v496 = vld [vmem:[%s2 + $0xda8] sm:$0xff]
  %v497 = vld [vmem:[%s2 + $0xdb0] sm:$0xff]
  %v498 = vld [vmem:[%s2 + $0xdb8] sm:$0xff]
  %v499 = vld [vmem:[%s2 + $0xdc0] sm:$0xff]
  %v500 = vld [vmem:[%s2 + $0xdc8] sm:$0xff]
  %v501 = vld [vmem:[%s2 + $0xdd0] sm:$0xff]
  %v502 = vld [vmem:[%s2 + $0xdd8] sm:$0xff]
  %v503 = vld [vmem:[%s2 + $0xde0] sm:$0xff]
  %v504 = vld [vmem:[%s2 + $0xde8] sm:$0xff]
  %v505 = vld [vmem:[%s2 + $0xdf0] sm:$0xff]
  %v506 = vld [vmem:[%s2 + $0xdf8] sm:$0xff]
  %v507 = vld [vmem:[%s2 + $0xe00] sm:$0xff]
  %v508 = vld [vmem:[%s2 + $0xe08] sm:$0xff]
  %v509 = vld [vmem:[%s2 + $0xe10] sm:$0xff]
  %v510 = vld [vmem:[%s2 + $0xe18] sm:$0xff]
  %v511 = vld [vmem:[%s2 + $0xe20] sm:$0xff]
  %v512 = vld [vmem:[%s2 + $0xe28] sm:$0xff]
  %v513 = vld [vmem:[%s2 + $0xe30] sm:$0xff]
  %v514 = vld [vmem:[%s2 + $0xe38] sm:$0xff]
  %v515 = vld [vmem:[%s2 + $0xe40] sm:$0xff]
  %v516 = vld [vmem:[%s2 + $0xe48] sm:$0xff]
  %v517 = vld [vmem:[%s2 + $0xe50] sm:$0xff]
  %v518 = vld [vmem:[%s2 + $0xe58] sm:$0xff]
  %v519 = vld [vmem:[%s2 + $0xe60] sm:$0xff]
  %v520 = vld [vmem:[%s2 + $0xe68] sm:$0xff]
  %v521 = vld [vmem:[%s2 + $0xe70] sm:$0xff]
  %v522 = vld [vmem:[%s2 + $0xe78] sm:$0xff]
  %v523 = vld [vmem:[%s2 + $0xe80] sm:$0xff]
  %v524 = vld [vmem:[%s2 + $0xe88] sm:$0xff]
  %v525 = vld [vmem:[%s2 + $0xe90] sm:$0xff]
  %v526 = vld [vmem:[%s2 + $0xe98] sm:$0xff]
  %v527 = vld [vmem:[%s2 + $0xea0] sm:$0xff]
  %v528 = vld [vmem:[%s2 + $0xea8] sm:$0xff]
  %v529 = vld [vmem:[%s2 + $0xeb0] sm:$0xff]
  %v530 = vld [vmem:[%s2 + $0xeb8] sm:$0xff]
  %v531 = vld [vmem:[%s2 + $0xec0] sm:$0xff]
  %v532 = vld [vmem:[%s2 + $0xec8] sm:$0xff]
  %v533 = vld [vmem:[%s2 + $0xed0] sm:$0xff]
  %v534 = vld [vmem:[%s2 + $0xed8] sm:$0xff]
  %v535 = vld [vmem:[%s2 + $0xee0] sm:$0xff]
  %v536 = vld [vmem:[%s2 + $0xee8] sm:$0xff]
  %v537 = vld [vmem:[%s2 + $0xef0] sm:$0xff]
  %v538 = vld [vmem:[%s2 + $0xef8] sm:$0xff]
  %v539 = vld [vmem:[%s2 + $0xf00] sm:$0xff]
  %v540 = vld [vmem:[%s2 + $0xf08] sm:$0xff]
  %v541 = vld [vmem:[%s2 + $0xf10] sm:$0xff]
  %v542 = vld [vmem:[%s2 + $0xf18] sm:$0xff]
  %v543 = vld [vmem:[%s2 + $0xf20] sm:$0xff]
  %v544 = vld [vmem:[%s2 + $0xf28] sm:$0xff]
  %v545 = vld [vmem:[%s2 + $0xf30] sm:$0xff]
  %v546 = vld [vmem:[%s2 + $0xf38] sm:$0xff]
  %v547 = vld [vmem:[%s2 + $0xf40] sm:$0xff]
  %v548 = vld [vmem:[%s2 + $0xf48] sm:$0xff]
  %v549 = vld [vmem:[%s2 + $0xf50] sm:$0xff]
  %v550 = vld [vmem:[%s2 + $0xf58] sm:$0xff]
  %v551 = vld [vmem:[%s2 + $0xf60] sm:$0xff]
  %v552 = vld [vmem:[%s2 + $0xf68] sm:$0xff]
  %v553 = vld [vmem:[%s2 + $0xf70] sm:$0xff]
  %v554 = vld [vmem:[%s2 + $0xf78] sm:$0xff]
  %v555 = vld [vmem:[%s2 + $0xf80] sm:$0xff]
  %v556 = vld [vmem:[%s2 + $0xf88] sm:$0xff]
  %v557 = vld [vmem:[%s2 + $0xf90] sm:$0xff]
  %v558 = vld [vmem:[%s2 + $0xf98] sm:$0xff]
  %v559 = vld [vmem:[%s2 + $0xfa0] sm:$0xff]
  %v560 = vld [vmem:[%s2 + $0xfa8] sm:$0xff]
  %v561 = vld [vmem:[%s2 + $0xfb0] sm:$0xff]
  %v562 = vld [vmem:[%s2 + $0xfb8] sm:$0xff]
  %v563 = vld [vmem:[%s2 + $0xfc0] sm:$0xff]
  %v564 = vld [vmem:[%s2 + $0xfc8] sm:$0xff]
  %v565 = vld [vmem:[%s2 + $0xfd0] sm:$0xff]
  %v566 = vld [vmem:[%s2 + $0xfd8] sm:$0xff]
  %v567 = vld [vmem:[%s2 + $0xfe0] sm:$0xff]
  %v568 = vld [vmem:[%s2 + $0xfe8] sm:$0xff]
  %v569 = vld [vmem:[%s2 + $0xff0] sm:$0xff]
  %v570 = vld [vmem:[%s2 + $0xff8] sm:$0xff]
  %v571 = vld [vmem:[%s2 + $0x1000] sm:$0xff]
  %v572 = vld [vmem:[%s2 + $0x1008] sm:$0xff]
  %v573 = vld [vmem:[%s2 + $0x1010] sm:$0xff]
  %v574 = vld [vmem:[%s2 + $0x1018] sm:$0xff]
  %v575 = vld [vmem:[%s2 + $0x1020] sm:$0xff]
  %v576 = vld [vmem:[%s2 + $0x1028] sm:$0xff]
  %v577 = vld [vmem:[%s2 + $0x1030] sm:$0xff]
  %v578 = vld [vmem:[%s2 + $0x1038] sm:$0xff]
  %v579 = vld [vmem:[%s2 + $0x1040] sm:$0xff]
  %v580 = vld [vmem:[%s2 + $0x1048] sm:$0xff]
  %v581 = vld [vmem:[%s2 + $0x1050] sm:$0xff]
  %v582 = vld [vmem:[%s2 + $0x1058] sm:$0xff]
  %v583 = vld [vmem:[%s2 + $0x1060] sm:$0xff]
  %v584 = vld [vmem:[%s2 + $0x1068] sm:$0xff]
  %v585 = vld [vmem:[%s2 + $0x1070] sm:$0xff]
  %v586 = vld [vmem:[%s2 + $0x1078] sm:$0xff]
  %v587 = vld [vmem:[%s2 + $0x1080] sm:$0xff]
  %v588 = vld [vmem:[%s2 + $0x1088] sm:$0xff]
  %v589 = vld [vmem:[%s2 + $0x1090] sm:$0xff]
  %v590 = vld [vmem:[%s2 + $0x1098] sm:$0xff]
  %v591 = vld [vmem:[%s2 + $0x10a0] sm:$0xff]
  %v592 = vld [vmem:[%s2 + $0x10a8] sm:$0xff]
  %v593 = vld [vmem:[%s2 + $0x10b0] sm:$0xff]
  %v594 = vld [vmem:[%s2 + $0x10b8] sm:$0xff]
  %v595 = vld [vmem:[%s2 + $0x10c0] sm:$0xff]
  %v596 = vld [vmem:[%s2 + $0x10c8] sm:$0xff]
  %v597 = vld [vmem:[%s2 + $0x10d0] sm:$0xff]
  %v598 = vld [vmem:[%s2 + $0x10d8] sm:$0xff]
  %v599 = vld [vmem:[%s2 + $0x10e0] sm:$0xff]
  %v600 = vld [vmem:[%s2 + $0x10e8] sm:$0xff]
  %v601 = vld [vmem:[%s2 + $0x10f0] sm:$0xff]
  %v602 = vld [vmem:[%s2 + $0x10f8] sm:$0xff]
  %v603 = vld [vmem:[%s2 + $0x1100] sm:$0xff]
  %v604 = vld [vmem:[%s2 + $0x1108] sm:$0xff]
  %v605 = vld [vmem:[%s2 + $0x1110] sm:$0xff]
  %v606 = vld [vmem:[%s2 + $0x1118] sm:$0xff]
  %v607 = vld [vmem:[%s2 + $0x1120] sm:$0xff]
  %v608 = vld [vmem:[%s2 + $0x1128] sm:$0xff]
  %v609 = vld [vmem:[%s2 + $0x1130] sm:$0xff]
  %v610 = vld [vmem:[%s2 + $0x1138] sm:$0xff]
  %v611 = vld [vmem:[%s2 + $0x1140] sm:$0xff]
  %v612 = vld [vmem:[%s2 + $0x1148] sm:$0xff]
  %v613 = vld [vmem:[%s2 + $0x1150] sm:$0xff]
  %v614 = vld [vmem:[%s2 + $0x1158] sm:$0xff]
  %v615 = vld [vmem:[%s2 + $0x1160] sm:$0xff]
  %v616 = vld [vmem:[%s2 + $0x1168] sm:$0xff]
  %v617 = vld [vmem:[%s2 + $0x1170] sm:$0xff]
  %v618 = vld [vmem:[%s2 + $0x1178] sm:$0xff]
  %v619 = vld [vmem:[%s2 + $0x1180] sm:$0xff]
  %v620 = vld [vmem:[%s2 + $0x1188] sm:$0xff]
  %v621 = vld [vmem:[%s2 + $0x1190] sm:$0xff]
  %v622 = vld [vmem:[%s2 + $0x1198] sm:$0xff]
  %v623 = vld [vmem:[%s2 + $0x11a0] sm:$0xff]
  %v624 = vld [vmem:[%s2 + $0x11a8] sm:$0xff]
  %v625 = vld [vmem:[%s2 + $0x11b0] sm:$0xff]
  %v626 = vld [vmem:[%s2 + $0x11b8] sm:$0xff]
  %v627 = vld [vmem:[%s2 + $0x11c0] sm:$0xff]
  %v628 = vld [vmem:[%s2 + $0x11c8] sm:$0xff]
  %v629 = vld [vmem:[%s2 + $0x11d0] sm:$0xff]
  %v630 = vld [vmem:[%s2 + $0x11d8] sm:$0xff]
  %v631 = vld [vmem:[%s2 + $0x11e0] sm:$0xff]
  %v632 = vld [vmem:[%s2 + $0x11e8] sm:$0xff]
  %v633 = vld [vmem:[%s2 + $0x11f0] sm:$0xff]
  %v634 = vld [vmem:[%s2 + $0x11f8] sm:$0xff]
  %v635 = vld [vmem:[%s2 + $0x1200] sm:$0xff]
  %v636 = vld [vmem:[%s2 + $0x1208] sm:$0xff]
  %v637 = vld [vmem:[%s2 + $0x1210] sm:$0xff]
  %v638 = vld [vmem:[%s2 + $0x1218] sm:$0xff]
  %v639 = vld [vmem:[%s2 + $0x1220] sm:$0xff]
  %v640 = vld [vmem:[%s2 + $0x1228] sm:$0xff]
  %v641 = vld [vmem:[%s2 + $0x1230] sm:$0xff]
  %v642 = vld [vmem:[%s2 + $0x1238] sm:$0xff]
  %v643 = vld [vmem:[%s2 + $0x1240] sm:$0xff]
  %v644 = vld [vmem:[%s2 + $0x1248] sm:$0xff]
  %v645 = vld [vmem:[%s2 + $0x1250] sm:$0xff]
  %v646 = vld [vmem:[%s2 + $0x1258] sm:$0xff]
  %v647 = vld [vmem:[%s2 + $0x1260] sm:$0xff]
  %v648 = vld [vmem:[%s2 + $0x1268] sm:$0xff]
  %v649 = vld [vmem:[%s2 + $0x1270] sm:$0xff]
  %v650 = vld [vmem:[%s2 + $0x1278] sm:$0xff]
  %v651 = vld [vmem:[%s2 + $0x1280] sm:$0xff]
  %v652 = vld [vmem:[%s2 + $0x1288] sm:$0xff]
  %v653 = vld [vmem:[%s2 + $0x1290] sm:$0xff]
  %v654 = vld [vmem:[%s2 + $0x1298] sm:$0xff]
  %v655 = vld [vmem:[%s2 + $0x12a0] sm:$0xff]
  %v656 = vld [vmem:[%s2 + $0x12a8] sm:$0xff]
  %v657 = vld [vmem:[%s2 + $0x12b0] sm:$0xff]
  %v658 = vld [vmem:[%s2 + $0x12b8] sm:$0xff]
  %v659 = vld [vmem:[%s2 + $0x12c0] sm:$0xff]
  %v660 = vld [vmem:[%s2 + $0x12c8] sm:$0xff]
  %v661 = vld [vmem:[%s2 + $0x12d0] sm:$0xff]
  %v662 = vld [vmem:[%s2 + $0x12d8] sm:$0xff]
  %v663 = vld [vmem:[%s2 + $0x12e0] sm:$0xff]
  %v664 = vld [vmem:[%s2 + $0x12e8] sm:$0xff]
  %v665 = vld [vmem:[%s2 + $0x12f0] sm:$0xff]
  %v666 = vld [vmem:[%s2 + $0x12f8] sm:$0xff]
  %v667 = vld [vmem:[%s2 + $0x1300] sm:$0xff]
  %v668 = vld [vmem:[%s2 + $0x1308] sm:$0xff]
  %v669 = vld [vmem:[%s2 + $0x1310] sm:$0xff]
  %v670 = vld [vmem:[%s2 + $0x1318] sm:$0xff]
  %v671 = vld [vmem:[%s2 + $0x1320] sm:$0xff]
  %v672 = vld [vmem:[%s2 + $0x1328] sm:$0xff]
  %v673 = vld [vmem:[%s2 + $0x1330] sm:$0xff]
  %v674 = vld [vmem:[%s2 + $0x1338] sm:$0xff]
  %v675 = vld [vmem:[%s2 + $0x1340] sm:$0xff]
  %v676 = vld [vmem:[%s2 + $0x1348] sm:$0xff]
  %v677 = vld [vmem:[%s2 + $0x1350] sm:$0xff]
  %v678 = vld [vmem:[%s2 + $0x1358] sm:$0xff]
  %v679 = vld [vmem:[%s2 + $0x1360] sm:$0xff]
  %v680 = vld [vmem:[%s2 + $0x1368] sm:$0xff]
  %v681 = vld [vmem:[%s2 + $0x1370] sm:$0xff]
  %v682 = vld [vmem:[%s2 + $0x1378] sm:$0xff]
  %v683 = vld [vmem:[%s2 + $0x1380] sm:$0xff]
  %v684 = vld [vmem:[%s2 + $0x1388] sm:$0xff]
  %v685 = vld [vmem:[%s2 + $0x1390] sm:$0xff]
  %v686 = vld [vmem:[%s2 + $0x1398] sm:$0xff]
  %v687 = vld [vmem:[%s2 + $0x13a0] sm:$0xff]
  %v688 = vld [vmem:[%s2 + $0x13a8] sm:$0xff]
  %v689 = vld [vmem:[%s2 + $0x13b0] sm:$0xff]
  %v690 = vld [vmem:[%s2 + $0x13b8] sm:$0xff]
  %v691 = vld [vmem:[%s2 + $0x13c0] sm:$0xff]
  %v692 = vld [vmem:[%s2 + $0x13c8] sm:$0xff]
  %v693 = vld [vmem:[%s2 + $0x13d0] sm:$0xff]
  %v694 = vld [vmem:[%s2 + $0x13d8] sm:$0xff]
  %v695 = vld [vmem:[%s2 + $0x13e0] sm:$0xff]
  %v696 = vld [vmem:[%s2 + $0x13e8] sm:$0xff]
  %v697 = vld [vmem:[%s2 + $0x13f0] sm:$0xff]
  %v698 = vld [vmem:[%s2 + $0x13f8] sm:$0xff]
  %v699 = vld [vmem:[%s2 + $0x1400] sm:$0xff]
  %v700 = vld [vmem:[%s2 + $0x1408] sm:$0xff]
  %v701 = vld [vmem:[%s2 + $0x1410] sm:$0xff]
  %v702 = vld [vmem:[%s2 + $0x1418] sm:$0xff]
  %v703 = vld [vmem:[%s2 + $0x1420] sm:$0xff]
  %v704 = vld [vmem:[%s2 + $0x1428] sm:$0xff]
  %v705 = vld [vmem:[%s2 + $0x1430] sm:$0xff]
  %v706 = vld [vmem:[%s2 + $0x1438] sm:$0xff]
  %v707 = vld [vmem:[%s2 + $0x1440] sm:$0xff]
  %v708 = vld [vmem:[%s2 + $0x1448] sm:$0xff]
  %v709 = vld [vmem:[%s2 + $0x1450] sm:$0xff]
  %v710 = vld [vmem:[%s2 + $0x1458] sm:$0xff]
  %v711 = vld [vmem:[%s2 + $0x1460] sm:$0xff]
  %v712 = vld [vmem:[%s2 + $0x1468] sm:$0xff]
  %v713 = vld [vmem:[%s2 + $0x1470] sm:$0xff]
  %v714 = vld [vmem:[%s2 + $0x1478] sm:$0xff]
  %v715 = vld [vmem:[%s3] sm:$0x3]
  %v717 = vperm.slane %v715, 0
  %v718 = vperm.slane %v715, 1
  %vm721 = vcmask 523264
  %v723 = vsel %vm721, %v58, 0
  %725 = vmatpush.msra.mxu0 %v89
  %726 = vmatpush.msra.mxu0 %v87
  %727 = vmatpush.msra.mxu0 %v85
  %728 = vmatpush.msra.mxu0 %v83
  %729 = vmatpush.msra.mxu0 %v81
  %730 = vmatpush.msra.mxu0 %v79
  %731 = vmatpush.msra.mxu0 %v77
  %732 = vmatpush.msra.mxu0 %v75
  %733 = vmatpush.msra.mxu0 %v73
  %734 = vmatpush.msra.mxu0 %v71
  %735 = vmatpush.msra.mxu0 %v69
  %736 = vmatpush.msra.mxu0 %v67
  %737 = vmatpush.msra.mxu0 %v65
  %738 = vmatpush.msra.mxu0 %v63
  %739 = vmatpush.msra.mxu0 %v61
  %740 = vmatpush.msra.mxu0 %v59
  %741 = vmatmul.f32.gmra.mxu0 %v38
  %v742 = vpop.f32.mrf.mxu0
  %v743 = vadd.f32 %v717, %v742
  %744 = vdwg.mxu0
  %745 = vmatpush.msra.mxu0 %v121
  %746 = vmatpush.msra.mxu0 %v119
  %747 = vmatpush.msra.mxu0 %v117
  %748 = vmatpush.msra.mxu0 %v115
  %749 = vmatpush.msra.mxu0 %v113
  %750 = vmatpush.msra.mxu0 %v111
  %751 = vmatpush.msra.mxu0 %v109
  %752 = vmatpush.msra.mxu0 %v107
  %753 = vmatpush.msra.mxu0 %v105
  %754 = vmatpush.msra.mxu0 %v103
  %755 = vmatpush.msra.mxu0 %v101
  %756 = vmatpush.msra.mxu0 %v99
  %757 = vmatpush.msra.mxu0 %v97
  %758 = vmatpush.msra.mxu0 %v95
  %759 = vmatpush.msra.mxu0 %v93
  %760 = vmatpush.msra.mxu0 %v91
  %761 = vmatmul.f32.gmra.mxu0 %v39
  %v762 = vpop.f32.mrf.mxu0
  %v763 = vadd.f32 %v743, %v762
  %764 = vdwg.mxu0
  %765 = vmatpush.msra.mxu0 %v153
  %766 = vmatpush.msra.mxu0 %v151
  %767 = vmatpush.msra.mxu0 %v149
  %768 = vmatpush.msra.mxu0 %v147
  %769 = vmatpush.msra.mxu0 %v145
  %770 = vmatpush.msra.mxu0 %v143
  %771 = vmatpush.msra.mxu0 %v141
  %772 = vmatpush.msra.mxu0 %v139
  %773 = vmatpush.msra.mxu0 %v137
  %774 = vmatpush.msra.mxu0 %v135
  %775 = vmatpush.msra.mxu0 %v133
  %776 = vmatpush.msra.mxu0 %v131
  %777 = vmatpush.msra.mxu0 %v129
  %778 = vmatpush.msra.mxu0 %v127
  %779 = vmatpush.msra.mxu0 %v125
  %780 = vmatpush.msra.mxu0 %v123
  %781 = vmatmul.f32.gmra.mxu0 %v40
  %v782 = vpop.f32.mrf.mxu0
  %v783 = vadd.f32 %v763, %v782
  %784 = vdwg.mxu0
  %785 = vmatpush.msra.mxu0 %v185
  %786 = vmatpush.msra.mxu0 %v183
  %787 = vmatpush.msra.mxu0 %v181
  %788 = vmatpush.msra.mxu0 %v179
  %789 = vmatpush.msra.mxu0 %v177
  %790 = vmatpush.msra.mxu0 %v175
  %791 = vmatpush.msra.mxu0 %v173
  %792 = vmatpush.msra.mxu0 %v171
  %793 = vmatpush.msra.mxu0 %v169
  %794 = vmatpush.msra.mxu0 %v167
  %795 = vmatpush.msra.mxu0 %v165
  %796 = vmatpush.msra.mxu0 %v163
  %797 = vmatpush.msra.mxu0 %v161
  %798 = vmatpush.msra.mxu0 %v159
  %799 = vmatpush.msra.mxu0 %v157
  %800 = vmatpush.msra.mxu0 %v155
  %801 = vmatmul.f32.gmra.mxu0 %v41
  %v802 = vpop.f32.mrf.mxu0
  %v803 = vadd.f32 %v783, %v802
  %804 = vdwg.mxu0
  %805 = vmatpush.msra.mxu0 %v217
  %806 = vmatpush.msra.mxu0 %v215
  %807 = vmatpush.msra.mxu0 %v213
  %808 = vmatpush.msra.mxu0 %v211
  %809 = vmatpush.msra.mxu0 %v209
  %810 = vmatpush.msra.mxu0 %v207
  %811 = vmatpush.msra.mxu0 %v205
  %812 = vmatpush.msra.mxu0 %v203
  %813 = vmatpush.msra.mxu0 %v201
  %814 = vmatpush.msra.mxu0 %v199
  %815 = vmatpush.msra.mxu0 %v197
  %816 = vmatpush.msra.mxu0 %v195
  %817 = vmatpush.msra.mxu0 %v193
  %818 = vmatpush.msra.mxu0 %v191
  %819 = vmatpush.msra.mxu0 %v189
  %820 = vmatpush.msra.mxu0 %v187
  %821 = vmatmul.f32.gmra.mxu0 %v42
  %v822 = vpop.f32.mrf.mxu0
  %v823 = vadd.f32 %v803, %v822
  %824 = vdwg.mxu0
  %825 = vmatpush.msra.mxu0 %v249
  %826 = vmatpush.msra.mxu0 %v247
  %827 = vmatpush.msra.mxu0 %v245
  %828 = vmatpush.msra.mxu0 %v243
  %829 = vmatpush.msra.mxu0 %v241
  %830 = vmatpush.msra.mxu0 %v239
  %831 = vmatpush.msra.mxu0 %v237
  %832 = vmatpush.msra.mxu0 %v235
  %833 = vmatpush.msra.mxu0 %v233
  %834 = vmatpush.msra.mxu0 %v231
  %835 = vmatpush.msra.mxu0 %v229
  %836 = vmatpush.msra.mxu0 %v227
  %837 = vmatpush.msra.mxu0 %v225
  %838 = vmatpush.msra.mxu0 %v223
  %839 = vmatpush.msra.mxu0 %v221
  %840 = vmatpush.msra.mxu0 %v219
  %841 = vmatmul.f32.gmra.mxu0 %v43
  %v842 = vpop.f32.mrf.mxu0
  %v843 = vadd.f32 %v823, %v842
  %844 = vdwg.mxu0
  %845 = vmatpush.msra.mxu0 %v281
  %846 = vmatpush.msra.mxu0 %v279
  %847 = vmatpush.msra.mxu0 %v277
  %848 = vmatpush.msra.mxu0 %v275
  %849 = vmatpush.msra.mxu0 %v273
  %850 = vmatpush.msra.mxu0 %v271
  %851 = vmatpush.msra.mxu0 %v269
  %852 = vmatpush.msra.mxu0 %v267
  %853 = vmatpush.msra.mxu0 %v265
  %854 = vmatpush.msra.mxu0 %v263
  %855 = vmatpush.msra.mxu0 %v261
  %856 = vmatpush.msra.mxu0 %v259
  %857 = vmatpush.msra.mxu0 %v257
  %858 = vmatpush.msra.mxu0 %v255
  %859 = vmatpush.msra.mxu0 %v253
  %860 = vmatpush.msra.mxu0 %v251
  %861 = vmatmul.f32.gmra.mxu0 %v44
  %v862 = vpop.f32.mrf.mxu0
  %v863 = vadd.f32 %v843, %v862
  %864 = vdwg.mxu0
  %865 = vmatpush.msra.mxu0 %v313
  %866 = vmatpush.msra.mxu0 %v311
  %867 = vmatpush.msra.mxu0 %v309
  %868 = vmatpush.msra.mxu0 %v307
  %869 = vmatpush.msra.mxu0 %v305
  %870 = vmatpush.msra.mxu0 %v303
  %871 = vmatpush.msra.mxu0 %v301
  %872 = vmatpush.msra.mxu0 %v299
  %873 = vmatpush.msra.mxu0 %v297
  %874 = vmatpush.msra.mxu0 %v295
  %875 = vmatpush.msra.mxu0 %v293
  %876 = vmatpush.msra.mxu0 %v291
  %877 = vmatpush.msra.mxu0 %v289
  %878 = vmatpush.msra.mxu0 %v287
  %879 = vmatpush.msra.mxu0 %v285
  %880 = vmatpush.msra.mxu0 %v283
  %881 = vmatmul.f32.gmra.mxu0 %v45
  %v882 = vpop.f32.mrf.mxu0
  %v883 = vadd.f32 %v863, %v882
  %884 = vdwg.mxu0
  %885 = vmatpush.msra.mxu0 %v345
  %886 = vmatpush.msra.mxu0 %v343
  %887 = vmatpush.msra.mxu0 %v341
  %888 = vmatpush.msra.mxu0 %v339
  %889 = vmatpush.msra.mxu0 %v337
  %890 = vmatpush.msra.mxu0 %v335
  %891 = vmatpush.msra.mxu0 %v333
  %892 = vmatpush.msra.mxu0 %v331
  %893 = vmatpush.msra.mxu0 %v329
  %894 = vmatpush.msra.mxu0 %v327
  %895 = vmatpush.msra.mxu0 %v325
  %896 = vmatpush.msra.mxu0 %v323
  %897 = vmatpush.msra.mxu0 %v321
  %898 = vmatpush.msra.mxu0 %v319
  %899 = vmatpush.msra.mxu0 %v317
  %900 = vmatpush.msra.mxu0 %v315
  %901 = vmatmul.f32.gmra.mxu0 %v46
  %v902 = vpop.f32.mrf.mxu0
  %v903 = vadd.f32 %v883, %v902
  %904 = vdwg.mxu0
  %905 = vmatpush.msra.mxu0 %v377
  %906 = vmatpush.msra.mxu0 %v375
  %907 = vmatpush.msra.mxu0 %v373
  %908 = vmatpush.msra.mxu0 %v371
  %909 = vmatpush.msra.mxu0 %v369
  %910 = vmatpush.msra.mxu0 %v367
  %911 = vmatpush.msra.mxu0 %v365
  %912 = vmatpush.msra.mxu0 %v363
  %913 = vmatpush.msra.mxu0 %v361
  %914 = vmatpush.msra.mxu0 %v359
  %915 = vmatpush.msra.mxu0 %v357
  %916 = vmatpush.msra.mxu0 %v355
  %917 = vmatpush.msra.mxu0 %v353
  %918 = vmatpush.msra.mxu0 %v351
  %919 = vmatpush.msra.mxu0 %v349
  %920 = vmatpush.msra.mxu0 %v347
  %921 = vmatmul.f32.gmra.mxu0 %v47
  %v922 = vpop.f32.mrf.mxu0
  %v923 = vadd.f32 %v903, %v922
  %924 = vdwg.mxu0
  %925 = vmatpush.msra.mxu0 %v409
  %926 = vmatpush.msra.mxu0 %v407
  %927 = vmatpush.msra.mxu0 %v405
  %928 = vmatpush.msra.mxu0 %v403
  %929 = vmatpush.msra.mxu0 %v401
  %930 = vmatpush.msra.mxu0 %v399
  %931 = vmatpush.msra.mxu0 %v397
  %932 = vmatpush.msra.mxu0 %v395
  %933 = vmatpush.msra.mxu0 %v393
  %934 = vmatpush.msra.mxu0 %v391
  %935 = vmatpush.msra.mxu0 %v389
  %936 = vmatpush.msra.mxu0 %v387
  %937 = vmatpush.msra.mxu0 %v385
  %938 = vmatpush.msra.mxu0 %v383
  %939 = vmatpush.msra.mxu0 %v381
  %940 = vmatpush.msra.mxu0 %v379
  %941 = vmatmul.f32.gmra.mxu0 %v48
  %v942 = vpop.f32.mrf.mxu0
  %v943 = vadd.f32 %v923, %v942
  %944 = vdwg.mxu0
  %945 = vmatpush.msra.mxu0 %v441
  %946 = vmatpush.msra.mxu0 %v439
  %947 = vmatpush.msra.mxu0 %v437
  %948 = vmatpush.msra.mxu0 %v435
  %949 = vmatpush.msra.mxu0 %v433
  %950 = vmatpush.msra.mxu0 %v431
  %951 = vmatpush.msra.mxu0 %v429
  %952 = vmatpush.msra.mxu0 %v427
  %953 = vmatpush.msra.mxu0 %v425
  %954 = vmatpush.msra.mxu0 %v423
  %955 = vmatpush.msra.mxu0 %v421
  %956 = vmatpush.msra.mxu0 %v419
  %957 = vmatpush.msra.mxu0 %v417
  %958 = vmatpush.msra.mxu0 %v415
  %959 = vmatpush.msra.mxu0 %v413
  %960 = vmatpush.msra.mxu0 %v411
  %961 = vmatmul.f32.gmra.mxu0 %v49
  %v962 = vpop.f32.mrf.mxu0
  %v963 = vadd.f32 %v943, %v962
  %964 = vdwg.mxu0
  %965 = vmatpush.msra.mxu0 %v473
  %966 = vmatpush.msra.mxu0 %v471
  %967 = vmatpush.msra.mxu0 %v469
  %968 = vmatpush.msra.mxu0 %v467
  %969 = vmatpush.msra.mxu0 %v465
  %970 = vmatpush.msra.mxu0 %v463
  %971 = vmatpush.msra.mxu0 %v461
  %972 = vmatpush.msra.mxu0 %v459
  %973 = vmatpush.msra.mxu0 %v457
  %974 = vmatpush.msra.mxu0 %v455
  %975 = vmatpush.msra.mxu0 %v453
  %976 = vmatpush.msra.mxu0 %v451
  %977 = vmatpush.msra.mxu0 %v449
  %978 = vmatpush.msra.mxu0 %v447
  %979 = vmatpush.msra.mxu0 %v445
  %980 = vmatpush.msra.mxu0 %v443
  %981 = vmatmul.f32.gmra.mxu0 %v50
  %v982 = vpop.f32.mrf.mxu0
  %v983 = vadd.f32 %v963, %v982
  %984 = vdwg.mxu0
  %985 = vmatpush.msra.mxu0 %v505
  %986 = vmatpush.msra.mxu0 %v503
  %987 = vmatpush.msra.mxu0 %v501
  %988 = vmatpush.msra.mxu0 %v499
  %989 = vmatpush.msra.mxu0 %v497
  %990 = vmatpush.msra.mxu0 %v495
  %991 = vmatpush.msra.mxu0 %v493
  %992 = vmatpush.msra.mxu0 %v491
  %993 = vmatpush.msra.mxu0 %v489
  %994 = vmatpush.msra.mxu0 %v487
  %995 = vmatpush.msra.mxu0 %v485
  %996 = vmatpush.msra.mxu0 %v483
  %997 = vmatpush.msra.mxu0 %v481
  %998 = vmatpush.msra.mxu0 %v479
  %999 = vmatpush.msra.mxu0 %v477
  %1000 = vmatpush.msra.mxu0 %v475
  %1001 = vmatmul.f32.gmra.mxu0 %v51
  %v1002 = vpop.f32.mrf.mxu0
  %v1003 = vadd.f32 %v983, %v1002
  %1004 = vdwg.mxu0
  %1005 = vmatpush.msra.mxu0 %v537
  %1006 = vmatpush.msra.mxu0 %v535
  %1007 = vmatpush.msra.mxu0 %v533
  %1008 = vmatpush.msra.mxu0 %v531
  %1009 = vmatpush.msra.mxu0 %v529
  %1010 = vmatpush.msra.mxu0 %v527
  %1011 = vmatpush.msra.mxu0 %v525
  %1012 = vmatpush.msra.mxu0 %v523
  %1013 = vmatpush.msra.mxu0 %v521
  %1014 = vmatpush.msra.mxu0 %v519
  %1015 = vmatpush.msra.mxu0 %v517
  %1016 = vmatpush.msra.mxu0 %v515
  %1017 = vmatpush.msra.mxu0 %v513
  %1018 = vmatpush.msra.mxu0 %v511
  %1019 = vmatpush.msra.mxu0 %v509
  %1020 = vmatpush.msra.mxu0 %v507
  %1021 = vmatmul.f32.gmra.mxu0 %v52
  %v1022 = vpop.f32.mrf.mxu0
  %v1023 = vadd.f32 %v1003, %v1022
  %1024 = vdwg.mxu0
  %1025 = vmatpush.msra.mxu0 %v569
  %1026 = vmatpush.msra.mxu0 %v567
  %1027 = vmatpush.msra.mxu0 %v565
  %1028 = vmatpush.msra.mxu0 %v563
  %1029 = vmatpush.msra.mxu0 %v561
  %1030 = vmatpush.msra.mxu0 %v559
  %1031 = vmatpush.msra.mxu0 %v557
  %1032 = vmatpush.msra.mxu0 %v555
  %1033 = vmatpush.msra.mxu0 %v553
  %1034 = vmatpush.msra.mxu0 %v551
  %1035 = vmatpush.msra.mxu0 %v549
  %1036 = vmatpush.msra.mxu0 %v547
  %1037 = vmatpush.msra.mxu0 %v545
  %1038 = vmatpush.msra.mxu0 %v543
  %1039 = vmatpush.msra.mxu0 %v541
  %1040 = vmatpush.msra.mxu0 %v539
  %1041 = vmatmul.f32.gmra.mxu0 %v53
  %v1042 = vpop.f32.mrf.mxu0
  %v1043 = vadd.f32 %v1023, %v1042
  %1044 = vdwg.mxu0
  %1045 = vmatpush.msra.mxu0 %v601
  %1046 = vmatpush.msra.mxu0 %v599
  %1047 = vmatpush.msra.mxu0 %v597
  %1048 = vmatpush.msra.mxu0 %v595
  %1049 = vmatpush.msra.mxu0 %v593
  %1050 = vmatpush.msra.mxu0 %v591
  %1051 = vmatpush.msra.mxu0 %v589
  %1052 = vmatpush.msra.mxu0 %v587
  %1053 = vmatpush.msra.mxu0 %v585
  %1054 = vmatpush.msra.mxu0 %v583
  %1055 = vmatpush.msra.mxu0 %v581
  %1056 = vmatpush.msra.mxu0 %v579
  %1057 = vmatpush.msra.mxu0 %v577
  %1058 = vmatpush.msra.mxu0 %v575
  %1059 = vmatpush.msra.mxu0 %v573
  %1060 = vmatpush.msra.mxu0 %v571
  %1061 = vmatmul.f32.gmra.mxu0 %v54
  %v1062 = vpop.f32.mrf.mxu0
  %v1063 = vadd.f32 %v1043, %v1062
  %1064 = vdwg.mxu0
  %1065 = vmatpush.msra.mxu0 %v633
  %1066 = vmatpush.msra.mxu0 %v631
  %1067 = vmatpush.msra.mxu0 %v629
  %1068 = vmatpush.msra.mxu0 %v627
  %1069 = vmatpush.msra.mxu0 %v625
  %1070 = vmatpush.msra.mxu0 %v623
  %1071 = vmatpush.msra.mxu0 %v621
  %1072 = vmatpush.msra.mxu0 %v619
  %1073 = vmatpush.msra.mxu0 %v617
  %1074 = vmatpush.msra.mxu0 %v615
  %1075 = vmatpush.msra.mxu0 %v613
  %1076 = vmatpush.msra.mxu0 %v611
  %1077 = vmatpush.msra.mxu0 %v609
  %1078 = vmatpush.msra.mxu0 %v607
  %1079 = vmatpush.msra.mxu0 %v605
  %1080 = vmatpush.msra.mxu0 %v603
  %1081 = vmatmul.f32.gmra.mxu0 %v55
  %v1082 = vpop.f32.mrf.mxu0
  %v1083 = vadd.f32 %v1063, %v1082
  %1084 = vdwg.mxu0
  %1085 = vmatpush.msra.mxu0 %v665
  %1086 = vmatpush.msra.mxu0 %v663
  %1087 = vmatpush.msra.mxu0 %v661
  %1088 = vmatpush.msra.mxu0 %v659
  %1089 = vmatpush.msra.mxu0 %v657
  %1090 = vmatpush.msra.mxu0 %v655
  %1091 = vmatpush.msra.mxu0 %v653
  %1092 = vmatpush.msra.mxu0 %v651
  %1093 = vmatpush.msra.mxu0 %v649
  %1094 = vmatpush.msra.mxu0 %v647
  %1095 = vmatpush.msra.mxu0 %v645
  %1096 = vmatpush.msra.mxu0 %v643
  %1097 = vmatpush.msra.mxu0 %v641
  %1098 = vmatpush.msra.mxu0 %v639
  %1099 = vmatpush.msra.mxu0 %v637
  %1100 = vmatpush.msra.mxu0 %v635
  %1101 = vmatmul.f32.gmra.mxu0 %v56
  %v1102 = vpop.f32.mrf.mxu0
  %v1103 = vadd.f32 %v1083, %v1102
  %1104 = vdwg.mxu0
  %1105 = vmatpush.msra.mxu0 %v697
  %1106 = vmatpush.msra.mxu0 %v695
  %1107 = vmatpush.msra.mxu0 %v693
  %1108 = vmatpush.msra.mxu0 %v691
  %1109 = vmatpush.msra.mxu0 %v689
  %1110 = vmatpush.msra.mxu0 %v687
  %1111 = vmatpush.msra.mxu0 %v685
  %1112 = vmatpush.msra.mxu0 %v683
  %1113 = vmatpush.msra.mxu0 %v681
  %1114 = vmatpush.msra.mxu0 %v679
  %1115 = vmatpush.msra.mxu0 %v677
  %1116 = vmatpush.msra.mxu0 %v675
  %1117 = vmatpush.msra.mxu0 %v673
  %1118 = vmatpush.msra.mxu0 %v671
  %1119 = vmatpush.msra.mxu0 %v669
  %1120 = vmatpush.msra.mxu0 %v667
  %1121 = vmatmul.f32.gmra.mxu0 %v57
  %v1122 = vpop.f32.mrf.mxu0
  %v1123 = vadd.f32 %v1103, %v1122
  %1124 = vdwg.mxu0
  %1125 = vmatpush.msra.mxu0 0.0
  %1126 = vmatpush.msra.mxu0 0.0
  %1127 = vmatpush.msra.mxu0 0.0
  %1128 = vmatpush.msra.mxu0 0.0
  %1129 = vmatpush.msra.mxu0 0.0
  %1130 = vmatpush.msra.mxu0 0.0
  %1131 = vmatpush.msra.mxu0 0.0
  %1132 = vmatpush.msra.mxu0 0.0
  %1133 = vmatpush.msra.mxu0 %v713
  %1134 = vmatpush.msra.mxu0 %v711
  %1135 = vmatpush.msra.mxu0 %v709
  %1136 = vmatpush.msra.mxu0 %v707
  %1137 = vmatpush.msra.mxu0 %v705
  %1138 = vmatpush.msra.mxu0 %v703
  %1139 = vmatpush.msra.mxu0 %v701
  %1140 = vmatpush.msra.mxu0 %v699
  %1141 = vmatmul.f32.gmra.mxu0 %v723
  %v1142 = vpop.f32.mrf.mxu0
  %v1143 = vadd.f32 %v1123, %v1142
  %1144 = vdwg.mxu0
  %1145 = vmatpush.msra.mxu0 %v90
  %1146 = vmatpush.msra.mxu0 %v88
  %1147 = vmatpush.msra.mxu0 %v86
  %1148 = vmatpush.msra.mxu0 %v84
  %1149 = vmatpush.msra.mxu0 %v82
  %1150 = vmatpush.msra.mxu0 %v80
  %1151 = vmatpush.msra.mxu0 %v78
  %1152 = vmatpush.msra.mxu0 %v76
  %1153 = vmatpush.msra.mxu0 %v74
  %1154 = vmatpush.msra.mxu0 %v72
  %1155 = vmatpush.msra.mxu0 %v70
  %1156 = vmatpush.msra.mxu0 %v68
  %1157 = vmatpush.msra.mxu0 %v66
  %1158 = vmatpush.msra.mxu0 %v64
  %1159 = vmatpush.msra.mxu0 %v62
  %1160 = vmatpush.msra.mxu0 %v60
  %1161 = vmatmul.f32.gmra.mxu0 %v38
  %v1162 = vpop.f32.mrf.mxu0
  %v1163 = vadd.f32 %v718, %v1162
  %1164 = vdwg.mxu0
  %1165 = vmatpush.msra.mxu0 %v122
  %1166 = vmatpush.msra.mxu0 %v120
  %1167 = vmatpush.msra.mxu0 %v118
  %1168 = vmatpush.msra.mxu0 %v116
  %1169 = vmatpush.msra.mxu0 %v114
  %1170 = vmatpush.msra.mxu0 %v112
  %1171 = vmatpush.msra.mxu0 %v110
  %1172 = vmatpush.msra.mxu0 %v108
  %1173 = vmatpush.msra.mxu0 %v106
  %1174 = vmatpush.msra.mxu0 %v104
  %1175 = vmatpush.msra.mxu0 %v102
  %1176 = vmatpush.msra.mxu0 %v100
  %1177 = vmatpush.msra.mxu0 %v98
  %1178 = vmatpush.msra.mxu0 %v96
  %1179 = vmatpush.msra.mxu0 %v94
  %1180 = vmatpush.msra.mxu0 %v92
  %1181 = vmatmul.f32.gmra.mxu0 %v39
  %v1182 = vpop.f32.mrf.mxu0
  %v1183 = vadd.f32 %v1163, %v1182
  %1184 = vdwg.mxu0
  %1185 = vmatpush.msra.mxu0 %v154
  %1186 = vmatpush.msra.mxu0 %v152
  %1187 = vmatpush.msra.mxu0 %v150
  %1188 = vmatpush.msra.mxu0 %v148
  %1189 = vmatpush.msra.mxu0 %v146
  %1190 = vmatpush.msra.mxu0 %v144
  %1191 = vmatpush.msra.mxu0 %v142
  %1192 = vmatpush.msra.mxu0 %v140
  %1193 = vmatpush.msra.mxu0 %v138
  %1194 = vmatpush.msra.mxu0 %v136
  %1195 = vmatpush.msra.mxu0 %v134
  %1196 = vmatpush.msra.mxu0 %v132
  %1197 = vmatpush.msra.mxu0 %v130
  %1198 = vmatpush.msra.mxu0 %v128
  %1199 = vmatpush.msra.mxu0 %v126
  %1200 = vmatpush.msra.mxu0 %v124
  %1201 = vmatmul.f32.gmra.mxu0 %v40
  %v1202 = vpop.f32.mrf.mxu0
  %v1203 = vadd.f32 %v1183, %v1202
  %1204 = vdwg.mxu0
  %1205 = vmatpush.msra.mxu0 %v186
  %1206 = vmatpush.msra.mxu0 %v184
  %1207 = vmatpush.msra.mxu0 %v182
  %1208 = vmatpush.msra.mxu0 %v180
  %1209 = vmatpush.msra.mxu0 %v178
  %1210 = vmatpush.msra.mxu0 %v176
  %1211 = vmatpush.msra.mxu0 %v174
  %1212 = vmatpush.msra.mxu0 %v172
  %1213 = vmatpush.msra.mxu0 %v170
  %1214 = vmatpush.msra.mxu0 %v168
  %1215 = vmatpush.msra.mxu0 %v166
  %1216 = vmatpush.msra.mxu0 %v164
  %1217 = vmatpush.msra.mxu0 %v162
  %1218 = vmatpush.msra.mxu0 %v160
  %1219 = vmatpush.msra.mxu0 %v158
  %1220 = vmatpush.msra.mxu0 %v156
  %1221 = vmatmul.f32.gmra.mxu0 %v41
  %v1222 = vpop.f32.mrf.mxu0
  %v1223 = vadd.f32 %v1203, %v1222
  %1224 = vdwg.mxu0
  %1225 = vmatpush.msra.mxu0 %v218
  %1226 = vmatpush.msra.mxu0 %v216
  %1227 = vmatpush.msra.mxu0 %v214
  %1228 = vmatpush.msra.mxu0 %v212
  %1229 = vmatpush.msra.mxu0 %v210
  %1230 = vmatpush.msra.mxu0 %v208
  %1231 = vmatpush.msra.mxu0 %v206
  %1232 = vmatpush.msra.mxu0 %v204
  %1233 = vmatpush.msra.mxu0 %v202
  %1234 = vmatpush.msra.mxu0 %v200
  %1235 = vmatpush.msra.mxu0 %v198
  %1236 = vmatpush.msra.mxu0 %v196
  %1237 = vmatpush.msra.mxu0 %v194
  %1238 = vmatpush.msra.mxu0 %v192
  %1239 = vmatpush.msra.mxu0 %v190
  %1240 = vmatpush.msra.mxu0 %v188
  %1241 = vmatmul.f32.gmra.mxu0 %v42
  %v1242 = vpop.f32.mrf.mxu0
  %v1243 = vadd.f32 %v1223, %v1242
  %1244 = vdwg.mxu0
  %1245 = vmatpush.msra.mxu0 %v250
  %1246 = vmatpush.msra.mxu0 %v248
  %1247 = vmatpush.msra.mxu0 %v246
  %1248 = vmatpush.msra.mxu0 %v244
  %1249 = vmatpush.msra.mxu0 %v242
  %1250 = vmatpush.msra.mxu0 %v240
  %1251 = vmatpush.msra.mxu0 %v238
  %1252 = vmatpush.msra.mxu0 %v236
  %1253 = vmatpush.msra.mxu0 %v234
  %1254 = vmatpush.msra.mxu0 %v232
  %1255 = vmatpush.msra.mxu0 %v230
  %1256 = vmatpush.msra.mxu0 %v228
  %1257 = vmatpush.msra.mxu0 %v226
  %1258 = vmatpush.msra.mxu0 %v224
  %1259 = vmatpush.msra.mxu0 %v222
  %1260 = vmatpush.msra.mxu0 %v220
  %1261 = vmatmul.f32.gmra.mxu0 %v43
  %v1262 = vpop.f32.mrf.mxu0
  %v1263 = vadd.f32 %v1243, %v1262
  %1264 = vdwg.mxu0
  %1265 = vmatpush.msra.mxu0 %v282
  %1266 = vmatpush.msra.mxu0 %v280
  %1267 = vmatpush.msra.mxu0 %v278
  %1268 = vmatpush.msra.mxu0 %v276
  %1269 = vmatpush.msra.mxu0 %v274
  %1270 = vmatpush.msra.mxu0 %v272
  %1271 = vmatpush.msra.mxu0 %v270
  %1272 = vmatpush.msra.mxu0 %v268
  %1273 = vmatpush.msra.mxu0 %v266
  %1274 = vmatpush.msra.mxu0 %v264
  %1275 = vmatpush.msra.mxu0 %v262
  %1276 = vmatpush.msra.mxu0 %v260
  %1277 = vmatpush.msra.mxu0 %v258
  %1278 = vmatpush.msra.mxu0 %v256
  %1279 = vmatpush.msra.mxu0 %v254
  %1280 = vmatpush.msra.mxu0 %v252
  %1281 = vmatmul.f32.gmra.mxu0 %v44
  %v1282 = vpop.f32.mrf.mxu0
  %v1283 = vadd.f32 %v1263, %v1282
  %1284 = vdwg.mxu0
  %1285 = vmatpush.msra.mxu0 %v314
  %1286 = vmatpush.msra.mxu0 %v312
  %1287 = vmatpush.msra.mxu0 %v310
  %1288 = vmatpush.msra.mxu0 %v308
  %1289 = vmatpush.msra.mxu0 %v306
  %1290 = vmatpush.msra.mxu0 %v304
  %1291 = vmatpush.msra.mxu0 %v302
  %1292 = vmatpush.msra.mxu0 %v300
  %1293 = vmatpush.msra.mxu0 %v298
  %1294 = vmatpush.msra.mxu0 %v296
  %1295 = vmatpush.msra.mxu0 %v294
  %1296 = vmatpush.msra.mxu0 %v292
  %1297 = vmatpush.msra.mxu0 %v290
  %1298 = vmatpush.msra.mxu0 %v288
  %1299 = vmatpush.msra.mxu0 %v286
  %1300 = vmatpush.msra.mxu0 %v284
  %1301 = vmatmul.f32.gmra.mxu0 %v45
  %v1302 = vpop.f32.mrf.mxu0
  %v1303 = vadd.f32 %v1283, %v1302
  %1304 = vdwg.mxu0
  %1305 = vmatpush.msra.mxu0 %v346
  %1306 = vmatpush.msra.mxu0 %v344
  %1307 = vmatpush.msra.mxu0 %v342
  %1308 = vmatpush.msra.mxu0 %v340
  %1309 = vmatpush.msra.mxu0 %v338
  %1310 = vmatpush.msra.mxu0 %v336
  %1311 = vmatpush.msra.mxu0 %v334
  %1312 = vmatpush.msra.mxu0 %v332
  %1313 = vmatpush.msra.mxu0 %v330
  %1314 = vmatpush.msra.mxu0 %v328
  %1315 = vmatpush.msra.mxu0 %v326
  %1316 = vmatpush.msra.mxu0 %v324
  %1317 = vmatpush.msra.mxu0 %v322
  %1318 = vmatpush.msra.mxu0 %v320
  %1319 = vmatpush.msra.mxu0 %v318
  %1320 = vmatpush.msra.mxu0 %v316
  %1321 = vmatmul.f32.gmra.mxu0 %v46
  %v1322 = vpop.f32.mrf.mxu0
  %v1323 = vadd.f32 %v1303, %v1322
  %1324 = vdwg.mxu0
  %1325 = vmatpush.msra.mxu0 %v378
  %1326 = vmatpush.msra.mxu0 %v376
  %1327 = vmatpush.msra.mxu0 %v374
  %1328 = vmatpush.msra.mxu0 %v372
  %1329 = vmatpush.msra.mxu0 %v370
  %1330 = vmatpush.msra.mxu0 %v368
  %1331 = vmatpush.msra.mxu0 %v366
  %1332 = vmatpush.msra.mxu0 %v364
  %1333 = vmatpush.msra.mxu0 %v362
  %1334 = vmatpush.msra.mxu0 %v360
  %1335 = vmatpush.msra.mxu0 %v358
  %1336 = vmatpush.msra.mxu0 %v356
  %1337 = vmatpush.msra.mxu0 %v354
  %1338 = vmatpush.msra.mxu0 %v352
  %1339 = vmatpush.msra.mxu0 %v350
  %1340 = vmatpush.msra.mxu0 %v348
  %1341 = vmatmul.f32.gmra.mxu0 %v47
  %v1342 = vpop.f32.mrf.mxu0
  %v1343 = vadd.f32 %v1323, %v1342
  %1344 = vdwg.mxu0
  %1345 = vmatpush.msra.mxu0 %v410
  %1346 = vmatpush.msra.mxu0 %v408
  %1347 = vmatpush.msra.mxu0 %v406
  %1348 = vmatpush.msra.mxu0 %v404
  %1349 = vmatpush.msra.mxu0 %v402
  %1350 = vmatpush.msra.mxu0 %v400
  %1351 = vmatpush.msra.mxu0 %v398
  %1352 = vmatpush.msra.mxu0 %v396
  %1353 = vmatpush.msra.mxu0 %v394
  %1354 = vmatpush.msra.mxu0 %v392
  %1355 = vmatpush.msra.mxu0 %v390
  %1356 = vmatpush.msra.mxu0 %v388
  %1357 = vmatpush.msra.mxu0 %v386
  %1358 = vmatpush.msra.mxu0 %v384
  %1359 = vmatpush.msra.mxu0 %v382
  %1360 = vmatpush.msra.mxu0 %v380
  %1361 = vmatmul.f32.gmra.mxu0 %v48
  %v1362 = vpop.f32.mrf.mxu0
  %v1363 = vadd.f32 %v1343, %v1362
  %1364 = vdwg.mxu0
  %1365 = vmatpush.msra.mxu0 %v442
  %1366 = vmatpush.msra.mxu0 %v440
  %1367 = vmatpush.msra.mxu0 %v438
  %1368 = vmatpush.msra.mxu0 %v436
  %1369 = vmatpush.msra.mxu0 %v434
  %1370 = vmatpush.msra.mxu0 %v432
  %1371 = vmatpush.msra.mxu0 %v430
  %1372 = vmatpush.msra.mxu0 %v428
  %1373 = vmatpush.msra.mxu0 %v426
  %1374 = vmatpush.msra.mxu0 %v424
  %1375 = vmatpush.msra.mxu0 %v422
  %1376 = vmatpush.msra.mxu0 %v420
  %1377 = vmatpush.msra.mxu0 %v418
  %1378 = vmatpush.msra.mxu0 %v416
  %1379 = vmatpush.msra.mxu0 %v414
  %1380 = vmatpush.msra.mxu0 %v412
  %1381 = vmatmul.f32.gmra.mxu0 %v49
  %v1382 = vpop.f32.mrf.mxu0
  %v1383 = vadd.f32 %v1363, %v1382
  %1384 = vdwg.mxu0
  %1385 = vmatpush.msra.mxu0 %v474
  %1386 = vmatpush.msra.mxu0 %v472
  %1387 = vmatpush.msra.mxu0 %v470
  %1388 = vmatpush.msra.mxu0 %v468
  %1389 = vmatpush.msra.mxu0 %v466
  %1390 = vmatpush.msra.mxu0 %v464
  %1391 = vmatpush.msra.mxu0 %v462
  %1392 = vmatpush.msra.mxu0 %v460
  %1393 = vmatpush.msra.mxu0 %v458
  %1394 = vmatpush.msra.mxu0 %v456
  %1395 = vmatpush.msra.mxu0 %v454
  %1396 = vmatpush.msra.mxu0 %v452
  %1397 = vmatpush.msra.mxu0 %v450
  %1398 = vmatpush.msra.mxu0 %v448
  %1399 = vmatpush.msra.mxu0 %v446
  %1400 = vmatpush.msra.mxu0 %v444
  %1401 = vmatmul.f32.gmra.mxu0 %v50
  %v1402 = vpop.f32.mrf.mxu0
  %v1403 = vadd.f32 %v1383, %v1402
  %1404 = vdwg.mxu0
  %1405 = vmatpush.msra.mxu0 %v506
  %1406 = vmatpush.msra.mxu0 %v504
  %1407 = vmatpush.msra.mxu0 %v502
  %1408 = vmatpush.msra.mxu0 %v500
  %1409 = vmatpush.msra.mxu0 %v498
  %1410 = vmatpush.msra.mxu0 %v496
  %1411 = vmatpush.msra.mxu0 %v494
  %1412 = vmatpush.msra.mxu0 %v492
  %1413 = vmatpush.msra.mxu0 %v490
  %1414 = vmatpush.msra.mxu0 %v488
  %1415 = vmatpush.msra.mxu0 %v486
  %1416 = vmatpush.msra.mxu0 %v484
  %1417 = vmatpush.msra.mxu0 %v482
  %1418 = vmatpush.msra.mxu0 %v480
  %1419 = vmatpush.msra.mxu0 %v478
  %1420 = vmatpush.msra.mxu0 %v476
  %1421 = vmatmul.f32.gmra.mxu0 %v51
  %v1422 = vpop.f32.mrf.mxu0
  %v1423 = vadd.f32 %v1403, %v1422
  %1424 = vdwg.mxu0
  %1425 = vmatpush.msra.mxu0 %v538
  %1426 = vmatpush.msra.mxu0 %v536
  %1427 = vmatpush.msra.mxu0 %v534
  %1428 = vmatpush.msra.mxu0 %v532
  %1429 = vmatpush.msra.mxu0 %v530
  %1430 = vmatpush.msra.mxu0 %v528
  %1431 = vmatpush.msra.mxu0 %v526
  %1432 = vmatpush.msra.mxu0 %v524
  %1433 = vmatpush.msra.mxu0 %v522
  %1434 = vmatpush.msra.mxu0 %v520
  %1435 = vmatpush.msra.mxu0 %v518
  %1436 = vmatpush.msra.mxu0 %v516
  %1437 = vmatpush.msra.mxu0 %v514
  %1438 = vmatpush.msra.mxu0 %v512
  %1439 = vmatpush.msra.mxu0 %v510
  %1440 = vmatpush.msra.mxu0 %v508
  %1441 = vmatmul.f32.gmra.mxu0 %v52
  %v1442 = vpop.f32.mrf.mxu0
  %v1443 = vadd.f32 %v1423, %v1442
  %1444 = vdwg.mxu0
  %1445 = vmatpush.msra.mxu0 %v570
  %1446 = vmatpush.msra.mxu0 %v568
  %1447 = vmatpush.msra.mxu0 %v566
  %1448 = vmatpush.msra.mxu0 %v564
  %1449 = vmatpush.msra.mxu0 %v562
  %1450 = vmatpush.msra.mxu0 %v560
  %1451 = vmatpush.msra.mxu0 %v558
  %1452 = vmatpush.msra.mxu0 %v556
  %1453 = vmatpush.msra.mxu0 %v554
  %1454 = vmatpush.msra.mxu0 %v552
  %1455 = vmatpush.msra.mxu0 %v550
  %1456 = vmatpush.msra.mxu0 %v548
  %1457 = vmatpush.msra.mxu0 %v546
  %1458 = vmatpush.msra.mxu0 %v544
  %1459 = vmatpush.msra.mxu0 %v542
  %1460 = vmatpush.msra.mxu0 %v540
  %1461 = vmatmul.f32.gmra.mxu0 %v53
  %v1462 = vpop.f32.mrf.mxu0
  %v1463 = vadd.f32 %v1443, %v1462
  %1464 = vdwg.mxu0
  %1465 = vmatpush.msra.mxu0 %v602
  %1466 = vmatpush.msra.mxu0 %v600
  %1467 = vmatpush.msra.mxu0 %v598
  %1468 = vmatpush.msra.mxu0 %v596
  %1469 = vmatpush.msra.mxu0 %v594
  %1470 = vmatpush.msra.mxu0 %v592
  %1471 = vmatpush.msra.mxu0 %v590
  %1472 = vmatpush.msra.mxu0 %v588
  %1473 = vmatpush.msra.mxu0 %v586
  %1474 = vmatpush.msra.mxu0 %v584
  %1475 = vmatpush.msra.mxu0 %v582
  %1476 = vmatpush.msra.mxu0 %v580
  %1477 = vmatpush.msra.mxu0 %v578
  %1478 = vmatpush.msra.mxu0 %v576
  %1479 = vmatpush.msra.mxu0 %v574
  %1480 = vmatpush.msra.mxu0 %v572
  %1481 = vmatmul.f32.gmra.mxu0 %v54
  %v1482 = vpop.f32.mrf.mxu0
  %v1483 = vadd.f32 %v1463, %v1482
  %1484 = vdwg.mxu0
  %1485 = vmatpush.msra.mxu0 %v634
  %1486 = vmatpush.msra.mxu0 %v632
  %1487 = vmatpush.msra.mxu0 %v630
  %1488 = vmatpush.msra.mxu0 %v628
  %1489 = vmatpush.msra.mxu0 %v626
  %1490 = vmatpush.msra.mxu0 %v624
  %1491 = vmatpush.msra.mxu0 %v622
  %1492 = vmatpush.msra.mxu0 %v620
  %1493 = vmatpush.msra.mxu0 %v618
  %1494 = vmatpush.msra.mxu0 %v616
  %1495 = vmatpush.msra.mxu0 %v614
  %1496 = vmatpush.msra.mxu0 %v612
  %1497 = vmatpush.msra.mxu0 %v610
  %1498 = vmatpush.msra.mxu0 %v608
  %1499 = vmatpush.msra.mxu0 %v606
  %1500 = vmatpush.msra.mxu0 %v604
  %1501 = vmatmul.f32.gmra.mxu0 %v55
  %v1502 = vpop.f32.mrf.mxu0
  %v1503 = vadd.f32 %v1483, %v1502
  %1504 = vdwg.mxu0
  %1505 = vmatpush.msra.mxu0 %v666
  %1506 = vmatpush.msra.mxu0 %v664
  %1507 = vmatpush.msra.mxu0 %v662
  %1508 = vmatpush.msra.mxu0 %v660
  %1509 = vmatpush.msra.mxu0 %v658
  %1510 = vmatpush.msra.mxu0 %v656
  %1511 = vmatpush.msra.mxu0 %v654
  %1512 = vmatpush.msra.mxu0 %v652
  %1513 = vmatpush.msra.mxu0 %v650
  %1514 = vmatpush.msra.mxu0 %v648
  %1515 = vmatpush.msra.mxu0 %v646
  %1516 = vmatpush.msra.mxu0 %v644
  %1517 = vmatpush.msra.mxu0 %v642
  %1518 = vmatpush.msra.mxu0 %v640
  %1519 = vmatpush.msra.mxu0 %v638
  %1520 = vmatpush.msra.mxu0 %v636
  %1521 = vmatmul.f32.gmra.mxu0 %v56
  %v1522 = vpop.f32.mrf.mxu0
  %v1523 = vadd.f32 %v1503, %v1522
  %1524 = vdwg.mxu0
  %1525 = vmatpush.msra.mxu0 %v698
  %1526 = vmatpush.msra.mxu0 %v696
  %1527 = vmatpush.msra.mxu0 %v694
  %1528 = vmatpush.msra.mxu0 %v692
  %1529 = vmatpush.msra.mxu0 %v690
  %1530 = vmatpush.msra.mxu0 %v688
  %1531 = vmatpush.msra.mxu0 %v686
  %1532 = vmatpush.msra.mxu0 %v684
  %1533 = vmatpush.msra.mxu0 %v682
  %1534 = vmatpush.msra.mxu0 %v680
  %1535 = vmatpush.msra.mxu0 %v678
  %1536 = vmatpush.msra.mxu0 %v676
  %1537 = vmatpush.msra.mxu0 %v674
  %1538 = vmatpush.msra.mxu0 %v672
  %1539 = vmatpush.msra.mxu0 %v670
  %1540 = vmatpush.msra.mxu0 %v668
  %1541 = vmatmul.f32.gmra.mxu0 %v57
  %v1542 = vpop.f32.mrf.mxu0
  %v1543 = vadd.f32 %v1523, %v1542
  %1544 = vdwg.mxu0
  %1545 = vmatpush.msra.mxu0 0.0
  %1546 = vmatpush.msra.mxu0 0.0
  %1547 = vmatpush.msra.mxu0 0.0
  %1548 = vmatpush.msra.mxu0 0.0
  %1549 = vmatpush.msra.mxu0 0.0
  %1550 = vmatpush.msra.mxu0 0.0
  %1551 = vmatpush.msra.mxu0 0.0
  %1552 = vmatpush.msra.mxu0 0.0
  %1553 = vmatpush.msra.mxu0 %v714
  %1554 = vmatpush.msra.mxu0 %v712
  %1555 = vmatpush.msra.mxu0 %v710
  %1556 = vmatpush.msra.mxu0 %v708
  %1557 = vmatpush.msra.mxu0 %v706
  %1558 = vmatpush.msra.mxu0 %v704
  %1559 = vmatpush.msra.mxu0 %v702
  %1560 = vmatpush.msra.mxu0 %v700
  %1561 = vmatmul.f32.gmra.mxu0 %v723
  %v1562 = vpop.f32.mrf.mxu0
  %v1563 = vadd.f32 %v1543, %v1562
  %1564 = vdwg.mxu0
  %v1565 = vmax.f32 %v1143, 0.0
  %v1566 = vmax.f32 %v1563, 0.0
  %v1567 = vld [vmem:[%s1] sm:$0xff]
  %v1568 = vld [vmem:[%s1 + $0x8] sm:$0xff]
  %v1569 = vld [vmem:[%s1 + $0x10] sm:$0xff]
  %v1570 = vld [vmem:[%s1 + $0x18] sm:$0xff]
  %v1571 = vld [vmem:[%s1 + $0x20] sm:$0xff]
  %v1572 = vld [vmem:[%s1 + $0x28] sm:$0xff]
  %v1573 = vld [vmem:[%s1 + $0x30] sm:$0xff]
  %v1574 = vld [vmem:[%s1 + $0x38] sm:$0xff]
  %v1575 = vld [vmem:[%s1 + $0x40] sm:$0xff]
  %v1576 = vld [vmem:[%s4] sm:$0xff]
  %v1577 = vld [vmem:[%s4 + $0x8] sm:$0xff]
  %v1578 = vld [vmem:[%s4 + $0x10] sm:$0xff]
  %v1579 = vld [vmem:[%s4 + $0x18] sm:$0xff]
  %v1580 = vld [vmem:[%s4 + $0x20] sm:$0xff]
  %v1581 = vld [vmem:[%s4 + $0x28] sm:$0xff]
  %v1582 = vld [vmem:[%s4 + $0x30] sm:$0xff]
  %v1583 = vld [vmem:[%s4 + $0x38] sm:$0xff]
  %v1584 = vld [vmem:[%s4 + $0x40] sm:$0xff]
  %v1585 = vld [vmem:[%s4 + $0x48] sm:$0xff]
  %v1586 = vld [vmem:[%s4 + $0x50] sm:$0xff]
  %v1587 = vld [vmem:[%s4 + $0x58] sm:$0xff]
  %v1588 = vld [vmem:[%s4 + $0x60] sm:$0xff]
  %v1589 = vld [vmem:[%s4 + $0x68] sm:$0xff]
  %v1590 = vld [vmem:[%s4 + $0x70] sm:$0xff]
  %v1591 = vld [vmem:[%s4 + $0x78] sm:$0xff]
  %v1592 = vld [vmem:[%s4 + $0x80] sm:$0xff]
  %v1593 = vld [vmem:[%s4 + $0x88] sm:$0xff]
  %v1594 = vld [vmem:[%s4 + $0x90] sm:$0xff]
  %v1595 = vld [vmem:[%s4 + $0x98] sm:$0xff]
  %v1596 = vld [vmem:[%s4 + $0xa0] sm:$0xff]
  %v1597 = vld [vmem:[%s4 + $0xa8] sm:$0xff]
  %v1598 = vld [vmem:[%s4 + $0xb0] sm:$0xff]
  %v1599 = vld [vmem:[%s4 + $0xb8] sm:$0xff]
  %v1600 = vld [vmem:[%s4 + $0xc0] sm:$0xff]
  %v1601 = vld [vmem:[%s4 + $0xc8] sm:$0xff]
  %v1602 = vld [vmem:[%s4 + $0xd0] sm:$0xff]
  %v1603 = vld [vmem:[%s4 + $0xd8] sm:$0xff]
  %v1604 = vld [vmem:[%s4 + $0xe0] sm:$0xff]
  %v1605 = vld [vmem:[%s4 + $0xe8] sm:$0xff]
  %v1606 = vld [vmem:[%s4 + $0xf0] sm:$0xff]
  %v1607 = vld [vmem:[%s4 + $0xf8] sm:$0xff]
  %v1608 = vld [vmem:[%s4 + $0x100] sm:$0xff]
  %v1609 = vld [vmem:[%s4 + $0x108] sm:$0xff]
  %v1610 = vld [vmem:[%s4 + $0x110] sm:$0xff]
  %v1611 = vld [vmem:[%s4 + $0x118] sm:$0xff]
  %v1612 = vld [vmem:[%s4 + $0x120] sm:$0xff]
  %v1613 = vld [vmem:[%s4 + $0x128] sm:$0xff]
  %v1614 = vld [vmem:[%s4 + $0x130] sm:$0xff]
  %v1615 = vld [vmem:[%s4 + $0x138] sm:$0xff]
  %v1616 = vld [vmem:[%s4 + $0x140] sm:$0xff]
  %v1617 = vld [vmem:[%s4 + $0x148] sm:$0xff]
  %v1618 = vld [vmem:[%s4 + $0x150] sm:$0xff]
  %v1619 = vld [vmem:[%s4 + $0x158] sm:$0xff]
  %v1620 = vld [vmem:[%s4 + $0x160] sm:$0xff]
  %v1621 = vld [vmem:[%s4 + $0x168] sm:$0xff]
  %v1622 = vld [vmem:[%s4 + $0x170] sm:$0xff]
  %v1623 = vld [vmem:[%s4 + $0x178] sm:$0xff]
  %v1624 = vld [vmem:[%s4 + $0x180] sm:$0xff]
  %v1625 = vld [vmem:[%s4 + $0x188] sm:$0xff]
  %v1626 = vld [vmem:[%s4 + $0x190] sm:$0xff]
  %v1627 = vld [vmem:[%s4 + $0x198] sm:$0xff]
  %v1628 = vld [vmem:[%s4 + $0x1a0] sm:$0xff]
  %v1629 = vld [vmem:[%s4 + $0x1a8] sm:$0xff]
  %v1630 = vld [vmem:[%s4 + $0x1b0] sm:$0xff]
  %v1631 = vld [vmem:[%s4 + $0x1b8] sm:$0xff]
  %v1632 = vld [vmem:[%s4 + $0x1c0] sm:$0xff]
  %v1633 = vld [vmem:[%s4 + $0x1c8] sm:$0xff]
  %v1634 = vld [vmem:[%s4 + $0x1d0] sm:$0xff]
  %v1635 = vld [vmem:[%s4 + $0x1d8] sm:$0xff]
  %v1636 = vld [vmem:[%s4 + $0x1e0] sm:$0xff]
  %v1637 = vld [vmem:[%s4 + $0x1e8] sm:$0xff]
  %v1638 = vld [vmem:[%s4 + $0x1f0] sm:$0xff]
  %v1639 = vld [vmem:[%s4 + $0x1f8] sm:$0xff]
  %v1640 = vld [vmem:[%s4 + $0x200] sm:$0xff]
  %v1641 = vld [vmem:[%s4 + $0x208] sm:$0xff]
  %v1642 = vld [vmem:[%s4 + $0x210] sm:$0xff]
  %v1643 = vld [vmem:[%s4 + $0x218] sm:$0xff]
  %v1644 = vld [vmem:[%s4 + $0x220] sm:$0xff]
  %v1645 = vld [vmem:[%s4 + $0x228] sm:$0xff]
  %v1646 = vld [vmem:[%s4 + $0x230] sm:$0xff]
  %v1647 = vld [vmem:[%s4 + $0x238] sm:$0xff]
  %v1648 = vld [vmem:[%s4 + $0x240] sm:$0xff]
  %v1649 = vld [vmem:[%s4 + $0x248] sm:$0xff]
  %v1650 = vld [vmem:[%s4 + $0x250] sm:$0xff]
  %v1651 = vld [vmem:[%s4 + $0x258] sm:$0xff]
  %v1652 = vld [vmem:[%s4 + $0x260] sm:$0xff]
  %v1653 = vld [vmem:[%s4 + $0x268] sm:$0xff]
  %v1654 = vld [vmem:[%s4 + $0x270] sm:$0xff]
  %v1655 = vld [vmem:[%s4 + $0x278] sm:$0xff]
  %v1656 = vld [vmem:[%s4 + $0x280] sm:$0xff]
  %v1657 = vld [vmem:[%s4 + $0x288] sm:$0xff]
  %v1658 = vld [vmem:[%s4 + $0x290] sm:$0xff]
  %v1659 = vld [vmem:[%s4 + $0x298] sm:$0xff]
  %v1660 = vld [vmem:[%s4 + $0x2a0] sm:$0xff]
  %v1661 = vld [vmem:[%s4 + $0x2a8] sm:$0xff]
  %v1662 = vld [vmem:[%s4 + $0x2b0] sm:$0xff]
  %v1663 = vld [vmem:[%s4 + $0x2b8] sm:$0xff]
  %v1664 = vld [vmem:[%s4 + $0x2c0] sm:$0xff]
  %v1665 = vld [vmem:[%s4 + $0x2c8] sm:$0xff]
  %v1666 = vld [vmem:[%s4 + $0x2d0] sm:$0xff]
  %v1667 = vld [vmem:[%s4 + $0x2d8] sm:$0xff]
  %v1668 = vld [vmem:[%s4 + $0x2e0] sm:$0xff]
  %v1669 = vld [vmem:[%s4 + $0x2e8] sm:$0xff]
  %v1670 = vld [vmem:[%s4 + $0x2f0] sm:$0xff]
  %v1671 = vld [vmem:[%s4 + $0x2f8] sm:$0xff]
  %v1672 = vld [vmem:[%s4 + $0x300] sm:$0xff]
  %v1673 = vld [vmem:[%s4 + $0x308] sm:$0xff]
  %v1674 = vld [vmem:[%s4 + $0x310] sm:$0xff]
  %v1675 = vld [vmem:[%s4 + $0x318] sm:$0xff]
  %v1676 = vld [vmem:[%s4 + $0x320] sm:$0xff]
  %v1677 = vld [vmem:[%s4 + $0x328] sm:$0xff]
  %v1678 = vld [vmem:[%s4 + $0x330] sm:$0xff]
  %v1679 = vld [vmem:[%s4 + $0x338] sm:$0xff]
  %v1680 = vld [vmem:[%s4 + $0x340] sm:$0xff]
  %v1681 = vld [vmem:[%s4 + $0x348] sm:$0xff]
  %v1682 = vld [vmem:[%s4 + $0x350] sm:$0xff]
  %v1683 = vld [vmem:[%s4 + $0x358] sm:$0xff]
  %v1684 = vld [vmem:[%s4 + $0x360] sm:$0xff]
  %v1685 = vld [vmem:[%s4 + $0x368] sm:$0xff]
  %v1686 = vld [vmem:[%s4 + $0x370] sm:$0xff]
  %v1687 = vld [vmem:[%s4 + $0x378] sm:$0xff]
  %v1688 = vld [vmem:[%s4 + $0x380] sm:$0xff]
  %v1689 = vld [vmem:[%s4 + $0x388] sm:$0xff]
  %v1690 = vld [vmem:[%s4 + $0x390] sm:$0xff]
  %v1691 = vld [vmem:[%s4 + $0x398] sm:$0xff]
  %v1692 = vld [vmem:[%s4 + $0x3a0] sm:$0xff]
  %v1693 = vld [vmem:[%s4 + $0x3a8] sm:$0xff]
  %v1694 = vld [vmem:[%s4 + $0x3b0] sm:$0xff]
  %v1695 = vld [vmem:[%s4 + $0x3b8] sm:$0xff]
  %v1696 = vld [vmem:[%s4 + $0x3c0] sm:$0xff]
  %v1697 = vld [vmem:[%s4 + $0x3c8] sm:$0xff]
  %v1698 = vld [vmem:[%s4 + $0x3d0] sm:$0xff]
  %v1699 = vld [vmem:[%s4 + $0x3d8] sm:$0xff]
  %v1700 = vld [vmem:[%s4 + $0x3e0] sm:$0xff]
  %v1701 = vld [vmem:[%s4 + $0x3e8] sm:$0xff]
  %v1702 = vld [vmem:[%s4 + $0x3f0] sm:$0xff]
  %v1703 = vld [vmem:[%s4 + $0x3f8] sm:$0xff]
  %v1704 = vld [vmem:[%s4 + $0x400] sm:$0xff]
  %v1705 = vld [vmem:[%s4 + $0x408] sm:$0xff]
  %v1706 = vld [vmem:[%s4 + $0x410] sm:$0xff]
  %v1707 = vld [vmem:[%s4 + $0x418] sm:$0xff]
  %v1708 = vld [vmem:[%s4 + $0x420] sm:$0xff]
  %v1709 = vld [vmem:[%s4 + $0x428] sm:$0xff]
  %v1710 = vld [vmem:[%s4 + $0x430] sm:$0xff]
  %v1711 = vld [vmem:[%s4 + $0x438] sm:$0xff]
  %v1712 = vld [vmem:[%s5] sm:$0xff]
  %v1713 = vld [vmem:[%s5 + $0x8] sm:$0xff]
  %v1714 = vld [vmem:[%s5 + $0x10] sm:$0xff]
  %v1715 = vld [vmem:[%s5 + $0x18] sm:$0xff]
  %v1716 = vld [vmem:[%s5 + $0x20] sm:$0xff]
  %v1717 = vld [vmem:[%s5 + $0x28] sm:$0xff]
  %v1718 = vld [vmem:[%s5 + $0x30] sm:$0xff]
  %v1719 = vld [vmem:[%s5 + $0x38] sm:$0xff]
  %v1720 = vld [vmem:[%s5 + $0x40] sm:$0xff]
  %v1721 = vld [vmem:[%s5 + $0x48] sm:$0xff]
  %v1722 = vld [vmem:[%s5 + $0x50] sm:$0xff]
  %v1723 = vld [vmem:[%s5 + $0x58] sm:$0xff]
  %v1724 = vld [vmem:[%s5 + $0x60] sm:$0xff]
  %v1725 = vld [vmem:[%s5 + $0x68] sm:$0xff]
  %v1726 = vld [vmem:[%s5 + $0x70] sm:$0xff]
  %v1727 = vld [vmem:[%s5 + $0x78] sm:$0xff]
  %v1728 = vld [vmem:[%s5 + $0x80] sm:$0xff]
  %v1729 = vld [vmem:[%s5 + $0x88] sm:$0xff]
  %v1730 = vld [vmem:[%s5 + $0x90] sm:$0xff]
  %v1731 = vld [vmem:[%s5 + $0x98] sm:$0xff]
  %v1732 = vld [vmem:[%s5 + $0xa0] sm:$0xff]
  %v1733 = vld [vmem:[%s5 + $0xa8] sm:$0xff]
  %v1734 = vld [vmem:[%s5 + $0xb0] sm:$0xff]
  %v1735 = vld [vmem:[%s5 + $0xb8] sm:$0xff]
  %v1736 = vld [vmem:[%s5 + $0xc0] sm:$0xff]
  %v1737 = vld [vmem:[%s5 + $0xc8] sm:$0xff]
  %v1738 = vld [vmem:[%s5 + $0xd0] sm:$0xff]
  %v1739 = vld [vmem:[%s5 + $0xd8] sm:$0xff]
  %v1740 = vld [vmem:[%s5 + $0xe0] sm:$0xff]
  %v1741 = vld [vmem:[%s5 + $0xe8] sm:$0xff]
  %v1742 = vld [vmem:[%s5 + $0xf0] sm:$0xff]
  %v1743 = vld [vmem:[%s5 + $0xf8] sm:$0xff]
  %1744 = vmatpush.msra.mxu0 %v1727
  %1745 = vmatpush.msra.mxu0 %v1726
  %1746 = vmatpush.msra.mxu0 %v1725
  %1747 = vmatpush.msra.mxu0 %v1724
  %1748 = vmatpush.msra.mxu0 %v1723
  %1749 = vmatpush.msra.mxu0 %v1722
  %1750 = vmatpush.msra.mxu0 %v1721
  %1751 = vmatpush.msra.mxu0 %v1720
  %1752 = vmatpush.msra.mxu0 %v1719
  %1753 = vmatpush.msra.mxu0 %v1718
  %1754 = vmatpush.msra.mxu0 %v1717
  %1755 = vmatpush.msra.mxu0 %v1716
  %1756 = vmatpush.msra.mxu0 %v1715
  %1757 = vmatpush.msra.mxu0 %v1714
  %1758 = vmatpush.msra.mxu0 %v1713
  %1759 = vmatpush.msra.mxu0 %v1712
  %1760 = vmatmul.f32.gmra.mxu0 %v1565
  %v1761 = vpop.f32.mrf.mxu0
  %v1762 = vadd.f32 0.0, %v1761
  %1763 = vdwg.mxu0
  %1764 = vmatpush.msra.mxu0 %v1743
  %1765 = vmatpush.msra.mxu0 %v1742
  %1766 = vmatpush.msra.mxu0 %v1741
  %1767 = vmatpush.msra.mxu0 %v1740
  %1768 = vmatpush.msra.mxu0 %v1739
  %1769 = vmatpush.msra.mxu0 %v1738
  %1770 = vmatpush.msra.mxu0 %v1737
  %1771 = vmatpush.msra.mxu0 %v1736
  %1772 = vmatpush.msra.mxu0 %v1735
  %1773 = vmatpush.msra.mxu0 %v1734
  %1774 = vmatpush.msra.mxu0 %v1733
  %1775 = vmatpush.msra.mxu0 %v1732
  %1776 = vmatpush.msra.mxu0 %v1731
  %1777 = vmatpush.msra.mxu0 %v1730
  %1778 = vmatpush.msra.mxu0 %v1729
  %1779 = vmatpush.msra.mxu0 %v1728
  %1780 = vmatmul.f32.gmra.mxu0 %v1566
  %v1781 = vpop.f32.mrf.mxu0
  %v1782 = vadd.f32 %v1762, %v1781
  %1783 = vdwg.mxu0
  %v1785 = vsel %vm721, %v1575, 0
  %1787 = vmatpush.msra.mxu0 %v1591
  %1788 = vmatpush.msra.mxu0 %v1590
  %1789 = vmatpush.msra.mxu0 %v1589
  %1790 = vmatpush.msra.mxu0 %v1588
  %1791 = vmatpush.msra.mxu0 %v1587
  %1792 = vmatpush.msra.mxu0 %v1586
  %1793 = vmatpush.msra.mxu0 %v1585
  %1794 = vmatpush.msra.mxu0 %v1584
  %1795 = vmatpush.msra.mxu0 %v1583
  %1796 = vmatpush.msra.mxu0 %v1582
  %1797 = vmatpush.msra.mxu0 %v1581
  %1798 = vmatpush.msra.mxu0 %v1580
  %1799 = vmatpush.msra.mxu0 %v1579
  %1800 = vmatpush.msra.mxu0 %v1578
  %1801 = vmatpush.msra.mxu0 %v1577
  %1802 = vmatpush.msra.mxu0 %v1576
  %1803 = vmatmul.f32.gmra.mxu0 %v1567
  %v1804 = vpop.f32.mrf.mxu0
  %v1805 = vadd.f32 %v1782, %v1804
  %1806 = vdwg.mxu0
  %1807 = vmatpush.msra.mxu0 %v1607
  %1808 = vmatpush.msra.mxu0 %v1606
  %1809 = vmatpush.msra.mxu0 %v1605
  %1810 = vmatpush.msra.mxu0 %v1604
  %1811 = vmatpush.msra.mxu0 %v1603
  %1812 = vmatpush.msra.mxu0 %v1602
  %1813 = vmatpush.msra.mxu0 %v1601
  %1814 = vmatpush.msra.mxu0 %v1600
  %1815 = vmatpush.msra.mxu0 %v1599
  %1816 = vmatpush.msra.mxu0 %v1598
  %1817 = vmatpush.msra.mxu0 %v1597
  %1818 = vmatpush.msra.mxu0 %v1596
  %1819 = vmatpush.msra.mxu0 %v1595
  %1820 = vmatpush.msra.mxu0 %v1594
  %1821 = vmatpush.msra.mxu0 %v1593
  %1822 = vmatpush.msra.mxu0 %v1592
  %1823 = vmatmul.f32.gmra.mxu0 %v1568
  %v1824 = vpop.f32.mrf.mxu0
  %v1825 = vadd.f32 %v1805, %v1824
  %1826 = vdwg.mxu0
  %1827 = vmatpush.msra.mxu0 %v1623
  %1828 = vmatpush.msra.mxu0 %v1622
  %1829 = vmatpush.msra.mxu0 %v1621
  %1830 = vmatpush.msra.mxu0 %v1620
  %1831 = vmatpush.msra.mxu0 %v1619
  %1832 = vmatpush.msra.mxu0 %v1618
  %1833 = vmatpush.msra.mxu0 %v1617
  %1834 = vmatpush.msra.mxu0 %v1616
  %1835 = vmatpush.msra.mxu0 %v1615
  %1836 = vmatpush.msra.mxu0 %v1614
  %1837 = vmatpush.msra.mxu0 %v1613
  %1838 = vmatpush.msra.mxu0 %v1612
  %1839 = vmatpush.msra.mxu0 %v1611
  %1840 = vmatpush.msra.mxu0 %v1610
  %1841 = vmatpush.msra.mxu0 %v1609
  %1842 = vmatpush.msra.mxu0 %v1608
  %1843 = vmatmul.f32.gmra.mxu0 %v1569
  %v1844 = vpop.f32.mrf.mxu0
  %v1845 = vadd.f32 %v1825, %v1844
  %1846 = vdwg.mxu0
  %1847 = vmatpush.msra.mxu0 %v1639
  %1848 = vmatpush.msra.mxu0 %v1638
  %1849 = vmatpush.msra.mxu0 %v1637
  %1850 = vmatpush.msra.mxu0 %v1636
  %1851 = vmatpush.msra.mxu0 %v1635
  %1852 = vmatpush.msra.mxu0 %v1634
  %1853 = vmatpush.msra.mxu0 %v1633
  %1854 = vmatpush.msra.mxu0 %v1632
  %1855 = vmatpush.msra.mxu0 %v1631
  %1856 = vmatpush.msra.mxu0 %v1630
  %1857 = vmatpush.msra.mxu0 %v1629
  %1858 = vmatpush.msra.mxu0 %v1628
  %1859 = vmatpush.msra.mxu0 %v1627
  %1860 = vmatpush.msra.mxu0 %v1626
  %1861 = vmatpush.msra.mxu0 %v1625
  %1862 = vmatpush.msra.mxu0 %v1624
  %1863 = vmatmul.f32.gmra.mxu0 %v1570
  %v1864 = vpop.f32.mrf.mxu0
  %v1865 = vadd.f32 %v1845, %v1864
  %1866 = vdwg.mxu0
  %1867 = vmatpush.msra.mxu0 %v1655
  %1868 = vmatpush.msra.mxu0 %v1654
  %1869 = vmatpush.msra.mxu0 %v1653
  %1870 = vmatpush.msra.mxu0 %v1652
  %1871 = vmatpush.msra.mxu0 %v1651
  %1872 = vmatpush.msra.mxu0 %v1650
  %1873 = vmatpush.msra.mxu0 %v1649
  %1874 = vmatpush.msra.mxu0 %v1648
  %1875 = vmatpush.msra.mxu0 %v1647
  %1876 = vmatpush.msra.mxu0 %v1646
  %1877 = vmatpush.msra.mxu0 %v1645
  %1878 = vmatpush.msra.mxu0 %v1644
  %1879 = vmatpush.msra.mxu0 %v1643
  %1880 = vmatpush.msra.mxu0 %v1642
  %1881 = vmatpush.msra.mxu0 %v1641
  %1882 = vmatpush.msra.mxu0 %v1640
  %1883 = vmatmul.f32.gmra.mxu0 %v1571
  %v1884 = vpop.f32.mrf.mxu0
  %v1885 = vadd.f32 %v1865, %v1884
  %1886 = vdwg.mxu0
  %1887 = vmatpush.msra.mxu0 %v1671
  %1888 = vmatpush.msra.mxu0 %v1670
  %1889 = vmatpush.msra.mxu0 %v1669
  %1890 = vmatpush.msra.mxu0 %v1668
  %1891 = vmatpush.msra.mxu0 %v1667
  %1892 = vmatpush.msra.mxu0 %v1666
  %1893 = vmatpush.msra.mxu0 %v1665
  %1894 = vmatpush.msra.mxu0 %v1664
  %1895 = vmatpush.msra.mxu0 %v1663
  %1896 = vmatpush.msra.mxu0 %v1662
  %1897 = vmatpush.msra.mxu0 %v1661
  %1898 = vmatpush.msra.mxu0 %v1660
  %1899 = vmatpush.msra.mxu0 %v1659
  %1900 = vmatpush.msra.mxu0 %v1658
  %1901 = vmatpush.msra.mxu0 %v1657
  %1902 = vmatpush.msra.mxu0 %v1656
  %1903 = vmatmul.f32.gmra.mxu0 %v1572
  %v1904 = vpop.f32.mrf.mxu0
  %v1905 = vadd.f32 %v1885, %v1904
  %1906 = vdwg.mxu0
  %1907 = vmatpush.msra.mxu0 %v1687
  %1908 = vmatpush.msra.mxu0 %v1686
  %1909 = vmatpush.msra.mxu0 %v1685
  %1910 = vmatpush.msra.mxu0 %v1684
  %1911 = vmatpush.msra.mxu0 %v1683
  %1912 = vmatpush.msra.mxu0 %v1682
  %1913 = vmatpush.msra.mxu0 %v1681
  %1914 = vmatpush.msra.mxu0 %v1680
  %1915 = vmatpush.msra.mxu0 %v1679
  %1916 = vmatpush.msra.mxu0 %v1678
  %1917 = vmatpush.msra.mxu0 %v1677
  %1918 = vmatpush.msra.mxu0 %v1676
  %1919 = vmatpush.msra.mxu0 %v1675
  %1920 = vmatpush.msra.mxu0 %v1674
  %1921 = vmatpush.msra.mxu0 %v1673
  %1922 = vmatpush.msra.mxu0 %v1672
  %1923 = vmatmul.f32.gmra.mxu0 %v1573
  %v1924 = vpop.f32.mrf.mxu0
  %v1925 = vadd.f32 %v1905, %v1924
  %1926 = vdwg.mxu0
  %1927 = vmatpush.msra.mxu0 %v1703
  %1928 = vmatpush.msra.mxu0 %v1702
  %1929 = vmatpush.msra.mxu0 %v1701
  %1930 = vmatpush.msra.mxu0 %v1700
  %1931 = vmatpush.msra.mxu0 %v1699
  %1932 = vmatpush.msra.mxu0 %v1698
  %1933 = vmatpush.msra.mxu0 %v1697
  %1934 = vmatpush.msra.mxu0 %v1696
  %1935 = vmatpush.msra.mxu0 %v1695
  %1936 = vmatpush.msra.mxu0 %v1694
  %1937 = vmatpush.msra.mxu0 %v1693
  %1938 = vmatpush.msra.mxu0 %v1692
  %1939 = vmatpush.msra.mxu0 %v1691
  %1940 = vmatpush.msra.mxu0 %v1690
  %1941 = vmatpush.msra.mxu0 %v1689
  %1942 = vmatpush.msra.mxu0 %v1688
  %1943 = vmatmul.f32.gmra.mxu0 %v1574
  %v1944 = vpop.f32.mrf.mxu0
  %v1945 = vadd.f32 %v1925, %v1944
  %1946 = vdwg.mxu0
  %1947 = vmatpush.msra.mxu0 0.0
  %1948 = vmatpush.msra.mxu0 0.0
  %1949 = vmatpush.msra.mxu0 0.0
  %1950 = vmatpush.msra.mxu0 0.0
  %1951 = vmatpush.msra.mxu0 0.0
  %1952 = vmatpush.msra.mxu0 0.0
  %1953 = vmatpush.msra.mxu0 0.0
  %1954 = vmatpush.msra.mxu0 0.0
  %1955 = vmatpush.msra.mxu0 %v1711
  %1956 = vmatpush.msra.mxu0 %v1710
  %1957 = vmatpush.msra.mxu0 %v1709
  %1958 = vmatpush.msra.mxu0 %v1708
  %1959 = vmatpush.msra.mxu0 %v1707
  %1960 = vmatpush.msra.mxu0 %v1706
  %1961 = vmatpush.msra.mxu0 %v1705
  %1962 = vmatpush.msra.mxu0 %v1704
  %1963 = vmatmul.f32.gmra.mxu0 %v1785
  %v1964 = vpop.f32.mrf.mxu0
  %v1965 = vadd.f32 %v1945, %v1964
  %1966 = vdwg.mxu0
  %v1967 = vld [vmem:[%s6] sm:$0x1]
  %v1969 = vperm.slane %v1967, 0
  %v1971 = vadd.f32 %v1965, %v1969
  %vm1972 = vcmp.ge.f32.partialorder %v1971, 0.0
  %v1973 = vmul.f32 %v1971, 0.01
  %v1974 = vsel %vm1972, %v1971, %v1973
  %v1975 = vld [vmem:[%s7] sm:$0xff]
  %v1976 = vld [vmem:[%s7 + $0x8] sm:$0xff]
  %v1977 = vld [vmem:[%s7 + $0x10] sm:$0xff]
  %v1978 = vld [vmem:[%s7 + $0x18] sm:$0xff]
  %v1979 = vld [vmem:[%s7 + $0x20] sm:$0xff]
  %v1980 = vld [vmem:[%s7 + $0x28] sm:$0xff]
  %v1981 = vld [vmem:[%s7 + $0x30] sm:$0xff]
  %v1982 = vld [vmem:[%s7 + $0x38] sm:$0xff]
  %v1983 = vld [vmem:[%s7 + $0x40] sm:$0xff]
  %v1984 = vld [vmem:[%s7 + $0x48] sm:$0xff]
  %v1985 = vld [vmem:[%s7 + $0x50] sm:$0xff]
  %v1986 = vld [vmem:[%s7 + $0x58] sm:$0xff]
  %v1987 = vld [vmem:[%s7 + $0x60] sm:$0xff]
  %v1988 = vld [vmem:[%s7 + $0x68] sm:$0xff]
  %v1989 = vld [vmem:[%s7 + $0x70] sm:$0xff]
  %v1990 = vld [vmem:[%s7 + $0x78] sm:$0xff]
  %v1991 = vld [vmem:[%s8] sm:$0x1]
  %v1993 = vperm.slane %v1991, 0
  %1995 = vmatpush.msra.mxu0 %v1990
  %1996 = vmatpush.msra.mxu0 %v1989
  %1997 = vmatpush.msra.mxu0 %v1988
  %1998 = vmatpush.msra.mxu0 %v1987
  %1999 = vmatpush.msra.mxu0 %v1986
  %2000 = vmatpush.msra.mxu0 %v1985
  %2001 = vmatpush.msra.mxu0 %v1984
  %2002 = vmatpush.msra.mxu0 %v1983
  %2003 = vmatpush.msra.mxu0 %v1982
  %2004 = vmatpush.msra.mxu0 %v1981
  %2005 = vmatpush.msra.mxu0 %v1980
  %2006 = vmatpush.msra.mxu0 %v1979
  %2007 = vmatpush.msra.mxu0 %v1978
  %2008 = vmatpush.msra.mxu0 %v1977
  %2009 = vmatpush.msra.mxu0 %v1976
  %2010 = vmatpush.msra.mxu0 %v1975
  %2011 = vmatmul.f32.gmra.mxu0 %v1974
  %v2012 = vpop.f32.mrf.mxu0
  %v2013 = vadd.f32 %v1993, %v2012
  %2014 = vdwg.mxu0
  %vm2015 = vcmp.ge.f32.partialorder %v2013, 0.0
  %v2016 = vmul.f32 %v2013, 0.01
  %v2017 = vsel %vm2015, %v2013, %v2016
  %v2018 = vld [vmem:[%s9] sm:$0xff]
  %v2019 = vld [vmem:[%s9 + $0x8] sm:$0xf]
  %v2020 = vld [vmem:[%s10] sm:$0x1]
  %v2022 = vperm.slane %v2020, 0
  %vm2024 = vcmask 97280
  %v2026 = vsel %vm2024, %v2017, 0
  %vm2028 = vcmask 1043456
  %v2030 = vsel %vm2028, %v2019, 0
  %2032 = vmatpush.msra.mxu0 0.0
  %2033 = vmatpush.msra.mxu0 0.0
  %2034 = vmatpush.msra.mxu0 0.0
  %2035 = vmatpush.msra.mxu0 0.0
  %2036 = vmatpush.msra.mxu0 0.0
  %2037 = vmatpush.msra.mxu0 0.0
  %2038 = vmatpush.msra.mxu0 0.0
  %2039 = vmatpush.msra.mxu0 0.0
  %2040 = vmatpush.msra.mxu0 0.0
  %2041 = vmatpush.msra.mxu0 0.0
  %2042 = vmatpush.msra.mxu0 0.0
  %2043 = vmatpush.msra.mxu0 0.0
  %2044 = vmatpush.msra.mxu0 0.0
  %2045 = vmatpush.msra.mxu0 0.0
  %2046 = vmatpush.msra.mxu0 %v2030
  %2047 = vmatpush.msra.mxu0 %v2018
  %2048 = vmatmul.f32.gmra.mxu0 %v2026
  %v2049 = vpop.f32.mrf.mxu0
  %v2050 = vadd.f32 %v2022, %v2049
  %2051 = vdwg.mxu0
  %vm2052 = vcmask 15360
  %v2053 = vsel %vm2052, %v2050, -inf
  %2054 = vmax.xlane.f32.xlu0 %v2053
  %v2055 = vpop.xlane.xlu0 %2054
  %v2056 = vsub.f32 %v2050, %v2055
  %v2057 = vmul.f32 %v2056, 1.442695
  %v2058 = vpow.pop %v2057
  %v2059 = vsel %vm2052, %v2058, 0.0
  %2060 = vadd.xlane.f32.xlu0 %v2059
  %v2061 = vpop.xlane.xlu0 %2060
  %v2062 = vrcp.pop %v2061
  %v2063 = vmul.f32 %v2061, %v2062
  %v2064 = vsub.f32 1.0, %v2063
  %v2065 = vmul.f32 %v2062, %v2064
  %v2066 = vadd.f32 %v2062, %v2065
  %vm2067 = vweird.f32 %v2061
  %vm2068 = vweird.f32 %v2062
  %vm2069 = vmor %vm2067, %vm2068
  %v2070 = vsel %vm2069, %v2062, %v2066
  %v2071 = vand.u32 2147483647, %v2061
  %vm2072 = vcmp.eq.f32.partialorder %v2071, 8.507059e+37
  %v2073 = vand.u32 %v2061, 2147483648
  %v2074 = vor.u32 1.1754944e-38, %v2073
  %v2075 = vsel %vm2072, %v2074, %v2070
  %v2076 = vmul.f32 %v2058, %v2075
  %2077 = vst.msk [vmem:[%s11] sm:$0xff] %vm2052, %v2076
  // Predicated region
  $region46: #{new_model2_forward.11} parent=0 // pred_check
    _
  $region47: #{new_model2_forward.11} parent=0 // pred_check_branch
    %2079 = sbr.rel (0) target = $region49
  $region48: #{new_model2_forward.11} parent=0 // pred_region
    _
  $region49: #{new_model2_forward.11} parent=0 // pred_fallthru
    _
  // Predicated region
  $region50: #{new_model2_forward.11} parent=0 // pred_check
    _
  $region51: #{new_model2_forward.11} parent=0 // pred_check_branch
    %2081 = sbr.rel (0) target = $region53
  $region52: #{new_model2_forward.11} parent=0 // pred_region
    _
  $region53: #{new_model2_forward.11} parent=0 // pred_fallthru
    _

</llo_original>
